<compile_context>
chip_gen: v5e
topology: v5e:2x2
jax: 0.10.0
libtpu: 0.0.40
codegen_flags: <defaults>
</compile_context>

<pallas_src>
import functools

import numpy as np
import jax
import jax.numpy as jnp
from jax.experimental import pallas as pl
from jax.experimental.pallas import tpu as pltpu

EPS = 1e-5
BATCH = 2

# (mode, H_in, H_out, C_in, C_out, activation); H == W at every stage.
_LAYERS = (
    ("conv",  16,  8,   4,  32, "relu"),
    ("conv",   8,  4,  32,  64, "relu"),
    ("conv",   4,  2,  64, 128, "relu"),
    ("convT",  2,  4, 128,  64, "relu"),
    ("convT",  4,  8,  64,  32, "relu"),
    ("convT",  8, 16,  32,   4, "sigmoid"),
)


# ----------------------------------------------------------------------------
# In-kernel building block: conv/convT (9 tap matmuls) + BN(train) + activation
# ----------------------------------------------------------------------------
def _conv_bn_act(a, g_ref, w_ref, gamma_ref, beta_ref, *, g_first, act):
    """One layer in transposed layout.

    a:         (C_in, M_in) activation, columns ordered (b, h, w).
    g_ref:     (9, M_in, M_out) 0/1 selection matrices (one per 3x3 tap).
    w_ref:     (9, C_out, C_in) per-tap weight slices (pre-transposed).
    gamma/beta:(C_out, 1) BatchNorm affine parameters.
    """
    acc = None
    for t in range(9):
        g_t = g_ref[t]                                   # (M_in, M_out)
        w_t = w_ref[t]                                   # (C_out, C_in)
        if g_first:
            # Encoder ordering: gather first (cheaper when C_in << M_in).
            term = jnp.dot(w_t,
                           jnp.dot(a, g_t, preferred_element_type=jnp.float32),
                           preferred_element_type=jnp.float32)
        else:
            # Decoder ordering: channel matmul first (cheaper when M_in small).
            term = jnp.dot(jnp.dot(w_t, a, preferred_element_type=jnp.float32),
                           g_t, preferred_element_type=jnp.float32)
        acc = term if acc is None else acc + term        # (C_out, M_out), f32

    # BatchNorm2d training mode: per-channel stats over batch*H*W (= lanes),
    # biased variance, eps = 1e-5.  (Conv bias omitted: cancelled by the mean.)
    mean = jnp.mean(acc, axis=1, keepdims=True)
    var = jnp.mean(jnp.square(acc - mean), axis=1, keepdims=True)
    y = (acc - mean) * jax.lax.rsqrt(var + EPS)
    y = y * gamma_ref[...] + beta_ref[...]

    if act == "relu":
        return jnp.maximum(y, 0.0)
    return jax.nn.sigmoid(y)


def _autoencoder_kernel(*refs, batch, c_in0, layer_cfg):
    x_ref, o_ref = refs[0], refs[-1]
    prm = refs[1:-1]

    # NCHW-flat input (B*C_in, H*W)  ->  transposed activation (C_in, B*H*W).
    a = jnp.concatenate(
        [x_ref[b * c_in0:(b + 1) * c_in0, :] for b in range(batch)], axis=1)

    for li, (g_first, act) in enumerate(layer_cfg):
        g_ref, w_ref, gamma_ref, beta_ref = prm[4 * li:4 * li + 4]
        a = _conv_bn_act(a, g_ref, w_ref, gamma_ref, beta_ref,
                         g_first=g_first, act=act)

    # Final activation is (C_out, B*H*W).  Store lane-dense as (B*C_out, H*W).
    c_out = o_ref.shape[0] // batch
    hw = o_ref.shape[1]
    for b in range(batch):
        o_ref[b * c_out:(b + 1) * c_out, :] = a[:, b * hw:(b + 1) * hw]


# ----------------------------------------------------------------------------
# Host-side (one-time) precomputation: selection matrices + packed weights
# ----------------------------------------------------------------------------
def _selection_matrices(batch, h_in, w_in, h_out, w_out, mode):
    """(9, B*H_in*W_in, B*H_out*W_out) 0/1 matrices; G[t, n, m] = 1 iff input
    pixel n feeds output pixel m through 3x3 tap t (taps row-major ky,kx)."""
    m_in, m_out = batch * h_in * w_in, batch * h_out * w_out
    g = np.zeros((9, m_in, m_out), np.float32)
    taps = [(ky, kx) for ky in range(3) for kx in range(3)]
    for t, (ky, kx) in enumerate(taps):
        for b in range(batch):
            for oy in range(h_out):
                for ox in range(w_out):
                    if mode == "conv":            # Conv2d: stride 2, pad 1
                        iy, ix = 2 * oy + ky - 1, 2 * ox + kx - 1
                        ok = (0 <= iy < h_in) and (0 <= ix < w_in)
                    else:                          # ConvT: s=2, p=1, out_pad=1
                        ny, nx = oy + 1 - ky, ox + 1 - kx
                        ok = (ny % 2 == 0) and (nx % 2 == 0)
                        iy, ix = ny // 2, nx // 2
                        ok = ok and (0 <= iy < h_in) and (0 <= ix < w_in)
                    if ok:
                        m = (b * h_out + oy) * w_out + ox
                        n = (b * h_in + iy) * w_in + ix
                        g[t, n, m] = 1.0
    return g


def pack_params(p):
    """Precompute everything the fused kernel needs (runs once, host-side)."""
    names = ("e1", "e2", "e3", "d1", "d2", "d3")
    packed = []
    for name, (mode, h_in, h_out, c_in, c_out, _) in zip(names, _LAYERS):
        g = _selection_matrices(BATCH, h_in, h_in, h_out, h_out, mode)
        w = np.asarray(p[name + "_w"], np.float32)
        if mode == "conv":      # (C_out, C_in, 3, 3) -> (9, C_out, C_in)
            w_t = w.transpose(2, 3, 0, 1).reshape(9, c_out, c_in)
        else:                   # (C_in, C_out, 3, 3) -> (9, C_out, C_in)
            w_t = w.transpose(2, 3, 1, 0).reshape(9, c_out, c_in)
        gamma = np.asarray(p["bn_" + name + "_g"], np.float32).reshape(c_out, 1)
        beta = np.asarray(p["bn_" + name + "_b"], np.float32).reshape(c_out, 1)
        # NOTE: conv bias p[name + "_b"] is intentionally NOT packed -- it is
        # exactly cancelled by the training-mode BatchNorm mean subtraction.
        packed += [jnp.asarray(g), jnp.asarray(w_t),
                   jnp.asarray(gamma), jnp.asarray(beta)]
    return tuple(packed)


# ----------------------------------------------------------------------------
# Forward pass: free reshape -> one fused pallas_call -> free reshape
# ----------------------------------------------------------------------------
def conv2d_autoencoder_forward(x_nchw, packed):
    b, c, h, w = x_nchw.shape
    x_flat = x_nchw.reshape(b * c, h * w).astype(jnp.float32)   # free reshape

    layer_cfg = tuple((mode == "conv", act)
                      for (mode, _, _, _, _, act) in _LAYERS)
    c_out_final = _LAYERS[-1][4]

    kernel = functools.partial(_autoencoder_kernel, batch=b, c_in0=c,
                               layer_cfg=layer_cfg)
    vmem = pl.BlockSpec(memory_space=pltpu.MemorySpace.VMEM)

    out_flat = pl.pallas_call(
        kernel,
        out_shape=jax.ShapeDtypeStruct((b * c_out_final, h * w), jnp.float32),
        in_specs=[vmem] * (1 + len(packed)),
        out_specs=vmem,
        compiler_params=pltpu.CompilerParams(
            vmem_limit_bytes=32 * 1024 * 1024),
    )(x_flat, *packed)

    return out_flat.reshape(b, c_out_final, h, w)               # free reshape


# ----------------------------------------------------------------------------
# Parameters (deterministic init, PyTorch layouts) and a pure-XLA reference
# ----------------------------------------------------------------------------
def init_params(key):
    def conv_w(key, shape):
        fan_in = shape[1] * shape[2] * shape[3]
        return jax.random.normal(key, shape, jnp.float32) * jnp.sqrt(2.0 / fan_in)

    keys = jax.random.split(key, 6)
    p = {}
    # Encoder Conv2d weights: (C_out, C_in, 3, 3)
    p["e1_w"], p["e1_b"] = conv_w(keys[0], (32, 4, 3, 3)), jnp.zeros((32,), jnp.float32)
    p["e2_w"], p["e2_b"] = conv_w(keys[1], (64, 32, 3, 3)), jnp.zeros((64,), jnp.float32)
    p["e3_w"], p["e3_b"] = conv_w(keys[2], (128, 64, 3, 3)), jnp.zeros((128,), jnp.float32)
    # Decoder ConvTranspose2d weights: (C_in, C_out, 3, 3)
    p["d1_w"], p["d1_b"] = conv_w(keys[3], (128, 64, 3, 3)), jnp.zeros((64,), jnp.float32)
    p["d2_w"], p["d2_b"] = conv_w(keys[4], (64, 32, 3, 3)), jnp.zeros((32,), jnp.float32)
    p["d3_w"], p["d3_b"] = conv_w(keys[5], (32, 4, 3, 3)), jnp.zeros((4,), jnp.float32)
    # BatchNorm affine params (PyTorch default init: weight=1, bias=0)
    for name, ch in [("bn_e1", 32), ("bn_e2", 64), ("bn_e3", 128),
                     ("bn_d1", 64), ("bn_d2", 32), ("bn_d3", 4)]:
        p[name + "_g"] = jnp.ones((ch,), jnp.float32)
        p[name + "_b"] = jnp.zeros((ch,), jnp.float32)
    return p


def _reference_forward(x, p):
    """Pure-JAX/XLA reference (no Pallas), used only for validation."""
    def bn(y, g, b2):
        m = jnp.mean(y, axis=(0, 2, 3), keepdims=True)
        v = jnp.mean(jnp.square(y - m), axis=(0, 2, 3), keepdims=True)
        return ((y - m) * jax.lax.rsqrt(v + EPS) * g.reshape(1, -1, 1, 1)
                + b2.reshape(1, -1, 1, 1))

    def conv(y, w, bias):
        y = jax.lax.conv_general_dilated(
            y, w, window_strides=(2, 2), padding=((1, 1), (1, 1)),
            dimension_numbers=("NCHW", "OIHW", "NCHW"))
        return y + bias.reshape(1, -1, 1, 1)

    def convT(y, w, bias):
        wf = jnp.transpose(w[:, :, ::-1, ::-1], (1, 0, 2, 3))
        y = jax.lax.conv_general_dilated(
            y, wf, window_strides=(1, 1), padding=((1, 2), (1, 2)),
            lhs_dilation=(2, 2), dimension_numbers=("NCHW", "OIHW", "NCHW"))
        return y + bias.reshape(1, -1, 1, 1)

    y = x
    y = jnp.maximum(bn(conv(y, p["e1_w"], p["e1_b"]), p["bn_e1_g"], p["bn_e1_b"]), 0.0)
    y = jnp.maximum(bn(conv(y, p["e2_w"], p["e2_b"]), p["bn_e2_g"], p["bn_e2_b"]), 0.0)
    y = jnp.maximum(bn(conv(y, p["e3_w"], p["e3_b"]), p["bn_e3_g"], p["bn_e3_b"]), 0.0)
    y = jnp.maximum(bn(convT(y, p["d1_w"], p["d1_b"]), p["bn_d1_g"], p["bn_d1_b"]), 0.0)
    y = jnp.maximum(bn(convT(y, p["d2_w"], p["d2_b"]), p["bn_d2_g"], p["bn_d2_b"]), 0.0)
    y = jax.nn.sigmoid(bn(convT(y, p["d3_w"], p["d3_b"]), p["bn_d3_g"], p["bn_d3_b"]))
    return y


if __name__ == "__main__":
    key = jax.random.PRNGKey(0)
    k_x, k_p = jax.random.split(key)
    x = jax.random.normal(k_x, (2, 4, 16, 16), jnp.float32)     # NCHW, like PyTorch
    params = init_params(k_p)
    packed = pack_params(params)                                # host-side, once

    fwd = jax.jit(conv2d_autoencoder_forward)
    out = jax.block_until_ready(fwd(x, packed))

    assert out.shape == (2, 4, 16, 16), out.shape
    assert bool(jnp.all(jnp.isfinite(out)))
    assert bool(jnp.all((out >= 0.0) & (out <= 1.0)))           # sigmoid output

    ref = jax.jit(_reference_forward)(x, params)
    max_err = float(jnp.max(jnp.abs(out - ref)))
    assert max_err < 1e-4, f"mismatch vs XLA reference: {max_err}"

    print("KERNEL_OK")
</pallas_src>

<mosaic_0001>
module attributes {stable_mosaic.version = 11 : i64} {
  func.func @_autoencoder_kernel(%arg0: memref<8x256xf32, #tpu.memory_space<vmem>>, %arg1: memref<9x512x128xf32, #tpu.memory_space<vmem>>, %arg2: memref<9x32x4xf32, #tpu.memory_space<vmem>>, %arg3: memref<32x1xf32, #tpu.memory_space<vmem>>, %arg4: memref<32x1xf32, #tpu.memory_space<vmem>>, %arg5: memref<9x128x32xf32, #tpu.memory_space<vmem>>, %arg6: memref<9x64x32xf32, #tpu.memory_space<vmem>>, %arg7: memref<64x1xf32, #tpu.memory_space<vmem>>, %arg8: memref<64x1xf32, #tpu.memory_space<vmem>>, %arg9: memref<9x32x8xf32, #tpu.memory_space<vmem>>, %arg10: memref<9x128x64xf32, #tpu.memory_space<vmem>>, %arg11: memref<128x1xf32, #tpu.memory_space<vmem>>, %arg12: memref<128x1xf32, #tpu.memory_space<vmem>>, %arg13: memref<9x8x32xf32, #tpu.memory_space<vmem>>, %arg14: memref<9x64x128xf32, #tpu.memory_space<vmem>>, %arg15: memref<64x1xf32, #tpu.memory_space<vmem>>, %arg16: memref<64x1xf32, #tpu.memory_space<vmem>>, %arg17: memref<9x32x128xf32, #tpu.memory_space<vmem>>, %arg18: memref<9x32x64xf32, #tpu.memory_space<vmem>>, %arg19: memref<32x1xf32, #tpu.memory_space<vmem>>, %arg20: memref<32x1xf32, #tpu.memory_space<vmem>>, %arg21: memref<9x128x512xf32, #tpu.memory_space<vmem>>, %arg22: memref<9x4x32xf32, #tpu.memory_space<vmem>>, %arg23: memref<4x1xf32, #tpu.memory_space<vmem>>, %arg24: memref<4x1xf32, #tpu.memory_space<vmem>>, %arg25: memref<8x256xf32, #tpu.memory_space<vmem>>) attributes {dimension_semantics = [], scalar_prefetch = 0 : i64, scratch_operands = 0 : i64, tpu.core_type = #tpu.core_type<tc>} {
    %c0 = arith.constant 0 : index
    %c0_0 = arith.constant 0 : index
    %0 = vector.load %arg0[%c0, %c0_0] : memref<8x256xf32, #tpu.memory_space<vmem>>, vector<4x256xf32>
    %c4 = arith.constant 4 : index
    %c0_1 = arith.constant 0 : index
    %1 = vector.load %arg0[%c4, %c0_1] : memref<8x256xf32, #tpu.memory_space<vmem>>, vector<4x256xf32>
    %2 = tpu.concatenate %0, %1 in 1 : vector<4x256xf32>, vector<4x256xf32> -> vector<4x512xf32>
    %c0_2 = arith.constant 0 : index
    %c0_3 = arith.constant 0 : index
    %c0_4 = arith.constant 0 : index
    %3 = vector.load %arg1[%c0_2, %c0_3, %c0_4] : memref<9x512x128xf32, #tpu.memory_space<vmem>>, vector<1x512x128xf32>
    %4 = vector.shape_cast %3 : vector<1x512x128xf32> to vector<512x128xf32>
    %c0_5 = arith.constant 0 : index
    %c0_6 = arith.constant 0 : index
    %c0_7 = arith.constant 0 : index
    %5 = vector.load %arg2[%c0_5, %c0_6, %c0_7] : memref<9x32x4xf32, #tpu.memory_space<vmem>>, vector<1x32x4xf32>
    %6 = vector.shape_cast %5 : vector<1x32x4xf32> to vector<32x4xf32>
    %cst = arith.constant dense<0.000000e+00> : vector<4x128xf32>
    %7 = tpu.matmul %2, %4, %cst {dimension_numbers = #tpu.dot_dimension_numbers<[1], [0], [0], [1], [0, 0, 1, 1], [], []>} : vector<4x512xf32>, vector<512x128xf32>, vector<4x128xf32> -> vector<4x128xf32>
    %cst_8 = arith.constant dense<0.000000e+00> : vector<32x128xf32>
    %8 = tpu.matmul %6, %7, %cst_8 {dimension_numbers = #tpu.dot_dimension_numbers<[1], [0], [0], [1], [0, 0, 1, 1], [], []>} : vector<32x4xf32>, vector<4x128xf32>, vector<32x128xf32> -> vector<32x128xf32>
    %c1 = arith.constant 1 : index
    %c0_9 = arith.constant 0 : index
    %c0_10 = arith.constant 0 : index
    %9 = vector.load %arg1[%c1, %c0_9, %c0_10] : memref<9x512x128xf32, #tpu.memory_space<vmem>>, vector<1x512x128xf32>
    %10 = vector.shape_cast %9 : vector<1x512x128xf32> to vector<512x128xf32>
    %c1_11 = arith.constant 1 : index
    %c0_12 = arith.constant 0 : index
    %c0_13 = arith.constant 0 : index
    %11 = vector.load %arg2[%c1_11, %c0_12, %c0_13] : memref<9x32x4xf32, #tpu.memory_space<vmem>>, vector<1x32x4xf32>
    %12 = vector.shape_cast %11 : vector<1x32x4xf32> to vector<32x4xf32>
    %cst_14 = arith.constant dense<0.000000e+00> : vector<4x128xf32>
    %13 = tpu.matmul %2, %10, %cst_14 {dimension_numbers = #tpu.dot_dimension_numbers<[1], [0], [0], [1], [0, 0, 1, 1], [], []>} : vector<4x512xf32>, vector<512x128xf32>, vector<4x128xf32> -> vector<4x128xf32>
    %cst_15 = arith.constant dense<0.000000e+00> : vector<32x128xf32>
    %14 = tpu.matmul %12, %13, %cst_15 {dimension_numbers = #tpu.dot_dimension_numbers<[1], [0], [0], [1], [0, 0, 1, 1], [], []>} : vector<32x4xf32>, vector<4x128xf32>, vector<32x128xf32> -> vector<32x128xf32>
    %15 = arith.addf %8, %14 : vector<32x128xf32>
    %c2 = arith.constant 2 : index
    %c0_16 = arith.constant 0 : index
    %c0_17 = arith.constant 0 : index
    %16 = vector.load %arg1[%c2, %c0_16, %c0_17] : memref<9x512x128xf32, #tpu.memory_space<vmem>>, vector<1x512x128xf32>
    %17 = vector.shape_cast %16 : vector<1x512x128xf32> to vector<512x128xf32>
    %c2_18 = arith.constant 2 : index
    %c0_19 = arith.constant 0 : index
    %c0_20 = arith.constant 0 : index
    %18 = vector.load %arg2[%c2_18, %c0_19, %c0_20] : memref<9x32x4xf32, #tpu.memory_space<vmem>>, vector<1x32x4xf32>
    %19 = vector.shape_cast %18 : vector<1x32x4xf32> to vector<32x4xf32>
    %cst_21 = arith.constant dense<0.000000e+00> : vector<4x128xf32>
    %20 = tpu.matmul %2, %17, %cst_21 {dimension_numbers = #tpu.dot_dimension_numbers<[1], [0], [0], [1], [0, 0, 1, 1], [], []>} : vector<4x512xf32>, vector<512x128xf32>, vector<4x128xf32> -> vector<4x128xf32>
    %cst_22 = arith.constant dense<0.000000e+00> : vector<32x128xf32>
    %21 = tpu.matmul %19, %20, %cst_22 {dimension_numbers = #tpu.dot_dimension_numbers<[1], [0], [0], [1], [0, 0, 1, 1], [], []>} : vector<32x4xf32>, vector<4x128xf32>, vector<32x128xf32> -> vector<32x128xf32>
    %22 = arith.addf %15, %21 : vector<32x128xf32>
    %c3 = arith.constant 3 : index
    %c0_23 = arith.constant 0 : index
    %c0_24 = arith.constant 0 : index
    %23 = vector.load %arg1[%c3, %c0_23, %c0_24] : memref<9x512x128xf32, #tpu.memory_space<vmem>>, vector<1x512x128xf32>
    %24 = vector.shape_cast %23 : vector<1x512x128xf32> to vector<512x128xf32>
    %c3_25 = arith.constant 3 : index
    %c0_26 = arith.constant 0 : index
    %c0_27 = arith.constant 0 : index
    %25 = vector.load %arg2[%c3_25, %c0_26, %c0_27] : memref<9x32x4xf32, #tpu.memory_space<vmem>>, vector<1x32x4xf32>
    %26 = vector.shape_cast %25 : vector<1x32x4xf32> to vector<32x4xf32>
    %cst_28 = arith.constant dense<0.000000e+00> : vector<4x128xf32>
    %27 = tpu.matmul %2, %24, %cst_28 {dimension_numbers = #tpu.dot_dimension_numbers<[1], [0], [0], [1], [0, 0, 1, 1], [], []>} : vector<4x512xf32>, vector<512x128xf32>, vector<4x128xf32> -> vector<4x128xf32>
    %cst_29 = arith.constant dense<0.000000e+00> : vector<32x128xf32>
    %28 = tpu.matmul %26, %27, %cst_29 {dimension_numbers = #tpu.dot_dimension_numbers<[1], [0], [0], [1], [0, 0, 1, 1], [], []>} : vector<32x4xf32>, vector<4x128xf32>, vector<32x128xf32> -> vector<32x128xf32>
    %29 = arith.addf %22, %28 : vector<32x128xf32>
    %c4_30 = arith.constant 4 : index
    %c0_31 = arith.constant 0 : index
    %c0_32 = arith.constant 0 : index
    %30 = vector.load %arg1[%c4_30, %c0_31, %c0_32] : memref<9x512x128xf32, #tpu.memory_space<vmem>>, vector<1x512x128xf32>
    %31 = vector.shape_cast %30 : vector<1x512x128xf32> to vector<512x128xf32>
    %c4_33 = arith.constant 4 : index
    %c0_34 = arith.constant 0 : index
    %c0_35 = arith.constant 0 : index
    %32 = vector.load %arg2[%c4_33, %c0_34, %c0_35] : memref<9x32x4xf32, #tpu.memory_space<vmem>>, vector<1x32x4xf32>
    %33 = vector.shape_cast %32 : vector<1x32x4xf32> to vector<32x4xf32>
    %cst_36 = arith.constant dense<0.000000e+00> : vector<4x128xf32>
    %34 = tpu.matmul %2, %31, %cst_36 {dimension_numbers = #tpu.dot_dimension_numbers<[1], [0], [0], [1], [0, 0, 1, 1], [], []>} : vector<4x512xf32>, vector<512x128xf32>, vector<4x128xf32> -> vector<4x128xf32>
    %cst_37 = arith.constant dense<0.000000e+00> : vector<32x128xf32>
    %35 = tpu.matmul %33, %34, %cst_37 {dimension_numbers = #tpu.dot_dimension_numbers<[1], [0], [0], [1], [0, 0, 1, 1], [], []>} : vector<32x4xf32>, vector<4x128xf32>, vector<32x128xf32> -> vector<32x128xf32>
    %36 = arith.addf %29, %35 : vector<32x128xf32>
    %c5 = arith.constant 5 : index
    %c0_38 = arith.constant 0 : index
    %c0_39 = arith.constant 0 : index
    %37 = vector.load %arg1[%c5, %c0_38, %c0_39] : memref<9x512x128xf32, #tpu.memory_space<vmem>>, vector<1x512x128xf32>
    %38 = vector.shape_cast %37 : vector<1x512x128xf32> to vector<512x128xf32>
    %c5_40 = arith.constant 5 : index
    %c0_41 = arith.constant 0 : index
    %c0_42 = arith.constant 0 : index
    %39 = vector.load %arg2[%c5_40, %c0_41, %c0_42] : memref<9x32x4xf32, #tpu.memory_space<vmem>>, vector<1x32x4xf32>
    %40 = vector.shape_cast %39 : vector<1x32x4xf32> to vector<32x4xf32>
    %cst_43 = arith.constant dense<0.000000e+00> : vector<4x128xf32>
    %41 = tpu.matmul %2, %38, %cst_43 {dimension_numbers = #tpu.dot_dimension_numbers<[1], [0], [0], [1], [0, 0, 1, 1], [], []>} : vector<4x512xf32>, vector<512x128xf32>, vector<4x128xf32> -> vector<4x128xf32>
    %cst_44 = arith.constant dense<0.000000e+00> : vector<32x128xf32>
    %42 = tpu.matmul %40, %41, %cst_44 {dimension_numbers = #tpu.dot_dimension_numbers<[1], [0], [0], [1], [0, 0, 1, 1], [], []>} : vector<32x4xf32>, vector<4x128xf32>, vector<32x128xf32> -> vector<32x128xf32>
    %43 = arith.addf %36, %42 : vector<32x128xf32>
    %c6 = arith.constant 6 : index
    %c0_45 = arith.constant 0 : index
    %c0_46 = arith.constant 0 : index
    %44 = vector.load %arg1[%c6, %c0_45, %c0_46] : memref<9x512x128xf32, #tpu.memory_space<vmem>>, vector<1x512x128xf32>
    %45 = vector.shape_cast %44 : vector<1x512x128xf32> to vector<512x128xf32>
    %c6_47 = arith.constant 6 : index
    %c0_48 = arith.constant 0 : index
    %c0_49 = arith.constant 0 : index
    %46 = vector.load %arg2[%c6_47, %c0_48, %c0_49] : memref<9x32x4xf32, #tpu.memory_space<vmem>>, vector<1x32x4xf32>
    %47 = vector.shape_cast %46 : vector<1x32x4xf32> to vector<32x4xf32>
    %cst_50 = arith.constant dense<0.000000e+00> : vector<4x128xf32>
    %48 = tpu.matmul %2, %45, %cst_50 {dimension_numbers = #tpu.dot_dimension_numbers<[1], [0], [0], [1], [0, 0, 1, 1], [], []>} : vector<4x512xf32>, vector<512x128xf32>, vector<4x128xf32> -> vector<4x128xf32>
    %cst_51 = arith.constant dense<0.000000e+00> : vector<32x128xf32>
    %49 = tpu.matmul %47, %48, %cst_51 {dimension_numbers = #tpu.dot_dimension_numbers<[1], [0], [0], [1], [0, 0, 1, 1], [], []>} : vector<32x4xf32>, vector<4x128xf32>, vector<32x128xf32> -> vector<32x128xf32>
    %50 = arith.addf %43, %49 : vector<32x128xf32>
    %c7 = arith.constant 7 : index
    %c0_52 = arith.constant 0 : index
    %c0_53 = arith.constant 0 : index
    %51 = vector.load %arg1[%c7, %c0_52, %c0_53] : memref<9x512x128xf32, #tpu.memory_space<vmem>>, vector<1x512x128xf32>
    %52 = vector.shape_cast %51 : vector<1x512x128xf32> to vector<512x128xf32>
    %c7_54 = arith.constant 7 : index
    %c0_55 = arith.constant 0 : index
    %c0_56 = arith.constant 0 : index
    %53 = vector.load %arg2[%c7_54, %c0_55, %c0_56] : memref<9x32x4xf32, #tpu.memory_space<vmem>>, vector<1x32x4xf32>
    %54 = vector.shape_cast %53 : vector<1x32x4xf32> to vector<32x4xf32>
    %cst_57 = arith.constant dense<0.000000e+00> : vector<4x128xf32>
    %55 = tpu.matmul %2, %52, %cst_57 {dimension_numbers = #tpu.dot_dimension_numbers<[1], [0], [0], [1], [0, 0, 1, 1], [], []>} : vector<4x512xf32>, vector<512x128xf32>, vector<4x128xf32> -> vector<4x128xf32>
    %cst_58 = arith.constant dense<0.000000e+00> : vector<32x128xf32>
    %56 = tpu.matmul %54, %55, %cst_58 {dimension_numbers = #tpu.dot_dimension_numbers<[1], [0], [0], [1], [0, 0, 1, 1], [], []>} : vector<32x4xf32>, vector<4x128xf32>, vector<32x128xf32> -> vector<32x128xf32>
    %57 = arith.addf %50, %56 : vector<32x128xf32>
    %c8 = arith.constant 8 : index
    %c0_59 = arith.constant 0 : index
    %c0_60 = arith.constant 0 : index
    %58 = vector.load %arg1[%c8, %c0_59, %c0_60] : memref<9x512x128xf32, #tpu.memory_space<vmem>>, vector<1x512x128xf32>
    %59 = vector.shape_cast %58 : vector<1x512x128xf32> to vector<512x128xf32>
    %c8_61 = arith.constant 8 : index
    %c0_62 = arith.constant 0 : index
    %c0_63 = arith.constant 0 : index
    %60 = vector.load %arg2[%c8_61, %c0_62, %c0_63] : memref<9x32x4xf32, #tpu.memory_space<vmem>>, vector<1x32x4xf32>
    %61 = vector.shape_cast %60 : vector<1x32x4xf32> to vector<32x4xf32>
    %cst_64 = arith.constant dense<0.000000e+00> : vector<4x128xf32>
    %62 = tpu.matmul %2, %59, %cst_64 {dimension_numbers = #tpu.dot_dimension_numbers<[1], [0], [0], [1], [0, 0, 1, 1], [], []>} : vector<4x512xf32>, vector<512x128xf32>, vector<4x128xf32> -> vector<4x128xf32>
    %cst_65 = arith.constant dense<0.000000e+00> : vector<32x128xf32>
    %63 = tpu.matmul %61, %62, %cst_65 {dimension_numbers = #tpu.dot_dimension_numbers<[1], [0], [0], [1], [0, 0, 1, 1], [], []>} : vector<32x4xf32>, vector<4x128xf32>, vector<32x128xf32> -> vector<32x128xf32>
    %64 = arith.addf %57, %63 : vector<32x128xf32>
    %cst_66 = arith.constant dense<0.000000e+00> : vector<32xf32>
    %65 = vector.multi_reduction <add>, %64, %cst_66 [1] : vector<32x128xf32> to vector<32xf32>
    %66 = vector.shape_cast %65 : vector<32xf32> to vector<32x1xf32>
    %cst_67 = arith.constant 1.280000e+02 : f32
    %67 = vector.broadcast %cst_67 : f32 to vector<32x1xf32>
    %68 = arith.divf %66, %67 : vector<32x1xf32>
    %69 = vector.broadcast %68 : vector<32x1xf32> to vector<32x128xf32>
    %70 = arith.subf %64, %69 : vector<32x128xf32>
    %71 = arith.mulf %70, %70 : vector<32x128xf32>
    %cst_68 = arith.constant dense<0.000000e+00> : vector<32xf32>
    %72 = vector.multi_reduction <add>, %71, %cst_68 [1] : vector<32x128xf32> to vector<32xf32>
    %73 = vector.shape_cast %72 : vector<32xf32> to vector<32x1xf32>
    %cst_69 = arith.constant 1.280000e+02 : f32
    %74 = vector.broadcast %cst_69 : f32 to vector<32x1xf32>
    %75 = arith.divf %73, %74 : vector<32x1xf32>
    %76 = vector.broadcast %68 : vector<32x1xf32> to vector<32x128xf32>
    %77 = arith.subf %64, %76 : vector<32x128xf32>
    %cst_70 = arith.constant 9.99999974E-6 : f32
    %78 = vector.broadcast %cst_70 : f32 to vector<32x1xf32>
    %79 = arith.addf %75, %78 : vector<32x1xf32>
    %80 = math.rsqrt %79 : vector<32x1xf32>
    %81 = vector.broadcast %80 : vector<32x1xf32> to vector<32x128xf32>
    %82 = arith.mulf %77, %81 : vector<32x128xf32>
    %c0_71 = arith.constant 0 : index
    %c0_72 = arith.constant 0 : index
    %83 = vector.load %arg3[%c0_71, %c0_72] : memref<32x1xf32, #tpu.memory_space<vmem>>, vector<32x1xf32>
    %84 = vector.broadcast %83 : vector<32x1xf32> to vector<32x128xf32>
    %85 = arith.mulf %82, %84 : vector<32x128xf32>
    %c0_73 = arith.constant 0 : index
    %c0_74 = arith.constant 0 : index
    %86 = vector.load %arg4[%c0_73, %c0_74] : memref<32x1xf32, #tpu.memory_space<vmem>>, vector<32x1xf32>
    %87 = vector.broadcast %86 : vector<32x1xf32> to vector<32x128xf32>
    %88 = arith.addf %85, %87 : vector<32x128xf32>
    %cst_75 = arith.constant 0.000000e+00 : f32
    %89 = vector.broadcast %cst_75 : f32 to vector<32x128xf32>
    %90 = arith.maximumf %88, %89 : vector<32x128xf32>
    %c0_76 = arith.constant 0 : index
    %c0_77 = arith.constant 0 : index
    %c0_78 = arith.constant 0 : index
    %91 = vector.load %arg5[%c0_76, %c0_77, %c0_78] : memref<9x128x32xf32, #tpu.memory_space<vmem>>, vector<1x128x32xf32>
    %92 = vector.shape_cast %91 : vector<1x128x32xf32> to vector<128x32xf32>
    %c0_79 = arith.constant 0 : index
    %c0_80 = arith.constant 0 : index
    %c0_81 = arith.constant 0 : index
    %93 = vector.load %arg6[%c0_79, %c0_80, %c0_81] : memref<9x64x32xf32, #tpu.memory_space<vmem>>, vector<1x64x32xf32>
    %94 = vector.shape_cast %93 : vector<1x64x32xf32> to vector<64x32xf32>
    %cst_82 = arith.constant dense<0.000000e+00> : vector<32x32xf32>
    %95 = tpu.matmul %90, %92, %cst_82 {dimension_numbers = #tpu.dot_dimension_numbers<[1], [0], [0], [1], [0, 0, 1, 1], [], []>} : vector<32x128xf32>, vector<128x32xf32>, vector<32x32xf32> -> vector<32x32xf32>
    %cst_83 = arith.constant dense<0.000000e+00> : vector<64x32xf32>
    %96 = tpu.matmul %94, %95, %cst_83 {dimension_numbers = #tpu.dot_dimension_numbers<[1], [0], [0], [1], [0, 0, 1, 1], [], []>} : vector<64x32xf32>, vector<32x32xf32>, vector<64x32xf32> -> vector<64x32xf32>
    %c1_84 = arith.constant 1 : index
    %c0_85 = arith.constant 0 : index
    %c0_86 = arith.constant 0 : index
    %97 = vector.load %arg5[%c1_84, %c0_85, %c0_86] : memref<9x128x32xf32, #tpu.memory_space<vmem>>, vector<1x128x32xf32>
    %98 = vector.shape_cast %97 : vector<1x128x32xf32> to vector<128x32xf32>
    %c1_87 = arith.constant 1 : index
    %c0_88 = arith.constant 0 : index
    %c0_89 = arith.constant 0 : index
    %99 = vector.load %arg6[%c1_87, %c0_88, %c0_89] : memref<9x64x32xf32, #tpu.memory_space<vmem>>, vector<1x64x32xf32>
    %100 = vector.shape_cast %99 : vector<1x64x32xf32> to vector<64x32xf32>
    %cst_90 = arith.constant dense<0.000000e+00> : vector<32x32xf32>
    %101 = tpu.matmul %90, %98, %cst_90 {dimension_numbers = #tpu.dot_dimension_numbers<[1], [0], [0], [1], [0, 0, 1, 1], [], []>} : vector<32x128xf32>, vector<128x32xf32>, vector<32x32xf32> -> vector<32x32xf32>
    %cst_91 = arith.constant dense<0.000000e+00> : vector<64x32xf32>
    %102 = tpu.matmul %100, %101, %cst_91 {dimension_numbers = #tpu.dot_dimension_numbers<[1], [0], [0], [1], [0, 0, 1, 1], [], []>} : vector<64x32xf32>, vector<32x32xf32>, vector<64x32xf32> -> vector<64x32xf32>
    %103 = arith.addf %96, %102 : vector<64x32xf32>
    %c2_92 = arith.constant 2 : index
    %c0_93 = arith.constant 0 : index
    %c0_94 = arith.constant 0 : index
    %104 = vector.load %arg5[%c2_92, %c0_93, %c0_94] : memref<9x128x32xf32, #tpu.memory_space<vmem>>, vector<1x128x32xf32>
    %105 = vector.shape_cast %104 : vector<1x128x32xf32> to vector<128x32xf32>
    %c2_95 = arith.constant 2 : index
    %c0_96 = arith.constant 0 : index
    %c0_97 = arith.constant 0 : index
    %106 = vector.load %arg6[%c2_95, %c0_96, %c0_97] : memref<9x64x32xf32, #tpu.memory_space<vmem>>, vector<1x64x32xf32>
    %107 = vector.shape_cast %106 : vector<1x64x32xf32> to vector<64x32xf32>
    %cst_98 = arith.constant dense<0.000000e+00> : vector<32x32xf32>
    %108 = tpu.matmul %90, %105, %cst_98 {dimension_numbers = #tpu.dot_dimension_numbers<[1], [0], [0], [1], [0, 0, 1, 1], [], []>} : vector<32x128xf32>, vector<128x32xf32>, vector<32x32xf32> -> vector<32x32xf32>
    %cst_99 = arith.constant dense<0.000000e+00> : vector<64x32xf32>
    %109 = tpu.matmul %107, %108, %cst_99 {dimension_numbers = #tpu.dot_dimension_numbers<[1], [0], [0], [1], [0, 0, 1, 1], [], []>} : vector<64x32xf32>, vector<32x32xf32>, vector<64x32xf32> -> vector<64x32xf32>
    %110 = arith.addf %103, %109 : vector<64x32xf32>
    %c3_100 = arith.constant 3 : index
    %c0_101 = arith.constant 0 : index
    %c0_102 = arith.constant 0 : index
    %111 = vector.load %arg5[%c3_100, %c0_101, %c0_102] : memref<9x128x32xf32, #tpu.memory_space<vmem>>, vector<1x128x32xf32>
    %112 = vector.shape_cast %111 : vector<1x128x32xf32> to vector<128x32xf32>
    %c3_103 = arith.constant 3 : index
    %c0_104 = arith.constant 0 : index
    %c0_105 = arith.constant 0 : index
    %113 = vector.load %arg6[%c3_103, %c0_104, %c0_105] : memref<9x64x32xf32, #tpu.memory_space<vmem>>, vector<1x64x32xf32>
    %114 = vector.shape_cast %113 : vector<1x64x32xf32> to vector<64x32xf32>
    %cst_106 = arith.constant dense<0.000000e+00> : vector<32x32xf32>
    %115 = tpu.matmul %90, %112, %cst_106 {dimension_numbers = #tpu.dot_dimension_numbers<[1], [0], [0], [1], [0, 0, 1, 1], [], []>} : vector<32x128xf32>, vector<128x32xf32>, vector<32x32xf32> -> vector<32x32xf32>
    %cst_107 = arith.constant dense<0.000000e+00> : vector<64x32xf32>
    %116 = tpu.matmul %114, %115, %cst_107 {dimension_numbers = #tpu.dot_dimension_numbers<[1], [0], [0], [1], [0, 0, 1, 1], [], []>} : vector<64x32xf32>, vector<32x32xf32>, vector<64x32xf32> -> vector<64x32xf32>
    %117 = arith.addf %110, %116 : vector<64x32xf32>
    %c4_108 = arith.constant 4 : index
    %c0_109 = arith.constant 0 : index
    %c0_110 = arith.constant 0 : index
    %118 = vector.load %arg5[%c4_108, %c0_109, %c0_110] : memref<9x128x32xf32, #tpu.memory_space<vmem>>, vector<1x128x32xf32>
    %119 = vector.shape_cast %118 : vector<1x128x32xf32> to vector<128x32xf32>
    %c4_111 = arith.constant 4 : index
    %c0_112 = arith.constant 0 : index
    %c0_113 = arith.constant 0 : index
    %120 = vector.load %arg6[%c4_111, %c0_112, %c0_113] : memref<9x64x32xf32, #tpu.memory_space<vmem>>, vector<1x64x32xf32>
    %121 = vector.shape_cast %120 : vector<1x64x32xf32> to vector<64x32xf32>
    %cst_114 = arith.constant dense<0.000000e+00> : vector<32x32xf32>
    %122 = tpu.matmul %90, %119, %cst_114 {dimension_numbers = #tpu.dot_dimension_numbers<[1], [0], [0], [1], [0, 0, 1, 1], [], []>} : vector<32x128xf32>, vector<128x32xf32>, vector<32x32xf32> -> vector<32x32xf32>
    %cst_115 = arith.constant dense<0.000000e+00> : vector<64x32xf32>
    %123 = tpu.matmul %121, %122, %cst_115 {dimension_numbers = #tpu.dot_dimension_numbers<[1], [0], [0], [1], [0, 0, 1, 1], [], []>} : vector<64x32xf32>, vector<32x32xf32>, vector<64x32xf32> -> vector<64x32xf32>
    %124 = arith.addf %117, %123 : vector<64x32xf32>
    %c5_116 = arith.constant 5 : index
    %c0_117 = arith.constant 0 : index
    %c0_118 = arith.constant 0 : index
    %125 = vector.load %arg5[%c5_116, %c0_117, %c0_118] : memref<9x128x32xf32, #tpu.memory_space<vmem>>, vector<1x128x32xf32>
    %126 = vector.shape_cast %125 : vector<1x128x32xf32> to vector<128x32xf32>
    %c5_119 = arith.constant 5 : index
    %c0_120 = arith.constant 0 : index
    %c0_121 = arith.constant 0 : index
    %127 = vector.load %arg6[%c5_119, %c0_120, %c0_121] : memref<9x64x32xf32, #tpu.memory_space<vmem>>, vector<1x64x32xf32>
    %128 = vector.shape_cast %127 : vector<1x64x32xf32> to vector<64x32xf32>
    %cst_122 = arith.constant dense<0.000000e+00> : vector<32x32xf32>
    %129 = tpu.matmul %90, %126, %cst_122 {dimension_numbers = #tpu.dot_dimension_numbers<[1], [0], [0], [1], [0, 0, 1, 1], [], []>} : vector<32x128xf32>, vector<128x32xf32>, vector<32x32xf32> -> vector<32x32xf32>
    %cst_123 = arith.constant dense<0.000000e+00> : vector<64x32xf32>
    %130 = tpu.matmul %128, %129, %cst_123 {dimension_numbers = #tpu.dot_dimension_numbers<[1], [0], [0], [1], [0, 0, 1, 1], [], []>} : vector<64x32xf32>, vector<32x32xf32>, vector<64x32xf32> -> vector<64x32xf32>
    %131 = arith.addf %124, %130 : vector<64x32xf32>
    %c6_124 = arith.constant 6 : index
    %c0_125 = arith.constant 0 : index
    %c0_126 = arith.constant 0 : index
    %132 = vector.load %arg5[%c6_124, %c0_125, %c0_126] : memref<9x128x32xf32, #tpu.memory_space<vmem>>, vector<1x128x32xf32>
    %133 = vector.shape_cast %132 : vector<1x128x32xf32> to vector<128x32xf32>
    %c6_127 = arith.constant 6 : index
    %c0_128 = arith.constant 0 : index
    %c0_129 = arith.constant 0 : index
    %134 = vector.load %arg6[%c6_127, %c0_128, %c0_129] : memref<9x64x32xf32, #tpu.memory_space<vmem>>, vector<1x64x32xf32>
    %135 = vector.shape_cast %134 : vector<1x64x32xf32> to vector<64x32xf32>
    %cst_130 = arith.constant dense<0.000000e+00> : vector<32x32xf32>
    %136 = tpu.matmul %90, %133, %cst_130 {dimension_numbers = #tpu.dot_dimension_numbers<[1], [0], [0], [1], [0, 0, 1, 1], [], []>} : vector<32x128xf32>, vector<128x32xf32>, vector<32x32xf32> -> vector<32x32xf32>
    %cst_131 = arith.constant dense<0.000000e+00> : vector<64x32xf32>
    %137 = tpu.matmul %135, %136, %cst_131 {dimension_numbers = #tpu.dot_dimension_numbers<[1], [0], [0], [1], [0, 0, 1, 1], [], []>} : vector<64x32xf32>, vector<32x32xf32>, vector<64x32xf32> -> vector<64x32xf32>
    %138 = arith.addf %131, %137 : vector<64x32xf32>
    %c7_132 = arith.constant 7 : index
    %c0_133 = arith.constant 0 : index
    %c0_134 = arith.constant 0 : index
    %139 = vector.load %arg5[%c7_132, %c0_133, %c0_134] : memref<9x128x32xf32, #tpu.memory_space<vmem>>, vector<1x128x32xf32>
    %140 = vector.shape_cast %139 : vector<1x128x32xf32> to vector<128x32xf32>
    %c7_135 = arith.constant 7 : index
    %c0_136 = arith.constant 0 : index
    %c0_137 = arith.constant 0 : index
    %141 = vector.load %arg6[%c7_135, %c0_136, %c0_137] : memref<9x64x32xf32, #tpu.memory_space<vmem>>, vector<1x64x32xf32>
    %142 = vector.shape_cast %141 : vector<1x64x32xf32> to vector<64x32xf32>
    %cst_138 = arith.constant dense<0.000000e+00> : vector<32x32xf32>
    %143 = tpu.matmul %90, %140, %cst_138 {dimension_numbers = #tpu.dot_dimension_numbers<[1], [0], [0], [1], [0, 0, 1, 1], [], []>} : vector<32x128xf32>, vector<128x32xf32>, vector<32x32xf32> -> vector<32x32xf32>
    %cst_139 = arith.constant dense<0.000000e+00> : vector<64x32xf32>
    %144 = tpu.matmul %142, %143, %cst_139 {dimension_numbers = #tpu.dot_dimension_numbers<[1], [0], [0], [1], [0, 0, 1, 1], [], []>} : vector<64x32xf32>, vector<32x32xf32>, vector<64x32xf32> -> vector<64x32xf32>
    %145 = arith.addf %138, %144 : vector<64x32xf32>
    %c8_140 = arith.constant 8 : index
    %c0_141 = arith.constant 0 : index
    %c0_142 = arith.constant 0 : index
    %146 = vector.load %arg5[%c8_140, %c0_141, %c0_142] : memref<9x128x32xf32, #tpu.memory_space<vmem>>, vector<1x128x32xf32>
    %147 = vector.shape_cast %146 : vector<1x128x32xf32> to vector<128x32xf32>
    %c8_143 = arith.constant 8 : index
    %c0_144 = arith.constant 0 : index
    %c0_145 = arith.constant 0 : index
    %148 = vector.load %arg6[%c8_143, %c0_144, %c0_145] : memref<9x64x32xf32, #tpu.memory_space<vmem>>, vector<1x64x32xf32>
    %149 = vector.shape_cast %148 : vector<1x64x32xf32> to vector<64x32xf32>
    %cst_146 = arith.constant dense<0.000000e+00> : vector<32x32xf32>
    %150 = tpu.matmul %90, %147, %cst_146 {dimension_numbers = #tpu.dot_dimension_numbers<[1], [0], [0], [1], [0, 0, 1, 1], [], []>} : vector<32x128xf32>, vector<128x32xf32>, vector<32x32xf32> -> vector<32x32xf32>
    %cst_147 = arith.constant dense<0.000000e+00> : vector<64x32xf32>
    %151 = tpu.matmul %149, %150, %cst_147 {dimension_numbers = #tpu.dot_dimension_numbers<[1], [0], [0], [1], [0, 0, 1, 1], [], []>} : vector<64x32xf32>, vector<32x32xf32>, vector<64x32xf32> -> vector<64x32xf32>
    %152 = arith.addf %145, %151 : vector<64x32xf32>
    %cst_148 = arith.constant dense<0.000000e+00> : vector<64xf32>
    %153 = vector.multi_reduction <add>, %152, %cst_148 [1] : vector<64x32xf32> to vector<64xf32>
    %154 = vector.shape_cast %153 : vector<64xf32> to vector<64x1xf32>
    %cst_149 = arith.constant 3.200000e+01 : f32
    %155 = vector.broadcast %cst_149 : f32 to vector<64x1xf32>
    %156 = arith.divf %154, %155 : vector<64x1xf32>
    %157 = vector.broadcast %156 : vector<64x1xf32> to vector<64x32xf32>
    %158 = arith.subf %152, %157 : vector<64x32xf32>
    %159 = arith.mulf %158, %158 : vector<64x32xf32>
    %cst_150 = arith.constant dense<0.000000e+00> : vector<64xf32>
    %160 = vector.multi_reduction <add>, %159, %cst_150 [1] : vector<64x32xf32> to vector<64xf32>
    %161 = vector.shape_cast %160 : vector<64xf32> to vector<64x1xf32>
    %cst_151 = arith.constant 3.200000e+01 : f32
    %162 = vector.broadcast %cst_151 : f32 to vector<64x1xf32>
    %163 = arith.divf %161, %162 : vector<64x1xf32>
    %164 = vector.broadcast %156 : vector<64x1xf32> to vector<64x32xf32>
    %165 = arith.subf %152, %164 : vector<64x32xf32>
    %cst_152 = arith.constant 9.99999974E-6 : f32
    %166 = vector.broadcast %cst_152 : f32 to vector<64x1xf32>
    %167 = arith.addf %163, %166 : vector<64x1xf32>
    %168 = math.rsqrt %167 : vector<64x1xf32>
    %169 = vector.broadcast %168 : vector<64x1xf32> to vector<64x32xf32>
    %170 = arith.mulf %165, %169 : vector<64x32xf32>
    %c0_153 = arith.constant 0 : index
    %c0_154 = arith.constant 0 : index
    %171 = vector.load %arg7[%c0_153, %c0_154] : memref<64x1xf32, #tpu.memory_space<vmem>>, vector<64x1xf32>
    %172 = vector.broadcast %171 : vector<64x1xf32> to vector<64x32xf32>
    %173 = arith.mulf %170, %172 : vector<64x32xf32>
    %c0_155 = arith.constant 0 : index
    %c0_156 = arith.constant 0 : index
    %174 = vector.load %arg8[%c0_155, %c0_156] : memref<64x1xf32, #tpu.memory_space<vmem>>, vector<64x1xf32>
    %175 = vector.broadcast %174 : vector<64x1xf32> to vector<64x32xf32>
    %176 = arith.addf %173, %175 : vector<64x32xf32>
    %cst_157 = arith.constant 0.000000e+00 : f32
    %177 = vector.broadcast %cst_157 : f32 to vector<64x32xf32>
    %178 = arith.maximumf %176, %177 : vector<64x32xf32>
    %c0_158 = arith.constant 0 : index
    %c0_159 = arith.constant 0 : index
    %c0_160 = arith.constant 0 : index
    %179 = vector.load %arg9[%c0_158, %c0_159, %c0_160] : memref<9x32x8xf32, #tpu.memory_space<vmem>>, vector<1x32x8xf32>
    %180 = vector.shape_cast %179 : vector<1x32x8xf32> to vector<32x8xf32>
    %c0_161 = arith.constant 0 : index
    %c0_162 = arith.constant 0 : index
    %c0_163 = arith.constant 0 : index
    %181 = vector.load %arg10[%c0_161, %c0_162, %c0_163] : memref<9x128x64xf32, #tpu.memory_space<vmem>>, vector<1x128x64xf32>
    %182 = vector.shape_cast %181 : vector<1x128x64xf32> to vector<128x64xf32>
    %cst_164 = arith.constant dense<0.000000e+00> : vector<64x8xf32>
    %183 = tpu.matmul %178, %180, %cst_164 {dimension_numbers = #tpu.dot_dimension_numbers<[1], [0], [0], [1], [0, 0, 1, 1], [], []>} : vector<64x32xf32>, vector<32x8xf32>, vector<64x8xf32> -> vector<64x8xf32>
    %cst_165 = arith.constant dense<0.000000e+00> : vector<128x8xf32>
    %184 = tpu.matmul %182, %183, %cst_165 {dimension_numbers = #tpu.dot_dimension_numbers<[1], [0], [0], [1], [0, 0, 1, 1], [], []>} : vector<128x64xf32>, vector<64x8xf32>, vector<128x8xf32> -> vector<128x8xf32>
    %c1_166 = arith.constant 1 : index
    %c0_167 = arith.constant 0 : index
    %c0_168 = arith.constant 0 : index
    %185 = vector.load %arg9[%c1_166, %c0_167, %c0_168] : memref<9x32x8xf32, #tpu.memory_space<vmem>>, vector<1x32x8xf32>
    %186 = vector.shape_cast %185 : vector<1x32x8xf32> to vector<32x8xf32>
    %c1_169 = arith.constant 1 : index
    %c0_170 = arith.constant 0 : index
    %c0_171 = arith.constant 0 : index
    %187 = vector.load %arg10[%c1_169, %c0_170, %c0_171] : memref<9x128x64xf32, #tpu.memory_space<vmem>>, vector<1x128x64xf32>
    %188 = vector.shape_cast %187 : vector<1x128x64xf32> to vector<128x64xf32>
    %cst_172 = arith.constant dense<0.000000e+00> : vector<64x8xf32>
    %189 = tpu.matmul %178, %186, %cst_172 {dimension_numbers = #tpu.dot_dimension_numbers<[1], [0], [0], [1], [0, 0, 1, 1], [], []>} : vector<64x32xf32>, vector<32x8xf32>, vector<64x8xf32> -> vector<64x8xf32>
    %cst_173 = arith.constant dense<0.000000e+00> : vector<128x8xf32>
    %190 = tpu.matmul %188, %189, %cst_173 {dimension_numbers = #tpu.dot_dimension_numbers<[1], [0], [0], [1], [0, 0, 1, 1], [], []>} : vector<128x64xf32>, vector<64x8xf32>, vector<128x8xf32> -> vector<128x8xf32>
    %191 = arith.addf %184, %190 : vector<128x8xf32>
    %c2_174 = arith.constant 2 : index
    %c0_175 = arith.constant 0 : index
    %c0_176 = arith.constant 0 : index
    %192 = vector.load %arg9[%c2_174, %c0_175, %c0_176] : memref<9x32x8xf32, #tpu.memory_space<vmem>>, vector<1x32x8xf32>
    %193 = vector.shape_cast %192 : vector<1x32x8xf32> to vector<32x8xf32>
    %c2_177 = arith.constant 2 : index
    %c0_178 = arith.constant 0 : index
    %c0_179 = arith.constant 0 : index
    %194 = vector.load %arg10[%c2_177, %c0_178, %c0_179] : memref<9x128x64xf32, #tpu.memory_space<vmem>>, vector<1x128x64xf32>
    %195 = vector.shape_cast %194 : vector<1x128x64xf32> to vector<128x64xf32>
    %cst_180 = arith.constant dense<0.000000e+00> : vector<64x8xf32>
    %196 = tpu.matmul %178, %193, %cst_180 {dimension_numbers = #tpu.dot_dimension_numbers<[1], [0], [0], [1], [0, 0, 1, 1], [], []>} : vector<64x32xf32>, vector<32x8xf32>, vector<64x8xf32> -> vector<64x8xf32>
    %cst_181 = arith.constant dense<0.000000e+00> : vector<128x8xf32>
    %197 = tpu.matmul %195, %196, %cst_181 {dimension_numbers = #tpu.dot_dimension_numbers<[1], [0], [0], [1], [0, 0, 1, 1], [], []>} : vector<128x64xf32>, vector<64x8xf32>, vector<128x8xf32> -> vector<128x8xf32>
    %198 = arith.addf %191, %197 : vector<128x8xf32>
    %c3_182 = arith.constant 3 : index
    %c0_183 = arith.constant 0 : index
    %c0_184 = arith.constant 0 : index
    %199 = vector.load %arg9[%c3_182, %c0_183, %c0_184] : memref<9x32x8xf32, #tpu.memory_space<vmem>>, vector<1x32x8xf32>
    %200 = vector.shape_cast %199 : vector<1x32x8xf32> to vector<32x8xf32>
    %c3_185 = arith.constant 3 : index
    %c0_186 = arith.constant 0 : index
    %c0_187 = arith.constant 0 : index
    %201 = vector.load %arg10[%c3_185, %c0_186, %c0_187] : memref<9x128x64xf32, #tpu.memory_space<vmem>>, vector<1x128x64xf32>
    %202 = vector.shape_cast %201 : vector<1x128x64xf32> to vector<128x64xf32>
    %cst_188 = arith.constant dense<0.000000e+00> : vector<64x8xf32>
    %203 = tpu.matmul %178, %200, %cst_188 {dimension_numbers = #tpu.dot_dimension_numbers<[1], [0], [0], [1], [0, 0, 1, 1], [], []>} : vector<64x32xf32>, vector<32x8xf32>, vector<64x8xf32> -> vector<64x8xf32>
    %cst_189 = arith.constant dense<0.000000e+00> : vector<128x8xf32>
    %204 = tpu.matmul %202, %203, %cst_189 {dimension_numbers = #tpu.dot_dimension_numbers<[1], [0], [0], [1], [0, 0, 1, 1], [], []>} : vector<128x64xf32>, vector<64x8xf32>, vector<128x8xf32> -> vector<128x8xf32>
    %205 = arith.addf %198, %204 : vector<128x8xf32>
    %c4_190 = arith.constant 4 : index
    %c0_191 = arith.constant 0 : index
    %c0_192 = arith.constant 0 : index
    %206 = vector.load %arg9[%c4_190, %c0_191, %c0_192] : memref<9x32x8xf32, #tpu.memory_space<vmem>>, vector<1x32x8xf32>
    %207 = vector.shape_cast %206 : vector<1x32x8xf32> to vector<32x8xf32>
    %c4_193 = arith.constant 4 : index
    %c0_194 = arith.constant 0 : index
    %c0_195 = arith.constant 0 : index
    %208 = vector.load %arg10[%c4_193, %c0_194, %c0_195] : memref<9x128x64xf32, #tpu.memory_space<vmem>>, vector<1x128x64xf32>
    %209 = vector.shape_cast %208 : vector<1x128x64xf32> to vector<128x64xf32>
    %cst_196 = arith.constant dense<0.000000e+00> : vector<64x8xf32>
    %210 = tpu.matmul %178, %207, %cst_196 {dimension_numbers = #tpu.dot_dimension_numbers<[1], [0], [0], [1], [0, 0, 1, 1], [], []>} : vector<64x32xf32>, vector<32x8xf32>, vector<64x8xf32> -> vector<64x8xf32>
    %cst_197 = arith.constant dense<0.000000e+00> : vector<128x8xf32>
    %211 = tpu.matmul %209, %210, %cst_197 {dimension_numbers = #tpu.dot_dimension_numbers<[1], [0], [0], [1], [0, 0, 1, 1], [], []>} : vector<128x64xf32>, vector<64x8xf32>, vector<128x8xf32> -> vector<128x8xf32>
    %212 = arith.addf %205, %211 : vector<128x8xf32>
    %c5_198 = arith.constant 5 : index
    %c0_199 = arith.constant 0 : index
    %c0_200 = arith.constant 0 : index
    %213 = vector.load %arg9[%c5_198, %c0_199, %c0_200] : memref<9x32x8xf32, #tpu.memory_space<vmem>>, vector<1x32x8xf32>
    %214 = vector.shape_cast %213 : vector<1x32x8xf32> to vector<32x8xf32>
    %c5_201 = arith.constant 5 : index
    %c0_202 = arith.constant 0 : index
    %c0_203 = arith.constant 0 : index
    %215 = vector.load %arg10[%c5_201, %c0_202, %c0_203] : memref<9x128x64xf32, #tpu.memory_space<vmem>>, vector<1x128x64xf32>
    %216 = vector.shape_cast %215 : vector<1x128x64xf32> to vector<128x64xf32>
    %cst_204 = arith.constant dense<0.000000e+00> : vector<64x8xf32>
    %217 = tpu.matmul %178, %214, %cst_204 {dimension_numbers = #tpu.dot_dimension_numbers<[1], [0], [0], [1], [0, 0, 1, 1], [], []>} : vector<64x32xf32>, vector<32x8xf32>, vector<64x8xf32> -> vector<64x8xf32>
    %cst_205 = arith.constant dense<0.000000e+00> : vector<128x8xf32>
    %218 = tpu.matmul %216, %217, %cst_205 {dimension_numbers = #tpu.dot_dimension_numbers<[1], [0], [0], [1], [0, 0, 1, 1], [], []>} : vector<128x64xf32>, vector<64x8xf32>, vector<128x8xf32> -> vector<128x8xf32>
    %219 = arith.addf %212, %218 : vector<128x8xf32>
    %c6_206 = arith.constant 6 : index
    %c0_207 = arith.constant 0 : index
    %c0_208 = arith.constant 0 : index
    %220 = vector.load %arg9[%c6_206, %c0_207, %c0_208] : memref<9x32x8xf32, #tpu.memory_space<vmem>>, vector<1x32x8xf32>
    %221 = vector.shape_cast %220 : vector<1x32x8xf32> to vector<32x8xf32>
    %c6_209 = arith.constant 6 : index
    %c0_210 = arith.constant 0 : index
    %c0_211 = arith.constant 0 : index
    %222 = vector.load %arg10[%c6_209, %c0_210, %c0_211] : memref<9x128x64xf32, #tpu.memory_space<vmem>>, vector<1x128x64xf32>
    %223 = vector.shape_cast %222 : vector<1x128x64xf32> to vector<128x64xf32>
    %cst_212 = arith.constant dense<0.000000e+00> : vector<64x8xf32>
    %224 = tpu.matmul %178, %221, %cst_212 {dimension_numbers = #tpu.dot_dimension_numbers<[1], [0], [0], [1], [0, 0, 1, 1], [], []>} : vector<64x32xf32>, vector<32x8xf32>, vector<64x8xf32> -> vector<64x8xf32>
    %cst_213 = arith.constant dense<0.000000e+00> : vector<128x8xf32>
    %225 = tpu.matmul %223, %224, %cst_213 {dimension_numbers = #tpu.dot_dimension_numbers<[1], [0], [0], [1], [0, 0, 1, 1], [], []>} : vector<128x64xf32>, vector<64x8xf32>, vector<128x8xf32> -> vector<128x8xf32>
    %226 = arith.addf %219, %225 : vector<128x8xf32>
    %c7_214 = arith.constant 7 : index
    %c0_215 = arith.constant 0 : index
    %c0_216 = arith.constant 0 : index
    %227 = vector.load %arg9[%c7_214, %c0_215, %c0_216] : memref<9x32x8xf32, #tpu.memory_space<vmem>>, vector<1x32x8xf32>
    %228 = vector.shape_cast %227 : vector<1x32x8xf32> to vector<32x8xf32>
    %c7_217 = arith.constant 7 : index
    %c0_218 = arith.constant 0 : index
    %c0_219 = arith.constant 0 : index
    %229 = vector.load %arg10[%c7_217, %c0_218, %c0_219] : memref<9x128x64xf32, #tpu.memory_space<vmem>>, vector<1x128x64xf32>
    %230 = vector.shape_cast %229 : vector<1x128x64xf32> to vector<128x64xf32>
    %cst_220 = arith.constant dense<0.000000e+00> : vector<64x8xf32>
    %231 = tpu.matmul %178, %228, %cst_220 {dimension_numbers = #tpu.dot_dimension_numbers<[1], [0], [0], [1], [0, 0, 1, 1], [], []>} : vector<64x32xf32>, vector<32x8xf32>, vector<64x8xf32> -> vector<64x8xf32>
    %cst_221 = arith.constant dense<0.000000e+00> : vector<128x8xf32>
    %232 = tpu.matmul %230, %231, %cst_221 {dimension_numbers = #tpu.dot_dimension_numbers<[1], [0], [0], [1], [0, 0, 1, 1], [], []>} : vector<128x64xf32>, vector<64x8xf32>, vector<128x8xf32> -> vector<128x8xf32>
    %233 = arith.addf %226, %232 : vector<128x8xf32>
    %c8_222 = arith.constant 8 : index
    %c0_223 = arith.constant 0 : index
    %c0_224 = arith.constant 0 : index
    %234 = vector.load %arg9[%c8_222, %c0_223, %c0_224] : memref<9x32x8xf32, #tpu.memory_space<vmem>>, vector<1x32x8xf32>
    %235 = vector.shape_cast %234 : vector<1x32x8xf32> to vector<32x8xf32>
    %c8_225 = arith.constant 8 : index
    %c0_226 = arith.constant 0 : index
    %c0_227 = arith.constant 0 : index
    %236 = vector.load %arg10[%c8_225, %c0_226, %c0_227] : memref<9x128x64xf32, #tpu.memory_space<vmem>>, vector<1x128x64xf32>
    %237 = vector.shape_cast %236 : vector<1x128x64xf32> to vector<128x64xf32>
    %cst_228 = arith.constant dense<0.000000e+00> : vector<64x8xf32>
    %238 = tpu.matmul %178, %235, %cst_228 {dimension_numbers = #tpu.dot_dimension_numbers<[1], [0], [0], [1], [0, 0, 1, 1], [], []>} : vector<64x32xf32>, vector<32x8xf32>, vector<64x8xf32> -> vector<64x8xf32>
    %cst_229 = arith.constant dense<0.000000e+00> : vector<128x8xf32>
    %239 = tpu.matmul %237, %238, %cst_229 {dimension_numbers = #tpu.dot_dimension_numbers<[1], [0], [0], [1], [0, 0, 1, 1], [], []>} : vector<128x64xf32>, vector<64x8xf32>, vector<128x8xf32> -> vector<128x8xf32>
    %240 = arith.addf %233, %239 : vector<128x8xf32>
    %cst_230 = arith.constant dense<0.000000e+00> : vector<128xf32>
    %241 = vector.multi_reduction <add>, %240, %cst_230 [1] : vector<128x8xf32> to vector<128xf32>
    %242 = vector.shape_cast %241 : vector<128xf32> to vector<128x1xf32>
    %cst_231 = arith.constant 8.000000e+00 : f32
    %243 = vector.broadcast %cst_231 : f32 to vector<128x1xf32>
    %244 = arith.divf %242, %243 : vector<128x1xf32>
    %245 = vector.broadcast %244 : vector<128x1xf32> to vector<128x8xf32>
    %246 = arith.subf %240, %245 : vector<128x8xf32>
    %247 = arith.mulf %246, %246 : vector<128x8xf32>
    %cst_232 = arith.constant dense<0.000000e+00> : vector<128xf32>
    %248 = vector.multi_reduction <add>, %247, %cst_232 [1] : vector<128x8xf32> to vector<128xf32>
    %249 = vector.shape_cast %248 : vector<128xf32> to vector<128x1xf32>
    %cst_233 = arith.constant 8.000000e+00 : f32
    %250 = vector.broadcast %cst_233 : f32 to vector<128x1xf32>
    %251 = arith.divf %249, %250 : vector<128x1xf32>
    %252 = vector.broadcast %244 : vector<128x1xf32> to vector<128x8xf32>
    %253 = arith.subf %240, %252 : vector<128x8xf32>
    %cst_234 = arith.constant 9.99999974E-6 : f32
    %254 = vector.broadcast %cst_234 : f32 to vector<128x1xf32>
    %255 = arith.addf %251, %254 : vector<128x1xf32>
    %256 = math.rsqrt %255 : vector<128x1xf32>
    %257 = vector.broadcast %256 : vector<128x1xf32> to vector<128x8xf32>
    %258 = arith.mulf %253, %257 : vector<128x8xf32>
    %c0_235 = arith.constant 0 : index
    %c0_236 = arith.constant 0 : index
    %259 = vector.load %arg11[%c0_235, %c0_236] : memref<128x1xf32, #tpu.memory_space<vmem>>, vector<128x1xf32>
    %260 = vector.broadcast %259 : vector<128x1xf32> to vector<128x8xf32>
    %261 = arith.mulf %258, %260 : vector<128x8xf32>
    %c0_237 = arith.constant 0 : index
    %c0_238 = arith.constant 0 : index
    %262 = vector.load %arg12[%c0_237, %c0_238] : memref<128x1xf32, #tpu.memory_space<vmem>>, vector<128x1xf32>
    %263 = vector.broadcast %262 : vector<128x1xf32> to vector<128x8xf32>
    %264 = arith.addf %261, %263 : vector<128x8xf32>
    %cst_239 = arith.constant 0.000000e+00 : f32
    %265 = vector.broadcast %cst_239 : f32 to vector<128x8xf32>
    %266 = arith.maximumf %264, %265 : vector<128x8xf32>
    %c0_240 = arith.constant 0 : index
    %c0_241 = arith.constant 0 : index
    %c0_242 = arith.constant 0 : index
    %267 = vector.load %arg13[%c0_240, %c0_241, %c0_242] : memref<9x8x32xf32, #tpu.memory_space<vmem>>, vector<1x8x32xf32>
    %268 = vector.shape_cast %267 : vector<1x8x32xf32> to vector<8x32xf32>
    %c0_243 = arith.constant 0 : index
    %c0_244 = arith.constant 0 : index
    %c0_245 = arith.constant 0 : index
    %269 = vector.load %arg14[%c0_243, %c0_244, %c0_245] : memref<9x64x128xf32, #tpu.memory_space<vmem>>, vector<1x64x128xf32>
    %270 = vector.shape_cast %269 : vector<1x64x128xf32> to vector<64x128xf32>
    %cst_246 = arith.constant dense<0.000000e+00> : vector<64x8xf32>
    %271 = tpu.matmul %270, %266, %cst_246 {dimension_numbers = #tpu.dot_dimension_numbers<[1], [0], [0], [1], [0, 0, 1, 1], [], []>} : vector<64x128xf32>, vector<128x8xf32>, vector<64x8xf32> -> vector<64x8xf32>
    %cst_247 = arith.constant dense<0.000000e+00> : vector<64x32xf32>
    %272 = tpu.matmul %271, %268, %cst_247 {dimension_numbers = #tpu.dot_dimension_numbers<[1], [0], [0], [1], [0, 0, 1, 1], [], []>} : vector<64x8xf32>, vector<8x32xf32>, vector<64x32xf32> -> vector<64x32xf32>
    %c1_248 = arith.constant 1 : index
    %c0_249 = arith.constant 0 : index
    %c0_250 = arith.constant 0 : index
    %273 = vector.load %arg13[%c1_248, %c0_249, %c0_250] : memref<9x8x32xf32, #tpu.memory_space<vmem>>, vector<1x8x32xf32>
    %274 = vector.shape_cast %273 : vector<1x8x32xf32> to vector<8x32xf32>
    %c1_251 = arith.constant 1 : index
    %c0_252 = arith.constant 0 : index
    %c0_253 = arith.constant 0 : index
    %275 = vector.load %arg14[%c1_251, %c0_252, %c0_253] : memref<9x64x128xf32, #tpu.memory_space<vmem>>, vector<1x64x128xf32>
    %276 = vector.shape_cast %275 : vector<1x64x128xf32> to vector<64x128xf32>
    %cst_254 = arith.constant dense<0.000000e+00> : vector<64x8xf32>
    %277 = tpu.matmul %276, %266, %cst_254 {dimension_numbers = #tpu.dot_dimension_numbers<[1], [0], [0], [1], [0, 0, 1, 1], [], []>} : vector<64x128xf32>, vector<128x8xf32>, vector<64x8xf32> -> vector<64x8xf32>
    %cst_255 = arith.constant dense<0.000000e+00> : vector<64x32xf32>
    %278 = tpu.matmul %277, %274, %cst_255 {dimension_numbers = #tpu.dot_dimension_numbers<[1], [0], [0], [1], [0, 0, 1, 1], [], []>} : vector<64x8xf32>, vector<8x32xf32>, vector<64x32xf32> -> vector<64x32xf32>
    %279 = arith.addf %272, %278 : vector<64x32xf32>
    %c2_256 = arith.constant 2 : index
    %c0_257 = arith.constant 0 : index
    %c0_258 = arith.constant 0 : index
    %280 = vector.load %arg13[%c2_256, %c0_257, %c0_258] : memref<9x8x32xf32, #tpu.memory_space<vmem>>, vector<1x8x32xf32>
    %281 = vector.shape_cast %280 : vector<1x8x32xf32> to vector<8x32xf32>
    %c2_259 = arith.constant 2 : index
    %c0_260 = arith.constant 0 : index
    %c0_261 = arith.constant 0 : index
    %282 = vector.load %arg14[%c2_259, %c0_260, %c0_261] : memref<9x64x128xf32, #tpu.memory_space<vmem>>, vector<1x64x128xf32>
    %283 = vector.shape_cast %282 : vector<1x64x128xf32> to vector<64x128xf32>
    %cst_262 = arith.constant dense<0.000000e+00> : vector<64x8xf32>
    %284 = tpu.matmul %283, %266, %cst_262 {dimension_numbers = #tpu.dot_dimension_numbers<[1], [0], [0], [1], [0, 0, 1, 1], [], []>} : vector<64x128xf32>, vector<128x8xf32>, vector<64x8xf32> -> vector<64x8xf32>
    %cst_263 = arith.constant dense<0.000000e+00> : vector<64x32xf32>
    %285 = tpu.matmul %284, %281, %cst_263 {dimension_numbers = #tpu.dot_dimension_numbers<[1], [0], [0], [1], [0, 0, 1, 1], [], []>} : vector<64x8xf32>, vector<8x32xf32>, vector<64x32xf32> -> vector<64x32xf32>
    %286 = arith.addf %279, %285 : vector<64x32xf32>
    %c3_264 = arith.constant 3 : index
    %c0_265 = arith.constant 0 : index
    %c0_266 = arith.constant 0 : index
    %287 = vector.load %arg13[%c3_264, %c0_265, %c0_266] : memref<9x8x32xf32, #tpu.memory_space<vmem>>, vector<1x8x32xf32>
    %288 = vector.shape_cast %287 : vector<1x8x32xf32> to vector<8x32xf32>
    %c3_267 = arith.constant 3 : index
    %c0_268 = arith.constant 0 : index
    %c0_269 = arith.constant 0 : index
    %289 = vector.load %arg14[%c3_267, %c0_268, %c0_269] : memref<9x64x128xf32, #tpu.memory_space<vmem>>, vector<1x64x128xf32>
    %290 = vector.shape_cast %289 : vector<1x64x128xf32> to vector<64x128xf32>
    %cst_270 = arith.constant dense<0.000000e+00> : vector<64x8xf32>
    %291 = tpu.matmul %290, %266, %cst_270 {dimension_numbers = #tpu.dot_dimension_numbers<[1], [0], [0], [1], [0, 0, 1, 1], [], []>} : vector<64x128xf32>, vector<128x8xf32>, vector<64x8xf32> -> vector<64x8xf32>
    %cst_271 = arith.constant dense<0.000000e+00> : vector<64x32xf32>
    %292 = tpu.matmul %291, %288, %cst_271 {dimension_numbers = #tpu.dot_dimension_numbers<[1], [0], [0], [1], [0, 0, 1, 1], [], []>} : vector<64x8xf32>, vector<8x32xf32>, vector<64x32xf32> -> vector<64x32xf32>
    %293 = arith.addf %286, %292 : vector<64x32xf32>
    %c4_272 = arith.constant 4 : index
    %c0_273 = arith.constant 0 : index
    %c0_274 = arith.constant 0 : index
    %294 = vector.load %arg13[%c4_272, %c0_273, %c0_274] : memref<9x8x32xf32, #tpu.memory_space<vmem>>, vector<1x8x32xf32>
    %295 = vector.shape_cast %294 : vector<1x8x32xf32> to vector<8x32xf32>
    %c4_275 = arith.constant 4 : index
    %c0_276 = arith.constant 0 : index
    %c0_277 = arith.constant 0 : index
    %296 = vector.load %arg14[%c4_275, %c0_276, %c0_277] : memref<9x64x128xf32, #tpu.memory_space<vmem>>, vector<1x64x128xf32>
    %297 = vector.shape_cast %296 : vector<1x64x128xf32> to vector<64x128xf32>
    %cst_278 = arith.constant dense<0.000000e+00> : vector<64x8xf32>
    %298 = tpu.matmul %297, %266, %cst_278 {dimension_numbers = #tpu.dot_dimension_numbers<[1], [0], [0], [1], [0, 0, 1, 1], [], []>} : vector<64x128xf32>, vector<128x8xf32>, vector<64x8xf32> -> vector<64x8xf32>
    %cst_279 = arith.constant dense<0.000000e+00> : vector<64x32xf32>
    %299 = tpu.matmul %298, %295, %cst_279 {dimension_numbers = #tpu.dot_dimension_numbers<[1], [0], [0], [1], [0, 0, 1, 1], [], []>} : vector<64x8xf32>, vector<8x32xf32>, vector<64x32xf32> -> vector<64x32xf32>
    %300 = arith.addf %293, %299 : vector<64x32xf32>
    %c5_280 = arith.constant 5 : index
    %c0_281 = arith.constant 0 : index
    %c0_282 = arith.constant 0 : index
    %301 = vector.load %arg13[%c5_280, %c0_281, %c0_282] : memref<9x8x32xf32, #tpu.memory_space<vmem>>, vector<1x8x32xf32>
    %302 = vector.shape_cast %301 : vector<1x8x32xf32> to vector<8x32xf32>
    %c5_283 = arith.constant 5 : index
    %c0_284 = arith.constant 0 : index
    %c0_285 = arith.constant 0 : index
    %303 = vector.load %arg14[%c5_283, %c0_284, %c0_285] : memref<9x64x128xf32, #tpu.memory_space<vmem>>, vector<1x64x128xf32>
    %304 = vector.shape_cast %303 : vector<1x64x128xf32> to vector<64x128xf32>
    %cst_286 = arith.constant dense<0.000000e+00> : vector<64x8xf32>
    %305 = tpu.matmul %304, %266, %cst_286 {dimension_numbers = #tpu.dot_dimension_numbers<[1], [0], [0], [1], [0, 0, 1, 1], [], []>} : vector<64x128xf32>, vector<128x8xf32>, vector<64x8xf32> -> vector<64x8xf32>
    %cst_287 = arith.constant dense<0.000000e+00> : vector<64x32xf32>
    %306 = tpu.matmul %305, %302, %cst_287 {dimension_numbers = #tpu.dot_dimension_numbers<[1], [0], [0], [1], [0, 0, 1, 1], [], []>} : vector<64x8xf32>, vector<8x32xf32>, vector<64x32xf32> -> vector<64x32xf32>
    %307 = arith.addf %300, %306 : vector<64x32xf32>
    %c6_288 = arith.constant 6 : index
    %c0_289 = arith.constant 0 : index
    %c0_290 = arith.constant 0 : index
    %308 = vector.load %arg13[%c6_288, %c0_289, %c0_290] : memref<9x8x32xf32, #tpu.memory_space<vmem>>, vector<1x8x32xf32>
    %309 = vector.shape_cast %308 : vector<1x8x32xf32> to vector<8x32xf32>
    %c6_291 = arith.constant 6 : index
    %c0_292 = arith.constant 0 : index
    %c0_293 = arith.constant 0 : index
    %310 = vector.load %arg14[%c6_291, %c0_292, %c0_293] : memref<9x64x128xf32, #tpu.memory_space<vmem>>, vector<1x64x128xf32>
    %311 = vector.shape_cast %310 : vector<1x64x128xf32> to vector<64x128xf32>
    %cst_294 = arith.constant dense<0.000000e+00> : vector<64x8xf32>
    %312 = tpu.matmul %311, %266, %cst_294 {dimension_numbers = #tpu.dot_dimension_numbers<[1], [0], [0], [1], [0, 0, 1, 1], [], []>} : vector<64x128xf32>, vector<128x8xf32>, vector<64x8xf32> -> vector<64x8xf32>
    %cst_295 = arith.constant dense<0.000000e+00> : vector<64x32xf32>
    %313 = tpu.matmul %312, %309, %cst_295 {dimension_numbers = #tpu.dot_dimension_numbers<[1], [0], [0], [1], [0, 0, 1, 1], [], []>} : vector<64x8xf32>, vector<8x32xf32>, vector<64x32xf32> -> vector<64x32xf32>
    %314 = arith.addf %307, %313 : vector<64x32xf32>
    %c7_296 = arith.constant 7 : index
    %c0_297 = arith.constant 0 : index
    %c0_298 = arith.constant 0 : index
    %315 = vector.load %arg13[%c7_296, %c0_297, %c0_298] : memref<9x8x32xf32, #tpu.memory_space<vmem>>, vector<1x8x32xf32>
    %316 = vector.shape_cast %315 : vector<1x8x32xf32> to vector<8x32xf32>
    %c7_299 = arith.constant 7 : index
    %c0_300 = arith.constant 0 : index
    %c0_301 = arith.constant 0 : index
    %317 = vector.load %arg14[%c7_299, %c0_300, %c0_301] : memref<9x64x128xf32, #tpu.memory_space<vmem>>, vector<1x64x128xf32>
    %318 = vector.shape_cast %317 : vector<1x64x128xf32> to vector<64x128xf32>
    %cst_302 = arith.constant dense<0.000000e+00> : vector<64x8xf32>
    %319 = tpu.matmul %318, %266, %cst_302 {dimension_numbers = #tpu.dot_dimension_numbers<[1], [0], [0], [1], [0, 0, 1, 1], [], []>} : vector<64x128xf32>, vector<128x8xf32>, vector<64x8xf32> -> vector<64x8xf32>
    %cst_303 = arith.constant dense<0.000000e+00> : vector<64x32xf32>
    %320 = tpu.matmul %319, %316, %cst_303 {dimension_numbers = #tpu.dot_dimension_numbers<[1], [0], [0], [1], [0, 0, 1, 1], [], []>} : vector<64x8xf32>, vector<8x32xf32>, vector<64x32xf32> -> vector<64x32xf32>
    %321 = arith.addf %314, %320 : vector<64x32xf32>
    %c8_304 = arith.constant 8 : index
    %c0_305 = arith.constant 0 : index
    %c0_306 = arith.constant 0 : index
    %322 = vector.load %arg13[%c8_304, %c0_305, %c0_306] : memref<9x8x32xf32, #tpu.memory_space<vmem>>, vector<1x8x32xf32>
    %323 = vector.shape_cast %322 : vector<1x8x32xf32> to vector<8x32xf32>
    %c8_307 = arith.constant 8 : index
    %c0_308 = arith.constant 0 : index
    %c0_309 = arith.constant 0 : index
    %324 = vector.load %arg14[%c8_307, %c0_308, %c0_309] : memref<9x64x128xf32, #tpu.memory_space<vmem>>, vector<1x64x128xf32>
    %325 = vector.shape_cast %324 : vector<1x64x128xf32> to vector<64x128xf32>
    %cst_310 = arith.constant dense<0.000000e+00> : vector<64x8xf32>
    %326 = tpu.matmul %325, %266, %cst_310 {dimension_numbers = #tpu.dot_dimension_numbers<[1], [0], [0], [1], [0, 0, 1, 1], [], []>} : vector<64x128xf32>, vector<128x8xf32>, vector<64x8xf32> -> vector<64x8xf32>
    %cst_311 = arith.constant dense<0.000000e+00> : vector<64x32xf32>
    %327 = tpu.matmul %326, %323, %cst_311 {dimension_numbers = #tpu.dot_dimension_numbers<[1], [0], [0], [1], [0, 0, 1, 1], [], []>} : vector<64x8xf32>, vector<8x32xf32>, vector<64x32xf32> -> vector<64x32xf32>
    %328 = arith.addf %321, %327 : vector<64x32xf32>
    %cst_312 = arith.constant dense<0.000000e+00> : vector<64xf32>
    %329 = vector.multi_reduction <add>, %328, %cst_312 [1] : vector<64x32xf32> to vector<64xf32>
    %330 = vector.shape_cast %329 : vector<64xf32> to vector<64x1xf32>
    %cst_313 = arith.constant 3.200000e+01 : f32
    %331 = vector.broadcast %cst_313 : f32 to vector<64x1xf32>
    %332 = arith.divf %330, %331 : vector<64x1xf32>
    %333 = vector.broadcast %332 : vector<64x1xf32> to vector<64x32xf32>
    %334 = arith.subf %328, %333 : vector<64x32xf32>
    %335 = arith.mulf %334, %334 : vector<64x32xf32>
    %cst_314 = arith.constant dense<0.000000e+00> : vector<64xf32>
    %336 = vector.multi_reduction <add>, %335, %cst_314 [1] : vector<64x32xf32> to vector<64xf32>
    %337 = vector.shape_cast %336 : vector<64xf32> to vector<64x1xf32>
    %cst_315 = arith.constant 3.200000e+01 : f32
    %338 = vector.broadcast %cst_315 : f32 to vector<64x1xf32>
    %339 = arith.divf %337, %338 : vector<64x1xf32>
    %340 = vector.broadcast %332 : vector<64x1xf32> to vector<64x32xf32>
    %341 = arith.subf %328, %340 : vector<64x32xf32>
    %cst_316 = arith.constant 9.99999974E-6 : f32
    %342 = vector.broadcast %cst_316 : f32 to vector<64x1xf32>
    %343 = arith.addf %339, %342 : vector<64x1xf32>
    %344 = math.rsqrt %343 : vector<64x1xf32>
    %345 = vector.broadcast %344 : vector<64x1xf32> to vector<64x32xf32>
    %346 = arith.mulf %341, %345 : vector<64x32xf32>
    %c0_317 = arith.constant 0 : index
    %c0_318 = arith.constant 0 : index
    %347 = vector.load %arg15[%c0_317, %c0_318] : memref<64x1xf32, #tpu.memory_space<vmem>>, vector<64x1xf32>
    %348 = vector.broadcast %347 : vector<64x1xf32> to vector<64x32xf32>
    %349 = arith.mulf %346, %348 : vector<64x32xf32>
    %c0_319 = arith.constant 0 : index
    %c0_320 = arith.constant 0 : index
    %350 = vector.load %arg16[%c0_319, %c0_320] : memref<64x1xf32, #tpu.memory_space<vmem>>, vector<64x1xf32>
    %351 = vector.broadcast %350 : vector<64x1xf32> to vector<64x32xf32>
    %352 = arith.addf %349, %351 : vector<64x32xf32>
    %cst_321 = arith.constant 0.000000e+00 : f32
    %353 = vector.broadcast %cst_321 : f32 to vector<64x32xf32>
    %354 = arith.maximumf %352, %353 : vector<64x32xf32>
    %c0_322 = arith.constant 0 : index
    %c0_323 = arith.constant 0 : index
    %c0_324 = arith.constant 0 : index
    %355 = vector.load %arg17[%c0_322, %c0_323, %c0_324] : memref<9x32x128xf32, #tpu.memory_space<vmem>>, vector<1x32x128xf32>
    %356 = vector.shape_cast %355 : vector<1x32x128xf32> to vector<32x128xf32>
    %c0_325 = arith.constant 0 : index
    %c0_326 = arith.constant 0 : index
    %c0_327 = arith.constant 0 : index
    %357 = vector.load %arg18[%c0_325, %c0_326, %c0_327] : memref<9x32x64xf32, #tpu.memory_space<vmem>>, vector<1x32x64xf32>
    %358 = vector.shape_cast %357 : vector<1x32x64xf32> to vector<32x64xf32>
    %cst_328 = arith.constant dense<0.000000e+00> : vector<32x32xf32>
    %359 = tpu.matmul %358, %354, %cst_328 {dimension_numbers = #tpu.dot_dimension_numbers<[1], [0], [0], [1], [0, 0, 1, 1], [], []>} : vector<32x64xf32>, vector<64x32xf32>, vector<32x32xf32> -> vector<32x32xf32>
    %cst_329 = arith.constant dense<0.000000e+00> : vector<32x128xf32>
    %360 = tpu.matmul %359, %356, %cst_329 {dimension_numbers = #tpu.dot_dimension_numbers<[1], [0], [0], [1], [0, 0, 1, 1], [], []>} : vector<32x32xf32>, vector<32x128xf32>, vector<32x128xf32> -> vector<32x128xf32>
    %c1_330 = arith.constant 1 : index
    %c0_331 = arith.constant 0 : index
    %c0_332 = arith.constant 0 : index
    %361 = vector.load %arg17[%c1_330, %c0_331, %c0_332] : memref<9x32x128xf32, #tpu.memory_space<vmem>>, vector<1x32x128xf32>
    %362 = vector.shape_cast %361 : vector<1x32x128xf32> to vector<32x128xf32>
    %c1_333 = arith.constant 1 : index
    %c0_334 = arith.constant 0 : index
    %c0_335 = arith.constant 0 : index
    %363 = vector.load %arg18[%c1_333, %c0_334, %c0_335] : memref<9x32x64xf32, #tpu.memory_space<vmem>>, vector<1x32x64xf32>
    %364 = vector.shape_cast %363 : vector<1x32x64xf32> to vector<32x64xf32>
    %cst_336 = arith.constant dense<0.000000e+00> : vector<32x32xf32>
    %365 = tpu.matmul %364, %354, %cst_336 {dimension_numbers = #tpu.dot_dimension_numbers<[1], [0], [0], [1], [0, 0, 1, 1], [], []>} : vector<32x64xf32>, vector<64x32xf32>, vector<32x32xf32> -> vector<32x32xf32>
    %cst_337 = arith.constant dense<0.000000e+00> : vector<32x128xf32>
    %366 = tpu.matmul %365, %362, %cst_337 {dimension_numbers = #tpu.dot_dimension_numbers<[1], [0], [0], [1], [0, 0, 1, 1], [], []>} : vector<32x32xf32>, vector<32x128xf32>, vector<32x128xf32> -> vector<32x128xf32>
    %367 = arith.addf %360, %366 : vector<32x128xf32>
    %c2_338 = arith.constant 2 : index
    %c0_339 = arith.constant 0 : index
    %c0_340 = arith.constant 0 : index
    %368 = vector.load %arg17[%c2_338, %c0_339, %c0_340] : memref<9x32x128xf32, #tpu.memory_space<vmem>>, vector<1x32x128xf32>
    %369 = vector.shape_cast %368 : vector<1x32x128xf32> to vector<32x128xf32>
    %c2_341 = arith.constant 2 : index
    %c0_342 = arith.constant 0 : index
    %c0_343 = arith.constant 0 : index
    %370 = vector.load %arg18[%c2_341, %c0_342, %c0_343] : memref<9x32x64xf32, #tpu.memory_space<vmem>>, vector<1x32x64xf32>
    %371 = vector.shape_cast %370 : vector<1x32x64xf32> to vector<32x64xf32>
    %cst_344 = arith.constant dense<0.000000e+00> : vector<32x32xf32>
    %372 = tpu.matmul %371, %354, %cst_344 {dimension_numbers = #tpu.dot_dimension_numbers<[1], [0], [0], [1], [0, 0, 1, 1], [], []>} : vector<32x64xf32>, vector<64x32xf32>, vector<32x32xf32> -> vector<32x32xf32>
    %cst_345 = arith.constant dense<0.000000e+00> : vector<32x128xf32>
    %373 = tpu.matmul %372, %369, %cst_345 {dimension_numbers = #tpu.dot_dimension_numbers<[1], [0], [0], [1], [0, 0, 1, 1], [], []>} : vector<32x32xf32>, vector<32x128xf32>, vector<32x128xf32> -> vector<32x128xf32>
    %374 = arith.addf %367, %373 : vector<32x128xf32>
    %c3_346 = arith.constant 3 : index
    %c0_347 = arith.constant 0 : index
    %c0_348 = arith.constant 0 : index
    %375 = vector.load %arg17[%c3_346, %c0_347, %c0_348] : memref<9x32x128xf32, #tpu.memory_space<vmem>>, vector<1x32x128xf32>
    %376 = vector.shape_cast %375 : vector<1x32x128xf32> to vector<32x128xf32>
    %c3_349 = arith.constant 3 : index
    %c0_350 = arith.constant 0 : index
    %c0_351 = arith.constant 0 : index
    %377 = vector.load %arg18[%c3_349, %c0_350, %c0_351] : memref<9x32x64xf32, #tpu.memory_space<vmem>>, vector<1x32x64xf32>
    %378 = vector.shape_cast %377 : vector<1x32x64xf32> to vector<32x64xf32>
    %cst_352 = arith.constant dense<0.000000e+00> : vector<32x32xf32>
    %379 = tpu.matmul %378, %354, %cst_352 {dimension_numbers = #tpu.dot_dimension_numbers<[1], [0], [0], [1], [0, 0, 1, 1], [], []>} : vector<32x64xf32>, vector<64x32xf32>, vector<32x32xf32> -> vector<32x32xf32>
    %cst_353 = arith.constant dense<0.000000e+00> : vector<32x128xf32>
    %380 = tpu.matmul %379, %376, %cst_353 {dimension_numbers = #tpu.dot_dimension_numbers<[1], [0], [0], [1], [0, 0, 1, 1], [], []>} : vector<32x32xf32>, vector<32x128xf32>, vector<32x128xf32> -> vector<32x128xf32>
    %381 = arith.addf %374, %380 : vector<32x128xf32>
    %c4_354 = arith.constant 4 : index
    %c0_355 = arith.constant 0 : index
    %c0_356 = arith.constant 0 : index
    %382 = vector.load %arg17[%c4_354, %c0_355, %c0_356] : memref<9x32x128xf32, #tpu.memory_space<vmem>>, vector<1x32x128xf32>
    %383 = vector.shape_cast %382 : vector<1x32x128xf32> to vector<32x128xf32>
    %c4_357 = arith.constant 4 : index
    %c0_358 = arith.constant 0 : index
    %c0_359 = arith.constant 0 : index
    %384 = vector.load %arg18[%c4_357, %c0_358, %c0_359] : memref<9x32x64xf32, #tpu.memory_space<vmem>>, vector<1x32x64xf32>
    %385 = vector.shape_cast %384 : vector<1x32x64xf32> to vector<32x64xf32>
    %cst_360 = arith.constant dense<0.000000e+00> : vector<32x32xf32>
    %386 = tpu.matmul %385, %354, %cst_360 {dimension_numbers = #tpu.dot_dimension_numbers<[1], [0], [0], [1], [0, 0, 1, 1], [], []>} : vector<32x64xf32>, vector<64x32xf32>, vector<32x32xf32> -> vector<32x32xf32>
    %cst_361 = arith.constant dense<0.000000e+00> : vector<32x128xf32>
    %387 = tpu.matmul %386, %383, %cst_361 {dimension_numbers = #tpu.dot_dimension_numbers<[1], [0], [0], [1], [0, 0, 1, 1], [], []>} : vector<32x32xf32>, vector<32x128xf32>, vector<32x128xf32> -> vector<32x128xf32>
    %388 = arith.addf %381, %387 : vector<32x128xf32>
    %c5_362 = arith.constant 5 : index
    %c0_363 = arith.constant 0 : index
    %c0_364 = arith.constant 0 : index
    %389 = vector.load %arg17[%c5_362, %c0_363, %c0_364] : memref<9x32x128xf32, #tpu.memory_space<vmem>>, vector<1x32x128xf32>
    %390 = vector.shape_cast %389 : vector<1x32x128xf32> to vector<32x128xf32>
    %c5_365 = arith.constant 5 : index
    %c0_366 = arith.constant 0 : index
    %c0_367 = arith.constant 0 : index
    %391 = vector.load %arg18[%c5_365, %c0_366, %c0_367] : memref<9x32x64xf32, #tpu.memory_space<vmem>>, vector<1x32x64xf32>
    %392 = vector.shape_cast %391 : vector<1x32x64xf32> to vector<32x64xf32>
    %cst_368 = arith.constant dense<0.000000e+00> : vector<32x32xf32>
    %393 = tpu.matmul %392, %354, %cst_368 {dimension_numbers = #tpu.dot_dimension_numbers<[1], [0], [0], [1], [0, 0, 1, 1], [], []>} : vector<32x64xf32>, vector<64x32xf32>, vector<32x32xf32> -> vector<32x32xf32>
    %cst_369 = arith.constant dense<0.000000e+00> : vector<32x128xf32>
    %394 = tpu.matmul %393, %390, %cst_369 {dimension_numbers = #tpu.dot_dimension_numbers<[1], [0], [0], [1], [0, 0, 1, 1], [], []>} : vector<32x32xf32>, vector<32x128xf32>, vector<32x128xf32> -> vector<32x128xf32>
    %395 = arith.addf %388, %394 : vector<32x128xf32>
    %c6_370 = arith.constant 6 : index
    %c0_371 = arith.constant 0 : index
    %c0_372 = arith.constant 0 : index
    %396 = vector.load %arg17[%c6_370, %c0_371, %c0_372] : memref<9x32x128xf32, #tpu.memory_space<vmem>>, vector<1x32x128xf32>
    %397 = vector.shape_cast %396 : vector<1x32x128xf32> to vector<32x128xf32>
    %c6_373 = arith.constant 6 : index
    %c0_374 = arith.constant 0 : index
    %c0_375 = arith.constant 0 : index
    %398 = vector.load %arg18[%c6_373, %c0_374, %c0_375] : memref<9x32x64xf32, #tpu.memory_space<vmem>>, vector<1x32x64xf32>
    %399 = vector.shape_cast %398 : vector<1x32x64xf32> to vector<32x64xf32>
    %cst_376 = arith.constant dense<0.000000e+00> : vector<32x32xf32>
    %400 = tpu.matmul %399, %354, %cst_376 {dimension_numbers = #tpu.dot_dimension_numbers<[1], [0], [0], [1], [0, 0, 1, 1], [], []>} : vector<32x64xf32>, vector<64x32xf32>, vector<32x32xf32> -> vector<32x32xf32>
    %cst_377 = arith.constant dense<0.000000e+00> : vector<32x128xf32>
    %401 = tpu.matmul %400, %397, %cst_377 {dimension_numbers = #tpu.dot_dimension_numbers<[1], [0], [0], [1], [0, 0, 1, 1], [], []>} : vector<32x32xf32>, vector<32x128xf32>, vector<32x128xf32> -> vector<32x128xf32>
    %402 = arith.addf %395, %401 : vector<32x128xf32>
    %c7_378 = arith.constant 7 : index
    %c0_379 = arith.constant 0 : index
    %c0_380 = arith.constant 0 : index
    %403 = vector.load %arg17[%c7_378, %c0_379, %c0_380] : memref<9x32x128xf32, #tpu.memory_space<vmem>>, vector<1x32x128xf32>
    %404 = vector.shape_cast %403 : vector<1x32x128xf32> to vector<32x128xf32>
    %c7_381 = arith.constant 7 : index
    %c0_382 = arith.constant 0 : index
    %c0_383 = arith.constant 0 : index
    %405 = vector.load %arg18[%c7_381, %c0_382, %c0_383] : memref<9x32x64xf32, #tpu.memory_space<vmem>>, vector<1x32x64xf32>
    %406 = vector.shape_cast %405 : vector<1x32x64xf32> to vector<32x64xf32>
    %cst_384 = arith.constant dense<0.000000e+00> : vector<32x32xf32>
    %407 = tpu.matmul %406, %354, %cst_384 {dimension_numbers = #tpu.dot_dimension_numbers<[1], [0], [0], [1], [0, 0, 1, 1], [], []>} : vector<32x64xf32>, vector<64x32xf32>, vector<32x32xf32> -> vector<32x32xf32>
    %cst_385 = arith.constant dense<0.000000e+00> : vector<32x128xf32>
    %408 = tpu.matmul %407, %404, %cst_385 {dimension_numbers = #tpu.dot_dimension_numbers<[1], [0], [0], [1], [0, 0, 1, 1], [], []>} : vector<32x32xf32>, vector<32x128xf32>, vector<32x128xf32> -> vector<32x128xf32>
    %409 = arith.addf %402, %408 : vector<32x128xf32>
    %c8_386 = arith.constant 8 : index
    %c0_387 = arith.constant 0 : index
    %c0_388 = arith.constant 0 : index
    %410 = vector.load %arg17[%c8_386, %c0_387, %c0_388] : memref<9x32x128xf32, #tpu.memory_space<vmem>>, vector<1x32x128xf32>
    %411 = vector.shape_cast %410 : vector<1x32x128xf32> to vector<32x128xf32>
    %c8_389 = arith.constant 8 : index
    %c0_390 = arith.constant 0 : index
    %c0_391 = arith.constant 0 : index
    %412 = vector.load %arg18[%c8_389, %c0_390, %c0_391] : memref<9x32x64xf32, #tpu.memory_space<vmem>>, vector<1x32x64xf32>
    %413 = vector.shape_cast %412 : vector<1x32x64xf32> to vector<32x64xf32>
    %cst_392 = arith.constant dense<0.000000e+00> : vector<32x32xf32>
    %414 = tpu.matmul %413, %354, %cst_392 {dimension_numbers = #tpu.dot_dimension_numbers<[1], [0], [0], [1], [0, 0, 1, 1], [], []>} : vector<32x64xf32>, vector<64x32xf32>, vector<32x32xf32> -> vector<32x32xf32>
    %cst_393 = arith.constant dense<0.000000e+00> : vector<32x128xf32>
    %415 = tpu.matmul %414, %411, %cst_393 {dimension_numbers = #tpu.dot_dimension_numbers<[1], [0], [0], [1], [0, 0, 1, 1], [], []>} : vector<32x32xf32>, vector<32x128xf32>, vector<32x128xf32> -> vector<32x128xf32>
    %416 = arith.addf %409, %415 : vector<32x128xf32>
    %cst_394 = arith.constant dense<0.000000e+00> : vector<32xf32>
    %417 = vector.multi_reduction <add>, %416, %cst_394 [1] : vector<32x128xf32> to vector<32xf32>
    %418 = vector.shape_cast %417 : vector<32xf32> to vector<32x1xf32>
    %cst_395 = arith.constant 1.280000e+02 : f32
    %419 = vector.broadcast %cst_395 : f32 to vector<32x1xf32>
    %420 = arith.divf %418, %419 : vector<32x1xf32>
    %421 = vector.broadcast %420 : vector<32x1xf32> to vector<32x128xf32>
    %422 = arith.subf %416, %421 : vector<32x128xf32>
    %423 = arith.mulf %422, %422 : vector<32x128xf32>
    %cst_396 = arith.constant dense<0.000000e+00> : vector<32xf32>
    %424 = vector.multi_reduction <add>, %423, %cst_396 [1] : vector<32x128xf32> to vector<32xf32>
    %425 = vector.shape_cast %424 : vector<32xf32> to vector<32x1xf32>
    %cst_397 = arith.constant 1.280000e+02 : f32
    %426 = vector.broadcast %cst_397 : f32 to vector<32x1xf32>
    %427 = arith.divf %425, %426 : vector<32x1xf32>
    %428 = vector.broadcast %420 : vector<32x1xf32> to vector<32x128xf32>
    %429 = arith.subf %416, %428 : vector<32x128xf32>
    %cst_398 = arith.constant 9.99999974E-6 : f32
    %430 = vector.broadcast %cst_398 : f32 to vector<32x1xf32>
    %431 = arith.addf %427, %430 : vector<32x1xf32>
    %432 = math.rsqrt %431 : vector<32x1xf32>
    %433 = vector.broadcast %432 : vector<32x1xf32> to vector<32x128xf32>
    %434 = arith.mulf %429, %433 : vector<32x128xf32>
    %c0_399 = arith.constant 0 : index
    %c0_400 = arith.constant 0 : index
    %435 = vector.load %arg19[%c0_399, %c0_400] : memref<32x1xf32, #tpu.memory_space<vmem>>, vector<32x1xf32>
    %436 = vector.broadcast %435 : vector<32x1xf32> to vector<32x128xf32>
    %437 = arith.mulf %434, %436 : vector<32x128xf32>
    %c0_401 = arith.constant 0 : index
    %c0_402 = arith.constant 0 : index
    %438 = vector.load %arg20[%c0_401, %c0_402] : memref<32x1xf32, #tpu.memory_space<vmem>>, vector<32x1xf32>
    %439 = vector.broadcast %438 : vector<32x1xf32> to vector<32x128xf32>
    %440 = arith.addf %437, %439 : vector<32x128xf32>
    %cst_403 = arith.constant 0.000000e+00 : f32
    %441 = vector.broadcast %cst_403 : f32 to vector<32x128xf32>
    %442 = arith.maximumf %440, %441 : vector<32x128xf32>
    %c0_404 = arith.constant 0 : index
    %c0_405 = arith.constant 0 : index
    %c0_406 = arith.constant 0 : index
    %443 = vector.load %arg21[%c0_404, %c0_405, %c0_406] : memref<9x128x512xf32, #tpu.memory_space<vmem>>, vector<1x128x512xf32>
    %444 = vector.shape_cast %443 : vector<1x128x512xf32> to vector<128x512xf32>
    %c0_407 = arith.constant 0 : index
    %c0_408 = arith.constant 0 : index
    %c0_409 = arith.constant 0 : index
    %445 = vector.load %arg22[%c0_407, %c0_408, %c0_409] : memref<9x4x32xf32, #tpu.memory_space<vmem>>, vector<1x4x32xf32>
    %446 = vector.shape_cast %445 : vector<1x4x32xf32> to vector<4x32xf32>
    %cst_410 = arith.constant dense<0.000000e+00> : vector<4x128xf32>
    %447 = tpu.matmul %446, %442, %cst_410 {dimension_numbers = #tpu.dot_dimension_numbers<[1], [0], [0], [1], [0, 0, 1, 1], [], []>} : vector<4x32xf32>, vector<32x128xf32>, vector<4x128xf32> -> vector<4x128xf32>
    %cst_411 = arith.constant dense<0.000000e+00> : vector<4x512xf32>
    %448 = tpu.matmul %447, %444, %cst_411 {dimension_numbers = #tpu.dot_dimension_numbers<[1], [0], [0], [1], [0, 0, 1, 1], [], []>} : vector<4x128xf32>, vector<128x512xf32>, vector<4x512xf32> -> vector<4x512xf32>
    %c1_412 = arith.constant 1 : index
    %c0_413 = arith.constant 0 : index
    %c0_414 = arith.constant 0 : index
    %449 = vector.load %arg21[%c1_412, %c0_413, %c0_414] : memref<9x128x512xf32, #tpu.memory_space<vmem>>, vector<1x128x512xf32>
    %450 = vector.shape_cast %449 : vector<1x128x512xf32> to vector<128x512xf32>
    %c1_415 = arith.constant 1 : index
    %c0_416 = arith.constant 0 : index
    %c0_417 = arith.constant 0 : index
    %451 = vector.load %arg22[%c1_415, %c0_416, %c0_417] : memref<9x4x32xf32, #tpu.memory_space<vmem>>, vector<1x4x32xf32>
    %452 = vector.shape_cast %451 : vector<1x4x32xf32> to vector<4x32xf32>
    %cst_418 = arith.constant dense<0.000000e+00> : vector<4x128xf32>
    %453 = tpu.matmul %452, %442, %cst_418 {dimension_numbers = #tpu.dot_dimension_numbers<[1], [0], [0], [1], [0, 0, 1, 1], [], []>} : vector<4x32xf32>, vector<32x128xf32>, vector<4x128xf32> -> vector<4x128xf32>
    %cst_419 = arith.constant dense<0.000000e+00> : vector<4x512xf32>
    %454 = tpu.matmul %453, %450, %cst_419 {dimension_numbers = #tpu.dot_dimension_numbers<[1], [0], [0], [1], [0, 0, 1, 1], [], []>} : vector<4x128xf32>, vector<128x512xf32>, vector<4x512xf32> -> vector<4x512xf32>
    %455 = arith.addf %448, %454 : vector<4x512xf32>
    %c2_420 = arith.constant 2 : index
    %c0_421 = arith.constant 0 : index
    %c0_422 = arith.constant 0 : index
    %456 = vector.load %arg21[%c2_420, %c0_421, %c0_422] : memref<9x128x512xf32, #tpu.memory_space<vmem>>, vector<1x128x512xf32>
    %457 = vector.shape_cast %456 : vector<1x128x512xf32> to vector<128x512xf32>
    %c2_423 = arith.constant 2 : index
    %c0_424 = arith.constant 0 : index
    %c0_425 = arith.constant 0 : index
    %458 = vector.load %arg22[%c2_423, %c0_424, %c0_425] : memref<9x4x32xf32, #tpu.memory_space<vmem>>, vector<1x4x32xf32>
    %459 = vector.shape_cast %458 : vector<1x4x32xf32> to vector<4x32xf32>
    %cst_426 = arith.constant dense<0.000000e+00> : vector<4x128xf32>
    %460 = tpu.matmul %459, %442, %cst_426 {dimension_numbers = #tpu.dot_dimension_numbers<[1], [0], [0], [1], [0, 0, 1, 1], [], []>} : vector<4x32xf32>, vector<32x128xf32>, vector<4x128xf32> -> vector<4x128xf32>
    %cst_427 = arith.constant dense<0.000000e+00> : vector<4x512xf32>
    %461 = tpu.matmul %460, %457, %cst_427 {dimension_numbers = #tpu.dot_dimension_numbers<[1], [0], [0], [1], [0, 0, 1, 1], [], []>} : vector<4x128xf32>, vector<128x512xf32>, vector<4x512xf32> -> vector<4x512xf32>
    %462 = arith.addf %455, %461 : vector<4x512xf32>
    %c3_428 = arith.constant 3 : index
    %c0_429 = arith.constant 0 : index
    %c0_430 = arith.constant 0 : index
    %463 = vector.load %arg21[%c3_428, %c0_429, %c0_430] : memref<9x128x512xf32, #tpu.memory_space<vmem>>, vector<1x128x512xf32>
    %464 = vector.shape_cast %463 : vector<1x128x512xf32> to vector<128x512xf32>
    %c3_431 = arith.constant 3 : index
    %c0_432 = arith.constant 0 : index
    %c0_433 = arith.constant 0 : index
    %465 = vector.load %arg22[%c3_431, %c0_432, %c0_433] : memref<9x4x32xf32, #tpu.memory_space<vmem>>, vector<1x4x32xf32>
    %466 = vector.shape_cast %465 : vector<1x4x32xf32> to vector<4x32xf32>
    %cst_434 = arith.constant dense<0.000000e+00> : vector<4x128xf32>
    %467 = tpu.matmul %466, %442, %cst_434 {dimension_numbers = #tpu.dot_dimension_numbers<[1], [0], [0], [1], [0, 0, 1, 1], [], []>} : vector<4x32xf32>, vector<32x128xf32>, vector<4x128xf32> -> vector<4x128xf32>
    %cst_435 = arith.constant dense<0.000000e+00> : vector<4x512xf32>
    %468 = tpu.matmul %467, %464, %cst_435 {dimension_numbers = #tpu.dot_dimension_numbers<[1], [0], [0], [1], [0, 0, 1, 1], [], []>} : vector<4x128xf32>, vector<128x512xf32>, vector<4x512xf32> -> vector<4x512xf32>
    %469 = arith.addf %462, %468 : vector<4x512xf32>
    %c4_436 = arith.constant 4 : index
    %c0_437 = arith.constant 0 : index
    %c0_438 = arith.constant 0 : index
    %470 = vector.load %arg21[%c4_436, %c0_437, %c0_438] : memref<9x128x512xf32, #tpu.memory_space<vmem>>, vector<1x128x512xf32>
    %471 = vector.shape_cast %470 : vector<1x128x512xf32> to vector<128x512xf32>
    %c4_439 = arith.constant 4 : index
    %c0_440 = arith.constant 0 : index
    %c0_441 = arith.constant 0 : index
    %472 = vector.load %arg22[%c4_439, %c0_440, %c0_441] : memref<9x4x32xf32, #tpu.memory_space<vmem>>, vector<1x4x32xf32>
    %473 = vector.shape_cast %472 : vector<1x4x32xf32> to vector<4x32xf32>
    %cst_442 = arith.constant dense<0.000000e+00> : vector<4x128xf32>
    %474 = tpu.matmul %473, %442, %cst_442 {dimension_numbers = #tpu.dot_dimension_numbers<[1], [0], [0], [1], [0, 0, 1, 1], [], []>} : vector<4x32xf32>, vector<32x128xf32>, vector<4x128xf32> -> vector<4x128xf32>
    %cst_443 = arith.constant dense<0.000000e+00> : vector<4x512xf32>
    %475 = tpu.matmul %474, %471, %cst_443 {dimension_numbers = #tpu.dot_dimension_numbers<[1], [0], [0], [1], [0, 0, 1, 1], [], []>} : vector<4x128xf32>, vector<128x512xf32>, vector<4x512xf32> -> vector<4x512xf32>
    %476 = arith.addf %469, %475 : vector<4x512xf32>
    %c5_444 = arith.constant 5 : index
    %c0_445 = arith.constant 0 : index
    %c0_446 = arith.constant 0 : index
    %477 = vector.load %arg21[%c5_444, %c0_445, %c0_446] : memref<9x128x512xf32, #tpu.memory_space<vmem>>, vector<1x128x512xf32>
    %478 = vector.shape_cast %477 : vector<1x128x512xf32> to vector<128x512xf32>
    %c5_447 = arith.constant 5 : index
    %c0_448 = arith.constant 0 : index
    %c0_449 = arith.constant 0 : index
    %479 = vector.load %arg22[%c5_447, %c0_448, %c0_449] : memref<9x4x32xf32, #tpu.memory_space<vmem>>, vector<1x4x32xf32>
    %480 = vector.shape_cast %479 : vector<1x4x32xf32> to vector<4x32xf32>
    %cst_450 = arith.constant dense<0.000000e+00> : vector<4x128xf32>
    %481 = tpu.matmul %480, %442, %cst_450 {dimension_numbers = #tpu.dot_dimension_numbers<[1], [0], [0], [1], [0, 0, 1, 1], [], []>} : vector<4x32xf32>, vector<32x128xf32>, vector<4x128xf32> -> vector<4x128xf32>
    %cst_451 = arith.constant dense<0.000000e+00> : vector<4x512xf32>
    %482 = tpu.matmul %481, %478, %cst_451 {dimension_numbers = #tpu.dot_dimension_numbers<[1], [0], [0], [1], [0, 0, 1, 1], [], []>} : vector<4x128xf32>, vector<128x512xf32>, vector<4x512xf32> -> vector<4x512xf32>
    %483 = arith.addf %476, %482 : vector<4x512xf32>
    %c6_452 = arith.constant 6 : index
    %c0_453 = arith.constant 0 : index
    %c0_454 = arith.constant 0 : index
    %484 = vector.load %arg21[%c6_452, %c0_453, %c0_454] : memref<9x128x512xf32, #tpu.memory_space<vmem>>, vector<1x128x512xf32>
    %485 = vector.shape_cast %484 : vector<1x128x512xf32> to vector<128x512xf32>
    %c6_455 = arith.constant 6 : index
    %c0_456 = arith.constant 0 : index
    %c0_457 = arith.constant 0 : index
    %486 = vector.load %arg22[%c6_455, %c0_456, %c0_457] : memref<9x4x32xf32, #tpu.memory_space<vmem>>, vector<1x4x32xf32>
    %487 = vector.shape_cast %486 : vector<1x4x32xf32> to vector<4x32xf32>
    %cst_458 = arith.constant dense<0.000000e+00> : vector<4x128xf32>
    %488 = tpu.matmul %487, %442, %cst_458 {dimension_numbers = #tpu.dot_dimension_numbers<[1], [0], [0], [1], [0, 0, 1, 1], [], []>} : vector<4x32xf32>, vector<32x128xf32>, vector<4x128xf32> -> vector<4x128xf32>
    %cst_459 = arith.constant dense<0.000000e+00> : vector<4x512xf32>
    %489 = tpu.matmul %488, %485, %cst_459 {dimension_numbers = #tpu.dot_dimension_numbers<[1], [0], [0], [1], [0, 0, 1, 1], [], []>} : vector<4x128xf32>, vector<128x512xf32>, vector<4x512xf32> -> vector<4x512xf32>
    %490 = arith.addf %483, %489 : vector<4x512xf32>
    %c7_460 = arith.constant 7 : index
    %c0_461 = arith.constant 0 : index
    %c0_462 = arith.constant 0 : index
    %491 = vector.load %arg21[%c7_460, %c0_461, %c0_462] : memref<9x128x512xf32, #tpu.memory_space<vmem>>, vector<1x128x512xf32>
    %492 = vector.shape_cast %491 : vector<1x128x512xf32> to vector<128x512xf32>
    %c7_463 = arith.constant 7 : index
    %c0_464 = arith.constant 0 : index
    %c0_465 = arith.constant 0 : index
    %493 = vector.load %arg22[%c7_463, %c0_464, %c0_465] : memref<9x4x32xf32, #tpu.memory_space<vmem>>, vector<1x4x32xf32>
    %494 = vector.shape_cast %493 : vector<1x4x32xf32> to vector<4x32xf32>
    %cst_466 = arith.constant dense<0.000000e+00> : vector<4x128xf32>
    %495 = tpu.matmul %494, %442, %cst_466 {dimension_numbers = #tpu.dot_dimension_numbers<[1], [0], [0], [1], [0, 0, 1, 1], [], []>} : vector<4x32xf32>, vector<32x128xf32>, vector<4x128xf32> -> vector<4x128xf32>
    %cst_467 = arith.constant dense<0.000000e+00> : vector<4x512xf32>
    %496 = tpu.matmul %495, %492, %cst_467 {dimension_numbers = #tpu.dot_dimension_numbers<[1], [0], [0], [1], [0, 0, 1, 1], [], []>} : vector<4x128xf32>, vector<128x512xf32>, vector<4x512xf32> -> vector<4x512xf32>
    %497 = arith.addf %490, %496 : vector<4x512xf32>
    %c8_468 = arith.constant 8 : index
    %c0_469 = arith.constant 0 : index
    %c0_470 = arith.constant 0 : index
    %498 = vector.load %arg21[%c8_468, %c0_469, %c0_470] : memref<9x128x512xf32, #tpu.memory_space<vmem>>, vector<1x128x512xf32>
    %499 = vector.shape_cast %498 : vector<1x128x512xf32> to vector<128x512xf32>
    %c8_471 = arith.constant 8 : index
    %c0_472 = arith.constant 0 : index
    %c0_473 = arith.constant 0 : index
    %500 = vector.load %arg22[%c8_471, %c0_472, %c0_473] : memref<9x4x32xf32, #tpu.memory_space<vmem>>, vector<1x4x32xf32>
    %501 = vector.shape_cast %500 : vector<1x4x32xf32> to vector<4x32xf32>
    %cst_474 = arith.constant dense<0.000000e+00> : vector<4x128xf32>
    %502 = tpu.matmul %501, %442, %cst_474 {dimension_numbers = #tpu.dot_dimension_numbers<[1], [0], [0], [1], [0, 0, 1, 1], [], []>} : vector<4x32xf32>, vector<32x128xf32>, vector<4x128xf32> -> vector<4x128xf32>
    %cst_475 = arith.constant dense<0.000000e+00> : vector<4x512xf32>
    %503 = tpu.matmul %502, %499, %cst_475 {dimension_numbers = #tpu.dot_dimension_numbers<[1], [0], [0], [1], [0, 0, 1, 1], [], []>} : vector<4x128xf32>, vector<128x512xf32>, vector<4x512xf32> -> vector<4x512xf32>
    %504 = arith.addf %497, %503 : vector<4x512xf32>
    %cst_476 = arith.constant dense<0.000000e+00> : vector<4xf32>
    %505 = vector.multi_reduction <add>, %504, %cst_476 [1] : vector<4x512xf32> to vector<4xf32>
    %506 = vector.shape_cast %505 : vector<4xf32> to vector<4x1xf32>
    %cst_477 = arith.constant 5.120000e+02 : f32
    %507 = vector.broadcast %cst_477 : f32 to vector<4x1xf32>
    %508 = arith.divf %506, %507 : vector<4x1xf32>
    %509 = vector.broadcast %508 : vector<4x1xf32> to vector<4x512xf32>
    %510 = arith.subf %504, %509 : vector<4x512xf32>
    %511 = arith.mulf %510, %510 : vector<4x512xf32>
    %cst_478 = arith.constant dense<0.000000e+00> : vector<4xf32>
    %512 = vector.multi_reduction <add>, %511, %cst_478 [1] : vector<4x512xf32> to vector<4xf32>
    %513 = vector.shape_cast %512 : vector<4xf32> to vector<4x1xf32>
    %cst_479 = arith.constant 5.120000e+02 : f32
    %514 = vector.broadcast %cst_479 : f32 to vector<4x1xf32>
    %515 = arith.divf %513, %514 : vector<4x1xf32>
    %516 = vector.broadcast %508 : vector<4x1xf32> to vector<4x512xf32>
    %517 = arith.subf %504, %516 : vector<4x512xf32>
    %cst_480 = arith.constant 9.99999974E-6 : f32
    %518 = vector.broadcast %cst_480 : f32 to vector<4x1xf32>
    %519 = arith.addf %515, %518 : vector<4x1xf32>
    %520 = math.rsqrt %519 : vector<4x1xf32>
    %521 = vector.broadcast %520 : vector<4x1xf32> to vector<4x512xf32>
    %522 = arith.mulf %517, %521 : vector<4x512xf32>
    %c0_481 = arith.constant 0 : index
    %c0_482 = arith.constant 0 : index
    %523 = vector.load %arg23[%c0_481, %c0_482] : memref<4x1xf32, #tpu.memory_space<vmem>>, vector<4x1xf32>
    %524 = vector.broadcast %523 : vector<4x1xf32> to vector<4x512xf32>
    %525 = arith.mulf %522, %524 : vector<4x512xf32>
    %c0_483 = arith.constant 0 : index
    %c0_484 = arith.constant 0 : index
    %526 = vector.load %arg24[%c0_483, %c0_484] : memref<4x1xf32, #tpu.memory_space<vmem>>, vector<4x1xf32>
    %527 = vector.broadcast %526 : vector<4x1xf32> to vector<4x512xf32>
    %528 = arith.addf %525, %527 : vector<4x512xf32>
    %529 = arith.negf %528 : vector<4x512xf32>
    %530 = math.exp %529 : vector<4x512xf32>
    %cst_485 = arith.constant 1.000000e+00 : f32
    %531 = vector.broadcast %cst_485 : f32 to vector<4x512xf32>
    %532 = arith.addf %531, %530 : vector<4x512xf32>
    %533 = arith.divf %531, %532 : vector<4x512xf32>
    %534 = vector.extract_strided_slice %533 {offsets = [0, 0], sizes = [4, 256], strides = [1, 1]} : vector<4x512xf32> to vector<4x256xf32>
    %c0_486 = arith.constant 0 : index
    %c0_487 = arith.constant 0 : index
    %535 = vector.load %arg25[%c0_486, %c0_487] : memref<8x256xf32, #tpu.memory_space<vmem>>, vector<4x256xf32>
    tpu.vector_store %arg25[%c0_486, %c0_487], %534 {strides = array<i32>} : memref<8x256xf32, #tpu.memory_space<vmem>>, vector<4x256xf32>,
    %536 = vector.extract_strided_slice %533 {offsets = [0, 256], sizes = [4, 256], strides = [1, 1]} : vector<4x512xf32> to vector<4x256xf32>
    %c4_488 = arith.constant 4 : index
    %c0_489 = arith.constant 0 : index
    %537 = vector.load %arg25[%c4_488, %c0_489] : memref<8x256xf32, #tpu.memory_space<vmem>>, vector<4x256xf32>
    tpu.vector_store %arg25[%c4_488, %c0_489], %536 {strides = array<i32>} : memref<8x256xf32, #tpu.memory_space<vmem>>, vector<4x256xf32>,
    return
  }
}

</mosaic_0001>

<llo_original>
// kernel: conv2d_autoencoder_forward.1
$region0: #{conv2d_autoencoder_forward.1}
  #allocation0 [shape = 'u32[]', space=smem, size = 0x4, offset = 0x4, fixed_abs, tag = 'smem constant byte address 0x4 - core index']
  #allocation1 [shape = 'u32[72,128]{1,0:T(1,128)}', space=vmem, size = 0x9000, scoped, tag = 'internal scratch']
  %s0 = inlined_call_operand.vmem [shape: f32[8,256], index: 0, kind: input, shape index: {}]
  %s1 = inlined_call_operand.vmem [shape: f32[9,512,128], index: 1, kind: input, shape index: {}]
  %s2 = inlined_call_operand.vmem [shape: f32[9,32,4], index: 2, kind: input, shape index: {}]
  %s3 = inlined_call_operand.vmem [shape: f32[32,1], index: 3, kind: input, shape index: {}]
  %s4 = inlined_call_operand.vmem [shape: f32[32,1], index: 4, kind: input, shape index: {}]
  %s5 = inlined_call_operand.vmem [shape: f32[9,128,32], index: 5, kind: input, shape index: {}]
  %s6 = inlined_call_operand.vmem [shape: f32[9,64,32], index: 6, kind: input, shape index: {}]
  %s7 = inlined_call_operand.vmem [shape: f32[64,1], index: 7, kind: input, shape index: {}]
  %s8 = inlined_call_operand.vmem [shape: f32[64,1], index: 8, kind: input, shape index: {}]
  %s9 = inlined_call_operand.vmem [shape: f32[9,32,8], index: 9, kind: input, shape index: {}]
  %s10 = inlined_call_operand.vmem [shape: f32[9,128,64], index: 10, kind: input, shape index: {}]
  %s11 = inlined_call_operand.vmem [shape: f32[128,1], index: 11, kind: input, shape index: {}]
  %s12 = inlined_call_operand.vmem [shape: f32[128,1], index: 12, kind: input, shape index: {}]
  %s13 = inlined_call_operand.hbm [shape: f32[9,8,32], index: 13, kind: input, shape index: {}]
  %s14 = inlined_call_operand.vmem [shape: f32[9,64,128], index: 14, kind: input, shape index: {}]
  %s15 = inlined_call_operand.vmem [shape: f32[64,1], index: 15, kind: input, shape index: {}]
  %s16 = inlined_call_operand.vmem [shape: f32[64,1], index: 16, kind: input, shape index: {}]
  %s17 = inlined_call_operand.vmem [shape: f32[9,32,128], index: 17, kind: input, shape index: {}]
  %s18 = inlined_call_operand.hbm [shape: f32[9,32,64], index: 18, kind: input, shape index: {}]
  %s19 = inlined_call_operand.vmem [shape: f32[32,1], index: 19, kind: input, shape index: {}]
  %s20 = inlined_call_operand.vmem [shape: f32[32,1], index: 20, kind: input, shape index: {}]
  %s21 = inlined_call_operand.hbm [shape: f32[9,128,512], index: 21, kind: input, shape index: {}]
  %s22 = inlined_call_operand.vmem [shape: f32[9,4,32], index: 22, kind: input, shape index: {}]
  %s23 = inlined_call_operand.vmem [shape: f32[4,1], index: 23, kind: input, shape index: {}]
  %s24 = inlined_call_operand.vmem [shape: f32[4,1], index: 24, kind: input, shape index: {}]
  %s25 = inlined_call_operand.vmem [shape: f32[8,256], index: 25, kind: output, shape index: {}]
  %s26 = sld [smem:[#allocation0]]
  $region122: #{conv2d_autoencoder_forward.1} parent=0
    _
  %s28 = ssub.s32 1, %s26
  %s29 = scalar_select 0, %s28, %s26
  $region1: #{conv2d_autoencoder_forward.1} parent=0
    #allocation2 [shape = 'u8[36864]{0}', space=vmem, size = 0x9000, scoped, tag = 'input window, operand 13, single buffered']
    #allocation3 [shape = 's32[1]{0}', space=sflag, size = 0x4, scoped, tag = 'scoped memory for conv2d_autoencoder_forward.1']
    #allocation4 [shape = 'u8[147456]{0}', space=vmem, size = 0x24000, scoped, tag = 'input window, operand 18, single buffered']
    #allocation5 [shape = 's32[1]{0}', space=sflag, size = 0x4, scoped, tag = 'scoped memory for conv2d_autoencoder_forward.1']
    #allocation6 [shape = 'u8[2359296]{0}', space=vmem, size = 0x240000, scoped, tag = 'input window, operand 21, single buffered']
    %30 = vsyncpa [#allocation3], 0
    %31 = vsyncpa [#allocation5], 0
    // Predicated region
    $region2: #{conv2d_autoencoder_forward.1} parent=1 // pred_check
      _
    $region3: #{conv2d_autoencoder_forward.1} parent=1 // pred_check_branch
      %33 = sbr.rel (0) target = $region5
    $region4: #{conv2d_autoencoder_forward.1} parent=1 // pred_region
      _
    $region5: #{conv2d_autoencoder_forward.1} parent=1 // pred_fallthru
      _
    // Predicated region
    $region6: #{conv2d_autoencoder_forward.1} parent=1 // pred_check
      _
    $region7: #{conv2d_autoencoder_forward.1} parent=1 // pred_check_branch
      %35 = sbr.rel (0) target = $region9
    $region8: #{conv2d_autoencoder_forward.1} parent=1 // pred_region
      _
    $region9: #{conv2d_autoencoder_forward.1} parent=1 // pred_fallthru
      _
    // Predicated region
    $region10: #{conv2d_autoencoder_forward.1} parent=1 // pred_check
      _
    $region11: #{conv2d_autoencoder_forward.1} parent=1 // pred_check_branch
      %37 = sbr.rel (0) target = $region13
    $region12: #{conv2d_autoencoder_forward.1} parent=1 // pred_region
      _
    $region13: #{conv2d_autoencoder_forward.1} parent=1 // pred_fallthru
      _
    // Predicated region
    $region14: #{conv2d_autoencoder_forward.1} parent=1 // pred_check
      _
    $region15: #{conv2d_autoencoder_forward.1} parent=1 // pred_check_branch
      %39 = sbr.rel (0) target = $region17
    $region16: #{conv2d_autoencoder_forward.1} parent=1 // pred_region
      _
    $region17: #{conv2d_autoencoder_forward.1} parent=1 // pred_fallthru
      _
    // Predicated region
    $region18: #{conv2d_autoencoder_forward.1} parent=1 // pred_check
      _
    $region19: #{conv2d_autoencoder_forward.1} parent=1 // pred_check_branch
      %41 = sbr.rel (0) target = $region21
    $region20: #{conv2d_autoencoder_forward.1} parent=1 // pred_region
      _
    $region21: #{conv2d_autoencoder_forward.1} parent=1 // pred_fallthru
      _
    // Predicated region
    $region22: #{conv2d_autoencoder_forward.1} parent=1 // pred_check
      _
    $region23: #{conv2d_autoencoder_forward.1} parent=1 // pred_check_branch
      %43 = sbr.rel (0) target = $region25
    $region24: #{conv2d_autoencoder_forward.1} parent=1 // pred_region
      _
    $region25: #{conv2d_autoencoder_forward.1} parent=1 // pred_fallthru
      _
    // Predicated region
    $region26: #{conv2d_autoencoder_forward.1} parent=1 // pred_check
      _
    $region27: #{conv2d_autoencoder_forward.1} parent=1 // pred_check_branch
      %45 = sbr.rel (0) target = $region29
    $region28: #{conv2d_autoencoder_forward.1} parent=1 // pred_region
      _
    $region29: #{conv2d_autoencoder_forward.1} parent=1 // pred_fallthru
      _
    // Predicated region
    $region30: #{conv2d_autoencoder_forward.1} parent=1 // pred_check
      _
    $region31: #{conv2d_autoencoder_forward.1} parent=1 // pred_check_branch
      %47 = sbr.rel (0) target = $region33
    $region32: #{conv2d_autoencoder_forward.1} parent=1 // pred_region
      _
    $region33: #{conv2d_autoencoder_forward.1} parent=1 // pred_fallthru
      _
    // Predicated region
    $region34: #{conv2d_autoencoder_forward.1} parent=1 // pred_check
      _
    $region35: #{conv2d_autoencoder_forward.1} parent=1 // pred_check_branch
      %49 = sbr.rel (0) target = $region37
    $region36: #{conv2d_autoencoder_forward.1} parent=1 // pred_region
      _
    $region37: #{conv2d_autoencoder_forward.1} parent=1 // pred_fallthru
      _
    // Predicated region
    $region38: #{conv2d_autoencoder_forward.1} parent=1 // pred_check
      _
    $region39: #{conv2d_autoencoder_forward.1} parent=1 // pred_check_branch
      %51 = sbr.rel (0) target = $region41
    $region40: #{conv2d_autoencoder_forward.1} parent=1 // pred_region
      _
    $region41: #{conv2d_autoencoder_forward.1} parent=1 // pred_fallthru
      _
    // Predicated region
    $region42: #{conv2d_autoencoder_forward.1} parent=1 // pred_check
      _
    $region43: #{conv2d_autoencoder_forward.1} parent=1 // pred_check_branch
      %53 = sbr.rel (0) target = $region45
    $region44: #{conv2d_autoencoder_forward.1} parent=1 // pred_region
      _
    $region45: #{conv2d_autoencoder_forward.1} parent=1 // pred_fallthru
      _
    // Predicated region
    $region46: #{conv2d_autoencoder_forward.1} parent=1 // pred_check
      _
    $region47: #{conv2d_autoencoder_forward.1} parent=1 // pred_check_branch
      %55 = sbr.rel (0) target = $region49
    $region48: #{conv2d_autoencoder_forward.1} parent=1 // pred_region
      _
    $region49: #{conv2d_autoencoder_forward.1} parent=1 // pred_fallthru
      _
    // Predicated region
    $region50: #{conv2d_autoencoder_forward.1} parent=1 // pred_check
      _
    $region51: #{conv2d_autoencoder_forward.1} parent=1 // pred_check_branch
      %57 = sbr.rel (0) target = $region53
    $region52: #{conv2d_autoencoder_forward.1} parent=1 // pred_region
      _
    $region53: #{conv2d_autoencoder_forward.1} parent=1 // pred_fallthru
      _
    // Predicated region
    $region54: #{conv2d_autoencoder_forward.1} parent=1 // pred_check
      _
    $region55: #{conv2d_autoencoder_forward.1} parent=1 // pred_check_branch
      %59 = sbr.rel (0) target = $region57
    $region56: #{conv2d_autoencoder_forward.1} parent=1 // pred_region
      %61 = vsyncadd [#allocation3], 0
      %s62 = sshll.u32 %s13, 4
      %s63 = int_to_ptr.hbm [resolvable:$true] %s62
      %s64 = sshll.u32 [#allocation2], 4
      %s65 = int_to_ptr.vmem [resolvable:$true] %s64
      %70 = dma.hbm_to_vmem [thread:$0]  %s63, 1152, %s65, [#allocation3], 128, 128, 8
    $region57: #{conv2d_autoencoder_forward.1} parent=1 // pred_fallthru
      _
    // Predicated region
    $region58: #{conv2d_autoencoder_forward.1} parent=1 // pred_check
      _
    $region59: #{conv2d_autoencoder_forward.1} parent=1 // pred_check_branch
      %72 = sbr.rel (0) target = $region61
    $region60: #{conv2d_autoencoder_forward.1} parent=1 // pred_region
      _
    $region61: #{conv2d_autoencoder_forward.1} parent=1 // pred_fallthru
      _
    // Predicated region
    $region62: #{conv2d_autoencoder_forward.1} parent=1 // pred_check
      _
    $region63: #{conv2d_autoencoder_forward.1} parent=1 // pred_check_branch
      %74 = sbr.rel (0) target = $region65
    $region64: #{conv2d_autoencoder_forward.1} parent=1 // pred_region
      _
    $region65: #{conv2d_autoencoder_forward.1} parent=1 // pred_fallthru
      _
    // Predicated region
    $region66: #{conv2d_autoencoder_forward.1} parent=1 // pred_check
      _
    $region67: #{conv2d_autoencoder_forward.1} parent=1 // pred_check_branch
      %76 = sbr.rel (0) target = $region69
    $region68: #{conv2d_autoencoder_forward.1} parent=1 // pred_region
      _
    $region69: #{conv2d_autoencoder_forward.1} parent=1 // pred_fallthru
      _
    // Predicated region
    $region70: #{conv2d_autoencoder_forward.1} parent=1 // pred_check
      _
    $region71: #{conv2d_autoencoder_forward.1} parent=1 // pred_check_branch
      %78 = sbr.rel (0) target = $region73
    $region72: #{conv2d_autoencoder_forward.1} parent=1 // pred_region
      _
    $region73: #{conv2d_autoencoder_forward.1} parent=1 // pred_fallthru
      _
    // Predicated region
    $region74: #{conv2d_autoencoder_forward.1} parent=1 // pred_check
      _
    $region75: #{conv2d_autoencoder_forward.1} parent=1 // pred_check_branch
      %80 = sbr.rel (0) target = $region77
    $region76: #{conv2d_autoencoder_forward.1} parent=1 // pred_region
      %82 = vsyncadd [#allocation5], 0
      %s83 = sshll.u32 %s18, 4
      %s84 = int_to_ptr.hbm [resolvable:$true] %s83
      %s85 = sshll.u32 [#allocation4], 4
      %s86 = int_to_ptr.vmem [resolvable:$true] %s85
      %91 = dma.hbm_to_vmem [thread:$0]  %s84, 4608, %s86, [#allocation5], 128, 128, 8
    $region77: #{conv2d_autoencoder_forward.1} parent=1 // pred_fallthru
      _
    // Predicated region
    $region78: #{conv2d_autoencoder_forward.1} parent=1 // pred_check
      _
    $region79: #{conv2d_autoencoder_forward.1} parent=1 // pred_check_branch
      %93 = sbr.rel (0) target = $region81
    $region80: #{conv2d_autoencoder_forward.1} parent=1 // pred_region
      _
    $region81: #{conv2d_autoencoder_forward.1} parent=1 // pred_fallthru
      _
    // Predicated region
    $region82: #{conv2d_autoencoder_forward.1} parent=1 // pred_check
      _
    $region83: #{conv2d_autoencoder_forward.1} parent=1 // pred_check_branch
      %95 = sbr.rel (0) target = $region85
    $region84: #{conv2d_autoencoder_forward.1} parent=1 // pred_region
      _
    $region85: #{conv2d_autoencoder_forward.1} parent=1 // pred_fallthru
      _
    // Predicated region
    $region86: #{conv2d_autoencoder_forward.1} parent=1 // pred_check
      _
    $region87: #{conv2d_autoencoder_forward.1} parent=1 // pred_check_branch
      %97 = sbr.rel (0) target = $region89
    $region88: #{conv2d_autoencoder_forward.1} parent=1 // pred_region
      %99 = vsyncadd [#allocation5], 0
      %s100 = sshll.u32 %s21, 4
      %s101 = int_to_ptr.hbm [resolvable:$true] %s100
      %s102 = sshll.u32 [#allocation6], 4
      %s103 = int_to_ptr.vmem [resolvable:$true] %s102
      %108 = dma.hbm_to_vmem [thread:$0]  %s101, 73728, %s103, [#allocation5], 512, 512, 32
    $region89: #{conv2d_autoencoder_forward.1} parent=1 // pred_fallthru
      _
    // Predicated region
    $region90: #{conv2d_autoencoder_forward.1} parent=1 // pred_check
      _
    $region91: #{conv2d_autoencoder_forward.1} parent=1 // pred_check_branch
      %110 = sbr.rel (0) target = $region93
    $region92: #{conv2d_autoencoder_forward.1} parent=1 // pred_region
      _
    $region93: #{conv2d_autoencoder_forward.1} parent=1 // pred_fallthru
      _
    // Predicated region
    $region94: #{conv2d_autoencoder_forward.1} parent=1 // pred_check
      _
    $region95: #{conv2d_autoencoder_forward.1} parent=1 // pred_check_branch
      %112 = sbr.rel (0) target = $region97
    $region96: #{conv2d_autoencoder_forward.1} parent=1 // pred_region
      _
    $region97: #{conv2d_autoencoder_forward.1} parent=1 // pred_fallthru
      _
    // Predicated region
    $region98: #{conv2d_autoencoder_forward.1} parent=1 // pred_check
      _
    $region99: #{conv2d_autoencoder_forward.1} parent=1 // pred_check_branch
      %114 = sbr.rel (0) target = $region101
    $region100: #{conv2d_autoencoder_forward.1} parent=1 // pred_region
      _
    $region101: #{conv2d_autoencoder_forward.1} parent=1 // pred_fallthru
      _
    // Predicated region
    $region102: #{conv2d_autoencoder_forward.1} parent=1 // pred_check
      _
    $region103: #{conv2d_autoencoder_forward.1} parent=1 // pred_check_branch
      %116 = sbr.rel (0) target = $region105
    $region104: #{conv2d_autoencoder_forward.1} parent=1 // pred_region
      %118 = dma.done [#allocation3], 1152
    $region105: #{conv2d_autoencoder_forward.1} parent=1 // pred_fallthru
      _
    // Predicated region
    $region106: #{conv2d_autoencoder_forward.1} parent=1 // pred_check
      _
    $region107: #{conv2d_autoencoder_forward.1} parent=1 // pred_check_branch
      %120 = sbr.rel (0) target = $region109
    $region108: #{conv2d_autoencoder_forward.1} parent=1 // pred_region
      %122 = dma.done [#allocation5], 4608
    $region109: #{conv2d_autoencoder_forward.1} parent=1 // pred_fallthru
      _
    // Predicated region
    $region110: #{conv2d_autoencoder_forward.1} parent=1 // pred_check
      _
    $region111: #{conv2d_autoencoder_forward.1} parent=1 // pred_check_branch
      %124 = sbr.rel (0) target = $region113
    $region112: #{conv2d_autoencoder_forward.1} parent=1 // pred_region
      %126 = dma.done [#allocation5], 73728
    $region113: #{conv2d_autoencoder_forward.1} parent=1 // pred_fallthru
      _
    %v127 = vld [vmem:[%s0] sm:$0xf]
    %v128 = vld [vmem:[%s0 + $0x8] sm:$0xf]
    %v129 = vld [vmem:[%s0] sm:$0xf0]
    %v130 = vld [vmem:[%s0 + $0x8] sm:$0xf0]
    %v133 = vrot.slane %v129, 4
    %v134 = vrot.slane %v130, 4
    %v137 = vld [vmem:[%s1] sm:$0xff]
    %v138 = vld [vmem:[%s1 + $0x8] sm:$0xff]
    %v139 = vld [vmem:[%s1 + $0x10] sm:$0xff]
    %v140 = vld [vmem:[%s1 + $0x18] sm:$0xff]
    %v141 = vld [vmem:[%s1 + $0x20] sm:$0xff]
    %v142 = vld [vmem:[%s1 + $0x28] sm:$0xff]
    %v143 = vld [vmem:[%s1 + $0x30] sm:$0xff]
    %v144 = vld [vmem:[%s1 + $0x38] sm:$0xff]
    %v145 = vld [vmem:[%s1 + $0x40] sm:$0xff]
    %v146 = vld [vmem:[%s1 + $0x48] sm:$0xff]
    %v147 = vld [vmem:[%s1 + $0x50] sm:$0xff]
    %v148 = vld [vmem:[%s1 + $0x58] sm:$0xff]
    %v149 = vld [vmem:[%s1 + $0x60] sm:$0xff]
    %v150 = vld [vmem:[%s1 + $0x68] sm:$0xff]
    %v151 = vld [vmem:[%s1 + $0x70] sm:$0xff]
    %v152 = vld [vmem:[%s1 + $0x78] sm:$0xff]
    %v153 = vld [vmem:[%s1 + $0x80] sm:$0xff]
    %v154 = vld [vmem:[%s1 + $0x88] sm:$0xff]
    %v155 = vld [vmem:[%s1 + $0x90] sm:$0xff]
    %v156 = vld [vmem:[%s1 + $0x98] sm:$0xff]
    %v157 = vld [vmem:[%s1 + $0xa0] sm:$0xff]
    %v158 = vld [vmem:[%s1 + $0xa8] sm:$0xff]
    %v159 = vld [vmem:[%s1 + $0xb0] sm:$0xff]
    %v160 = vld [vmem:[%s1 + $0xb8] sm:$0xff]
    %v161 = vld [vmem:[%s1 + $0xc0] sm:$0xff]
    %v162 = vld [vmem:[%s1 + $0xc8] sm:$0xff]
    %v163 = vld [vmem:[%s1 + $0xd0] sm:$0xff]
    %v164 = vld [vmem:[%s1 + $0xd8] sm:$0xff]
    %v165 = vld [vmem:[%s1 + $0xe0] sm:$0xff]
    %v166 = vld [vmem:[%s1 + $0xe8] sm:$0xff]
    %v167 = vld [vmem:[%s1 + $0xf0] sm:$0xff]
    %v168 = vld [vmem:[%s1 + $0xf8] sm:$0xff]
    %v169 = vld [vmem:[%s1 + $0x100] sm:$0xff]
    %v170 = vld [vmem:[%s1 + $0x108] sm:$0xff]
    %v171 = vld [vmem:[%s1 + $0x110] sm:$0xff]
    %v172 = vld [vmem:[%s1 + $0x118] sm:$0xff]
    %v173 = vld [vmem:[%s1 + $0x120] sm:$0xff]
    %v174 = vld [vmem:[%s1 + $0x128] sm:$0xff]
    %v175 = vld [vmem:[%s1 + $0x130] sm:$0xff]
    %v176 = vld [vmem:[%s1 + $0x138] sm:$0xff]
    %v177 = vld [vmem:[%s1 + $0x140] sm:$0xff]
    %v178 = vld [vmem:[%s1 + $0x148] sm:$0xff]
    %v179 = vld [vmem:[%s1 + $0x150] sm:$0xff]
    %v180 = vld [vmem:[%s1 + $0x158] sm:$0xff]
    %v181 = vld [vmem:[%s1 + $0x160] sm:$0xff]
    %v182 = vld [vmem:[%s1 + $0x168] sm:$0xff]
    %v183 = vld [vmem:[%s1 + $0x170] sm:$0xff]
    %v184 = vld [vmem:[%s1 + $0x178] sm:$0xff]
    %v185 = vld [vmem:[%s1 + $0x180] sm:$0xff]
    %v186 = vld [vmem:[%s1 + $0x188] sm:$0xff]
    %v187 = vld [vmem:[%s1 + $0x190] sm:$0xff]
    %v188 = vld [vmem:[%s1 + $0x198] sm:$0xff]
    %v189 = vld [vmem:[%s1 + $0x1a0] sm:$0xff]
    %v190 = vld [vmem:[%s1 + $0x1a8] sm:$0xff]
    %v191 = vld [vmem:[%s1 + $0x1b0] sm:$0xff]
    %v192 = vld [vmem:[%s1 + $0x1b8] sm:$0xff]
    %v193 = vld [vmem:[%s1 + $0x1c0] sm:$0xff]
    %v194 = vld [vmem:[%s1 + $0x1c8] sm:$0xff]
    %v195 = vld [vmem:[%s1 + $0x1d0] sm:$0xff]
    %v196 = vld [vmem:[%s1 + $0x1d8] sm:$0xff]
    %v197 = vld [vmem:[%s1 + $0x1e0] sm:$0xff]
    %v198 = vld [vmem:[%s1 + $0x1e8] sm:$0xff]
    %v199 = vld [vmem:[%s1 + $0x1f0] sm:$0xff]
    %v200 = vld [vmem:[%s1 + $0x1f8] sm:$0xff]
    %v201 = vld [vmem:[%s2] sm:$0xff]
    %v202 = vld [vmem:[%s2 + $0x8] sm:$0xff]
    %v203 = vld [vmem:[%s2 + $0x10] sm:$0xff]
    %v204 = vld [vmem:[%s2 + $0x18] sm:$0xff]
    %205 = vmatpush.msra.mxu0 %v152
    %206 = vmatpush.msra.mxu0 %v151
    %207 = vmatpush.msra.mxu0 %v150
    %208 = vmatpush.msra.mxu0 %v149
    %209 = vmatpush.msra.mxu0 %v148
    %210 = vmatpush.msra.mxu0 %v147
    %211 = vmatpush.msra.mxu0 %v146
    %212 = vmatpush.msra.mxu0 %v145
    %213 = vmatpush.msra.mxu0 %v144
    %214 = vmatpush.msra.mxu0 %v143
    %215 = vmatpush.msra.mxu0 %v142
    %216 = vmatpush.msra.mxu0 %v141
    %217 = vmatpush.msra.mxu0 %v140
    %218 = vmatpush.msra.mxu0 %v139
    %219 = vmatpush.msra.mxu0 %v138
    %220 = vmatpush.msra.mxu0 %v137
    %221 = vmatmul.f32.gmra.mxu0 %v127
    %v222 = vpop.f32.mrf.mxu0
    %v223 = vadd.f32 0.0, %v222
    %224 = vdwg.mxu0
    %225 = vmatpush.msra.mxu0 %v168
    %226 = vmatpush.msra.mxu0 %v167
    %227 = vmatpush.msra.mxu0 %v166
    %228 = vmatpush.msra.mxu0 %v165
    %229 = vmatpush.msra.mxu0 %v164
    %230 = vmatpush.msra.mxu0 %v163
    %231 = vmatpush.msra.mxu0 %v162
    %232 = vmatpush.msra.mxu0 %v161
    %233 = vmatpush.msra.mxu0 %v160
    %234 = vmatpush.msra.mxu0 %v159
    %235 = vmatpush.msra.mxu0 %v158
    %236 = vmatpush.msra.mxu0 %v157
    %237 = vmatpush.msra.mxu0 %v156
    %238 = vmatpush.msra.mxu0 %v155
    %239 = vmatpush.msra.mxu0 %v154
    %240 = vmatpush.msra.mxu0 %v153
    %241 = vmatmul.f32.gmra.mxu0 %v128
    %v242 = vpop.f32.mrf.mxu0
    %v243 = vadd.f32 %v223, %v242
    %244 = vdwg.mxu0
    %245 = vmatpush.msra.mxu0 %v184
    %246 = vmatpush.msra.mxu0 %v183
    %247 = vmatpush.msra.mxu0 %v182
    %248 = vmatpush.msra.mxu0 %v181
    %249 = vmatpush.msra.mxu0 %v180
    %250 = vmatpush.msra.mxu0 %v179
    %251 = vmatpush.msra.mxu0 %v178
    %252 = vmatpush.msra.mxu0 %v177
    %253 = vmatpush.msra.mxu0 %v176
    %254 = vmatpush.msra.mxu0 %v175
    %255 = vmatpush.msra.mxu0 %v174
    %256 = vmatpush.msra.mxu0 %v173
    %257 = vmatpush.msra.mxu0 %v172
    %258 = vmatpush.msra.mxu0 %v171
    %259 = vmatpush.msra.mxu0 %v170
    %260 = vmatpush.msra.mxu0 %v169
    %261 = vmatmul.f32.gmra.mxu0 %v133
    %v262 = vpop.f32.mrf.mxu0
    %v263 = vadd.f32 %v243, %v262
    %264 = vdwg.mxu0
    %265 = vmatpush.msra.mxu0 %v200
    %266 = vmatpush.msra.mxu0 %v199
    %267 = vmatpush.msra.mxu0 %v198
    %268 = vmatpush.msra.mxu0 %v197
    %269 = vmatpush.msra.mxu0 %v196
    %270 = vmatpush.msra.mxu0 %v195
    %271 = vmatpush.msra.mxu0 %v194
    %272 = vmatpush.msra.mxu0 %v193
    %273 = vmatpush.msra.mxu0 %v192
    %274 = vmatpush.msra.mxu0 %v191
    %275 = vmatpush.msra.mxu0 %v190
    %276 = vmatpush.msra.mxu0 %v189
    %277 = vmatpush.msra.mxu0 %v188
    %278 = vmatpush.msra.mxu0 %v187
    %279 = vmatpush.msra.mxu0 %v186
    %280 = vmatpush.msra.mxu0 %v185
    %281 = vmatmul.f32.gmra.mxu0 %v134
    %v282 = vpop.f32.mrf.mxu0
    %v283 = vadd.f32 %v263, %v282
    %284 = vdwg.mxu0
    %s285 = scalar_lea.vmem %s1, 512
    %v286 = vld [vmem:[%s285] sm:$0xff]
    %v287 = vld [vmem:[%s285 + $0x8] sm:$0xff]
    %v288 = vld [vmem:[%s285 + $0x10] sm:$0xff]
    %v289 = vld [vmem:[%s285 + $0x18] sm:$0xff]
    %v290 = vld [vmem:[%s285 + $0x20] sm:$0xff]
    %v291 = vld [vmem:[%s285 + $0x28] sm:$0xff]
    %v292 = vld [vmem:[%s285 + $0x30] sm:$0xff]
    %v293 = vld [vmem:[%s285 + $0x38] sm:$0xff]
    %v294 = vld [vmem:[%s285 + $0x40] sm:$0xff]
    %v295 = vld [vmem:[%s285 + $0x48] sm:$0xff]
    %v296 = vld [vmem:[%s285 + $0x50] sm:$0xff]
    %v297 = vld [vmem:[%s285 + $0x58] sm:$0xff]
    %v298 = vld [vmem:[%s285 + $0x60] sm:$0xff]
    %v299 = vld [vmem:[%s285 + $0x68] sm:$0xff]
    %v300 = vld [vmem:[%s285 + $0x70] sm:$0xff]
    %v301 = vld [vmem:[%s285 + $0x78] sm:$0xff]
    %v302 = vld [vmem:[%s285 + $0x80] sm:$0xff]
    %v303 = vld [vmem:[%s285 + $0x88] sm:$0xff]
    %v304 = vld [vmem:[%s285 + $0x90] sm:$0xff]
    %v305 = vld [vmem:[%s285 + $0x98] sm:$0xff]
    %v306 = vld [vmem:[%s285 + $0xa0] sm:$0xff]
    %v307 = vld [vmem:[%s285 + $0xa8] sm:$0xff]
    %v308 = vld [vmem:[%s285 + $0xb0] sm:$0xff]
    %v309 = vld [vmem:[%s285 + $0xb8] sm:$0xff]
    %v310 = vld [vmem:[%s285 + $0xc0] sm:$0xff]
    %v311 = vld [vmem:[%s285 + $0xc8] sm:$0xff]
    %v312 = vld [vmem:[%s285 + $0xd0] sm:$0xff]
    %v313 = vld [vmem:[%s285 + $0xd8] sm:$0xff]
    %v314 = vld [vmem:[%s285 + $0xe0] sm:$0xff]
    %v315 = vld [vmem:[%s285 + $0xe8] sm:$0xff]
    %v316 = vld [vmem:[%s285 + $0xf0] sm:$0xff]
    %v317 = vld [vmem:[%s285 + $0xf8] sm:$0xff]
    %v318 = vld [vmem:[%s285 + $0x100] sm:$0xff]
    %v319 = vld [vmem:[%s285 + $0x108] sm:$0xff]
    %v320 = vld [vmem:[%s285 + $0x110] sm:$0xff]
    %v321 = vld [vmem:[%s285 + $0x118] sm:$0xff]
    %v322 = vld [vmem:[%s285 + $0x120] sm:$0xff]
    %v323 = vld [vmem:[%s285 + $0x128] sm:$0xff]
    %v324 = vld [vmem:[%s285 + $0x130] sm:$0xff]
    %v325 = vld [vmem:[%s285 + $0x138] sm:$0xff]
    %v326 = vld [vmem:[%s285 + $0x140] sm:$0xff]
    %v327 = vld [vmem:[%s285 + $0x148] sm:$0xff]
    %v328 = vld [vmem:[%s285 + $0x150] sm:$0xff]
    %v329 = vld [vmem:[%s285 + $0x158] sm:$0xff]
    %v330 = vld [vmem:[%s285 + $0x160] sm:$0xff]
    %v331 = vld [vmem:[%s285 + $0x168] sm:$0xff]
    %v332 = vld [vmem:[%s285 + $0x170] sm:$0xff]
    %v333 = vld [vmem:[%s285 + $0x178] sm:$0xff]
    %v334 = vld [vmem:[%s285 + $0x180] sm:$0xff]
    %v335 = vld [vmem:[%s285 + $0x188] sm:$0xff]
    %v336 = vld [vmem:[%s285 + $0x190] sm:$0xff]
    %v337 = vld [vmem:[%s285 + $0x198] sm:$0xff]
    %v338 = vld [vmem:[%s285 + $0x1a0] sm:$0xff]
    %v339 = vld [vmem:[%s285 + $0x1a8] sm:$0xff]
    %v340 = vld [vmem:[%s285 + $0x1b0] sm:$0xff]
    %v341 = vld [vmem:[%s285 + $0x1b8] sm:$0xff]
    %v342 = vld [vmem:[%s285 + $0x1c0] sm:$0xff]
    %v343 = vld [vmem:[%s285 + $0x1c8] sm:$0xff]
    %v344 = vld [vmem:[%s285 + $0x1d0] sm:$0xff]
    %v345 = vld [vmem:[%s285 + $0x1d8] sm:$0xff]
    %v346 = vld [vmem:[%s285 + $0x1e0] sm:$0xff]
    %v347 = vld [vmem:[%s285 + $0x1e8] sm:$0xff]
    %v348 = vld [vmem:[%s285 + $0x1f0] sm:$0xff]
    %v349 = vld [vmem:[%s285 + $0x1f8] sm:$0xff]
    %s350 = scalar_lea.vmem %s2, 32
    %v351 = vld [vmem:[%s350] sm:$0xff]
    %v352 = vld [vmem:[%s350 + $0x8] sm:$0xff]
    %v353 = vld [vmem:[%s350 + $0x10] sm:$0xff]
    %v354 = vld [vmem:[%s350 + $0x18] sm:$0xff]
    %355 = vmatpush.msra.mxu0 %v301
    %356 = vmatpush.msra.mxu0 %v300
    %357 = vmatpush.msra.mxu0 %v299
    %358 = vmatpush.msra.mxu0 %v298
    %359 = vmatpush.msra.mxu0 %v297
    %360 = vmatpush.msra.mxu0 %v296
    %361 = vmatpush.msra.mxu0 %v295
    %362 = vmatpush.msra.mxu0 %v294
    %363 = vmatpush.msra.mxu0 %v293
    %364 = vmatpush.msra.mxu0 %v292
    %365 = vmatpush.msra.mxu0 %v291
    %366 = vmatpush.msra.mxu0 %v290
    %367 = vmatpush.msra.mxu0 %v289
    %368 = vmatpush.msra.mxu0 %v288
    %369 = vmatpush.msra.mxu0 %v287
    %370 = vmatpush.msra.mxu0 %v286
    %371 = vmatmul.f32.gmra.mxu0 %v127
    %v372 = vpop.f32.mrf.mxu0
    %v373 = vadd.f32 0.0, %v372
    %374 = vdwg.mxu0
    %375 = vmatpush.msra.mxu0 %v317
    %376 = vmatpush.msra.mxu0 %v316
    %377 = vmatpush.msra.mxu0 %v315
    %378 = vmatpush.msra.mxu0 %v314
    %379 = vmatpush.msra.mxu0 %v313
    %380 = vmatpush.msra.mxu0 %v312
    %381 = vmatpush.msra.mxu0 %v311
    %382 = vmatpush.msra.mxu0 %v310
    %383 = vmatpush.msra.mxu0 %v309
    %384 = vmatpush.msra.mxu0 %v308
    %385 = vmatpush.msra.mxu0 %v307
    %386 = vmatpush.msra.mxu0 %v306
    %387 = vmatpush.msra.mxu0 %v305
    %388 = vmatpush.msra.mxu0 %v304
    %389 = vmatpush.msra.mxu0 %v303
    %390 = vmatpush.msra.mxu0 %v302
    %391 = vmatmul.f32.gmra.mxu0 %v128
    %v392 = vpop.f32.mrf.mxu0
    %v393 = vadd.f32 %v373, %v392
    %394 = vdwg.mxu0
    %395 = vmatpush.msra.mxu0 %v333
    %396 = vmatpush.msra.mxu0 %v332
    %397 = vmatpush.msra.mxu0 %v331
    %398 = vmatpush.msra.mxu0 %v330
    %399 = vmatpush.msra.mxu0 %v329
    %400 = vmatpush.msra.mxu0 %v328
    %401 = vmatpush.msra.mxu0 %v327
    %402 = vmatpush.msra.mxu0 %v326
    %403 = vmatpush.msra.mxu0 %v325
    %404 = vmatpush.msra.mxu0 %v324
    %405 = vmatpush.msra.mxu0 %v323
    %406 = vmatpush.msra.mxu0 %v322
    %407 = vmatpush.msra.mxu0 %v321
    %408 = vmatpush.msra.mxu0 %v320
    %409 = vmatpush.msra.mxu0 %v319
    %410 = vmatpush.msra.mxu0 %v318
    %411 = vmatmul.f32.gmra.mxu0 %v133
    %v412 = vpop.f32.mrf.mxu0
    %v413 = vadd.f32 %v393, %v412
    %414 = vdwg.mxu0
    %415 = vmatpush.msra.mxu0 %v349
    %416 = vmatpush.msra.mxu0 %v348
    %417 = vmatpush.msra.mxu0 %v347
    %418 = vmatpush.msra.mxu0 %v346
    %419 = vmatpush.msra.mxu0 %v345
    %420 = vmatpush.msra.mxu0 %v344
    %421 = vmatpush.msra.mxu0 %v343
    %422 = vmatpush.msra.mxu0 %v342
    %423 = vmatpush.msra.mxu0 %v341
    %424 = vmatpush.msra.mxu0 %v340
    %425 = vmatpush.msra.mxu0 %v339
    %426 = vmatpush.msra.mxu0 %v338
    %427 = vmatpush.msra.mxu0 %v337
    %428 = vmatpush.msra.mxu0 %v336
    %429 = vmatpush.msra.mxu0 %v335
    %430 = vmatpush.msra.mxu0 %v334
    %431 = vmatmul.f32.gmra.mxu0 %v134
    %v432 = vpop.f32.mrf.mxu0
    %v433 = vadd.f32 %v413, %v432
    %434 = vdwg.mxu0
    %vm435 = vcmask 31744
    %v437 = vsel %vm435, %v351, 0
    %v440 = vsel %vm435, %v352, 0
    %v443 = vsel %vm435, %v353, 0
    %v446 = vsel %vm435, %v354, 0
    %vm448 = vcmask 1043456
    %v450 = vsel %vm448, %v433, 0
    %452 = vmatpush.msra.mxu0 0.0
    %453 = vmatpush.msra.mxu0 0.0
    %454 = vmatpush.msra.mxu0 0.0
    %455 = vmatpush.msra.mxu0 0.0
    %456 = vmatpush.msra.mxu0 0.0
    %457 = vmatpush.msra.mxu0 0.0
    %458 = vmatpush.msra.mxu0 0.0
    %459 = vmatpush.msra.mxu0 0.0
    %460 = vmatpush.msra.mxu0 0.0
    %461 = vmatpush.msra.mxu0 0.0
    %462 = vmatpush.msra.mxu0 0.0
    %463 = vmatpush.msra.mxu0 0.0
    %464 = vmatpush.msra.mxu0 0.0
    %465 = vmatpush.msra.mxu0 0.0
    %466 = vmatpush.msra.mxu0 0.0
    %467 = vmatpush.msra.mxu0 %v450
    %468 = vmatmul.f32.gmra.mxu0 %v437
    %v469 = vpop.f32.mrf.mxu0
    %v470 = vadd.f32 0.0, %v469
    %471 = vmatmul.f32.gmra.mxu0 %v440
    %v472 = vpop.f32.mrf.mxu0
    %v473 = vadd.f32 0.0, %v472
    %474 = vmatmul.f32.gmra.mxu0 %v443
    %v475 = vpop.f32.mrf.mxu0
    %v476 = vadd.f32 0.0, %v475
    %477 = vmatmul.f32.gmra.mxu0 %v446
    %v478 = vpop.f32.mrf.mxu0
    %v479 = vadd.f32 0.0, %v478
    %480 = vdwg.mxu0
    %v482 = vsel %vm435, %v201, 0
    %v485 = vsel %vm435, %v202, 0
    %v488 = vsel %vm435, %v203, 0
    %v491 = vsel %vm435, %v204, 0
    %v494 = vsel %vm448, %v283, 0
    %496 = vmatpush.msra.mxu0 0.0
    %497 = vmatpush.msra.mxu0 0.0
    %498 = vmatpush.msra.mxu0 0.0
    %499 = vmatpush.msra.mxu0 0.0
    %500 = vmatpush.msra.mxu0 0.0
    %501 = vmatpush.msra.mxu0 0.0
    %502 = vmatpush.msra.mxu0 0.0
    %503 = vmatpush.msra.mxu0 0.0
    %504 = vmatpush.msra.mxu0 0.0
    %505 = vmatpush.msra.mxu0 0.0
    %506 = vmatpush.msra.mxu0 0.0
    %507 = vmatpush.msra.mxu0 0.0
    %508 = vmatpush.msra.mxu0 0.0
    %509 = vmatpush.msra.mxu0 0.0
    %510 = vmatpush.msra.mxu0 0.0
    %511 = vmatpush.msra.mxu0 %v494
    %512 = vmatmul.f32.gmra.mxu0 %v482
    %v513 = vpop.f32.mrf.mxu0
    %v514 = vadd.f32 %v470, %v513
    %515 = vmatmul.f32.gmra.mxu0 %v485
    %v516 = vpop.f32.mrf.mxu0
    %v517 = vadd.f32 %v473, %v516
    %518 = vmatmul.f32.gmra.mxu0 %v488
    %v519 = vpop.f32.mrf.mxu0
    %v520 = vadd.f32 %v476, %v519
    %521 = vmatmul.f32.gmra.mxu0 %v491
    %v522 = vpop.f32.mrf.mxu0
    %v523 = vadd.f32 %v479, %v522
    %524 = vdwg.mxu0
    %s525 = scalar_lea.vmem %s1, 1024
    %v526 = vld [vmem:[%s525] sm:$0xff]
    %v527 = vld [vmem:[%s525 + $0x8] sm:$0xff]
    %v528 = vld [vmem:[%s525 + $0x10] sm:$0xff]
    %v529 = vld [vmem:[%s525 + $0x18] sm:$0xff]
    %v530 = vld [vmem:[%s525 + $0x20] sm:$0xff]
    %v531 = vld [vmem:[%s525 + $0x28] sm:$0xff]
    %v532 = vld [vmem:[%s525 + $0x30] sm:$0xff]
    %v533 = vld [vmem:[%s525 + $0x38] sm:$0xff]
    %v534 = vld [vmem:[%s525 + $0x40] sm:$0xff]
    %v535 = vld [vmem:[%s525 + $0x48] sm:$0xff]
    %v536 = vld [vmem:[%s525 + $0x50] sm:$0xff]
    %v537 = vld [vmem:[%s525 + $0x58] sm:$0xff]
    %v538 = vld [vmem:[%s525 + $0x60] sm:$0xff]
    %v539 = vld [vmem:[%s525 + $0x68] sm:$0xff]
    %v540 = vld [vmem:[%s525 + $0x70] sm:$0xff]
    %v541 = vld [vmem:[%s525 + $0x78] sm:$0xff]
    %v542 = vld [vmem:[%s525 + $0x80] sm:$0xff]
    %v543 = vld [vmem:[%s525 + $0x88] sm:$0xff]
    %v544 = vld [vmem:[%s525 + $0x90] sm:$0xff]
    %v545 = vld [vmem:[%s525 + $0x98] sm:$0xff]
    %v546 = vld [vmem:[%s525 + $0xa0] sm:$0xff]
    %v547 = vld [vmem:[%s525 + $0xa8] sm:$0xff]
    %v548 = vld [vmem:[%s525 + $0xb0] sm:$0xff]
    %v549 = vld [vmem:[%s525 + $0xb8] sm:$0xff]
    %v550 = vld [vmem:[%s525 + $0xc0] sm:$0xff]
    %v551 = vld [vmem:[%s525 + $0xc8] sm:$0xff]
    %v552 = vld [vmem:[%s525 + $0xd0] sm:$0xff]
    %v553 = vld [vmem:[%s525 + $0xd8] sm:$0xff]
    %v554 = vld [vmem:[%s525 + $0xe0] sm:$0xff]
    %v555 = vld [vmem:[%s525 + $0xe8] sm:$0xff]
    %v556 = vld [vmem:[%s525 + $0xf0] sm:$0xff]
    %v557 = vld [vmem:[%s525 + $0xf8] sm:$0xff]
    %v558 = vld [vmem:[%s525 + $0x100] sm:$0xff]
    %v559 = vld [vmem:[%s525 + $0x108] sm:$0xff]
    %v560 = vld [vmem:[%s525 + $0x110] sm:$0xff]
    %v561 = vld [vmem:[%s525 + $0x118] sm:$0xff]
    %v562 = vld [vmem:[%s525 + $0x120] sm:$0xff]
    %v563 = vld [vmem:[%s525 + $0x128] sm:$0xff]
    %v564 = vld [vmem:[%s525 + $0x130] sm:$0xff]
    %v565 = vld [vmem:[%s525 + $0x138] sm:$0xff]
    %v566 = vld [vmem:[%s525 + $0x140] sm:$0xff]
    %v567 = vld [vmem:[%s525 + $0x148] sm:$0xff]
    %v568 = vld [vmem:[%s525 + $0x150] sm:$0xff]
    %v569 = vld [vmem:[%s525 + $0x158] sm:$0xff]
    %v570 = vld [vmem:[%s525 + $0x160] sm:$0xff]
    %v571 = vld [vmem:[%s525 + $0x168] sm:$0xff]
    %v572 = vld [vmem:[%s525 + $0x170] sm:$0xff]
    %v573 = vld [vmem:[%s525 + $0x178] sm:$0xff]
    %v574 = vld [vmem:[%s525 + $0x180] sm:$0xff]
    %v575 = vld [vmem:[%s525 + $0x188] sm:$0xff]
    %v576 = vld [vmem:[%s525 + $0x190] sm:$0xff]
    %v577 = vld [vmem:[%s525 + $0x198] sm:$0xff]
    %v578 = vld [vmem:[%s525 + $0x1a0] sm:$0xff]
    %v579 = vld [vmem:[%s525 + $0x1a8] sm:$0xff]
    %v580 = vld [vmem:[%s525 + $0x1b0] sm:$0xff]
    %v581 = vld [vmem:[%s525 + $0x1b8] sm:$0xff]
    %v582 = vld [vmem:[%s525 + $0x1c0] sm:$0xff]
    %v583 = vld [vmem:[%s525 + $0x1c8] sm:$0xff]
    %v584 = vld [vmem:[%s525 + $0x1d0] sm:$0xff]
    %v585 = vld [vmem:[%s525 + $0x1d8] sm:$0xff]
    %v586 = vld [vmem:[%s525 + $0x1e0] sm:$0xff]
    %v587 = vld [vmem:[%s525 + $0x1e8] sm:$0xff]
    %v588 = vld [vmem:[%s525 + $0x1f0] sm:$0xff]
    %v589 = vld [vmem:[%s525 + $0x1f8] sm:$0xff]
    %s590 = scalar_lea.vmem %s2, 64
    %v591 = vld [vmem:[%s590] sm:$0xff]
    %v592 = vld [vmem:[%s590 + $0x8] sm:$0xff]
    %v593 = vld [vmem:[%s590 + $0x10] sm:$0xff]
    %v594 = vld [vmem:[%s590 + $0x18] sm:$0xff]
    %595 = vmatpush.msra.mxu0 %v541
    %596 = vmatpush.msra.mxu0 %v540
    %597 = vmatpush.msra.mxu0 %v539
    %598 = vmatpush.msra.mxu0 %v538
    %599 = vmatpush.msra.mxu0 %v537
    %600 = vmatpush.msra.mxu0 %v536
    %601 = vmatpush.msra.mxu0 %v535
    %602 = vmatpush.msra.mxu0 %v534
    %603 = vmatpush.msra.mxu0 %v533
    %604 = vmatpush.msra.mxu0 %v532
    %605 = vmatpush.msra.mxu0 %v531
    %606 = vmatpush.msra.mxu0 %v530
    %607 = vmatpush.msra.mxu0 %v529
    %608 = vmatpush.msra.mxu0 %v528
    %609 = vmatpush.msra.mxu0 %v527
    %610 = vmatpush.msra.mxu0 %v526
    %611 = vmatmul.f32.gmra.mxu0 %v127
    %v612 = vpop.f32.mrf.mxu0
    %v613 = vadd.f32 0.0, %v612
    %614 = vdwg.mxu0
    %615 = vmatpush.msra.mxu0 %v557
    %616 = vmatpush.msra.mxu0 %v556
    %617 = vmatpush.msra.mxu0 %v555
    %618 = vmatpush.msra.mxu0 %v554
    %619 = vmatpush.msra.mxu0 %v553
    %620 = vmatpush.msra.mxu0 %v552
    %621 = vmatpush.msra.mxu0 %v551
    %622 = vmatpush.msra.mxu0 %v550
    %623 = vmatpush.msra.mxu0 %v549
    %624 = vmatpush.msra.mxu0 %v548
    %625 = vmatpush.msra.mxu0 %v547
    %626 = vmatpush.msra.mxu0 %v546
    %627 = vmatpush.msra.mxu0 %v545
    %628 = vmatpush.msra.mxu0 %v544
    %629 = vmatpush.msra.mxu0 %v543
    %630 = vmatpush.msra.mxu0 %v542
    %631 = vmatmul.f32.gmra.mxu0 %v128
    %v632 = vpop.f32.mrf.mxu0
    %v633 = vadd.f32 %v613, %v632
    %634 = vdwg.mxu0
    %635 = vmatpush.msra.mxu0 %v573
    %636 = vmatpush.msra.mxu0 %v572
    %637 = vmatpush.msra.mxu0 %v571
    %638 = vmatpush.msra.mxu0 %v570
    %639 = vmatpush.msra.mxu0 %v569
    %640 = vmatpush.msra.mxu0 %v568
    %641 = vmatpush.msra.mxu0 %v567
    %642 = vmatpush.msra.mxu0 %v566
    %643 = vmatpush.msra.mxu0 %v565
    %644 = vmatpush.msra.mxu0 %v564
    %645 = vmatpush.msra.mxu0 %v563
    %646 = vmatpush.msra.mxu0 %v562
    %647 = vmatpush.msra.mxu0 %v561
    %648 = vmatpush.msra.mxu0 %v560
    %649 = vmatpush.msra.mxu0 %v559
    %650 = vmatpush.msra.mxu0 %v558
    %651 = vmatmul.f32.gmra.mxu0 %v133
    %v652 = vpop.f32.mrf.mxu0
    %v653 = vadd.f32 %v633, %v652
    %654 = vdwg.mxu0
    %655 = vmatpush.msra.mxu0 %v589
    %656 = vmatpush.msra.mxu0 %v588
    %657 = vmatpush.msra.mxu0 %v587
    %658 = vmatpush.msra.mxu0 %v586
    %659 = vmatpush.msra.mxu0 %v585
    %660 = vmatpush.msra.mxu0 %v584
    %661 = vmatpush.msra.mxu0 %v583
    %662 = vmatpush.msra.mxu0 %v582
    %663 = vmatpush.msra.mxu0 %v581
    %664 = vmatpush.msra.mxu0 %v580
    %665 = vmatpush.msra.mxu0 %v579
    %666 = vmatpush.msra.mxu0 %v578
    %667 = vmatpush.msra.mxu0 %v577
    %668 = vmatpush.msra.mxu0 %v576
    %669 = vmatpush.msra.mxu0 %v575
    %670 = vmatpush.msra.mxu0 %v574
    %671 = vmatmul.f32.gmra.mxu0 %v134
    %v672 = vpop.f32.mrf.mxu0
    %v673 = vadd.f32 %v653, %v672
    %674 = vdwg.mxu0
    %v676 = vsel %vm435, %v591, 0
    %v679 = vsel %vm435, %v592, 0
    %v682 = vsel %vm435, %v593, 0
    %v685 = vsel %vm435, %v594, 0
    %v688 = vsel %vm448, %v673, 0
    %690 = vmatpush.msra.mxu0 0.0
    %691 = vmatpush.msra.mxu0 0.0
    %692 = vmatpush.msra.mxu0 0.0
    %693 = vmatpush.msra.mxu0 0.0
    %694 = vmatpush.msra.mxu0 0.0
    %695 = vmatpush.msra.mxu0 0.0
    %696 = vmatpush.msra.mxu0 0.0
    %697 = vmatpush.msra.mxu0 0.0
    %698 = vmatpush.msra.mxu0 0.0
    %699 = vmatpush.msra.mxu0 0.0
    %700 = vmatpush.msra.mxu0 0.0
    %701 = vmatpush.msra.mxu0 0.0
    %702 = vmatpush.msra.mxu0 0.0
    %703 = vmatpush.msra.mxu0 0.0
    %704 = vmatpush.msra.mxu0 0.0
    %705 = vmatpush.msra.mxu0 %v688
    %706 = vmatmul.f32.gmra.mxu0 %v676
    %v707 = vpop.f32.mrf.mxu0
    %v708 = vadd.f32 0.0, %v707
    %709 = vmatmul.f32.gmra.mxu0 %v679
    %v710 = vpop.f32.mrf.mxu0
    %v711 = vadd.f32 0.0, %v710
    %712 = vmatmul.f32.gmra.mxu0 %v682
    %v713 = vpop.f32.mrf.mxu0
    %v714 = vadd.f32 0.0, %v713
    %715 = vmatmul.f32.gmra.mxu0 %v685
    %v716 = vpop.f32.mrf.mxu0
    %v717 = vadd.f32 0.0, %v716
    %718 = vdwg.mxu0
    %v719 = vadd.f32 %v514, %v708
    %v720 = vadd.f32 %v517, %v711
    %v721 = vadd.f32 %v520, %v714
    %v722 = vadd.f32 %v523, %v717
    %s723 = scalar_lea.vmem %s1, 1536
    %v724 = vld [vmem:[%s723] sm:$0xff]
    %v725 = vld [vmem:[%s723 + $0x8] sm:$0xff]
    %v726 = vld [vmem:[%s723 + $0x10] sm:$0xff]
    %v727 = vld [vmem:[%s723 + $0x18] sm:$0xff]
    %v728 = vld [vmem:[%s723 + $0x20] sm:$0xff]
    %v729 = vld [vmem:[%s723 + $0x28] sm:$0xff]
    %v730 = vld [vmem:[%s723 + $0x30] sm:$0xff]
    %v731 = vld [vmem:[%s723 + $0x38] sm:$0xff]
    %v732 = vld [vmem:[%s723 + $0x40] sm:$0xff]
    %v733 = vld [vmem:[%s723 + $0x48] sm:$0xff]
    %v734 = vld [vmem:[%s723 + $0x50] sm:$0xff]
    %v735 = vld [vmem:[%s723 + $0x58] sm:$0xff]
    %v736 = vld [vmem:[%s723 + $0x60] sm:$0xff]
    %v737 = vld [vmem:[%s723 + $0x68] sm:$0xff]
    %v738 = vld [vmem:[%s723 + $0x70] sm:$0xff]
    %v739 = vld [vmem:[%s723 + $0x78] sm:$0xff]
    %v740 = vld [vmem:[%s723 + $0x80] sm:$0xff]
    %v741 = vld [vmem:[%s723 + $0x88] sm:$0xff]
    %v742 = vld [vmem:[%s723 + $0x90] sm:$0xff]
    %v743 = vld [vmem:[%s723 + $0x98] sm:$0xff]
    %v744 = vld [vmem:[%s723 + $0xa0] sm:$0xff]
    %v745 = vld [vmem:[%s723 + $0xa8] sm:$0xff]
    %v746 = vld [vmem:[%s723 + $0xb0] sm:$0xff]
    %v747 = vld [vmem:[%s723 + $0xb8] sm:$0xff]
    %v748 = vld [vmem:[%s723 + $0xc0] sm:$0xff]
    %v749 = vld [vmem:[%s723 + $0xc8] sm:$0xff]
    %v750 = vld [vmem:[%s723 + $0xd0] sm:$0xff]
    %v751 = vld [vmem:[%s723 + $0xd8] sm:$0xff]
    %v752 = vld [vmem:[%s723 + $0xe0] sm:$0xff]
    %v753 = vld [vmem:[%s723 + $0xe8] sm:$0xff]
    %v754 = vld [vmem:[%s723 + $0xf0] sm:$0xff]
    %v755 = vld [vmem:[%s723 + $0xf8] sm:$0xff]
    %v756 = vld [vmem:[%s723 + $0x100] sm:$0xff]
    %v757 = vld [vmem:[%s723 + $0x108] sm:$0xff]
    %v758 = vld [vmem:[%s723 + $0x110] sm:$0xff]
    %v759 = vld [vmem:[%s723 + $0x118] sm:$0xff]
    %v760 = vld [vmem:[%s723 + $0x120] sm:$0xff]
    %v761 = vld [vmem:[%s723 + $0x128] sm:$0xff]
    %v762 = vld [vmem:[%s723 + $0x130] sm:$0xff]
    %v763 = vld [vmem:[%s723 + $0x138] sm:$0xff]
    %v764 = vld [vmem:[%s723 + $0x140] sm:$0xff]
    %v765 = vld [vmem:[%s723 + $0x148] sm:$0xff]
    %v766 = vld [vmem:[%s723 + $0x150] sm:$0xff]
    %v767 = vld [vmem:[%s723 + $0x158] sm:$0xff]
    %v768 = vld [vmem:[%s723 + $0x160] sm:$0xff]
    %v769 = vld [vmem:[%s723 + $0x168] sm:$0xff]
    %v770 = vld [vmem:[%s723 + $0x170] sm:$0xff]
    %v771 = vld [vmem:[%s723 + $0x178] sm:$0xff]
    %v772 = vld [vmem:[%s723 + $0x180] sm:$0xff]
    %v773 = vld [vmem:[%s723 + $0x188] sm:$0xff]
    %v774 = vld [vmem:[%s723 + $0x190] sm:$0xff]
    %v775 = vld [vmem:[%s723 + $0x198] sm:$0xff]
    %v776 = vld [vmem:[%s723 + $0x1a0] sm:$0xff]
    %v777 = vld [vmem:[%s723 + $0x1a8] sm:$0xff]
    %v778 = vld [vmem:[%s723 + $0x1b0] sm:$0xff]
    %v779 = vld [vmem:[%s723 + $0x1b8] sm:$0xff]
    %v780 = vld [vmem:[%s723 + $0x1c0] sm:$0xff]
    %v781 = vld [vmem:[%s723 + $0x1c8] sm:$0xff]
    %v782 = vld [vmem:[%s723 + $0x1d0] sm:$0xff]
    %v783 = vld [vmem:[%s723 + $0x1d8] sm:$0xff]
    %v784 = vld [vmem:[%s723 + $0x1e0] sm:$0xff]
    %v785 = vld [vmem:[%s723 + $0x1e8] sm:$0xff]
    %v786 = vld [vmem:[%s723 + $0x1f0] sm:$0xff]
    %v787 = vld [vmem:[%s723 + $0x1f8] sm:$0xff]
    %s788 = scalar_lea.vmem %s2, 96
    %v789 = vld [vmem:[%s788] sm:$0xff]
    %v790 = vld [vmem:[%s788 + $0x8] sm:$0xff]
    %v791 = vld [vmem:[%s788 + $0x10] sm:$0xff]
    %v792 = vld [vmem:[%s788 + $0x18] sm:$0xff]
    %793 = vmatpush.msra.mxu0 %v739
    %794 = vmatpush.msra.mxu0 %v738
    %795 = vmatpush.msra.mxu0 %v737
    %796 = vmatpush.msra.mxu0 %v736
    %797 = vmatpush.msra.mxu0 %v735
    %798 = vmatpush.msra.mxu0 %v734
    %799 = vmatpush.msra.mxu0 %v733
    %800 = vmatpush.msra.mxu0 %v732
    %801 = vmatpush.msra.mxu0 %v731
    %802 = vmatpush.msra.mxu0 %v730
    %803 = vmatpush.msra.mxu0 %v729
    %804 = vmatpush.msra.mxu0 %v728
    %805 = vmatpush.msra.mxu0 %v727
    %806 = vmatpush.msra.mxu0 %v726
    %807 = vmatpush.msra.mxu0 %v725
    %808 = vmatpush.msra.mxu0 %v724
    %809 = vmatmul.f32.gmra.mxu0 %v127
    %v810 = vpop.f32.mrf.mxu0
    %v811 = vadd.f32 0.0, %v810
    %812 = vdwg.mxu0
    %813 = vmatpush.msra.mxu0 %v755
    %814 = vmatpush.msra.mxu0 %v754
    %815 = vmatpush.msra.mxu0 %v753
    %816 = vmatpush.msra.mxu0 %v752
    %817 = vmatpush.msra.mxu0 %v751
    %818 = vmatpush.msra.mxu0 %v750
    %819 = vmatpush.msra.mxu0 %v749
    %820 = vmatpush.msra.mxu0 %v748
    %821 = vmatpush.msra.mxu0 %v747
    %822 = vmatpush.msra.mxu0 %v746
    %823 = vmatpush.msra.mxu0 %v745
    %824 = vmatpush.msra.mxu0 %v744
    %825 = vmatpush.msra.mxu0 %v743
    %826 = vmatpush.msra.mxu0 %v742
    %827 = vmatpush.msra.mxu0 %v741
    %828 = vmatpush.msra.mxu0 %v740
    %829 = vmatmul.f32.gmra.mxu0 %v128
    %v830 = vpop.f32.mrf.mxu0
    %v831 = vadd.f32 %v811, %v830
    %832 = vdwg.mxu0
    %833 = vmatpush.msra.mxu0 %v771
    %834 = vmatpush.msra.mxu0 %v770
    %835 = vmatpush.msra.mxu0 %v769
    %836 = vmatpush.msra.mxu0 %v768
    %837 = vmatpush.msra.mxu0 %v767
    %838 = vmatpush.msra.mxu0 %v766
    %839 = vmatpush.msra.mxu0 %v765
    %840 = vmatpush.msra.mxu0 %v764
    %841 = vmatpush.msra.mxu0 %v763
    %842 = vmatpush.msra.mxu0 %v762
    %843 = vmatpush.msra.mxu0 %v761
    %844 = vmatpush.msra.mxu0 %v760
    %845 = vmatpush.msra.mxu0 %v759
    %846 = vmatpush.msra.mxu0 %v758
    %847 = vmatpush.msra.mxu0 %v757
    %848 = vmatpush.msra.mxu0 %v756
    %849 = vmatmul.f32.gmra.mxu0 %v133
    %v850 = vpop.f32.mrf.mxu0
    %v851 = vadd.f32 %v831, %v850
    %852 = vdwg.mxu0
    %853 = vmatpush.msra.mxu0 %v787
    %854 = vmatpush.msra.mxu0 %v786
    %855 = vmatpush.msra.mxu0 %v785
    %856 = vmatpush.msra.mxu0 %v784
    %857 = vmatpush.msra.mxu0 %v783
    %858 = vmatpush.msra.mxu0 %v782
    %859 = vmatpush.msra.mxu0 %v781
    %860 = vmatpush.msra.mxu0 %v780
    %861 = vmatpush.msra.mxu0 %v779
    %862 = vmatpush.msra.mxu0 %v778
    %863 = vmatpush.msra.mxu0 %v777
    %864 = vmatpush.msra.mxu0 %v776
    %865 = vmatpush.msra.mxu0 %v775
    %866 = vmatpush.msra.mxu0 %v774
    %867 = vmatpush.msra.mxu0 %v773
    %868 = vmatpush.msra.mxu0 %v772
    %869 = vmatmul.f32.gmra.mxu0 %v134
    %v870 = vpop.f32.mrf.mxu0
    %v871 = vadd.f32 %v851, %v870
    %872 = vdwg.mxu0
    %v874 = vsel %vm435, %v789, 0
    %v877 = vsel %vm435, %v790, 0
    %v880 = vsel %vm435, %v791, 0
    %v883 = vsel %vm435, %v792, 0
    %v886 = vsel %vm448, %v871, 0
    %888 = vmatpush.msra.mxu0 0.0
    %889 = vmatpush.msra.mxu0 0.0
    %890 = vmatpush.msra.mxu0 0.0
    %891 = vmatpush.msra.mxu0 0.0
    %892 = vmatpush.msra.mxu0 0.0
    %893 = vmatpush.msra.mxu0 0.0
    %894 = vmatpush.msra.mxu0 0.0
    %895 = vmatpush.msra.mxu0 0.0
    %896 = vmatpush.msra.mxu0 0.0
    %897 = vmatpush.msra.mxu0 0.0
    %898 = vmatpush.msra.mxu0 0.0
    %899 = vmatpush.msra.mxu0 0.0
    %900 = vmatpush.msra.mxu0 0.0
    %901 = vmatpush.msra.mxu0 0.0
    %902 = vmatpush.msra.mxu0 0.0
    %903 = vmatpush.msra.mxu0 %v886
    %904 = vmatmul.f32.gmra.mxu0 %v874
    %v905 = vpop.f32.mrf.mxu0
    %v906 = vadd.f32 0.0, %v905
    %907 = vmatmul.f32.gmra.mxu0 %v877
    %v908 = vpop.f32.mrf.mxu0
    %v909 = vadd.f32 0.0, %v908
    %910 = vmatmul.f32.gmra.mxu0 %v880
    %v911 = vpop.f32.mrf.mxu0
    %v912 = vadd.f32 0.0, %v911
    %913 = vmatmul.f32.gmra.mxu0 %v883
    %v914 = vpop.f32.mrf.mxu0
    %v915 = vadd.f32 0.0, %v914
    %916 = vdwg.mxu0
    %v917 = vadd.f32 %v719, %v906
    %v918 = vadd.f32 %v720, %v909
    %v919 = vadd.f32 %v721, %v912
    %v920 = vadd.f32 %v722, %v915
    %s921 = scalar_lea.vmem %s1, 2048
    %v922 = vld [vmem:[%s921] sm:$0xff]
    %v923 = vld [vmem:[%s921 + $0x8] sm:$0xff]
    %v924 = vld [vmem:[%s921 + $0x10] sm:$0xff]
    %v925 = vld [vmem:[%s921 + $0x18] sm:$0xff]
    %v926 = vld [vmem:[%s921 + $0x20] sm:$0xff]
    %v927 = vld [vmem:[%s921 + $0x28] sm:$0xff]
    %v928 = vld [vmem:[%s921 + $0x30] sm:$0xff]
    %v929 = vld [vmem:[%s921 + $0x38] sm:$0xff]
    %v930 = vld [vmem:[%s921 + $0x40] sm:$0xff]
    %v931 = vld [vmem:[%s921 + $0x48] sm:$0xff]
    %v932 = vld [vmem:[%s921 + $0x50] sm:$0xff]
    %v933 = vld [vmem:[%s921 + $0x58] sm:$0xff]
    %v934 = vld [vmem:[%s921 + $0x60] sm:$0xff]
    %v935 = vld [vmem:[%s921 + $0x68] sm:$0xff]
    %v936 = vld [vmem:[%s921 + $0x70] sm:$0xff]
    %v937 = vld [vmem:[%s921 + $0x78] sm:$0xff]
    %v938 = vld [vmem:[%s921 + $0x80] sm:$0xff]
    %v939 = vld [vmem:[%s921 + $0x88] sm:$0xff]
    %v940 = vld [vmem:[%s921 + $0x90] sm:$0xff]
    %v941 = vld [vmem:[%s921 + $0x98] sm:$0xff]
    %v942 = vld [vmem:[%s921 + $0xa0] sm:$0xff]
    %v943 = vld [vmem:[%s921 + $0xa8] sm:$0xff]
    %v944 = vld [vmem:[%s921 + $0xb0] sm:$0xff]
    %v945 = vld [vmem:[%s921 + $0xb8] sm:$0xff]
    %v946 = vld [vmem:[%s921 + $0xc0] sm:$0xff]
    %v947 = vld [vmem:[%s921 + $0xc8] sm:$0xff]
    %v948 = vld [vmem:[%s921 + $0xd0] sm:$0xff]
    %v949 = vld [vmem:[%s921 + $0xd8] sm:$0xff]
    %v950 = vld [vmem:[%s921 + $0xe0] sm:$0xff]
    %v951 = vld [vmem:[%s921 + $0xe8] sm:$0xff]
    %v952 = vld [vmem:[%s921 + $0xf0] sm:$0xff]
    %v953 = vld [vmem:[%s921 + $0xf8] sm:$0xff]
    %v954 = vld [vmem:[%s921 + $0x100] sm:$0xff]
    %v955 = vld [vmem:[%s921 + $0x108] sm:$0xff]
    %v956 = vld [vmem:[%s921 + $0x110] sm:$0xff]
    %v957 = vld [vmem:[%s921 + $0x118] sm:$0xff]
    %v958 = vld [vmem:[%s921 + $0x120] sm:$0xff]
    %v959 = vld [vmem:[%s921 + $0x128] sm:$0xff]
    %v960 = vld [vmem:[%s921 + $0x130] sm:$0xff]
    %v961 = vld [vmem:[%s921 + $0x138] sm:$0xff]
    %v962 = vld [vmem:[%s921 + $0x140] sm:$0xff]
    %v963 = vld [vmem:[%s921 + $0x148] sm:$0xff]
    %v964 = vld [vmem:[%s921 + $0x150] sm:$0xff]
    %v965 = vld [vmem:[%s921 + $0x158] sm:$0xff]
    %v966 = vld [vmem:[%s921 + $0x160] sm:$0xff]
    %v967 = vld [vmem:[%s921 + $0x168] sm:$0xff]
    %v968 = vld [vmem:[%s921 + $0x170] sm:$0xff]
    %v969 = vld [vmem:[%s921 + $0x178] sm:$0xff]
    %v970 = vld [vmem:[%s921 + $0x180] sm:$0xff]
    %v971 = vld [vmem:[%s921 + $0x188] sm:$0xff]
    %v972 = vld [vmem:[%s921 + $0x190] sm:$0xff]
    %v973 = vld [vmem:[%s921 + $0x198] sm:$0xff]
    %v974 = vld [vmem:[%s921 + $0x1a0] sm:$0xff]
    %v975 = vld [vmem:[%s921 + $0x1a8] sm:$0xff]
    %v976 = vld [vmem:[%s921 + $0x1b0] sm:$0xff]
    %v977 = vld [vmem:[%s921 + $0x1b8] sm:$0xff]
    %v978 = vld [vmem:[%s921 + $0x1c0] sm:$0xff]
    %v979 = vld [vmem:[%s921 + $0x1c8] sm:$0xff]
    %v980 = vld [vmem:[%s921 + $0x1d0] sm:$0xff]
    %v981 = vld [vmem:[%s921 + $0x1d8] sm:$0xff]
    %v982 = vld [vmem:[%s921 + $0x1e0] sm:$0xff]
    %v983 = vld [vmem:[%s921 + $0x1e8] sm:$0xff]
    %v984 = vld [vmem:[%s921 + $0x1f0] sm:$0xff]
    %v985 = vld [vmem:[%s921 + $0x1f8] sm:$0xff]
    %s986 = scalar_lea.vmem %s2, 128
    %v987 = vld [vmem:[%s986] sm:$0xff]
    %v988 = vld [vmem:[%s986 + $0x8] sm:$0xff]
    %v989 = vld [vmem:[%s986 + $0x10] sm:$0xff]
    %v990 = vld [vmem:[%s986 + $0x18] sm:$0xff]
    %991 = vmatpush.msra.mxu0 %v937
    %992 = vmatpush.msra.mxu0 %v936
    %993 = vmatpush.msra.mxu0 %v935
    %994 = vmatpush.msra.mxu0 %v934
    %995 = vmatpush.msra.mxu0 %v933
    %996 = vmatpush.msra.mxu0 %v932
    %997 = vmatpush.msra.mxu0 %v931
    %998 = vmatpush.msra.mxu0 %v930
    %999 = vmatpush.msra.mxu0 %v929
    %1000 = vmatpush.msra.mxu0 %v928
    %1001 = vmatpush.msra.mxu0 %v927
    %1002 = vmatpush.msra.mxu0 %v926
    %1003 = vmatpush.msra.mxu0 %v925
    %1004 = vmatpush.msra.mxu0 %v924
    %1005 = vmatpush.msra.mxu0 %v923
    %1006 = vmatpush.msra.mxu0 %v922
    %1007 = vmatmul.f32.gmra.mxu0 %v127
    %v1008 = vpop.f32.mrf.mxu0
    %v1009 = vadd.f32 0.0, %v1008
    %1010 = vdwg.mxu0
    %1011 = vmatpush.msra.mxu0 %v953
    %1012 = vmatpush.msra.mxu0 %v952
    %1013 = vmatpush.msra.mxu0 %v951
    %1014 = vmatpush.msra.mxu0 %v950
    %1015 = vmatpush.msra.mxu0 %v949
    %1016 = vmatpush.msra.mxu0 %v948
    %1017 = vmatpush.msra.mxu0 %v947
    %1018 = vmatpush.msra.mxu0 %v946
    %1019 = vmatpush.msra.mxu0 %v945
    %1020 = vmatpush.msra.mxu0 %v944
    %1021 = vmatpush.msra.mxu0 %v943
    %1022 = vmatpush.msra.mxu0 %v942
    %1023 = vmatpush.msra.mxu0 %v941
    %1024 = vmatpush.msra.mxu0 %v940
    %1025 = vmatpush.msra.mxu0 %v939
    %1026 = vmatpush.msra.mxu0 %v938
    %1027 = vmatmul.f32.gmra.mxu0 %v128
    %v1028 = vpop.f32.mrf.mxu0
    %v1029 = vadd.f32 %v1009, %v1028
    %1030 = vdwg.mxu0
    %1031 = vmatpush.msra.mxu0 %v969
    %1032 = vmatpush.msra.mxu0 %v968
    %1033 = vmatpush.msra.mxu0 %v967
    %1034 = vmatpush.msra.mxu0 %v966
    %1035 = vmatpush.msra.mxu0 %v965
    %1036 = vmatpush.msra.mxu0 %v964
    %1037 = vmatpush.msra.mxu0 %v963
    %1038 = vmatpush.msra.mxu0 %v962
    %1039 = vmatpush.msra.mxu0 %v961
    %1040 = vmatpush.msra.mxu0 %v960
    %1041 = vmatpush.msra.mxu0 %v959
    %1042 = vmatpush.msra.mxu0 %v958
    %1043 = vmatpush.msra.mxu0 %v957
    %1044 = vmatpush.msra.mxu0 %v956
    %1045 = vmatpush.msra.mxu0 %v955
    %1046 = vmatpush.msra.mxu0 %v954
    %1047 = vmatmul.f32.gmra.mxu0 %v133
    %v1048 = vpop.f32.mrf.mxu0
    %v1049 = vadd.f32 %v1029, %v1048
    %1050 = vdwg.mxu0
    %1051 = vmatpush.msra.mxu0 %v985
    %1052 = vmatpush.msra.mxu0 %v984
    %1053 = vmatpush.msra.mxu0 %v983
    %1054 = vmatpush.msra.mxu0 %v982
    %1055 = vmatpush.msra.mxu0 %v981
    %1056 = vmatpush.msra.mxu0 %v980
    %1057 = vmatpush.msra.mxu0 %v979
    %1058 = vmatpush.msra.mxu0 %v978
    %1059 = vmatpush.msra.mxu0 %v977
    %1060 = vmatpush.msra.mxu0 %v976
    %1061 = vmatpush.msra.mxu0 %v975
    %1062 = vmatpush.msra.mxu0 %v974
    %1063 = vmatpush.msra.mxu0 %v973
    %1064 = vmatpush.msra.mxu0 %v972
    %1065 = vmatpush.msra.mxu0 %v971
    %1066 = vmatpush.msra.mxu0 %v970
    %1067 = vmatmul.f32.gmra.mxu0 %v134
    %v1068 = vpop.f32.mrf.mxu0
    %v1069 = vadd.f32 %v1049, %v1068
    %1070 = vdwg.mxu0
    %v1072 = vsel %vm435, %v987, 0
    %v1075 = vsel %vm435, %v988, 0
    %v1078 = vsel %vm435, %v989, 0
    %v1081 = vsel %vm435, %v990, 0
    %v1084 = vsel %vm448, %v1069, 0
    %1086 = vmatpush.msra.mxu0 0.0
    %1087 = vmatpush.msra.mxu0 0.0
    %1088 = vmatpush.msra.mxu0 0.0
    %1089 = vmatpush.msra.mxu0 0.0
    %1090 = vmatpush.msra.mxu0 0.0
    %1091 = vmatpush.msra.mxu0 0.0
    %1092 = vmatpush.msra.mxu0 0.0
    %1093 = vmatpush.msra.mxu0 0.0
    %1094 = vmatpush.msra.mxu0 0.0
    %1095 = vmatpush.msra.mxu0 0.0
    %1096 = vmatpush.msra.mxu0 0.0
    %1097 = vmatpush.msra.mxu0 0.0
    %1098 = vmatpush.msra.mxu0 0.0
    %1099 = vmatpush.msra.mxu0 0.0
    %1100 = vmatpush.msra.mxu0 0.0
    %1101 = vmatpush.msra.mxu0 %v1084
    %1102 = vmatmul.f32.gmra.mxu0 %v1072
    %v1103 = vpop.f32.mrf.mxu0
    %v1104 = vadd.f32 0.0, %v1103
    %1105 = vmatmul.f32.gmra.mxu0 %v1075
    %v1106 = vpop.f32.mrf.mxu0
    %v1107 = vadd.f32 0.0, %v1106
    %1108 = vmatmul.f32.gmra.mxu0 %v1078
    %v1109 = vpop.f32.mrf.mxu0
    %v1110 = vadd.f32 0.0, %v1109
    %1111 = vmatmul.f32.gmra.mxu0 %v1081
    %v1112 = vpop.f32.mrf.mxu0
    %v1113 = vadd.f32 0.0, %v1112
    %1114 = vdwg.mxu0
    %v1115 = vadd.f32 %v917, %v1104
    %v1116 = vadd.f32 %v918, %v1107
    %v1117 = vadd.f32 %v919, %v1110
    %v1118 = vadd.f32 %v920, %v1113
    %s1119 = scalar_lea.vmem %s1, 2560
    %v1120 = vld [vmem:[%s1119] sm:$0xff]
    %v1121 = vld [vmem:[%s1119 + $0x8] sm:$0xff]
    %v1122 = vld [vmem:[%s1119 + $0x10] sm:$0xff]
    %v1123 = vld [vmem:[%s1119 + $0x18] sm:$0xff]
    %v1124 = vld [vmem:[%s1119 + $0x20] sm:$0xff]
    %v1125 = vld [vmem:[%s1119 + $0x28] sm:$0xff]
    %v1126 = vld [vmem:[%s1119 + $0x30] sm:$0xff]
    %v1127 = vld [vmem:[%s1119 + $0x38] sm:$0xff]
    %v1128 = vld [vmem:[%s1119 + $0x40] sm:$0xff]
    %v1129 = vld [vmem:[%s1119 + $0x48] sm:$0xff]
    %v1130 = vld [vmem:[%s1119 + $0x50] sm:$0xff]
    %v1131 = vld [vmem:[%s1119 + $0x58] sm:$0xff]
    %v1132 = vld [vmem:[%s1119 + $0x60] sm:$0xff]
    %v1133 = vld [vmem:[%s1119 + $0x68] sm:$0xff]
    %v1134 = vld [vmem:[%s1119 + $0x70] sm:$0xff]
    %v1135 = vld [vmem:[%s1119 + $0x78] sm:$0xff]
    %v1136 = vld [vmem:[%s1119 + $0x80] sm:$0xff]
    %v1137 = vld [vmem:[%s1119 + $0x88] sm:$0xff]
    %v1138 = vld [vmem:[%s1119 + $0x90] sm:$0xff]
    %v1139 = vld [vmem:[%s1119 + $0x98] sm:$0xff]
    %v1140 = vld [vmem:[%s1119 + $0xa0] sm:$0xff]
    %v1141 = vld [vmem:[%s1119 + $0xa8] sm:$0xff]
    %v1142 = vld [vmem:[%s1119 + $0xb0] sm:$0xff]
    %v1143 = vld [vmem:[%s1119 + $0xb8] sm:$0xff]
    %v1144 = vld [vmem:[%s1119 + $0xc0] sm:$0xff]
    %v1145 = vld [vmem:[%s1119 + $0xc8] sm:$0xff]
    %v1146 = vld [vmem:[%s1119 + $0xd0] sm:$0xff]
    %v1147 = vld [vmem:[%s1119 + $0xd8] sm:$0xff]
    %v1148 = vld [vmem:[%s1119 + $0xe0] sm:$0xff]
    %v1149 = vld [vmem:[%s1119 + $0xe8] sm:$0xff]
    %v1150 = vld [vmem:[%s1119 + $0xf0] sm:$0xff]
    %v1151 = vld [vmem:[%s1119 + $0xf8] sm:$0xff]
    %v1152 = vld [vmem:[%s1119 + $0x100] sm:$0xff]
    %v1153 = vld [vmem:[%s1119 + $0x108] sm:$0xff]
    %v1154 = vld [vmem:[%s1119 + $0x110] sm:$0xff]
    %v1155 = vld [vmem:[%s1119 + $0x118] sm:$0xff]
    %v1156 = vld [vmem:[%s1119 + $0x120] sm:$0xff]
    %v1157 = vld [vmem:[%s1119 + $0x128] sm:$0xff]
    %v1158 = vld [vmem:[%s1119 + $0x130] sm:$0xff]
    %v1159 = vld [vmem:[%s1119 + $0x138] sm:$0xff]
    %v1160 = vld [vmem:[%s1119 + $0x140] sm:$0xff]
    %v1161 = vld [vmem:[%s1119 + $0x148] sm:$0xff]
    %v1162 = vld [vmem:[%s1119 + $0x150] sm:$0xff]
    %v1163 = vld [vmem:[%s1119 + $0x158] sm:$0xff]
    %v1164 = vld [vmem:[%s1119 + $0x160] sm:$0xff]
    %v1165 = vld [vmem:[%s1119 + $0x168] sm:$0xff]
    %v1166 = vld [vmem:[%s1119 + $0x170] sm:$0xff]
    %v1167 = vld [vmem:[%s1119 + $0x178] sm:$0xff]
    %v1168 = vld [vmem:[%s1119 + $0x180] sm:$0xff]
    %v1169 = vld [vmem:[%s1119 + $0x188] sm:$0xff]
    %v1170 = vld [vmem:[%s1119 + $0x190] sm:$0xff]
    %v1171 = vld [vmem:[%s1119 + $0x198] sm:$0xff]
    %v1172 = vld [vmem:[%s1119 + $0x1a0] sm:$0xff]
    %v1173 = vld [vmem:[%s1119 + $0x1a8] sm:$0xff]
    %v1174 = vld [vmem:[%s1119 + $0x1b0] sm:$0xff]
    %v1175 = vld [vmem:[%s1119 + $0x1b8] sm:$0xff]
    %v1176 = vld [vmem:[%s1119 + $0x1c0] sm:$0xff]
    %v1177 = vld [vmem:[%s1119 + $0x1c8] sm:$0xff]
    %v1178 = vld [vmem:[%s1119 + $0x1d0] sm:$0xff]
    %v1179 = vld [vmem:[%s1119 + $0x1d8] sm:$0xff]
    %v1180 = vld [vmem:[%s1119 + $0x1e0] sm:$0xff]
    %v1181 = vld [vmem:[%s1119 + $0x1e8] sm:$0xff]
    %v1182 = vld [vmem:[%s1119 + $0x1f0] sm:$0xff]
    %v1183 = vld [vmem:[%s1119 + $0x1f8] sm:$0xff]
    %s1184 = scalar_lea.vmem %s2, 160
    %v1185 = vld [vmem:[%s1184] sm:$0xff]
    %v1186 = vld [vmem:[%s1184 + $0x8] sm:$0xff]
    %v1187 = vld [vmem:[%s1184 + $0x10] sm:$0xff]
    %v1188 = vld [vmem:[%s1184 + $0x18] sm:$0xff]
    %1189 = vmatpush.msra.mxu0 %v1135
    %1190 = vmatpush.msra.mxu0 %v1134
    %1191 = vmatpush.msra.mxu0 %v1133
    %1192 = vmatpush.msra.mxu0 %v1132
    %1193 = vmatpush.msra.mxu0 %v1131
    %1194 = vmatpush.msra.mxu0 %v1130
    %1195 = vmatpush.msra.mxu0 %v1129
    %1196 = vmatpush.msra.mxu0 %v1128
    %1197 = vmatpush.msra.mxu0 %v1127
    %1198 = vmatpush.msra.mxu0 %v1126
    %1199 = vmatpush.msra.mxu0 %v1125
    %1200 = vmatpush.msra.mxu0 %v1124
    %1201 = vmatpush.msra.mxu0 %v1123
    %1202 = vmatpush.msra.mxu0 %v1122
    %1203 = vmatpush.msra.mxu0 %v1121
    %1204 = vmatpush.msra.mxu0 %v1120
    %1205 = vmatmul.f32.gmra.mxu0 %v127
    %v1206 = vpop.f32.mrf.mxu0
    %v1207 = vadd.f32 0.0, %v1206
    %1208 = vdwg.mxu0
    %1209 = vmatpush.msra.mxu0 %v1151
    %1210 = vmatpush.msra.mxu0 %v1150
    %1211 = vmatpush.msra.mxu0 %v1149
    %1212 = vmatpush.msra.mxu0 %v1148
    %1213 = vmatpush.msra.mxu0 %v1147
    %1214 = vmatpush.msra.mxu0 %v1146
    %1215 = vmatpush.msra.mxu0 %v1145
    %1216 = vmatpush.msra.mxu0 %v1144
    %1217 = vmatpush.msra.mxu0 %v1143
    %1218 = vmatpush.msra.mxu0 %v1142
    %1219 = vmatpush.msra.mxu0 %v1141
    %1220 = vmatpush.msra.mxu0 %v1140
    %1221 = vmatpush.msra.mxu0 %v1139
    %1222 = vmatpush.msra.mxu0 %v1138
    %1223 = vmatpush.msra.mxu0 %v1137
    %1224 = vmatpush.msra.mxu0 %v1136
    %1225 = vmatmul.f32.gmra.mxu0 %v128
    %v1226 = vpop.f32.mrf.mxu0
    %v1227 = vadd.f32 %v1207, %v1226
    %1228 = vdwg.mxu0
    %1229 = vmatpush.msra.mxu0 %v1167
    %1230 = vmatpush.msra.mxu0 %v1166
    %1231 = vmatpush.msra.mxu0 %v1165
    %1232 = vmatpush.msra.mxu0 %v1164
    %1233 = vmatpush.msra.mxu0 %v1163
    %1234 = vmatpush.msra.mxu0 %v1162
    %1235 = vmatpush.msra.mxu0 %v1161
    %1236 = vmatpush.msra.mxu0 %v1160
    %1237 = vmatpush.msra.mxu0 %v1159
    %1238 = vmatpush.msra.mxu0 %v1158
    %1239 = vmatpush.msra.mxu0 %v1157
    %1240 = vmatpush.msra.mxu0 %v1156
    %1241 = vmatpush.msra.mxu0 %v1155
    %1242 = vmatpush.msra.mxu0 %v1154
    %1243 = vmatpush.msra.mxu0 %v1153
    %1244 = vmatpush.msra.mxu0 %v1152
    %1245 = vmatmul.f32.gmra.mxu0 %v133
    %v1246 = vpop.f32.mrf.mxu0
    %v1247 = vadd.f32 %v1227, %v1246
    %1248 = vdwg.mxu0
    %1249 = vmatpush.msra.mxu0 %v1183
    %1250 = vmatpush.msra.mxu0 %v1182
    %1251 = vmatpush.msra.mxu0 %v1181
    %1252 = vmatpush.msra.mxu0 %v1180
    %1253 = vmatpush.msra.mxu0 %v1179
    %1254 = vmatpush.msra.mxu0 %v1178
    %1255 = vmatpush.msra.mxu0 %v1177
    %1256 = vmatpush.msra.mxu0 %v1176
    %1257 = vmatpush.msra.mxu0 %v1175
    %1258 = vmatpush.msra.mxu0 %v1174
    %1259 = vmatpush.msra.mxu0 %v1173
    %1260 = vmatpush.msra.mxu0 %v1172
    %1261 = vmatpush.msra.mxu0 %v1171
    %1262 = vmatpush.msra.mxu0 %v1170
    %1263 = vmatpush.msra.mxu0 %v1169
    %1264 = vmatpush.msra.mxu0 %v1168
    %1265 = vmatmul.f32.gmra.mxu0 %v134
    %v1266 = vpop.f32.mrf.mxu0
    %v1267 = vadd.f32 %v1247, %v1266
    %1268 = vdwg.mxu0
    %v1270 = vsel %vm435, %v1185, 0
    %v1273 = vsel %vm435, %v1186, 0
    %v1276 = vsel %vm435, %v1187, 0
    %v1279 = vsel %vm435, %v1188, 0
    %v1282 = vsel %vm448, %v1267, 0
    %1284 = vmatpush.msra.mxu0 0.0
    %1285 = vmatpush.msra.mxu0 0.0
    %1286 = vmatpush.msra.mxu0 0.0
    %1287 = vmatpush.msra.mxu0 0.0
    %1288 = vmatpush.msra.mxu0 0.0
    %1289 = vmatpush.msra.mxu0 0.0
    %1290 = vmatpush.msra.mxu0 0.0
    %1291 = vmatpush.msra.mxu0 0.0
    %1292 = vmatpush.msra.mxu0 0.0
    %1293 = vmatpush.msra.mxu0 0.0
    %1294 = vmatpush.msra.mxu0 0.0
    %1295 = vmatpush.msra.mxu0 0.0
    %1296 = vmatpush.msra.mxu0 0.0
    %1297 = vmatpush.msra.mxu0 0.0
    %1298 = vmatpush.msra.mxu0 0.0
    %1299 = vmatpush.msra.mxu0 %v1282
    %1300 = vmatmul.f32.gmra.mxu0 %v1270
    %v1301 = vpop.f32.mrf.mxu0
    %v1302 = vadd.f32 0.0, %v1301
    %1303 = vmatmul.f32.gmra.mxu0 %v1273
    %v1304 = vpop.f32.mrf.mxu0
    %v1305 = vadd.f32 0.0, %v1304
    %1306 = vmatmul.f32.gmra.mxu0 %v1276
    %v1307 = vpop.f32.mrf.mxu0
    %v1308 = vadd.f32 0.0, %v1307
    %1309 = vmatmul.f32.gmra.mxu0 %v1279
    %v1310 = vpop.f32.mrf.mxu0
    %v1311 = vadd.f32 0.0, %v1310
    %1312 = vdwg.mxu0
    %v1313 = vadd.f32 %v1115, %v1302
    %v1314 = vadd.f32 %v1116, %v1305
    %v1315 = vadd.f32 %v1117, %v1308
    %v1316 = vadd.f32 %v1118, %v1311
    %s1317 = scalar_lea.vmem %s1, 3072
    %v1318 = vld [vmem:[%s1317] sm:$0xff]
    %v1319 = vld [vmem:[%s1317 + $0x8] sm:$0xff]
    %v1320 = vld [vmem:[%s1317 + $0x10] sm:$0xff]
    %v1321 = vld [vmem:[%s1317 + $0x18] sm:$0xff]
    %v1322 = vld [vmem:[%s1317 + $0x20] sm:$0xff]
    %v1323 = vld [vmem:[%s1317 + $0x28] sm:$0xff]
    %v1324 = vld [vmem:[%s1317 + $0x30] sm:$0xff]
    %v1325 = vld [vmem:[%s1317 + $0x38] sm:$0xff]
    %v1326 = vld [vmem:[%s1317 + $0x40] sm:$0xff]
    %v1327 = vld [vmem:[%s1317 + $0x48] sm:$0xff]
    %v1328 = vld [vmem:[%s1317 + $0x50] sm:$0xff]
    %v1329 = vld [vmem:[%s1317 + $0x58] sm:$0xff]
    %v1330 = vld [vmem:[%s1317 + $0x60] sm:$0xff]
    %v1331 = vld [vmem:[%s1317 + $0x68] sm:$0xff]
    %v1332 = vld [vmem:[%s1317 + $0x70] sm:$0xff]
    %v1333 = vld [vmem:[%s1317 + $0x78] sm:$0xff]
    %v1334 = vld [vmem:[%s1317 + $0x80] sm:$0xff]
    %v1335 = vld [vmem:[%s1317 + $0x88] sm:$0xff]
    %v1336 = vld [vmem:[%s1317 + $0x90] sm:$0xff]
    %v1337 = vld [vmem:[%s1317 + $0x98] sm:$0xff]
    %v1338 = vld [vmem:[%s1317 + $0xa0] sm:$0xff]
    %v1339 = vld [vmem:[%s1317 + $0xa8] sm:$0xff]
    %v1340 = vld [vmem:[%s1317 + $0xb0] sm:$0xff]
    %v1341 = vld [vmem:[%s1317 + $0xb8] sm:$0xff]
    %v1342 = vld [vmem:[%s1317 + $0xc0] sm:$0xff]
    %v1343 = vld [vmem:[%s1317 + $0xc8] sm:$0xff]
    %v1344 = vld [vmem:[%s1317 + $0xd0] sm:$0xff]
    %v1345 = vld [vmem:[%s1317 + $0xd8] sm:$0xff]
    %v1346 = vld [vmem:[%s1317 + $0xe0] sm:$0xff]
    %v1347 = vld [vmem:[%s1317 + $0xe8] sm:$0xff]
    %v1348 = vld [vmem:[%s1317 + $0xf0] sm:$0xff]
    %v1349 = vld [vmem:[%s1317 + $0xf8] sm:$0xff]
    %v1350 = vld [vmem:[%s1317 + $0x100] sm:$0xff]
    %v1351 = vld [vmem:[%s1317 + $0x108] sm:$0xff]
    %v1352 = vld [vmem:[%s1317 + $0x110] sm:$0xff]
    %v1353 = vld [vmem:[%s1317 + $0x118] sm:$0xff]
    %v1354 = vld [vmem:[%s1317 + $0x120] sm:$0xff]
    %v1355 = vld [vmem:[%s1317 + $0x128] sm:$0xff]
    %v1356 = vld [vmem:[%s1317 + $0x130] sm:$0xff]
    %v1357 = vld [vmem:[%s1317 + $0x138] sm:$0xff]
    %v1358 = vld [vmem:[%s1317 + $0x140] sm:$0xff]
    %v1359 = vld [vmem:[%s1317 + $0x148] sm:$0xff]
    %v1360 = vld [vmem:[%s1317 + $0x150] sm:$0xff]
    %v1361 = vld [vmem:[%s1317 + $0x158] sm:$0xff]
    %v1362 = vld [vmem:[%s1317 + $0x160] sm:$0xff]
    %v1363 = vld [vmem:[%s1317 + $0x168] sm:$0xff]
    %v1364 = vld [vmem:[%s1317 + $0x170] sm:$0xff]
    %v1365 = vld [vmem:[%s1317 + $0x178] sm:$0xff]
    %v1366 = vld [vmem:[%s1317 + $0x180] sm:$0xff]
    %v1367 = vld [vmem:[%s1317 + $0x188] sm:$0xff]
    %v1368 = vld [vmem:[%s1317 + $0x190] sm:$0xff]
    %v1369 = vld [vmem:[%s1317 + $0x198] sm:$0xff]
    %v1370 = vld [vmem:[%s1317 + $0x1a0] sm:$0xff]
    %v1371 = vld [vmem:[%s1317 + $0x1a8] sm:$0xff]
    %v1372 = vld [vmem:[%s1317 + $0x1b0] sm:$0xff]
    %v1373 = vld [vmem:[%s1317 + $0x1b8] sm:$0xff]
    %v1374 = vld [vmem:[%s1317 + $0x1c0] sm:$0xff]
    %v1375 = vld [vmem:[%s1317 + $0x1c8] sm:$0xff]
    %v1376 = vld [vmem:[%s1317 + $0x1d0] sm:$0xff]
    %v1377 = vld [vmem:[%s1317 + $0x1d8] sm:$0xff]
    %v1378 = vld [vmem:[%s1317 + $0x1e0] sm:$0xff]
    %v1379 = vld [vmem:[%s1317 + $0x1e8] sm:$0xff]
    %v1380 = vld [vmem:[%s1317 + $0x1f0] sm:$0xff]
    %v1381 = vld [vmem:[%s1317 + $0x1f8] sm:$0xff]
    %s1382 = scalar_lea.vmem %s2, 192
    %v1383 = vld [vmem:[%s1382] sm:$0xff]
    %v1384 = vld [vmem:[%s1382 + $0x8] sm:$0xff]
    %v1385 = vld [vmem:[%s1382 + $0x10] sm:$0xff]
    %v1386 = vld [vmem:[%s1382 + $0x18] sm:$0xff]
    %1387 = vmatpush.msra.mxu0 %v1333
    %1388 = vmatpush.msra.mxu0 %v1332
    %1389 = vmatpush.msra.mxu0 %v1331
    %1390 = vmatpush.msra.mxu0 %v1330
    %1391 = vmatpush.msra.mxu0 %v1329
    %1392 = vmatpush.msra.mxu0 %v1328
    %1393 = vmatpush.msra.mxu0 %v1327
    %1394 = vmatpush.msra.mxu0 %v1326
    %1395 = vmatpush.msra.mxu0 %v1325
    %1396 = vmatpush.msra.mxu0 %v1324
    %1397 = vmatpush.msra.mxu0 %v1323
    %1398 = vmatpush.msra.mxu0 %v1322
    %1399 = vmatpush.msra.mxu0 %v1321
    %1400 = vmatpush.msra.mxu0 %v1320
    %1401 = vmatpush.msra.mxu0 %v1319
    %1402 = vmatpush.msra.mxu0 %v1318
    %1403 = vmatmul.f32.gmra.mxu0 %v127
    %v1404 = vpop.f32.mrf.mxu0
    %v1405 = vadd.f32 0.0, %v1404
    %1406 = vdwg.mxu0
    %1407 = vmatpush.msra.mxu0 %v1349
    %1408 = vmatpush.msra.mxu0 %v1348
    %1409 = vmatpush.msra.mxu0 %v1347
    %1410 = vmatpush.msra.mxu0 %v1346
    %1411 = vmatpush.msra.mxu0 %v1345
    %1412 = vmatpush.msra.mxu0 %v1344
    %1413 = vmatpush.msra.mxu0 %v1343
    %1414 = vmatpush.msra.mxu0 %v1342
    %1415 = vmatpush.msra.mxu0 %v1341
    %1416 = vmatpush.msra.mxu0 %v1340
    %1417 = vmatpush.msra.mxu0 %v1339
    %1418 = vmatpush.msra.mxu0 %v1338
    %1419 = vmatpush.msra.mxu0 %v1337
    %1420 = vmatpush.msra.mxu0 %v1336
    %1421 = vmatpush.msra.mxu0 %v1335
    %1422 = vmatpush.msra.mxu0 %v1334
    %1423 = vmatmul.f32.gmra.mxu0 %v128
    %v1424 = vpop.f32.mrf.mxu0
    %v1425 = vadd.f32 %v1405, %v1424
    %1426 = vdwg.mxu0
    %1427 = vmatpush.msra.mxu0 %v1365
    %1428 = vmatpush.msra.mxu0 %v1364
    %1429 = vmatpush.msra.mxu0 %v1363
    %1430 = vmatpush.msra.mxu0 %v1362
    %1431 = vmatpush.msra.mxu0 %v1361
    %1432 = vmatpush.msra.mxu0 %v1360
    %1433 = vmatpush.msra.mxu0 %v1359
    %1434 = vmatpush.msra.mxu0 %v1358
    %1435 = vmatpush.msra.mxu0 %v1357
    %1436 = vmatpush.msra.mxu0 %v1356
    %1437 = vmatpush.msra.mxu0 %v1355
    %1438 = vmatpush.msra.mxu0 %v1354
    %1439 = vmatpush.msra.mxu0 %v1353
    %1440 = vmatpush.msra.mxu0 %v1352
    %1441 = vmatpush.msra.mxu0 %v1351
    %1442 = vmatpush.msra.mxu0 %v1350
    %1443 = vmatmul.f32.gmra.mxu0 %v133
    %v1444 = vpop.f32.mrf.mxu0
    %v1445 = vadd.f32 %v1425, %v1444
    %1446 = vdwg.mxu0
    %1447 = vmatpush.msra.mxu0 %v1381
    %1448 = vmatpush.msra.mxu0 %v1380
    %1449 = vmatpush.msra.mxu0 %v1379
    %1450 = vmatpush.msra.mxu0 %v1378
    %1451 = vmatpush.msra.mxu0 %v1377
    %1452 = vmatpush.msra.mxu0 %v1376
    %1453 = vmatpush.msra.mxu0 %v1375
    %1454 = vmatpush.msra.mxu0 %v1374
    %1455 = vmatpush.msra.mxu0 %v1373
    %1456 = vmatpush.msra.mxu0 %v1372
    %1457 = vmatpush.msra.mxu0 %v1371
    %1458 = vmatpush.msra.mxu0 %v1370
    %1459 = vmatpush.msra.mxu0 %v1369
    %1460 = vmatpush.msra.mxu0 %v1368
    %1461 = vmatpush.msra.mxu0 %v1367
    %1462 = vmatpush.msra.mxu0 %v1366
    %1463 = vmatmul.f32.gmra.mxu0 %v134
    %v1464 = vpop.f32.mrf.mxu0
    %v1465 = vadd.f32 %v1445, %v1464
    %1466 = vdwg.mxu0
    %v1468 = vsel %vm435, %v1383, 0
    %v1471 = vsel %vm435, %v1384, 0
    %v1474 = vsel %vm435, %v1385, 0
    %v1477 = vsel %vm435, %v1386, 0
    %v1480 = vsel %vm448, %v1465, 0
    %1482 = vmatpush.msra.mxu0 0.0
    %1483 = vmatpush.msra.mxu0 0.0
    %1484 = vmatpush.msra.mxu0 0.0
    %1485 = vmatpush.msra.mxu0 0.0
    %1486 = vmatpush.msra.mxu0 0.0
    %1487 = vmatpush.msra.mxu0 0.0
    %1488 = vmatpush.msra.mxu0 0.0
    %1489 = vmatpush.msra.mxu0 0.0
    %1490 = vmatpush.msra.mxu0 0.0
    %1491 = vmatpush.msra.mxu0 0.0
    %1492 = vmatpush.msra.mxu0 0.0
    %1493 = vmatpush.msra.mxu0 0.0
    %1494 = vmatpush.msra.mxu0 0.0
    %1495 = vmatpush.msra.mxu0 0.0
    %1496 = vmatpush.msra.mxu0 0.0
    %1497 = vmatpush.msra.mxu0 %v1480
    %1498 = vmatmul.f32.gmra.mxu0 %v1468
    %v1499 = vpop.f32.mrf.mxu0
    %v1500 = vadd.f32 0.0, %v1499
    %1501 = vmatmul.f32.gmra.mxu0 %v1471
    %v1502 = vpop.f32.mrf.mxu0
    %v1503 = vadd.f32 0.0, %v1502
    %1504 = vmatmul.f32.gmra.mxu0 %v1474
    %v1505 = vpop.f32.mrf.mxu0
    %v1506 = vadd.f32 0.0, %v1505
    %1507 = vmatmul.f32.gmra.mxu0 %v1477
    %v1508 = vpop.f32.mrf.mxu0
    %v1509 = vadd.f32 0.0, %v1508
    %1510 = vdwg.mxu0
    %v1511 = vadd.f32 %v1313, %v1500
    %v1512 = vadd.f32 %v1314, %v1503
    %v1513 = vadd.f32 %v1315, %v1506
    %v1514 = vadd.f32 %v1316, %v1509
    %s1515 = scalar_lea.vmem %s1, 3584
    %v1516 = vld [vmem:[%s1515] sm:$0xff]
    %v1517 = vld [vmem:[%s1515 + $0x8] sm:$0xff]
    %v1518 = vld [vmem:[%s1515 + $0x10] sm:$0xff]
    %v1519 = vld [vmem:[%s1515 + $0x18] sm:$0xff]
    %v1520 = vld [vmem:[%s1515 + $0x20] sm:$0xff]
    %v1521 = vld [vmem:[%s1515 + $0x28] sm:$0xff]
    %v1522 = vld [vmem:[%s1515 + $0x30] sm:$0xff]
    %v1523 = vld [vmem:[%s1515 + $0x38] sm:$0xff]
    %v1524 = vld [vmem:[%s1515 + $0x40] sm:$0xff]
    %v1525 = vld [vmem:[%s1515 + $0x48] sm:$0xff]
    %v1526 = vld [vmem:[%s1515 + $0x50] sm:$0xff]
    %v1527 = vld [vmem:[%s1515 + $0x58] sm:$0xff]
    %v1528 = vld [vmem:[%s1515 + $0x60] sm:$0xff]
    %v1529 = vld [vmem:[%s1515 + $0x68] sm:$0xff]
    %v1530 = vld [vmem:[%s1515 + $0x70] sm:$0xff]
    %v1531 = vld [vmem:[%s1515 + $0x78] sm:$0xff]
    %v1532 = vld [vmem:[%s1515 + $0x80] sm:$0xff]
    %v1533 = vld [vmem:[%s1515 + $0x88] sm:$0xff]
    %v1534 = vld [vmem:[%s1515 + $0x90] sm:$0xff]
    %v1535 = vld [vmem:[%s1515 + $0x98] sm:$0xff]
    %v1536 = vld [vmem:[%s1515 + $0xa0] sm:$0xff]
    %v1537 = vld [vmem:[%s1515 + $0xa8] sm:$0xff]
    %v1538 = vld [vmem:[%s1515 + $0xb0] sm:$0xff]
    %v1539 = vld [vmem:[%s1515 + $0xb8] sm:$0xff]
    %v1540 = vld [vmem:[%s1515 + $0xc0] sm:$0xff]
    %v1541 = vld [vmem:[%s1515 + $0xc8] sm:$0xff]
    %v1542 = vld [vmem:[%s1515 + $0xd0] sm:$0xff]
    %v1543 = vld [vmem:[%s1515 + $0xd8] sm:$0xff]
    %v1544 = vld [vmem:[%s1515 + $0xe0] sm:$0xff]
    %v1545 = vld [vmem:[%s1515 + $0xe8] sm:$0xff]
    %v1546 = vld [vmem:[%s1515 + $0xf0] sm:$0xff]
    %v1547 = vld [vmem:[%s1515 + $0xf8] sm:$0xff]
    %v1548 = vld [vmem:[%s1515 + $0x100] sm:$0xff]
    %v1549 = vld [vmem:[%s1515 + $0x108] sm:$0xff]
    %v1550 = vld [vmem:[%s1515 + $0x110] sm:$0xff]
    %v1551 = vld [vmem:[%s1515 + $0x118] sm:$0xff]
    %v1552 = vld [vmem:[%s1515 + $0x120] sm:$0xff]
    %v1553 = vld [vmem:[%s1515 + $0x128] sm:$0xff]
    %v1554 = vld [vmem:[%s1515 + $0x130] sm:$0xff]
    %v1555 = vld [vmem:[%s1515 + $0x138] sm:$0xff]
    %v1556 = vld [vmem:[%s1515 + $0x140] sm:$0xff]
    %v1557 = vld [vmem:[%s1515 + $0x148] sm:$0xff]
    %v1558 = vld [vmem:[%s1515 + $0x150] sm:$0xff]
    %v1559 = vld [vmem:[%s1515 + $0x158] sm:$0xff]
    %v1560 = vld [vmem:[%s1515 + $0x160] sm:$0xff]
    %v1561 = vld [vmem:[%s1515 + $0x168] sm:$0xff]
    %v1562 = vld [vmem:[%s1515 + $0x170] sm:$0xff]
    %v1563 = vld [vmem:[%s1515 + $0x178] sm:$0xff]
    %v1564 = vld [vmem:[%s1515 + $0x180] sm:$0xff]
    %v1565 = vld [vmem:[%s1515 + $0x188] sm:$0xff]
    %v1566 = vld [vmem:[%s1515 + $0x190] sm:$0xff]
    %v1567 = vld [vmem:[%s1515 + $0x198] sm:$0xff]
    %v1568 = vld [vmem:[%s1515 + $0x1a0] sm:$0xff]
    %v1569 = vld [vmem:[%s1515 + $0x1a8] sm:$0xff]
    %v1570 = vld [vmem:[%s1515 + $0x1b0] sm:$0xff]
    %v1571 = vld [vmem:[%s1515 + $0x1b8] sm:$0xff]
    %v1572 = vld [vmem:[%s1515 + $0x1c0] sm:$0xff]
    %v1573 = vld [vmem:[%s1515 + $0x1c8] sm:$0xff]
    %v1574 = vld [vmem:[%s1515 + $0x1d0] sm:$0xff]
    %v1575 = vld [vmem:[%s1515 + $0x1d8] sm:$0xff]
    %v1576 = vld [vmem:[%s1515 + $0x1e0] sm:$0xff]
    %v1577 = vld [vmem:[%s1515 + $0x1e8] sm:$0xff]
    %v1578 = vld [vmem:[%s1515 + $0x1f0] sm:$0xff]
    %v1579 = vld [vmem:[%s1515 + $0x1f8] sm:$0xff]
    %s1580 = scalar_lea.vmem %s2, 224
    %v1581 = vld [vmem:[%s1580] sm:$0xff]
    %v1582 = vld [vmem:[%s1580 + $0x8] sm:$0xff]
    %v1583 = vld [vmem:[%s1580 + $0x10] sm:$0xff]
    %v1584 = vld [vmem:[%s1580 + $0x18] sm:$0xff]
    %1585 = vmatpush.msra.mxu0 %v1531
    %1586 = vmatpush.msra.mxu0 %v1530
    %1587 = vmatpush.msra.mxu0 %v1529
    %1588 = vmatpush.msra.mxu0 %v1528
    %1589 = vmatpush.msra.mxu0 %v1527
    %1590 = vmatpush.msra.mxu0 %v1526
    %1591 = vmatpush.msra.mxu0 %v1525
    %1592 = vmatpush.msra.mxu0 %v1524
    %1593 = vmatpush.msra.mxu0 %v1523
    %1594 = vmatpush.msra.mxu0 %v1522
    %1595 = vmatpush.msra.mxu0 %v1521
    %1596 = vmatpush.msra.mxu0 %v1520
    %1597 = vmatpush.msra.mxu0 %v1519
    %1598 = vmatpush.msra.mxu0 %v1518
    %1599 = vmatpush.msra.mxu0 %v1517
    %1600 = vmatpush.msra.mxu0 %v1516
    %1601 = vmatmul.f32.gmra.mxu0 %v127
    %v1602 = vpop.f32.mrf.mxu0
    %v1603 = vadd.f32 0.0, %v1602
    %1604 = vdwg.mxu0
    %1605 = vmatpush.msra.mxu0 %v1547
    %1606 = vmatpush.msra.mxu0 %v1546
    %1607 = vmatpush.msra.mxu0 %v1545
    %1608 = vmatpush.msra.mxu0 %v1544
    %1609 = vmatpush.msra.mxu0 %v1543
    %1610 = vmatpush.msra.mxu0 %v1542
    %1611 = vmatpush.msra.mxu0 %v1541
    %1612 = vmatpush.msra.mxu0 %v1540
    %1613 = vmatpush.msra.mxu0 %v1539
    %1614 = vmatpush.msra.mxu0 %v1538
    %1615 = vmatpush.msra.mxu0 %v1537
    %1616 = vmatpush.msra.mxu0 %v1536
    %1617 = vmatpush.msra.mxu0 %v1535
    %1618 = vmatpush.msra.mxu0 %v1534
    %1619 = vmatpush.msra.mxu0 %v1533
    %1620 = vmatpush.msra.mxu0 %v1532
    %1621 = vmatmul.f32.gmra.mxu0 %v128
    %v1622 = vpop.f32.mrf.mxu0
    %v1623 = vadd.f32 %v1603, %v1622
    %1624 = vdwg.mxu0
    %1625 = vmatpush.msra.mxu0 %v1563
    %1626 = vmatpush.msra.mxu0 %v1562
    %1627 = vmatpush.msra.mxu0 %v1561
    %1628 = vmatpush.msra.mxu0 %v1560
    %1629 = vmatpush.msra.mxu0 %v1559
    %1630 = vmatpush.msra.mxu0 %v1558
    %1631 = vmatpush.msra.mxu0 %v1557
    %1632 = vmatpush.msra.mxu0 %v1556
    %1633 = vmatpush.msra.mxu0 %v1555
    %1634 = vmatpush.msra.mxu0 %v1554
    %1635 = vmatpush.msra.mxu0 %v1553
    %1636 = vmatpush.msra.mxu0 %v1552
    %1637 = vmatpush.msra.mxu0 %v1551
    %1638 = vmatpush.msra.mxu0 %v1550
    %1639 = vmatpush.msra.mxu0 %v1549
    %1640 = vmatpush.msra.mxu0 %v1548
    %1641 = vmatmul.f32.gmra.mxu0 %v133
    %v1642 = vpop.f32.mrf.mxu0
    %v1643 = vadd.f32 %v1623, %v1642
    %1644 = vdwg.mxu0
    %1645 = vmatpush.msra.mxu0 %v1579
    %1646 = vmatpush.msra.mxu0 %v1578
    %1647 = vmatpush.msra.mxu0 %v1577
    %1648 = vmatpush.msra.mxu0 %v1576
    %1649 = vmatpush.msra.mxu0 %v1575
    %1650 = vmatpush.msra.mxu0 %v1574
    %1651 = vmatpush.msra.mxu0 %v1573
    %1652 = vmatpush.msra.mxu0 %v1572
    %1653 = vmatpush.msra.mxu0 %v1571
    %1654 = vmatpush.msra.mxu0 %v1570
    %1655 = vmatpush.msra.mxu0 %v1569
    %1656 = vmatpush.msra.mxu0 %v1568
    %1657 = vmatpush.msra.mxu0 %v1567
    %1658 = vmatpush.msra.mxu0 %v1566
    %1659 = vmatpush.msra.mxu0 %v1565
    %1660 = vmatpush.msra.mxu0 %v1564
    %1661 = vmatmul.f32.gmra.mxu0 %v134
    %v1662 = vpop.f32.mrf.mxu0
    %v1663 = vadd.f32 %v1643, %v1662
    %1664 = vdwg.mxu0
    %v1666 = vsel %vm435, %v1581, 0
    %v1669 = vsel %vm435, %v1582, 0
    %v1672 = vsel %vm435, %v1583, 0
    %v1675 = vsel %vm435, %v1584, 0
    %v1678 = vsel %vm448, %v1663, 0
    %1680 = vmatpush.msra.mxu0 0.0
    %1681 = vmatpush.msra.mxu0 0.0
    %1682 = vmatpush.msra.mxu0 0.0
    %1683 = vmatpush.msra.mxu0 0.0
    %1684 = vmatpush.msra.mxu0 0.0
    %1685 = vmatpush.msra.mxu0 0.0
    %1686 = vmatpush.msra.mxu0 0.0
    %1687 = vmatpush.msra.mxu0 0.0
    %1688 = vmatpush.msra.mxu0 0.0
    %1689 = vmatpush.msra.mxu0 0.0
    %1690 = vmatpush.msra.mxu0 0.0
    %1691 = vmatpush.msra.mxu0 0.0
    %1692 = vmatpush.msra.mxu0 0.0
    %1693 = vmatpush.msra.mxu0 0.0
    %1694 = vmatpush.msra.mxu0 0.0
    %1695 = vmatpush.msra.mxu0 %v1678
    %1696 = vmatmul.f32.gmra.mxu0 %v1666
    %v1697 = vpop.f32.mrf.mxu0
    %v1698 = vadd.f32 0.0, %v1697
    %1699 = vmatmul.f32.gmra.mxu0 %v1669
    %v1700 = vpop.f32.mrf.mxu0
    %v1701 = vadd.f32 0.0, %v1700
    %1702 = vmatmul.f32.gmra.mxu0 %v1672
    %v1703 = vpop.f32.mrf.mxu0
    %v1704 = vadd.f32 0.0, %v1703
    %1705 = vmatmul.f32.gmra.mxu0 %v1675
    %v1706 = vpop.f32.mrf.mxu0
    %v1707 = vadd.f32 0.0, %v1706
    %1708 = vdwg.mxu0
    %v1709 = vadd.f32 %v1511, %v1698
    %v1710 = vadd.f32 %v1512, %v1701
    %v1711 = vadd.f32 %v1513, %v1704
    %v1712 = vadd.f32 %v1514, %v1707
    %s1713 = scalar_lea.vmem %s1, 4096
    %v1714 = vld [vmem:[%s1713] sm:$0xff]
    %v1715 = vld [vmem:[%s1713 + $0x8] sm:$0xff]
    %v1716 = vld [vmem:[%s1713 + $0x10] sm:$0xff]
    %v1717 = vld [vmem:[%s1713 + $0x18] sm:$0xff]
    %v1718 = vld [vmem:[%s1713 + $0x20] sm:$0xff]
    %v1719 = vld [vmem:[%s1713 + $0x28] sm:$0xff]
    %v1720 = vld [vmem:[%s1713 + $0x30] sm:$0xff]
    %v1721 = vld [vmem:[%s1713 + $0x38] sm:$0xff]
    %v1722 = vld [vmem:[%s1713 + $0x40] sm:$0xff]
    %v1723 = vld [vmem:[%s1713 + $0x48] sm:$0xff]
    %v1724 = vld [vmem:[%s1713 + $0x50] sm:$0xff]
    %v1725 = vld [vmem:[%s1713 + $0x58] sm:$0xff]
    %v1726 = vld [vmem:[%s1713 + $0x60] sm:$0xff]
    %v1727 = vld [vmem:[%s1713 + $0x68] sm:$0xff]
    %v1728 = vld [vmem:[%s1713 + $0x70] sm:$0xff]
    %v1729 = vld [vmem:[%s1713 + $0x78] sm:$0xff]
    %v1730 = vld [vmem:[%s1713 + $0x80] sm:$0xff]
    %v1731 = vld [vmem:[%s1713 + $0x88] sm:$0xff]
    %v1732 = vld [vmem:[%s1713 + $0x90] sm:$0xff]
    %v1733 = vld [vmem:[%s1713 + $0x98] sm:$0xff]
    %v1734 = vld [vmem:[%s1713 + $0xa0] sm:$0xff]
    %v1735 = vld [vmem:[%s1713 + $0xa8] sm:$0xff]
    %v1736 = vld [vmem:[%s1713 + $0xb0] sm:$0xff]
    %v1737 = vld [vmem:[%s1713 + $0xb8] sm:$0xff]
    %v1738 = vld [vmem:[%s1713 + $0xc0] sm:$0xff]
    %v1739 = vld [vmem:[%s1713 + $0xc8] sm:$0xff]
    %v1740 = vld [vmem:[%s1713 + $0xd0] sm:$0xff]
    %v1741 = vld [vmem:[%s1713 + $0xd8] sm:$0xff]
    %v1742 = vld [vmem:[%s1713 + $0xe0] sm:$0xff]
    %v1743 = vld [vmem:[%s1713 + $0xe8] sm:$0xff]
    %v1744 = vld [vmem:[%s1713 + $0xf0] sm:$0xff]
    %v1745 = vld [vmem:[%s1713 + $0xf8] sm:$0xff]
    %v1746 = vld [vmem:[%s1713 + $0x100] sm:$0xff]
    %v1747 = vld [vmem:[%s1713 + $0x108] sm:$0xff]
    %v1748 = vld [vmem:[%s1713 + $0x110] sm:$0xff]
    %v1749 = vld [vmem:[%s1713 + $0x118] sm:$0xff]
    %v1750 = vld [vmem:[%s1713 + $0x120] sm:$0xff]
    %v1751 = vld [vmem:[%s1713 + $0x128] sm:$0xff]
    %v1752 = vld [vmem:[%s1713 + $0x130] sm:$0xff]
    %v1753 = vld [vmem:[%s1713 + $0x138] sm:$0xff]
    %v1754 = vld [vmem:[%s1713 + $0x140] sm:$0xff]
    %v1755 = vld [vmem:[%s1713 + $0x148] sm:$0xff]
    %v1756 = vld [vmem:[%s1713 + $0x150] sm:$0xff]
    %v1757 = vld [vmem:[%s1713 + $0x158] sm:$0xff]
    %v1758 = vld [vmem:[%s1713 + $0x160] sm:$0xff]
    %v1759 = vld [vmem:[%s1713 + $0x168] sm:$0xff]
    %v1760 = vld [vmem:[%s1713 + $0x170] sm:$0xff]
    %v1761 = vld [vmem:[%s1713 + $0x178] sm:$0xff]
    %v1762 = vld [vmem:[%s1713 + $0x180] sm:$0xff]
    %v1763 = vld [vmem:[%s1713 + $0x188] sm:$0xff]
    %v1764 = vld [vmem:[%s1713 + $0x190] sm:$0xff]
    %v1765 = vld [vmem:[%s1713 + $0x198] sm:$0xff]
    %v1766 = vld [vmem:[%s1713 + $0x1a0] sm:$0xff]
    %v1767 = vld [vmem:[%s1713 + $0x1a8] sm:$0xff]
    %v1768 = vld [vmem:[%s1713 + $0x1b0] sm:$0xff]
    %v1769 = vld [vmem:[%s1713 + $0x1b8] sm:$0xff]
    %v1770 = vld [vmem:[%s1713 + $0x1c0] sm:$0xff]
    %v1771 = vld [vmem:[%s1713 + $0x1c8] sm:$0xff]
    %v1772 = vld [vmem:[%s1713 + $0x1d0] sm:$0xff]
    %v1773 = vld [vmem:[%s1713 + $0x1d8] sm:$0xff]
    %v1774 = vld [vmem:[%s1713 + $0x1e0] sm:$0xff]
    %v1775 = vld [vmem:[%s1713 + $0x1e8] sm:$0xff]
    %v1776 = vld [vmem:[%s1713 + $0x1f0] sm:$0xff]
    %v1777 = vld [vmem:[%s1713 + $0x1f8] sm:$0xff]
    %s1778 = scalar_lea.vmem %s2, 256
    %v1779 = vld [vmem:[%s1778] sm:$0xff]
    %v1780 = vld [vmem:[%s1778 + $0x8] sm:$0xff]
    %v1781 = vld [vmem:[%s1778 + $0x10] sm:$0xff]
    %v1782 = vld [vmem:[%s1778 + $0x18] sm:$0xff]
    %1783 = vmatpush.msra.mxu0 %v1729
    %1784 = vmatpush.msra.mxu0 %v1728
    %1785 = vmatpush.msra.mxu0 %v1727
    %1786 = vmatpush.msra.mxu0 %v1726
    %1787 = vmatpush.msra.mxu0 %v1725
    %1788 = vmatpush.msra.mxu0 %v1724
    %1789 = vmatpush.msra.mxu0 %v1723
    %1790 = vmatpush.msra.mxu0 %v1722
    %1791 = vmatpush.msra.mxu0 %v1721
    %1792 = vmatpush.msra.mxu0 %v1720
    %1793 = vmatpush.msra.mxu0 %v1719
    %1794 = vmatpush.msra.mxu0 %v1718
    %1795 = vmatpush.msra.mxu0 %v1717
    %1796 = vmatpush.msra.mxu0 %v1716
    %1797 = vmatpush.msra.mxu0 %v1715
    %1798 = vmatpush.msra.mxu0 %v1714
    %1799 = vmatmul.f32.gmra.mxu0 %v127
    %v1800 = vpop.f32.mrf.mxu0
    %v1801 = vadd.f32 0.0, %v1800
    %1802 = vdwg.mxu0
    %1803 = vmatpush.msra.mxu0 %v1745
    %1804 = vmatpush.msra.mxu0 %v1744
    %1805 = vmatpush.msra.mxu0 %v1743
    %1806 = vmatpush.msra.mxu0 %v1742
    %1807 = vmatpush.msra.mxu0 %v1741
    %1808 = vmatpush.msra.mxu0 %v1740
    %1809 = vmatpush.msra.mxu0 %v1739
    %1810 = vmatpush.msra.mxu0 %v1738
    %1811 = vmatpush.msra.mxu0 %v1737
    %1812 = vmatpush.msra.mxu0 %v1736
    %1813 = vmatpush.msra.mxu0 %v1735
    %1814 = vmatpush.msra.mxu0 %v1734
    %1815 = vmatpush.msra.mxu0 %v1733
    %1816 = vmatpush.msra.mxu0 %v1732
    %1817 = vmatpush.msra.mxu0 %v1731
    %1818 = vmatpush.msra.mxu0 %v1730
    %1819 = vmatmul.f32.gmra.mxu0 %v128
    %v1820 = vpop.f32.mrf.mxu0
    %v1821 = vadd.f32 %v1801, %v1820
    %1822 = vdwg.mxu0
    %1823 = vmatpush.msra.mxu0 %v1761
    %1824 = vmatpush.msra.mxu0 %v1760
    %1825 = vmatpush.msra.mxu0 %v1759
    %1826 = vmatpush.msra.mxu0 %v1758
    %1827 = vmatpush.msra.mxu0 %v1757
    %1828 = vmatpush.msra.mxu0 %v1756
    %1829 = vmatpush.msra.mxu0 %v1755
    %1830 = vmatpush.msra.mxu0 %v1754
    %1831 = vmatpush.msra.mxu0 %v1753
    %1832 = vmatpush.msra.mxu0 %v1752
    %1833 = vmatpush.msra.mxu0 %v1751
    %1834 = vmatpush.msra.mxu0 %v1750
    %1835 = vmatpush.msra.mxu0 %v1749
    %1836 = vmatpush.msra.mxu0 %v1748
    %1837 = vmatpush.msra.mxu0 %v1747
    %1838 = vmatpush.msra.mxu0 %v1746
    %1839 = vmatmul.f32.gmra.mxu0 %v133
    %v1840 = vpop.f32.mrf.mxu0
    %v1841 = vadd.f32 %v1821, %v1840
    %1842 = vdwg.mxu0
    %1843 = vmatpush.msra.mxu0 %v1777
    %1844 = vmatpush.msra.mxu0 %v1776
    %1845 = vmatpush.msra.mxu0 %v1775
    %1846 = vmatpush.msra.mxu0 %v1774
    %1847 = vmatpush.msra.mxu0 %v1773
    %1848 = vmatpush.msra.mxu0 %v1772
    %1849 = vmatpush.msra.mxu0 %v1771
    %1850 = vmatpush.msra.mxu0 %v1770
    %1851 = vmatpush.msra.mxu0 %v1769
    %1852 = vmatpush.msra.mxu0 %v1768
    %1853 = vmatpush.msra.mxu0 %v1767
    %1854 = vmatpush.msra.mxu0 %v1766
    %1855 = vmatpush.msra.mxu0 %v1765
    %1856 = vmatpush.msra.mxu0 %v1764
    %1857 = vmatpush.msra.mxu0 %v1763
    %1858 = vmatpush.msra.mxu0 %v1762
    %1859 = vmatmul.f32.gmra.mxu0 %v134
    %v1860 = vpop.f32.mrf.mxu0
    %v1861 = vadd.f32 %v1841, %v1860
    %1862 = vdwg.mxu0
    %v1864 = vsel %vm435, %v1779, 0
    %v1867 = vsel %vm435, %v1780, 0
    %v1870 = vsel %vm435, %v1781, 0
    %v1873 = vsel %vm435, %v1782, 0
    %v1876 = vsel %vm448, %v1861, 0
    %1878 = vmatpush.msra.mxu0 0.0
    %1879 = vmatpush.msra.mxu0 0.0
    %1880 = vmatpush.msra.mxu0 0.0
    %1881 = vmatpush.msra.mxu0 0.0
    %1882 = vmatpush.msra.mxu0 0.0
    %1883 = vmatpush.msra.mxu0 0.0
    %1884 = vmatpush.msra.mxu0 0.0
    %1885 = vmatpush.msra.mxu0 0.0
    %1886 = vmatpush.msra.mxu0 0.0
    %1887 = vmatpush.msra.mxu0 0.0
    %1888 = vmatpush.msra.mxu0 0.0
    %1889 = vmatpush.msra.mxu0 0.0
    %1890 = vmatpush.msra.mxu0 0.0
    %1891 = vmatpush.msra.mxu0 0.0
    %1892 = vmatpush.msra.mxu0 0.0
    %1893 = vmatpush.msra.mxu0 %v1876
    %1894 = vmatmul.f32.gmra.mxu0 %v1864
    %v1895 = vpop.f32.mrf.mxu0
    %v1896 = vadd.f32 0.0, %v1895
    %1897 = vmatmul.f32.gmra.mxu0 %v1867
    %v1898 = vpop.f32.mrf.mxu0
    %v1899 = vadd.f32 0.0, %v1898
    %1900 = vmatmul.f32.gmra.mxu0 %v1870
    %v1901 = vpop.f32.mrf.mxu0
    %v1902 = vadd.f32 0.0, %v1901
    %1903 = vmatmul.f32.gmra.mxu0 %v1873
    %v1904 = vpop.f32.mrf.mxu0
    %v1905 = vadd.f32 0.0, %v1904
    %1906 = vdwg.mxu0
    %v1907 = vadd.f32 %v1709, %v1896
    %v1908 = vadd.f32 %v1710, %v1899
    %v1909 = vadd.f32 %v1711, %v1902
    %v1910 = vadd.f32 %v1712, %v1905
    %1911 = vadd.xlane.f32.xlu0 %v1907
    %v1912 = vpop.xlane.xlu0 %1911
    %1913 = vadd.xlane.f32.xlu0 %v1908
    %v1914 = vpop.xlane.xlu0 %1913
    %1915 = vadd.xlane.f32.xlu0 %v1909
    %v1916 = vpop.xlane.xlu0 %1915
    %1917 = vadd.xlane.f32.xlu0 %v1910
    %v1918 = vpop.xlane.xlu0 %1917
    %v1919 = vrcp.pop 128.0
    %v1920 = vmul.f32 128.0, %v1919
    %v1921 = vsub.f32 1.0, %v1920
    %v1922 = vmul.f32 %v1919, %v1921
    %v1923 = vadd.f32 %v1919, %v1922
    %vm1924 = vweird.f32 %v1919
    %v1925 = vsel %vm1924, %v1919, %v1923
    %v1926 = vmul.f32 %v1912, %v1925
    %v1927 = vmul.f32 %v1914, %v1925
    %v1928 = vmul.f32 %v1916, %v1925
    %v1929 = vmul.f32 %v1918, %v1925
    %v1930 = vsub.f32 %v1907, %v1926
    %v1931 = vsub.f32 %v1908, %v1927
    %v1932 = vsub.f32 %v1909, %v1928
    %v1933 = vsub.f32 %v1910, %v1929
    %v1934 = vmul.f32 %v1930, %v1930
    %v1935 = vmul.f32 %v1931, %v1931
    %v1936 = vmul.f32 %v1932, %v1932
    %v1937 = vmul.f32 %v1933, %v1933
    %1938 = vadd.xlane.f32.xlu0 %v1934
    %v1939 = vpop.xlane.xlu0 %1938
    %1940 = vadd.xlane.f32.xlu0 %v1935
    %v1941 = vpop.xlane.xlu0 %1940
    %1942 = vadd.xlane.f32.xlu0 %v1936
    %v1943 = vpop.xlane.xlu0 %1942
    %1944 = vadd.xlane.f32.xlu0 %v1937
    %v1945 = vpop.xlane.xlu0 %1944
    %v1946 = vmul.f32 %v1939, %v1925
    %v1947 = vmul.f32 %v1941, %v1925
    %v1948 = vmul.f32 %v1943, %v1925
    %v1949 = vmul.f32 %v1945, %v1925
    %v1950 = vadd.f32 %v1946, 1e-05
    %v1951 = vadd.f32 %v1947, 1e-05
    %v1952 = vadd.f32 %v1948, 1e-05
    %v1953 = vadd.f32 %v1949, 1e-05
    %v1954 = vrsqrt.pop %v1950
    %v1955 = vmul.f32 %v1954, %v1950
    %v1956 = vmul.f32 %v1955, %v1954
    %v1957 = vmul.f32 0.5, %v1956
    %v1958 = vsub.f32 1.5, %v1957
    %v1959 = vmul.f32 %v1954, %v1958
    %vm1960 = vweird.f32 %v1950
    %vm1961 = vweird.f32 %v1954
    %vm1962 = vmor %vm1960, %vm1961
    %v1963 = vsel %vm1962, %v1954, %v1959
    %v1964 = vrsqrt.pop %v1951
    %v1965 = vmul.f32 %v1964, %v1951
    %v1966 = vmul.f32 %v1965, %v1964
    %v1967 = vmul.f32 0.5, %v1966
    %v1968 = vsub.f32 1.5, %v1967
    %v1969 = vmul.f32 %v1964, %v1968
    %vm1970 = vweird.f32 %v1951
    %vm1971 = vweird.f32 %v1964
    %vm1972 = vmor %vm1970, %vm1971
    %v1973 = vsel %vm1972, %v1964, %v1969
    %v1974 = vrsqrt.pop %v1952
    %v1975 = vmul.f32 %v1974, %v1952
    %v1976 = vmul.f32 %v1975, %v1974
    %v1977 = vmul.f32 0.5, %v1976
    %v1978 = vsub.f32 1.5, %v1977
    %v1979 = vmul.f32 %v1974, %v1978
    %vm1980 = vweird.f32 %v1952
    %vm1981 = vweird.f32 %v1974
    %vm1982 = vmor %vm1980, %vm1981
    %v1983 = vsel %vm1982, %v1974, %v1979
    %v1984 = vrsqrt.pop %v1953
    %v1985 = vmul.f32 %v1984, %v1953
    %v1986 = vmul.f32 %v1985, %v1984
    %v1987 = vmul.f32 0.5, %v1986
    %v1988 = vsub.f32 1.5, %v1987
    %v1989 = vmul.f32 %v1984, %v1988
    %vm1990 = vweird.f32 %v1953
    %vm1991 = vweird.f32 %v1984
    %vm1992 = vmor %vm1990, %vm1991
    %v1993 = vsel %vm1992, %v1984, %v1989
    %v1994 = vmul.f32 %v1930, %v1963
    %v1995 = vmul.f32 %v1931, %v1973
    %v1996 = vmul.f32 %v1932, %v1983
    %v1997 = vmul.f32 %v1933, %v1993
    %v1998 = vld [vmem:[%s3] sm:$0xff]
    %v1999 = vld [vmem:[%s3 + $0x8] sm:$0xff]
    %v2000 = vld [vmem:[%s3 + $0x10] sm:$0xff]
    %v2001 = vld [vmem:[%s3 + $0x18] sm:$0xff]
    %2003 = vset.pattern.permute.xlu0 0
    %2004 = vperm.xlu0 %2003, %v1998
    %v2005 = vpop.permute.xlu0 %2004
    %2008 = vset.pattern.permute.xlu0 0
    %2009 = vperm.xlu0 %2008, %v1999
    %v2010 = vpop.permute.xlu0 %2009
    %2013 = vset.pattern.permute.xlu0 0
    %2014 = vperm.xlu0 %2013, %v2000
    %v2015 = vpop.permute.xlu0 %2014
    %2018 = vset.pattern.permute.xlu0 0
    %2019 = vperm.xlu0 %2018, %v2001
    %v2020 = vpop.permute.xlu0 %2019
    %v2022 = vmul.f32 %v1994, %v2005
    %v2023 = vmul.f32 %v1995, %v2010
    %v2024 = vmul.f32 %v1996, %v2015
    %v2025 = vmul.f32 %v1997, %v2020
    %v2026 = vld [vmem:[%s4] sm:$0xff]
    %v2027 = vld [vmem:[%s4 + $0x8] sm:$0xff]
    %v2028 = vld [vmem:[%s4 + $0x10] sm:$0xff]
    %v2029 = vld [vmem:[%s4 + $0x18] sm:$0xff]
    %2031 = vset.pattern.permute.xlu0 0
    %2032 = vperm.xlu0 %2031, %v2026
    %v2033 = vpop.permute.xlu0 %2032
    %2036 = vset.pattern.permute.xlu0 0
    %2037 = vperm.xlu0 %2036, %v2027
    %v2038 = vpop.permute.xlu0 %2037
    %2041 = vset.pattern.permute.xlu0 0
    %2042 = vperm.xlu0 %2041, %v2028
    %v2043 = vpop.permute.xlu0 %2042
    %2046 = vset.pattern.permute.xlu0 0
    %2047 = vperm.xlu0 %2046, %v2029
    %v2048 = vpop.permute.xlu0 %2047
    %v2050 = vadd.f32 %v2022, %v2033
    %v2051 = vadd.f32 %v2023, %v2038
    %v2052 = vadd.f32 %v2024, %v2043
    %v2053 = vadd.f32 %v2025, %v2048
    %v2054 = vmax.f32 %v2050, 0.0
    %v2055 = vmax.f32 %v2051, 0.0
    %v2056 = vmax.f32 %v2052, 0.0
    %v2057 = vmax.f32 %v2053, 0.0
    %v2058 = vld [vmem:[%s5] sm:$0xff]
    %v2059 = vld [vmem:[%s5 + $0x8] sm:$0xff]
    %v2060 = vld [vmem:[%s5 + $0x10] sm:$0xff]
    %v2061 = vld [vmem:[%s5 + $0x18] sm:$0xff]
    %v2062 = vld [vmem:[%s5 + $0x20] sm:$0xff]
    %v2063 = vld [vmem:[%s5 + $0x28] sm:$0xff]
    %v2064 = vld [vmem:[%s5 + $0x30] sm:$0xff]
    %v2065 = vld [vmem:[%s5 + $0x38] sm:$0xff]
    %v2066 = vld [vmem:[%s5 + $0x40] sm:$0xff]
    %v2067 = vld [vmem:[%s5 + $0x48] sm:$0xff]
    %v2068 = vld [vmem:[%s5 + $0x50] sm:$0xff]
    %v2069 = vld [vmem:[%s5 + $0x58] sm:$0xff]
    %v2070 = vld [vmem:[%s5 + $0x60] sm:$0xff]
    %v2071 = vld [vmem:[%s5 + $0x68] sm:$0xff]
    %v2072 = vld [vmem:[%s5 + $0x70] sm:$0xff]
    %v2073 = vld [vmem:[%s5 + $0x78] sm:$0xff]
    %v2074 = vld [vmem:[%s6] sm:$0xff]
    %v2075 = vld [vmem:[%s6 + $0x8] sm:$0xff]
    %v2076 = vld [vmem:[%s6 + $0x10] sm:$0xff]
    %v2077 = vld [vmem:[%s6 + $0x18] sm:$0xff]
    %v2078 = vld [vmem:[%s6 + $0x20] sm:$0xff]
    %v2079 = vld [vmem:[%s6 + $0x28] sm:$0xff]
    %v2080 = vld [vmem:[%s6 + $0x30] sm:$0xff]
    %v2081 = vld [vmem:[%s6 + $0x38] sm:$0xff]
    %2082 = vmatpush.msra.mxu0 %v2073
    %2083 = vmatpush.msra.mxu0 %v2072
    %2084 = vmatpush.msra.mxu0 %v2071
    %2085 = vmatpush.msra.mxu0 %v2070
    %2086 = vmatpush.msra.mxu0 %v2069
    %2087 = vmatpush.msra.mxu0 %v2068
    %2088 = vmatpush.msra.mxu0 %v2067
    %2089 = vmatpush.msra.mxu0 %v2066
    %2090 = vmatpush.msra.mxu0 %v2065
    %2091 = vmatpush.msra.mxu0 %v2064
    %2092 = vmatpush.msra.mxu0 %v2063
    %2093 = vmatpush.msra.mxu0 %v2062
    %2094 = vmatpush.msra.mxu0 %v2061
    %2095 = vmatpush.msra.mxu0 %v2060
    %2096 = vmatpush.msra.mxu0 %v2059
    %2097 = vmatpush.msra.mxu0 %v2058
    %2098 = vmatmul.f32.gmra.mxu0 %v2054
    %v2099 = vpop.f32.mrf.mxu0
    %v2100 = vadd.f32 0.0, %v2099
    %2101 = vmatmul.f32.gmra.mxu0 %v2055
    %v2102 = vpop.f32.mrf.mxu0
    %v2103 = vadd.f32 0.0, %v2102
    %2104 = vmatmul.f32.gmra.mxu0 %v2056
    %v2105 = vpop.f32.mrf.mxu0
    %v2106 = vadd.f32 0.0, %v2105
    %2107 = vmatmul.f32.gmra.mxu0 %v2057
    %v2108 = vpop.f32.mrf.mxu0
    %v2109 = vadd.f32 0.0, %v2108
    %2110 = vdwg.mxu0
    %s2111 = scalar_lea.vmem %s5, 128
    %v2112 = vld [vmem:[%s2111] sm:$0xff]
    %v2113 = vld [vmem:[%s2111 + $0x8] sm:$0xff]
    %v2114 = vld [vmem:[%s2111 + $0x10] sm:$0xff]
    %v2115 = vld [vmem:[%s2111 + $0x18] sm:$0xff]
    %v2116 = vld [vmem:[%s2111 + $0x20] sm:$0xff]
    %v2117 = vld [vmem:[%s2111 + $0x28] sm:$0xff]
    %v2118 = vld [vmem:[%s2111 + $0x30] sm:$0xff]
    %v2119 = vld [vmem:[%s2111 + $0x38] sm:$0xff]
    %v2120 = vld [vmem:[%s2111 + $0x40] sm:$0xff]
    %v2121 = vld [vmem:[%s2111 + $0x48] sm:$0xff]
    %v2122 = vld [vmem:[%s2111 + $0x50] sm:$0xff]
    %v2123 = vld [vmem:[%s2111 + $0x58] sm:$0xff]
    %v2124 = vld [vmem:[%s2111 + $0x60] sm:$0xff]
    %v2125 = vld [vmem:[%s2111 + $0x68] sm:$0xff]
    %v2126 = vld [vmem:[%s2111 + $0x70] sm:$0xff]
    %v2127 = vld [vmem:[%s2111 + $0x78] sm:$0xff]
    %s2128 = scalar_lea.vmem %s6, 64
    %v2129 = vld [vmem:[%s2128] sm:$0xff]
    %v2130 = vld [vmem:[%s2128 + $0x8] sm:$0xff]
    %v2131 = vld [vmem:[%s2128 + $0x10] sm:$0xff]
    %v2132 = vld [vmem:[%s2128 + $0x18] sm:$0xff]
    %v2133 = vld [vmem:[%s2128 + $0x20] sm:$0xff]
    %v2134 = vld [vmem:[%s2128 + $0x28] sm:$0xff]
    %v2135 = vld [vmem:[%s2128 + $0x30] sm:$0xff]
    %v2136 = vld [vmem:[%s2128 + $0x38] sm:$0xff]
    %2137 = vmatpush.msra.mxu0 %v2127
    %2138 = vmatpush.msra.mxu0 %v2126
    %2139 = vmatpush.msra.mxu0 %v2125
    %2140 = vmatpush.msra.mxu0 %v2124
    %2141 = vmatpush.msra.mxu0 %v2123
    %2142 = vmatpush.msra.mxu0 %v2122
    %2143 = vmatpush.msra.mxu0 %v2121
    %2144 = vmatpush.msra.mxu0 %v2120
    %2145 = vmatpush.msra.mxu0 %v2119
    %2146 = vmatpush.msra.mxu0 %v2118
    %2147 = vmatpush.msra.mxu0 %v2117
    %2148 = vmatpush.msra.mxu0 %v2116
    %2149 = vmatpush.msra.mxu0 %v2115
    %2150 = vmatpush.msra.mxu0 %v2114
    %2151 = vmatpush.msra.mxu0 %v2113
    %2152 = vmatpush.msra.mxu0 %v2112
    %2153 = vmatmul.f32.gmra.mxu0 %v2054
    %v2154 = vpop.f32.mrf.mxu0
    %v2155 = vadd.f32 0.0, %v2154
    %2156 = vmatmul.f32.gmra.mxu0 %v2055
    %v2157 = vpop.f32.mrf.mxu0
    %v2158 = vadd.f32 0.0, %v2157
    %2159 = vmatmul.f32.gmra.mxu0 %v2056
    %v2160 = vpop.f32.mrf.mxu0
    %v2161 = vadd.f32 0.0, %v2160
    %2162 = vmatmul.f32.gmra.mxu0 %v2057
    %v2163 = vpop.f32.mrf.mxu0
    %v2164 = vadd.f32 0.0, %v2163
    %2165 = vdwg.mxu0
    %vm2166 = vcmask 261120
    %v2168 = vsel %vm2166, %v2129, 0
    %v2171 = vsel %vm2166, %v2130, 0
    %v2174 = vsel %vm2166, %v2131, 0
    %v2177 = vsel %vm2166, %v2132, 0
    %v2180 = vsel %vm2166, %v2133, 0
    %v2183 = vsel %vm2166, %v2134, 0
    %v2186 = vsel %vm2166, %v2135, 0
    %v2189 = vsel %vm2166, %v2136, 0
    %2191 = vmatpush.msra.mxu0 0.0
    %2192 = vmatpush.msra.mxu0 0.0
    %2193 = vmatpush.msra.mxu0 0.0
    %2194 = vmatpush.msra.mxu0 0.0
    %2195 = vmatpush.msra.mxu0 0.0
    %2196 = vmatpush.msra.mxu0 0.0
    %2197 = vmatpush.msra.mxu0 0.0
    %2198 = vmatpush.msra.mxu0 0.0
    %2199 = vmatpush.msra.mxu0 0.0
    %2200 = vmatpush.msra.mxu0 0.0
    %2201 = vmatpush.msra.mxu0 0.0
    %2202 = vmatpush.msra.mxu0 0.0
    %2203 = vmatpush.msra.mxu0 %v2164
    %2204 = vmatpush.msra.mxu0 %v2161
    %2205 = vmatpush.msra.mxu0 %v2158
    %2206 = vmatpush.msra.mxu0 %v2155
    %2207 = vmatmul.f32.gmra.mxu0 %v2168
    %v2208 = vpop.f32.mrf.mxu0
    %v2209 = vadd.f32 0.0, %v2208
    %2210 = vmatmul.f32.gmra.mxu0 %v2171
    %v2211 = vpop.f32.mrf.mxu0
    %v2212 = vadd.f32 0.0, %v2211
    %2213 = vmatmul.f32.gmra.mxu0 %v2174
    %v2214 = vpop.f32.mrf.mxu0
    %v2215 = vadd.f32 0.0, %v2214
    %2216 = vmatmul.f32.gmra.mxu0 %v2177
    %v2217 = vpop.f32.mrf.mxu0
    %v2218 = vadd.f32 0.0, %v2217
    %2219 = vmatmul.f32.gmra.mxu0 %v2180
    %v2220 = vpop.f32.mrf.mxu0
    %v2221 = vadd.f32 0.0, %v2220
    %2222 = vmatmul.f32.gmra.mxu0 %v2183
    %v2223 = vpop.f32.mrf.mxu0
    %v2224 = vadd.f32 0.0, %v2223
    %2225 = vmatmul.f32.gmra.mxu0 %v2186
    %v2226 = vpop.f32.mrf.mxu0
    %v2227 = vadd.f32 0.0, %v2226
    %2228 = vmatmul.f32.gmra.mxu0 %v2189
    %v2229 = vpop.f32.mrf.mxu0
    %v2230 = vadd.f32 0.0, %v2229
    %2231 = vdwg.mxu0
    %v2233 = vsel %vm2166, %v2074, 0
    %v2236 = vsel %vm2166, %v2075, 0
    %v2239 = vsel %vm2166, %v2076, 0
    %v2242 = vsel %vm2166, %v2077, 0
    %v2245 = vsel %vm2166, %v2078, 0
    %v2248 = vsel %vm2166, %v2079, 0
    %v2251 = vsel %vm2166, %v2080, 0
    %v2254 = vsel %vm2166, %v2081, 0
    %2256 = vmatpush.msra.mxu0 0.0
    %2257 = vmatpush.msra.mxu0 0.0
    %2258 = vmatpush.msra.mxu0 0.0
    %2259 = vmatpush.msra.mxu0 0.0
    %2260 = vmatpush.msra.mxu0 0.0
    %2261 = vmatpush.msra.mxu0 0.0
    %2262 = vmatpush.msra.mxu0 0.0
    %2263 = vmatpush.msra.mxu0 0.0
    %2264 = vmatpush.msra.mxu0 0.0
    %2265 = vmatpush.msra.mxu0 0.0
    %2266 = vmatpush.msra.mxu0 0.0
    %2267 = vmatpush.msra.mxu0 0.0
    %2268 = vmatpush.msra.mxu0 %v2109
    %2269 = vmatpush.msra.mxu0 %v2106
    %2270 = vmatpush.msra.mxu0 %v2103
    %2271 = vmatpush.msra.mxu0 %v2100
    %2272 = vmatmul.f32.gmra.mxu0 %v2233
    %v2273 = vpop.f32.mrf.mxu0
    %v2274 = vadd.f32 %v2209, %v2273
    %2275 = vmatmul.f32.gmra.mxu0 %v2236
    %v2276 = vpop.f32.mrf.mxu0
    %v2277 = vadd.f32 %v2212, %v2276
    %2278 = vmatmul.f32.gmra.mxu0 %v2239
    %v2279 = vpop.f32.mrf.mxu0
    %v2280 = vadd.f32 %v2215, %v2279
    %2281 = vmatmul.f32.gmra.mxu0 %v2242
    %v2282 = vpop.f32.mrf.mxu0
    %v2283 = vadd.f32 %v2218, %v2282
    %2284 = vmatmul.f32.gmra.mxu0 %v2245
    %v2285 = vpop.f32.mrf.mxu0
    %v2286 = vadd.f32 %v2221, %v2285
    %2287 = vmatmul.f32.gmra.mxu0 %v2248
    %v2288 = vpop.f32.mrf.mxu0
    %v2289 = vadd.f32 %v2224, %v2288
    %2290 = vmatmul.f32.gmra.mxu0 %v2251
    %v2291 = vpop.f32.mrf.mxu0
    %v2292 = vadd.f32 %v2227, %v2291
    %2293 = vmatmul.f32.gmra.mxu0 %v2254
    %v2294 = vpop.f32.mrf.mxu0
    %v2295 = vadd.f32 %v2230, %v2294
    %2296 = vdwg.mxu0
    %s2297 = scalar_lea.vmem %s5, 256
    %v2298 = vld [vmem:[%s2297] sm:$0xff]
    %v2299 = vld [vmem:[%s2297 + $0x8] sm:$0xff]
    %v2300 = vld [vmem:[%s2297 + $0x10] sm:$0xff]
    %v2301 = vld [vmem:[%s2297 + $0x18] sm:$0xff]
    %v2302 = vld [vmem:[%s2297 + $0x20] sm:$0xff]
    %v2303 = vld [vmem:[%s2297 + $0x28] sm:$0xff]
    %v2304 = vld [vmem:[%s2297 + $0x30] sm:$0xff]
    %v2305 = vld [vmem:[%s2297 + $0x38] sm:$0xff]
    %v2306 = vld [vmem:[%s2297 + $0x40] sm:$0xff]
    %v2307 = vld [vmem:[%s2297 + $0x48] sm:$0xff]
    %v2308 = vld [vmem:[%s2297 + $0x50] sm:$0xff]
    %v2309 = vld [vmem:[%s2297 + $0x58] sm:$0xff]
    %v2310 = vld [vmem:[%s2297 + $0x60] sm:$0xff]
    %v2311 = vld [vmem:[%s2297 + $0x68] sm:$0xff]
    %v2312 = vld [vmem:[%s2297 + $0x70] sm:$0xff]
    %v2313 = vld [vmem:[%s2297 + $0x78] sm:$0xff]
    %s2314 = scalar_lea.vmem %s6, 128
    %v2315 = vld [vmem:[%s2314] sm:$0xff]
    %v2316 = vld [vmem:[%s2314 + $0x8] sm:$0xff]
    %v2317 = vld [vmem:[%s2314 + $0x10] sm:$0xff]
    %v2318 = vld [vmem:[%s2314 + $0x18] sm:$0xff]
    %v2319 = vld [vmem:[%s2314 + $0x20] sm:$0xff]
    %v2320 = vld [vmem:[%s2314 + $0x28] sm:$0xff]
    %v2321 = vld [vmem:[%s2314 + $0x30] sm:$0xff]
    %v2322 = vld [vmem:[%s2314 + $0x38] sm:$0xff]
    %2323 = vmatpush.msra.mxu0 %v2313
    %2324 = vmatpush.msra.mxu0 %v2312
    %2325 = vmatpush.msra.mxu0 %v2311
    %2326 = vmatpush.msra.mxu0 %v2310
    %2327 = vmatpush.msra.mxu0 %v2309
    %2328 = vmatpush.msra.mxu0 %v2308
    %2329 = vmatpush.msra.mxu0 %v2307
    %2330 = vmatpush.msra.mxu0 %v2306
    %2331 = vmatpush.msra.mxu0 %v2305
    %2332 = vmatpush.msra.mxu0 %v2304
    %2333 = vmatpush.msra.mxu0 %v2303
    %2334 = vmatpush.msra.mxu0 %v2302
    %2335 = vmatpush.msra.mxu0 %v2301
    %2336 = vmatpush.msra.mxu0 %v2300
    %2337 = vmatpush.msra.mxu0 %v2299
    %2338 = vmatpush.msra.mxu0 %v2298
    %2339 = vmatmul.f32.gmra.mxu0 %v2054
    %v2340 = vpop.f32.mrf.mxu0
    %v2341 = vadd.f32 0.0, %v2340
    %2342 = vmatmul.f32.gmra.mxu0 %v2055
    %v2343 = vpop.f32.mrf.mxu0
    %v2344 = vadd.f32 0.0, %v2343
    %2345 = vmatmul.f32.gmra.mxu0 %v2056
    %v2346 = vpop.f32.mrf.mxu0
    %v2347 = vadd.f32 0.0, %v2346
    %2348 = vmatmul.f32.gmra.mxu0 %v2057
    %v2349 = vpop.f32.mrf.mxu0
    %v2350 = vadd.f32 0.0, %v2349
    %2351 = vdwg.mxu0
    %v2353 = vsel %vm2166, %v2315, 0
    %v2356 = vsel %vm2166, %v2316, 0
    %v2359 = vsel %vm2166, %v2317, 0
    %v2362 = vsel %vm2166, %v2318, 0
    %v2365 = vsel %vm2166, %v2319, 0
    %v2368 = vsel %vm2166, %v2320, 0
    %v2371 = vsel %vm2166, %v2321, 0
    %v2374 = vsel %vm2166, %v2322, 0
    %2376 = vmatpush.msra.mxu0 0.0
    %2377 = vmatpush.msra.mxu0 0.0
    %2378 = vmatpush.msra.mxu0 0.0
    %2379 = vmatpush.msra.mxu0 0.0
    %2380 = vmatpush.msra.mxu0 0.0
    %2381 = vmatpush.msra.mxu0 0.0
    %2382 = vmatpush.msra.mxu0 0.0
    %2383 = vmatpush.msra.mxu0 0.0
    %2384 = vmatpush.msra.mxu0 0.0
    %2385 = vmatpush.msra.mxu0 0.0
    %2386 = vmatpush.msra.mxu0 0.0
    %2387 = vmatpush.msra.mxu0 0.0
    %2388 = vmatpush.msra.mxu0 %v2350
    %2389 = vmatpush.msra.mxu0 %v2347
    %2390 = vmatpush.msra.mxu0 %v2344
    %2391 = vmatpush.msra.mxu0 %v2341
    %2392 = vmatmul.f32.gmra.mxu0 %v2353
    %v2393 = vpop.f32.mrf.mxu0
    %v2394 = vadd.f32 0.0, %v2393
    %2395 = vmatmul.f32.gmra.mxu0 %v2356
    %v2396 = vpop.f32.mrf.mxu0
    %v2397 = vadd.f32 0.0, %v2396
    %2398 = vmatmul.f32.gmra.mxu0 %v2359
    %v2399 = vpop.f32.mrf.mxu0
    %v2400 = vadd.f32 0.0, %v2399
    %2401 = vmatmul.f32.gmra.mxu0 %v2362
    %v2402 = vpop.f32.mrf.mxu0
    %v2403 = vadd.f32 0.0, %v2402
    %2404 = vmatmul.f32.gmra.mxu0 %v2365
    %v2405 = vpop.f32.mrf.mxu0
    %v2406 = vadd.f32 0.0, %v2405
    %2407 = vmatmul.f32.gmra.mxu0 %v2368
    %v2408 = vpop.f32.mrf.mxu0
    %v2409 = vadd.f32 0.0, %v2408
    %2410 = vmatmul.f32.gmra.mxu0 %v2371
    %v2411 = vpop.f32.mrf.mxu0
    %v2412 = vadd.f32 0.0, %v2411
    %2413 = vmatmul.f32.gmra.mxu0 %v2374
    %v2414 = vpop.f32.mrf.mxu0
    %v2415 = vadd.f32 0.0, %v2414
    %2416 = vdwg.mxu0
    %v2417 = vadd.f32 %v2274, %v2394
    %v2418 = vadd.f32 %v2277, %v2397
    %v2419 = vadd.f32 %v2280, %v2400
    %v2420 = vadd.f32 %v2283, %v2403
    %v2421 = vadd.f32 %v2286, %v2406
    %v2422 = vadd.f32 %v2289, %v2409
    %v2423 = vadd.f32 %v2292, %v2412
    %v2424 = vadd.f32 %v2295, %v2415
    %s2425 = scalar_lea.vmem %s5, 384
    %v2426 = vld [vmem:[%s2425] sm:$0xff]
    %v2427 = vld [vmem:[%s2425 + $0x8] sm:$0xff]
    %v2428 = vld [vmem:[%s2425 + $0x10] sm:$0xff]
    %v2429 = vld [vmem:[%s2425 + $0x18] sm:$0xff]
    %v2430 = vld [vmem:[%s2425 + $0x20] sm:$0xff]
    %v2431 = vld [vmem:[%s2425 + $0x28] sm:$0xff]
    %v2432 = vld [vmem:[%s2425 + $0x30] sm:$0xff]
    %v2433 = vld [vmem:[%s2425 + $0x38] sm:$0xff]
    %v2434 = vld [vmem:[%s2425 + $0x40] sm:$0xff]
    %v2435 = vld [vmem:[%s2425 + $0x48] sm:$0xff]
    %v2436 = vld [vmem:[%s2425 + $0x50] sm:$0xff]
    %v2437 = vld [vmem:[%s2425 + $0x58] sm:$0xff]
    %v2438 = vld [vmem:[%s2425 + $0x60] sm:$0xff]
    %v2439 = vld [vmem:[%s2425 + $0x68] sm:$0xff]
    %v2440 = vld [vmem:[%s2425 + $0x70] sm:$0xff]
    %v2441 = vld [vmem:[%s2425 + $0x78] sm:$0xff]
    %s2442 = scalar_lea.vmem %s6, 192
    %v2443 = vld [vmem:[%s2442] sm:$0xff]
    %v2444 = vld [vmem:[%s2442 + $0x8] sm:$0xff]
    %v2445 = vld [vmem:[%s2442 + $0x10] sm:$0xff]
    %v2446 = vld [vmem:[%s2442 + $0x18] sm:$0xff]
    %v2447 = vld [vmem:[%s2442 + $0x20] sm:$0xff]
    %v2448 = vld [vmem:[%s2442 + $0x28] sm:$0xff]
    %v2449 = vld [vmem:[%s2442 + $0x30] sm:$0xff]
    %v2450 = vld [vmem:[%s2442 + $0x38] sm:$0xff]
    %2451 = vmatpush.msra.mxu0 %v2441
    %2452 = vmatpush.msra.mxu0 %v2440
    %2453 = vmatpush.msra.mxu0 %v2439
    %2454 = vmatpush.msra.mxu0 %v2438
    %2455 = vmatpush.msra.mxu0 %v2437
    %2456 = vmatpush.msra.mxu0 %v2436
    %2457 = vmatpush.msra.mxu0 %v2435
    %2458 = vmatpush.msra.mxu0 %v2434
    %2459 = vmatpush.msra.mxu0 %v2433
    %2460 = vmatpush.msra.mxu0 %v2432
    %2461 = vmatpush.msra.mxu0 %v2431
    %2462 = vmatpush.msra.mxu0 %v2430
    %2463 = vmatpush.msra.mxu0 %v2429
    %2464 = vmatpush.msra.mxu0 %v2428
    %2465 = vmatpush.msra.mxu0 %v2427
    %2466 = vmatpush.msra.mxu0 %v2426
    %2467 = vmatmul.f32.gmra.mxu0 %v2054
    %v2468 = vpop.f32.mrf.mxu0
    %v2469 = vadd.f32 0.0, %v2468
    %2470 = vmatmul.f32.gmra.mxu0 %v2055
    %v2471 = vpop.f32.mrf.mxu0
    %v2472 = vadd.f32 0.0, %v2471
    %2473 = vmatmul.f32.gmra.mxu0 %v2056
    %v2474 = vpop.f32.mrf.mxu0
    %v2475 = vadd.f32 0.0, %v2474
    %2476 = vmatmul.f32.gmra.mxu0 %v2057
    %v2477 = vpop.f32.mrf.mxu0
    %v2478 = vadd.f32 0.0, %v2477
    %2479 = vdwg.mxu0
    %v2481 = vsel %vm2166, %v2443, 0
    %v2484 = vsel %vm2166, %v2444, 0
    %v2487 = vsel %vm2166, %v2445, 0
    %v2490 = vsel %vm2166, %v2446, 0
    %v2493 = vsel %vm2166, %v2447, 0
    %v2496 = vsel %vm2166, %v2448, 0
    %v2499 = vsel %vm2166, %v2449, 0
    %v2502 = vsel %vm2166, %v2450, 0
    %2504 = vmatpush.msra.mxu0 0.0
    %2505 = vmatpush.msra.mxu0 0.0
    %2506 = vmatpush.msra.mxu0 0.0
    %2507 = vmatpush.msra.mxu0 0.0
    %2508 = vmatpush.msra.mxu0 0.0
    %2509 = vmatpush.msra.mxu0 0.0
    %2510 = vmatpush.msra.mxu0 0.0
    %2511 = vmatpush.msra.mxu0 0.0
    %2512 = vmatpush.msra.mxu0 0.0
    %2513 = vmatpush.msra.mxu0 0.0
    %2514 = vmatpush.msra.mxu0 0.0
    %2515 = vmatpush.msra.mxu0 0.0
    %2516 = vmatpush.msra.mxu0 %v2478
    %2517 = vmatpush.msra.mxu0 %v2475
    %2518 = vmatpush.msra.mxu0 %v2472
    %2519 = vmatpush.msra.mxu0 %v2469
    %2520 = vmatmul.f32.gmra.mxu0 %v2481
    %v2521 = vpop.f32.mrf.mxu0
    %v2522 = vadd.f32 0.0, %v2521
    %2523 = vmatmul.f32.gmra.mxu0 %v2484
    %v2524 = vpop.f32.mrf.mxu0
    %v2525 = vadd.f32 0.0, %v2524
    %2526 = vmatmul.f32.gmra.mxu0 %v2487
    %v2527 = vpop.f32.mrf.mxu0
    %v2528 = vadd.f32 0.0, %v2527
    %2529 = vmatmul.f32.gmra.mxu0 %v2490
    %v2530 = vpop.f32.mrf.mxu0
    %v2531 = vadd.f32 0.0, %v2530
    %2532 = vmatmul.f32.gmra.mxu0 %v2493
    %v2533 = vpop.f32.mrf.mxu0
    %v2534 = vadd.f32 0.0, %v2533
    %2535 = vmatmul.f32.gmra.mxu0 %v2496
    %v2536 = vpop.f32.mrf.mxu0
    %v2537 = vadd.f32 0.0, %v2536
    %2538 = vmatmul.f32.gmra.mxu0 %v2499
    %v2539 = vpop.f32.mrf.mxu0
    %v2540 = vadd.f32 0.0, %v2539
    %2541 = vmatmul.f32.gmra.mxu0 %v2502
    %v2542 = vpop.f32.mrf.mxu0
    %v2543 = vadd.f32 0.0, %v2542
    %2544 = vdwg.mxu0
    %v2545 = vadd.f32 %v2417, %v2522
    %v2546 = vadd.f32 %v2418, %v2525
    %v2547 = vadd.f32 %v2419, %v2528
    %v2548 = vadd.f32 %v2420, %v2531
    %v2549 = vadd.f32 %v2421, %v2534
    %v2550 = vadd.f32 %v2422, %v2537
    %v2551 = vadd.f32 %v2423, %v2540
    %v2552 = vadd.f32 %v2424, %v2543
    %s2553 = scalar_lea.vmem %s5, 512
    %v2554 = vld [vmem:[%s2553] sm:$0xff]
    %v2555 = vld [vmem:[%s2553 + $0x8] sm:$0xff]
    %v2556 = vld [vmem:[%s2553 + $0x10] sm:$0xff]
    %v2557 = vld [vmem:[%s2553 + $0x18] sm:$0xff]
    %v2558 = vld [vmem:[%s2553 + $0x20] sm:$0xff]
    %v2559 = vld [vmem:[%s2553 + $0x28] sm:$0xff]
    %v2560 = vld [vmem:[%s2553 + $0x30] sm:$0xff]
    %v2561 = vld [vmem:[%s2553 + $0x38] sm:$0xff]
    %v2562 = vld [vmem:[%s2553 + $0x40] sm:$0xff]
    %v2563 = vld [vmem:[%s2553 + $0x48] sm:$0xff]
    %v2564 = vld [vmem:[%s2553 + $0x50] sm:$0xff]
    %v2565 = vld [vmem:[%s2553 + $0x58] sm:$0xff]
    %v2566 = vld [vmem:[%s2553 + $0x60] sm:$0xff]
    %v2567 = vld [vmem:[%s2553 + $0x68] sm:$0xff]
    %v2568 = vld [vmem:[%s2553 + $0x70] sm:$0xff]
    %v2569 = vld [vmem:[%s2553 + $0x78] sm:$0xff]
    %s2570 = scalar_lea.vmem %s6, 256
    %v2571 = vld [vmem:[%s2570] sm:$0xff]
    %v2572 = vld [vmem:[%s2570 + $0x8] sm:$0xff]
    %v2573 = vld [vmem:[%s2570 + $0x10] sm:$0xff]
    %v2574 = vld [vmem:[%s2570 + $0x18] sm:$0xff]
    %v2575 = vld [vmem:[%s2570 + $0x20] sm:$0xff]
    %v2576 = vld [vmem:[%s2570 + $0x28] sm:$0xff]
    %v2577 = vld [vmem:[%s2570 + $0x30] sm:$0xff]
    %v2578 = vld [vmem:[%s2570 + $0x38] sm:$0xff]
    %2579 = vmatpush.msra.mxu0 %v2569
    %2580 = vmatpush.msra.mxu0 %v2568
    %2581 = vmatpush.msra.mxu0 %v2567
    %2582 = vmatpush.msra.mxu0 %v2566
    %2583 = vmatpush.msra.mxu0 %v2565
    %2584 = vmatpush.msra.mxu0 %v2564
    %2585 = vmatpush.msra.mxu0 %v2563
    %2586 = vmatpush.msra.mxu0 %v2562
    %2587 = vmatpush.msra.mxu0 %v2561
    %2588 = vmatpush.msra.mxu0 %v2560
    %2589 = vmatpush.msra.mxu0 %v2559
    %2590 = vmatpush.msra.mxu0 %v2558
    %2591 = vmatpush.msra.mxu0 %v2557
    %2592 = vmatpush.msra.mxu0 %v2556
    %2593 = vmatpush.msra.mxu0 %v2555
    %2594 = vmatpush.msra.mxu0 %v2554
    %2595 = vmatmul.f32.gmra.mxu0 %v2054
    %v2596 = vpop.f32.mrf.mxu0
    %v2597 = vadd.f32 0.0, %v2596
    %2598 = vmatmul.f32.gmra.mxu0 %v2055
    %v2599 = vpop.f32.mrf.mxu0
    %v2600 = vadd.f32 0.0, %v2599
    %2601 = vmatmul.f32.gmra.mxu0 %v2056
    %v2602 = vpop.f32.mrf.mxu0
    %v2603 = vadd.f32 0.0, %v2602
    %2604 = vmatmul.f32.gmra.mxu0 %v2057
    %v2605 = vpop.f32.mrf.mxu0
    %v2606 = vadd.f32 0.0, %v2605
    %2607 = vdwg.mxu0
    %v2609 = vsel %vm2166, %v2571, 0
    %v2612 = vsel %vm2166, %v2572, 0
    %v2615 = vsel %vm2166, %v2573, 0
    %v2618 = vsel %vm2166, %v2574, 0
    %v2621 = vsel %vm2166, %v2575, 0
    %v2624 = vsel %vm2166, %v2576, 0
    %v2627 = vsel %vm2166, %v2577, 0
    %v2630 = vsel %vm2166, %v2578, 0
    %2632 = vmatpush.msra.mxu0 0.0
    %2633 = vmatpush.msra.mxu0 0.0
    %2634 = vmatpush.msra.mxu0 0.0
    %2635 = vmatpush.msra.mxu0 0.0
    %2636 = vmatpush.msra.mxu0 0.0
    %2637 = vmatpush.msra.mxu0 0.0
    %2638 = vmatpush.msra.mxu0 0.0
    %2639 = vmatpush.msra.mxu0 0.0
    %2640 = vmatpush.msra.mxu0 0.0
    %2641 = vmatpush.msra.mxu0 0.0
    %2642 = vmatpush.msra.mxu0 0.0
    %2643 = vmatpush.msra.mxu0 0.0
    %2644 = vmatpush.msra.mxu0 %v2606
    %2645 = vmatpush.msra.mxu0 %v2603
    %2646 = vmatpush.msra.mxu0 %v2600
    %2647 = vmatpush.msra.mxu0 %v2597
    %2648 = vmatmul.f32.gmra.mxu0 %v2609
    %v2649 = vpop.f32.mrf.mxu0
    %v2650 = vadd.f32 0.0, %v2649
    %2651 = vmatmul.f32.gmra.mxu0 %v2612
    %v2652 = vpop.f32.mrf.mxu0
    %v2653 = vadd.f32 0.0, %v2652
    %2654 = vmatmul.f32.gmra.mxu0 %v2615
    %v2655 = vpop.f32.mrf.mxu0
    %v2656 = vadd.f32 0.0, %v2655
    %2657 = vmatmul.f32.gmra.mxu0 %v2618
    %v2658 = vpop.f32.mrf.mxu0
    %v2659 = vadd.f32 0.0, %v2658
    %2660 = vmatmul.f32.gmra.mxu0 %v2621
    %v2661 = vpop.f32.mrf.mxu0
    %v2662 = vadd.f32 0.0, %v2661
    %2663 = vmatmul.f32.gmra.mxu0 %v2624
    %v2664 = vpop.f32.mrf.mxu0
    %v2665 = vadd.f32 0.0, %v2664
    %2666 = vmatmul.f32.gmra.mxu0 %v2627
    %v2667 = vpop.f32.mrf.mxu0
    %v2668 = vadd.f32 0.0, %v2667
    %2669 = vmatmul.f32.gmra.mxu0 %v2630
    %v2670 = vpop.f32.mrf.mxu0
    %v2671 = vadd.f32 0.0, %v2670
    %2672 = vdwg.mxu0
    %v2673 = vadd.f32 %v2545, %v2650
    %v2674 = vadd.f32 %v2546, %v2653
    %v2675 = vadd.f32 %v2547, %v2656
    %v2676 = vadd.f32 %v2548, %v2659
    %v2677 = vadd.f32 %v2549, %v2662
    %v2678 = vadd.f32 %v2550, %v2665
    %v2679 = vadd.f32 %v2551, %v2668
    %v2680 = vadd.f32 %v2552, %v2671
    %s2681 = scalar_lea.vmem %s5, 640
    %v2682 = vld [vmem:[%s2681] sm:$0xff]
    %v2683 = vld [vmem:[%s2681 + $0x8] sm:$0xff]
    %v2684 = vld [vmem:[%s2681 + $0x10] sm:$0xff]
    %v2685 = vld [vmem:[%s2681 + $0x18] sm:$0xff]
    %v2686 = vld [vmem:[%s2681 + $0x20] sm:$0xff]
    %v2687 = vld [vmem:[%s2681 + $0x28] sm:$0xff]
    %v2688 = vld [vmem:[%s2681 + $0x30] sm:$0xff]
    %v2689 = vld [vmem:[%s2681 + $0x38] sm:$0xff]
    %v2690 = vld [vmem:[%s2681 + $0x40] sm:$0xff]
    %v2691 = vld [vmem:[%s2681 + $0x48] sm:$0xff]
    %v2692 = vld [vmem:[%s2681 + $0x50] sm:$0xff]
    %v2693 = vld [vmem:[%s2681 + $0x58] sm:$0xff]
    %v2694 = vld [vmem:[%s2681 + $0x60] sm:$0xff]
    %v2695 = vld [vmem:[%s2681 + $0x68] sm:$0xff]
    %v2696 = vld [vmem:[%s2681 + $0x70] sm:$0xff]
    %v2697 = vld [vmem:[%s2681 + $0x78] sm:$0xff]
    %s2698 = scalar_lea.vmem %s6, 320
    %v2699 = vld [vmem:[%s2698] sm:$0xff]
    %v2700 = vld [vmem:[%s2698 + $0x8] sm:$0xff]
    %v2701 = vld [vmem:[%s2698 + $0x10] sm:$0xff]
    %v2702 = vld [vmem:[%s2698 + $0x18] sm:$0xff]
    %v2703 = vld [vmem:[%s2698 + $0x20] sm:$0xff]
    %v2704 = vld [vmem:[%s2698 + $0x28] sm:$0xff]
    %v2705 = vld [vmem:[%s2698 + $0x30] sm:$0xff]
    %v2706 = vld [vmem:[%s2698 + $0x38] sm:$0xff]
    %2707 = vmatpush.msra.mxu0 %v2697
    %2708 = vmatpush.msra.mxu0 %v2696
    %2709 = vmatpush.msra.mxu0 %v2695
    %2710 = vmatpush.msra.mxu0 %v2694
    %2711 = vmatpush.msra.mxu0 %v2693
    %2712 = vmatpush.msra.mxu0 %v2692
    %2713 = vmatpush.msra.mxu0 %v2691
    %2714 = vmatpush.msra.mxu0 %v2690
    %2715 = vmatpush.msra.mxu0 %v2689
    %2716 = vmatpush.msra.mxu0 %v2688
    %2717 = vmatpush.msra.mxu0 %v2687
    %2718 = vmatpush.msra.mxu0 %v2686
    %2719 = vmatpush.msra.mxu0 %v2685
    %2720 = vmatpush.msra.mxu0 %v2684
    %2721 = vmatpush.msra.mxu0 %v2683
    %2722 = vmatpush.msra.mxu0 %v2682
    %2723 = vmatmul.f32.gmra.mxu0 %v2054
    %v2724 = vpop.f32.mrf.mxu0
    %v2725 = vadd.f32 0.0, %v2724
    %2726 = vmatmul.f32.gmra.mxu0 %v2055
    %v2727 = vpop.f32.mrf.mxu0
    %v2728 = vadd.f32 0.0, %v2727
    %2729 = vmatmul.f32.gmra.mxu0 %v2056
    %v2730 = vpop.f32.mrf.mxu0
    %v2731 = vadd.f32 0.0, %v2730
    %2732 = vmatmul.f32.gmra.mxu0 %v2057
    %v2733 = vpop.f32.mrf.mxu0
    %v2734 = vadd.f32 0.0, %v2733
    %2735 = vdwg.mxu0
    %v2737 = vsel %vm2166, %v2699, 0
    %v2740 = vsel %vm2166, %v2700, 0
    %v2743 = vsel %vm2166, %v2701, 0
    %v2746 = vsel %vm2166, %v2702, 0
    %v2749 = vsel %vm2166, %v2703, 0
    %v2752 = vsel %vm2166, %v2704, 0
    %v2755 = vsel %vm2166, %v2705, 0
    %v2758 = vsel %vm2166, %v2706, 0
    %2760 = vmatpush.msra.mxu0 0.0
    %2761 = vmatpush.msra.mxu0 0.0
    %2762 = vmatpush.msra.mxu0 0.0
    %2763 = vmatpush.msra.mxu0 0.0
    %2764 = vmatpush.msra.mxu0 0.0
    %2765 = vmatpush.msra.mxu0 0.0
    %2766 = vmatpush.msra.mxu0 0.0
    %2767 = vmatpush.msra.mxu0 0.0
    %2768 = vmatpush.msra.mxu0 0.0
    %2769 = vmatpush.msra.mxu0 0.0
    %2770 = vmatpush.msra.mxu0 0.0
    %2771 = vmatpush.msra.mxu0 0.0
    %2772 = vmatpush.msra.mxu0 %v2734
    %2773 = vmatpush.msra.mxu0 %v2731
    %2774 = vmatpush.msra.mxu0 %v2728
    %2775 = vmatpush.msra.mxu0 %v2725
    %2776 = vmatmul.f32.gmra.mxu0 %v2737
    %v2777 = vpop.f32.mrf.mxu0
    %v2778 = vadd.f32 0.0, %v2777
    %2779 = vmatmul.f32.gmra.mxu0 %v2740
    %v2780 = vpop.f32.mrf.mxu0
    %v2781 = vadd.f32 0.0, %v2780
    %2782 = vmatmul.f32.gmra.mxu0 %v2743
    %v2783 = vpop.f32.mrf.mxu0
    %v2784 = vadd.f32 0.0, %v2783
    %2785 = vmatmul.f32.gmra.mxu0 %v2746
    %v2786 = vpop.f32.mrf.mxu0
    %v2787 = vadd.f32 0.0, %v2786
    %2788 = vmatmul.f32.gmra.mxu0 %v2749
    %v2789 = vpop.f32.mrf.mxu0
    %v2790 = vadd.f32 0.0, %v2789
    %2791 = vmatmul.f32.gmra.mxu0 %v2752
    %v2792 = vpop.f32.mrf.mxu0
    %v2793 = vadd.f32 0.0, %v2792
    %2794 = vmatmul.f32.gmra.mxu0 %v2755
    %v2795 = vpop.f32.mrf.mxu0
    %v2796 = vadd.f32 0.0, %v2795
    %2797 = vmatmul.f32.gmra.mxu0 %v2758
    %v2798 = vpop.f32.mrf.mxu0
    %v2799 = vadd.f32 0.0, %v2798
    %2800 = vdwg.mxu0
    %v2801 = vadd.f32 %v2673, %v2778
    %v2802 = vadd.f32 %v2674, %v2781
    %v2803 = vadd.f32 %v2675, %v2784
    %v2804 = vadd.f32 %v2676, %v2787
    %v2805 = vadd.f32 %v2677, %v2790
    %v2806 = vadd.f32 %v2678, %v2793
    %v2807 = vadd.f32 %v2679, %v2796
    %v2808 = vadd.f32 %v2680, %v2799
    %s2809 = scalar_lea.vmem %s5, 768
    %v2810 = vld [vmem:[%s2809] sm:$0xff]
    %v2811 = vld [vmem:[%s2809 + $0x8] sm:$0xff]
    %v2812 = vld [vmem:[%s2809 + $0x10] sm:$0xff]
    %v2813 = vld [vmem:[%s2809 + $0x18] sm:$0xff]
    %v2814 = vld [vmem:[%s2809 + $0x20] sm:$0xff]
    %v2815 = vld [vmem:[%s2809 + $0x28] sm:$0xff]
    %v2816 = vld [vmem:[%s2809 + $0x30] sm:$0xff]
    %v2817 = vld [vmem:[%s2809 + $0x38] sm:$0xff]
    %v2818 = vld [vmem:[%s2809 + $0x40] sm:$0xff]
    %v2819 = vld [vmem:[%s2809 + $0x48] sm:$0xff]
    %v2820 = vld [vmem:[%s2809 + $0x50] sm:$0xff]
    %v2821 = vld [vmem:[%s2809 + $0x58] sm:$0xff]
    %v2822 = vld [vmem:[%s2809 + $0x60] sm:$0xff]
    %v2823 = vld [vmem:[%s2809 + $0x68] sm:$0xff]
    %v2824 = vld [vmem:[%s2809 + $0x70] sm:$0xff]
    %v2825 = vld [vmem:[%s2809 + $0x78] sm:$0xff]
    %s2826 = scalar_lea.vmem %s6, 384
    %v2827 = vld [vmem:[%s2826] sm:$0xff]
    %v2828 = vld [vmem:[%s2826 + $0x8] sm:$0xff]
    %v2829 = vld [vmem:[%s2826 + $0x10] sm:$0xff]
    %v2830 = vld [vmem:[%s2826 + $0x18] sm:$0xff]
    %v2831 = vld [vmem:[%s2826 + $0x20] sm:$0xff]
    %v2832 = vld [vmem:[%s2826 + $0x28] sm:$0xff]
    %v2833 = vld [vmem:[%s2826 + $0x30] sm:$0xff]
    %v2834 = vld [vmem:[%s2826 + $0x38] sm:$0xff]
    %2835 = vmatpush.msra.mxu0 %v2825
    %2836 = vmatpush.msra.mxu0 %v2824
    %2837 = vmatpush.msra.mxu0 %v2823
    %2838 = vmatpush.msra.mxu0 %v2822
    %2839 = vmatpush.msra.mxu0 %v2821
    %2840 = vmatpush.msra.mxu0 %v2820
    %2841 = vmatpush.msra.mxu0 %v2819
    %2842 = vmatpush.msra.mxu0 %v2818
    %2843 = vmatpush.msra.mxu0 %v2817
    %2844 = vmatpush.msra.mxu0 %v2816
    %2845 = vmatpush.msra.mxu0 %v2815
    %2846 = vmatpush.msra.mxu0 %v2814
    %2847 = vmatpush.msra.mxu0 %v2813
    %2848 = vmatpush.msra.mxu0 %v2812
    %2849 = vmatpush.msra.mxu0 %v2811
    %2850 = vmatpush.msra.mxu0 %v2810
    %2851 = vmatmul.f32.gmra.mxu0 %v2054
    %v2852 = vpop.f32.mrf.mxu0
    %v2853 = vadd.f32 0.0, %v2852
    %2854 = vmatmul.f32.gmra.mxu0 %v2055
    %v2855 = vpop.f32.mrf.mxu0
    %v2856 = vadd.f32 0.0, %v2855
    %2857 = vmatmul.f32.gmra.mxu0 %v2056
    %v2858 = vpop.f32.mrf.mxu0
    %v2859 = vadd.f32 0.0, %v2858
    %2860 = vmatmul.f32.gmra.mxu0 %v2057
    %v2861 = vpop.f32.mrf.mxu0
    %v2862 = vadd.f32 0.0, %v2861
    %2863 = vdwg.mxu0
    %v2865 = vsel %vm2166, %v2827, 0
    %v2868 = vsel %vm2166, %v2828, 0
    %v2871 = vsel %vm2166, %v2829, 0
    %v2874 = vsel %vm2166, %v2830, 0
    %v2877 = vsel %vm2166, %v2831, 0
    %v2880 = vsel %vm2166, %v2832, 0
    %v2883 = vsel %vm2166, %v2833, 0
    %v2886 = vsel %vm2166, %v2834, 0
    %2888 = vmatpush.msra.mxu0 0.0
    %2889 = vmatpush.msra.mxu0 0.0
    %2890 = vmatpush.msra.mxu0 0.0
    %2891 = vmatpush.msra.mxu0 0.0
    %2892 = vmatpush.msra.mxu0 0.0
    %2893 = vmatpush.msra.mxu0 0.0
    %2894 = vmatpush.msra.mxu0 0.0
    %2895 = vmatpush.msra.mxu0 0.0
    %2896 = vmatpush.msra.mxu0 0.0
    %2897 = vmatpush.msra.mxu0 0.0
    %2898 = vmatpush.msra.mxu0 0.0
    %2899 = vmatpush.msra.mxu0 0.0
    %2900 = vmatpush.msra.mxu0 %v2862
    %2901 = vmatpush.msra.mxu0 %v2859
    %2902 = vmatpush.msra.mxu0 %v2856
    %2903 = vmatpush.msra.mxu0 %v2853
    %2904 = vmatmul.f32.gmra.mxu0 %v2865
    %v2905 = vpop.f32.mrf.mxu0
    %v2906 = vadd.f32 0.0, %v2905
    %2907 = vmatmul.f32.gmra.mxu0 %v2868
    %v2908 = vpop.f32.mrf.mxu0
    %v2909 = vadd.f32 0.0, %v2908
    %2910 = vmatmul.f32.gmra.mxu0 %v2871
    %v2911 = vpop.f32.mrf.mxu0
    %v2912 = vadd.f32 0.0, %v2911
    %2913 = vmatmul.f32.gmra.mxu0 %v2874
    %v2914 = vpop.f32.mrf.mxu0
    %v2915 = vadd.f32 0.0, %v2914
    %2916 = vmatmul.f32.gmra.mxu0 %v2877
    %v2917 = vpop.f32.mrf.mxu0
    %v2918 = vadd.f32 0.0, %v2917
    %2919 = vmatmul.f32.gmra.mxu0 %v2880
    %v2920 = vpop.f32.mrf.mxu0
    %v2921 = vadd.f32 0.0, %v2920
    %2922 = vmatmul.f32.gmra.mxu0 %v2883
    %v2923 = vpop.f32.mrf.mxu0
    %v2924 = vadd.f32 0.0, %v2923
    %2925 = vmatmul.f32.gmra.mxu0 %v2886
    %v2926 = vpop.f32.mrf.mxu0
    %v2927 = vadd.f32 0.0, %v2926
    %2928 = vdwg.mxu0
    %v2929 = vadd.f32 %v2801, %v2906
    %v2930 = vadd.f32 %v2802, %v2909
    %v2931 = vadd.f32 %v2803, %v2912
    %v2932 = vadd.f32 %v2804, %v2915
    %v2933 = vadd.f32 %v2805, %v2918
    %v2934 = vadd.f32 %v2806, %v2921
    %v2935 = vadd.f32 %v2807, %v2924
    %v2936 = vadd.f32 %v2808, %v2927
    %s2937 = scalar_lea.vmem %s5, 896
    %v2938 = vld [vmem:[%s2937] sm:$0xff]
    %v2939 = vld [vmem:[%s2937 + $0x8] sm:$0xff]
    %v2940 = vld [vmem:[%s2937 + $0x10] sm:$0xff]
    %v2941 = vld [vmem:[%s2937 + $0x18] sm:$0xff]
    %v2942 = vld [vmem:[%s2937 + $0x20] sm:$0xff]
    %v2943 = vld [vmem:[%s2937 + $0x28] sm:$0xff]
    %v2944 = vld [vmem:[%s2937 + $0x30] sm:$0xff]
    %v2945 = vld [vmem:[%s2937 + $0x38] sm:$0xff]
    %v2946 = vld [vmem:[%s2937 + $0x40] sm:$0xff]
    %v2947 = vld [vmem:[%s2937 + $0x48] sm:$0xff]
    %v2948 = vld [vmem:[%s2937 + $0x50] sm:$0xff]
    %v2949 = vld [vmem:[%s2937 + $0x58] sm:$0xff]
    %v2950 = vld [vmem:[%s2937 + $0x60] sm:$0xff]
    %v2951 = vld [vmem:[%s2937 + $0x68] sm:$0xff]
    %v2952 = vld [vmem:[%s2937 + $0x70] sm:$0xff]
    %v2953 = vld [vmem:[%s2937 + $0x78] sm:$0xff]
    %s2954 = scalar_lea.vmem %s6, 448
    %v2955 = vld [vmem:[%s2954] sm:$0xff]
    %v2956 = vld [vmem:[%s2954 + $0x8] sm:$0xff]
    %v2957 = vld [vmem:[%s2954 + $0x10] sm:$0xff]
    %v2958 = vld [vmem:[%s2954 + $0x18] sm:$0xff]
    %v2959 = vld [vmem:[%s2954 + $0x20] sm:$0xff]
    %v2960 = vld [vmem:[%s2954 + $0x28] sm:$0xff]
    %v2961 = vld [vmem:[%s2954 + $0x30] sm:$0xff]
    %v2962 = vld [vmem:[%s2954 + $0x38] sm:$0xff]
    %2963 = vmatpush.msra.mxu0 %v2953
    %2964 = vmatpush.msra.mxu0 %v2952
    %2965 = vmatpush.msra.mxu0 %v2951
    %2966 = vmatpush.msra.mxu0 %v2950
    %2967 = vmatpush.msra.mxu0 %v2949
    %2968 = vmatpush.msra.mxu0 %v2948
    %2969 = vmatpush.msra.mxu0 %v2947
    %2970 = vmatpush.msra.mxu0 %v2946
    %2971 = vmatpush.msra.mxu0 %v2945
    %2972 = vmatpush.msra.mxu0 %v2944
    %2973 = vmatpush.msra.mxu0 %v2943
    %2974 = vmatpush.msra.mxu0 %v2942
    %2975 = vmatpush.msra.mxu0 %v2941
    %2976 = vmatpush.msra.mxu0 %v2940
    %2977 = vmatpush.msra.mxu0 %v2939
    %2978 = vmatpush.msra.mxu0 %v2938
    %2979 = vmatmul.f32.gmra.mxu0 %v2054
    %v2980 = vpop.f32.mrf.mxu0
    %v2981 = vadd.f32 0.0, %v2980
    %2982 = vmatmul.f32.gmra.mxu0 %v2055
    %v2983 = vpop.f32.mrf.mxu0
    %v2984 = vadd.f32 0.0, %v2983
    %2985 = vmatmul.f32.gmra.mxu0 %v2056
    %v2986 = vpop.f32.mrf.mxu0
    %v2987 = vadd.f32 0.0, %v2986
    %2988 = vmatmul.f32.gmra.mxu0 %v2057
    %v2989 = vpop.f32.mrf.mxu0
    %v2990 = vadd.f32 0.0, %v2989
    %2991 = vdwg.mxu0
    %v2993 = vsel %vm2166, %v2955, 0
    %v2996 = vsel %vm2166, %v2956, 0
    %v2999 = vsel %vm2166, %v2957, 0
    %v3002 = vsel %vm2166, %v2958, 0
    %v3005 = vsel %vm2166, %v2959, 0
    %v3008 = vsel %vm2166, %v2960, 0
    %v3011 = vsel %vm2166, %v2961, 0
    %v3014 = vsel %vm2166, %v2962, 0
    %3016 = vmatpush.msra.mxu0 0.0
    %3017 = vmatpush.msra.mxu0 0.0
    %3018 = vmatpush.msra.mxu0 0.0
    %3019 = vmatpush.msra.mxu0 0.0
    %3020 = vmatpush.msra.mxu0 0.0
    %3021 = vmatpush.msra.mxu0 0.0
    %3022 = vmatpush.msra.mxu0 0.0
    %3023 = vmatpush.msra.mxu0 0.0
    %3024 = vmatpush.msra.mxu0 0.0
    %3025 = vmatpush.msra.mxu0 0.0
    %3026 = vmatpush.msra.mxu0 0.0
    %3027 = vmatpush.msra.mxu0 0.0
    %3028 = vmatpush.msra.mxu0 %v2990
    %3029 = vmatpush.msra.mxu0 %v2987
    %3030 = vmatpush.msra.mxu0 %v2984
    %3031 = vmatpush.msra.mxu0 %v2981
    %3032 = vmatmul.f32.gmra.mxu0 %v2993
    %v3033 = vpop.f32.mrf.mxu0
    %v3034 = vadd.f32 0.0, %v3033
    %3035 = vmatmul.f32.gmra.mxu0 %v2996
    %v3036 = vpop.f32.mrf.mxu0
    %v3037 = vadd.f32 0.0, %v3036
    %3038 = vmatmul.f32.gmra.mxu0 %v2999
    %v3039 = vpop.f32.mrf.mxu0
    %v3040 = vadd.f32 0.0, %v3039
    %3041 = vmatmul.f32.gmra.mxu0 %v3002
    %v3042 = vpop.f32.mrf.mxu0
    %v3043 = vadd.f32 0.0, %v3042
    %3044 = vmatmul.f32.gmra.mxu0 %v3005
    %v3045 = vpop.f32.mrf.mxu0
    %v3046 = vadd.f32 0.0, %v3045
    %3047 = vmatmul.f32.gmra.mxu0 %v3008
    %v3048 = vpop.f32.mrf.mxu0
    %v3049 = vadd.f32 0.0, %v3048
    %3050 = vmatmul.f32.gmra.mxu0 %v3011
    %v3051 = vpop.f32.mrf.mxu0
    %v3052 = vadd.f32 0.0, %v3051
    %3053 = vmatmul.f32.gmra.mxu0 %v3014
    %v3054 = vpop.f32.mrf.mxu0
    %v3055 = vadd.f32 0.0, %v3054
    %3056 = vdwg.mxu0
    %v3057 = vadd.f32 %v2929, %v3034
    %v3058 = vadd.f32 %v2930, %v3037
    %v3059 = vadd.f32 %v2931, %v3040
    %v3060 = vadd.f32 %v2932, %v3043
    %v3061 = vadd.f32 %v2933, %v3046
    %v3062 = vadd.f32 %v2934, %v3049
    %v3063 = vadd.f32 %v2935, %v3052
    %v3064 = vadd.f32 %v2936, %v3055
    %s3065 = scalar_lea.vmem %s5, 1024
    %v3066 = vld [vmem:[%s3065] sm:$0xff]
    %v3067 = vld [vmem:[%s3065 + $0x8] sm:$0xff]
    %v3068 = vld [vmem:[%s3065 + $0x10] sm:$0xff]
    %v3069 = vld [vmem:[%s3065 + $0x18] sm:$0xff]
    %v3070 = vld [vmem:[%s3065 + $0x20] sm:$0xff]
    %v3071 = vld [vmem:[%s3065 + $0x28] sm:$0xff]
    %v3072 = vld [vmem:[%s3065 + $0x30] sm:$0xff]
    %v3073 = vld [vmem:[%s3065 + $0x38] sm:$0xff]
    %v3074 = vld [vmem:[%s3065 + $0x40] sm:$0xff]
    %v3075 = vld [vmem:[%s3065 + $0x48] sm:$0xff]
    %v3076 = vld [vmem:[%s3065 + $0x50] sm:$0xff]
    %v3077 = vld [vmem:[%s3065 + $0x58] sm:$0xff]
    %v3078 = vld [vmem:[%s3065 + $0x60] sm:$0xff]
    %v3079 = vld [vmem:[%s3065 + $0x68] sm:$0xff]
    %v3080 = vld [vmem:[%s3065 + $0x70] sm:$0xff]
    %v3081 = vld [vmem:[%s3065 + $0x78] sm:$0xff]
    %s3082 = scalar_lea.vmem %s6, 512
    %v3083 = vld [vmem:[%s3082] sm:$0xff]
    %v3084 = vld [vmem:[%s3082 + $0x8] sm:$0xff]
    %v3085 = vld [vmem:[%s3082 + $0x10] sm:$0xff]
    %v3086 = vld [vmem:[%s3082 + $0x18] sm:$0xff]
    %v3087 = vld [vmem:[%s3082 + $0x20] sm:$0xff]
    %v3088 = vld [vmem:[%s3082 + $0x28] sm:$0xff]
    %v3089 = vld [vmem:[%s3082 + $0x30] sm:$0xff]
    %v3090 = vld [vmem:[%s3082 + $0x38] sm:$0xff]
    %3091 = vmatpush.msra.mxu0 %v3081
    %3092 = vmatpush.msra.mxu0 %v3080
    %3093 = vmatpush.msra.mxu0 %v3079
    %3094 = vmatpush.msra.mxu0 %v3078
    %3095 = vmatpush.msra.mxu0 %v3077
    %3096 = vmatpush.msra.mxu0 %v3076
    %3097 = vmatpush.msra.mxu0 %v3075
    %3098 = vmatpush.msra.mxu0 %v3074
    %3099 = vmatpush.msra.mxu0 %v3073
    %3100 = vmatpush.msra.mxu0 %v3072
    %3101 = vmatpush.msra.mxu0 %v3071
    %3102 = vmatpush.msra.mxu0 %v3070
    %3103 = vmatpush.msra.mxu0 %v3069
    %3104 = vmatpush.msra.mxu0 %v3068
    %3105 = vmatpush.msra.mxu0 %v3067
    %3106 = vmatpush.msra.mxu0 %v3066
    %3107 = vmatmul.f32.gmra.mxu0 %v2054
    %v3108 = vpop.f32.mrf.mxu0
    %v3109 = vadd.f32 0.0, %v3108
    %3110 = vmatmul.f32.gmra.mxu0 %v2055
    %v3111 = vpop.f32.mrf.mxu0
    %v3112 = vadd.f32 0.0, %v3111
    %3113 = vmatmul.f32.gmra.mxu0 %v2056
    %v3114 = vpop.f32.mrf.mxu0
    %v3115 = vadd.f32 0.0, %v3114
    %3116 = vmatmul.f32.gmra.mxu0 %v2057
    %v3117 = vpop.f32.mrf.mxu0
    %v3118 = vadd.f32 0.0, %v3117
    %3119 = vdwg.mxu0
    %v3121 = vsel %vm2166, %v3083, 0
    %v3124 = vsel %vm2166, %v3084, 0
    %v3127 = vsel %vm2166, %v3085, 0
    %v3130 = vsel %vm2166, %v3086, 0
    %v3133 = vsel %vm2166, %v3087, 0
    %v3136 = vsel %vm2166, %v3088, 0
    %v3139 = vsel %vm2166, %v3089, 0
    %v3142 = vsel %vm2166, %v3090, 0
    %3144 = vmatpush.msra.mxu0 0.0
    %3145 = vmatpush.msra.mxu0 0.0
    %3146 = vmatpush.msra.mxu0 0.0
    %3147 = vmatpush.msra.mxu0 0.0
    %3148 = vmatpush.msra.mxu0 0.0
    %3149 = vmatpush.msra.mxu0 0.0
    %3150 = vmatpush.msra.mxu0 0.0
    %3151 = vmatpush.msra.mxu0 0.0
    %3152 = vmatpush.msra.mxu0 0.0
    %3153 = vmatpush.msra.mxu0 0.0
    %3154 = vmatpush.msra.mxu0 0.0
    %3155 = vmatpush.msra.mxu0 0.0
    %3156 = vmatpush.msra.mxu0 %v3118
    %3157 = vmatpush.msra.mxu0 %v3115
    %3158 = vmatpush.msra.mxu0 %v3112
    %3159 = vmatpush.msra.mxu0 %v3109
    %3160 = vmatmul.f32.gmra.mxu0 %v3121
    %v3161 = vpop.f32.mrf.mxu0
    %v3162 = vadd.f32 0.0, %v3161
    %3163 = vmatmul.f32.gmra.mxu0 %v3124
    %v3164 = vpop.f32.mrf.mxu0
    %v3165 = vadd.f32 0.0, %v3164
    %3166 = vmatmul.f32.gmra.mxu0 %v3127
    %v3167 = vpop.f32.mrf.mxu0
    %v3168 = vadd.f32 0.0, %v3167
    %3169 = vmatmul.f32.gmra.mxu0 %v3130
    %v3170 = vpop.f32.mrf.mxu0
    %v3171 = vadd.f32 0.0, %v3170
    %3172 = vmatmul.f32.gmra.mxu0 %v3133
    %v3173 = vpop.f32.mrf.mxu0
    %v3174 = vadd.f32 0.0, %v3173
    %3175 = vmatmul.f32.gmra.mxu0 %v3136
    %v3176 = vpop.f32.mrf.mxu0
    %v3177 = vadd.f32 0.0, %v3176
    %3178 = vmatmul.f32.gmra.mxu0 %v3139
    %v3179 = vpop.f32.mrf.mxu0
    %v3180 = vadd.f32 0.0, %v3179
    %3181 = vmatmul.f32.gmra.mxu0 %v3142
    %v3182 = vpop.f32.mrf.mxu0
    %v3183 = vadd.f32 0.0, %v3182
    %3184 = vdwg.mxu0
    %v3185 = vadd.f32 %v3057, %v3162
    %v3186 = vadd.f32 %v3058, %v3165
    %v3187 = vadd.f32 %v3059, %v3168
    %v3188 = vadd.f32 %v3060, %v3171
    %v3189 = vadd.f32 %v3061, %v3174
    %v3190 = vadd.f32 %v3062, %v3177
    %v3191 = vadd.f32 %v3063, %v3180
    %v3192 = vadd.f32 %v3064, %v3183
    %v3193 = vsel %vm2166, %v3185, 0.0
    %3194 = vadd.xlane.f32.xlu0 %v3193
    %v3195 = vpop.xlane.xlu0 %3194
    %v3196 = vsel %vm2166, %v3186, 0.0
    %3197 = vadd.xlane.f32.xlu0 %v3196
    %v3198 = vpop.xlane.xlu0 %3197
    %v3199 = vsel %vm2166, %v3187, 0.0
    %3200 = vadd.xlane.f32.xlu0 %v3199
    %v3201 = vpop.xlane.xlu0 %3200
    %v3202 = vsel %vm2166, %v3188, 0.0
    %3203 = vadd.xlane.f32.xlu0 %v3202
    %v3204 = vpop.xlane.xlu0 %3203
    %v3205 = vsel %vm2166, %v3189, 0.0
    %3206 = vadd.xlane.f32.xlu0 %v3205
    %v3207 = vpop.xlane.xlu0 %3206
    %v3208 = vsel %vm2166, %v3190, 0.0
    %3209 = vadd.xlane.f32.xlu0 %v3208
    %v3210 = vpop.xlane.xlu0 %3209
    %v3211 = vsel %vm2166, %v3191, 0.0
    %3212 = vadd.xlane.f32.xlu0 %v3211
    %v3213 = vpop.xlane.xlu0 %3212
    %v3214 = vsel %vm2166, %v3192, 0.0
    %3215 = vadd.xlane.f32.xlu0 %v3214
    %v3216 = vpop.xlane.xlu0 %3215
    %v3217 = vrcp.pop 32.0
    %v3218 = vmul.f32 32.0, %v3217
    %v3219 = vsub.f32 1.0, %v3218
    %v3220 = vmul.f32 %v3217, %v3219
    %v3221 = vadd.f32 %v3217, %v3220
    %vm3222 = vweird.f32 %v3217
    %v3223 = vsel %vm3222, %v3217, %v3221
    %v3224 = vmul.f32 %v3195, %v3223
    %v3225 = vmul.f32 %v3198, %v3223
    %v3226 = vmul.f32 %v3201, %v3223
    %v3227 = vmul.f32 %v3204, %v3223
    %v3228 = vmul.f32 %v3207, %v3223
    %v3229 = vmul.f32 %v3210, %v3223
    %v3230 = vmul.f32 %v3213, %v3223
    %v3231 = vmul.f32 %v3216, %v3223
    %v3232 = vsub.f32 %v3185, %v3224
    %v3233 = vsub.f32 %v3186, %v3225
    %v3234 = vsub.f32 %v3187, %v3226
    %v3235 = vsub.f32 %v3188, %v3227
    %v3236 = vsub.f32 %v3189, %v3228
    %v3237 = vsub.f32 %v3190, %v3229
    %v3238 = vsub.f32 %v3191, %v3230
    %v3239 = vsub.f32 %v3192, %v3231
    %v3240 = vmul.f32 %v3232, %v3232
    %v3241 = vmul.f32 %v3233, %v3233
    %v3242 = vmul.f32 %v3234, %v3234
    %v3243 = vmul.f32 %v3235, %v3235
    %v3244 = vmul.f32 %v3236, %v3236
    %v3245 = vmul.f32 %v3237, %v3237
    %v3246 = vmul.f32 %v3238, %v3238
    %v3247 = vmul.f32 %v3239, %v3239
    %v3248 = vsel %vm2166, %v3240, 0.0
    %3249 = vadd.xlane.f32.xlu0 %v3248
    %v3250 = vpop.xlane.xlu0 %3249
    %v3251 = vsel %vm2166, %v3241, 0.0
    %3252 = vadd.xlane.f32.xlu0 %v3251
    %v3253 = vpop.xlane.xlu0 %3252
    %v3254 = vsel %vm2166, %v3242, 0.0
    %3255 = vadd.xlane.f32.xlu0 %v3254
    %v3256 = vpop.xlane.xlu0 %3255
    %v3257 = vsel %vm2166, %v3243, 0.0
    %3258 = vadd.xlane.f32.xlu0 %v3257
    %v3259 = vpop.xlane.xlu0 %3258
    %v3260 = vsel %vm2166, %v3244, 0.0
    %3261 = vadd.xlane.f32.xlu0 %v3260
    %v3262 = vpop.xlane.xlu0 %3261
    %v3263 = vsel %vm2166, %v3245, 0.0
    %3264 = vadd.xlane.f32.xlu0 %v3263
    %v3265 = vpop.xlane.xlu0 %3264
    %v3266 = vsel %vm2166, %v3246, 0.0
    %3267 = vadd.xlane.f32.xlu0 %v3266
    %v3268 = vpop.xlane.xlu0 %3267
    %v3269 = vsel %vm2166, %v3247, 0.0
    %3270 = vadd.xlane.f32.xlu0 %v3269
    %v3271 = vpop.xlane.xlu0 %3270
    %v3272 = vmul.f32 %v3250, %v3223
    %v3273 = vmul.f32 %v3253, %v3223
    %v3274 = vmul.f32 %v3256, %v3223
    %v3275 = vmul.f32 %v3259, %v3223
    %v3276 = vmul.f32 %v3262, %v3223
    %v3277 = vmul.f32 %v3265, %v3223
    %v3278 = vmul.f32 %v3268, %v3223
    %v3279 = vmul.f32 %v3271, %v3223
    %v3280 = vadd.f32 %v3272, 1e-05
    %v3281 = vadd.f32 %v3273, 1e-05
    %v3282 = vadd.f32 %v3274, 1e-05
    %v3283 = vadd.f32 %v3275, 1e-05
    %v3284 = vadd.f32 %v3276, 1e-05
    %v3285 = vadd.f32 %v3277, 1e-05
    %v3286 = vadd.f32 %v3278, 1e-05
    %v3287 = vadd.f32 %v3279, 1e-05
    %v3288 = vrsqrt.pop %v3280
    %v3289 = vmul.f32 %v3288, %v3280
    %v3290 = vmul.f32 %v3289, %v3288
    %v3291 = vmul.f32 0.5, %v3290
    %v3292 = vsub.f32 1.5, %v3291
    %v3293 = vmul.f32 %v3288, %v3292
    %vm3294 = vweird.f32 %v3280
    %vm3295 = vweird.f32 %v3288
    %vm3296 = vmor %vm3294, %vm3295
    %v3297 = vsel %vm3296, %v3288, %v3293
    %v3298 = vrsqrt.pop %v3281
    %v3299 = vmul.f32 %v3298, %v3281
    %v3300 = vmul.f32 %v3299, %v3298
    %v3301 = vmul.f32 0.5, %v3300
    %v3302 = vsub.f32 1.5, %v3301
    %v3303 = vmul.f32 %v3298, %v3302
    %vm3304 = vweird.f32 %v3281
    %vm3305 = vweird.f32 %v3298
    %vm3306 = vmor %vm3304, %vm3305
    %v3307 = vsel %vm3306, %v3298, %v3303
    %v3308 = vrsqrt.pop %v3282
    %v3309 = vmul.f32 %v3308, %v3282
    %v3310 = vmul.f32 %v3309, %v3308
    %v3311 = vmul.f32 0.5, %v3310
    %v3312 = vsub.f32 1.5, %v3311
    %v3313 = vmul.f32 %v3308, %v3312
    %vm3314 = vweird.f32 %v3282
    %vm3315 = vweird.f32 %v3308
    %vm3316 = vmor %vm3314, %vm3315
    %v3317 = vsel %vm3316, %v3308, %v3313
    %v3318 = vrsqrt.pop %v3283
    %v3319 = vmul.f32 %v3318, %v3283
    %v3320 = vmul.f32 %v3319, %v3318
    %v3321 = vmul.f32 0.5, %v3320
    %v3322 = vsub.f32 1.5, %v3321
    %v3323 = vmul.f32 %v3318, %v3322
    %vm3324 = vweird.f32 %v3283
    %vm3325 = vweird.f32 %v3318
    %vm3326 = vmor %vm3324, %vm3325
    %v3327 = vsel %vm3326, %v3318, %v3323
    %v3328 = vrsqrt.pop %v3284
    %v3329 = vmul.f32 %v3328, %v3284
    %v3330 = vmul.f32 %v3329, %v3328
    %v3331 = vmul.f32 0.5, %v3330
    %v3332 = vsub.f32 1.5, %v3331
    %v3333 = vmul.f32 %v3328, %v3332
    %vm3334 = vweird.f32 %v3284
    %vm3335 = vweird.f32 %v3328
    %vm3336 = vmor %vm3334, %vm3335
    %v3337 = vsel %vm3336, %v3328, %v3333
    %v3338 = vrsqrt.pop %v3285
    %v3339 = vmul.f32 %v3338, %v3285
    %v3340 = vmul.f32 %v3339, %v3338
    %v3341 = vmul.f32 0.5, %v3340
    %v3342 = vsub.f32 1.5, %v3341
    %v3343 = vmul.f32 %v3338, %v3342
    %vm3344 = vweird.f32 %v3285
    %vm3345 = vweird.f32 %v3338
    %vm3346 = vmor %vm3344, %vm3345
    %v3347 = vsel %vm3346, %v3338, %v3343
    %v3348 = vrsqrt.pop %v3286
    %v3349 = vmul.f32 %v3348, %v3286
    %v3350 = vmul.f32 %v3349, %v3348
    %v3351 = vmul.f32 0.5, %v3350
    %v3352 = vsub.f32 1.5, %v3351
    %v3353 = vmul.f32 %v3348, %v3352
    %vm3354 = vweird.f32 %v3286
    %vm3355 = vweird.f32 %v3348
    %vm3356 = vmor %vm3354, %vm3355
    %v3357 = vsel %vm3356, %v3348, %v3353
    %v3358 = vrsqrt.pop %v3287
    %v3359 = vmul.f32 %v3358, %v3287
    %v3360 = vmul.f32 %v3359, %v3358
    %v3361 = vmul.f32 0.5, %v3360
    %v3362 = vsub.f32 1.5, %v3361
    %v3363 = vmul.f32 %v3358, %v3362
    %vm3364 = vweird.f32 %v3287
    %vm3365 = vweird.f32 %v3358
    %vm3366 = vmor %vm3364, %vm3365
    %v3367 = vsel %vm3366, %v3358, %v3363
    %v3368 = vmul.f32 %v3232, %v3297
    %v3369 = vmul.f32 %v3233, %v3307
    %v3370 = vmul.f32 %v3234, %v3317
    %v3371 = vmul.f32 %v3235, %v3327
    %v3372 = vmul.f32 %v3236, %v3337
    %v3373 = vmul.f32 %v3237, %v3347
    %v3374 = vmul.f32 %v3238, %v3357
    %v3375 = vmul.f32 %v3239, %v3367
    %v3376 = vld [vmem:[%s7] sm:$0xff]
    %v3377 = vld [vmem:[%s7 + $0x8] sm:$0xff]
    %v3378 = vld [vmem:[%s7 + $0x10] sm:$0xff]
    %v3379 = vld [vmem:[%s7 + $0x18] sm:$0xff]
    %v3380 = vld [vmem:[%s7 + $0x20] sm:$0xff]
    %v3381 = vld [vmem:[%s7 + $0x28] sm:$0xff]
    %v3382 = vld [vmem:[%s7 + $0x30] sm:$0xff]
    %v3383 = vld [vmem:[%s7 + $0x38] sm:$0xff]
    %3385 = vset.pattern.permute.xlu0 0
    %3386 = vperm.xlu0 %3385, %v3376
    %v3387 = vpop.permute.xlu0 %3386
    %3390 = vset.pattern.permute.xlu0 0
    %3391 = vperm.xlu0 %3390, %v3377
    %v3392 = vpop.permute.xlu0 %3391
    %3395 = vset.pattern.permute.xlu0 0
    %3396 = vperm.xlu0 %3395, %v3378
    %v3397 = vpop.permute.xlu0 %3396
    %3400 = vset.pattern.permute.xlu0 0
    %3401 = vperm.xlu0 %3400, %v3379
    %v3402 = vpop.permute.xlu0 %3401
    %3405 = vset.pattern.permute.xlu0 0
    %3406 = vperm.xlu0 %3405, %v3380
    %v3407 = vpop.permute.xlu0 %3406
    %3410 = vset.pattern.permute.xlu0 0
    %3411 = vperm.xlu0 %3410, %v3381
    %v3412 = vpop.permute.xlu0 %3411
    %3415 = vset.pattern.permute.xlu0 0
    %3416 = vperm.xlu0 %3415, %v3382
    %v3417 = vpop.permute.xlu0 %3416
    %3420 = vset.pattern.permute.xlu0 0
    %3421 = vperm.xlu0 %3420, %v3383
    %v3422 = vpop.permute.xlu0 %3421
    %v3424 = vmul.f32 %v3368, %v3387
    %v3425 = vmul.f32 %v3369, %v3392
    %v3426 = vmul.f32 %v3370, %v3397
    %v3427 = vmul.f32 %v3371, %v3402
    %v3428 = vmul.f32 %v3372, %v3407
    %v3429 = vmul.f32 %v3373, %v3412
    %v3430 = vmul.f32 %v3374, %v3417
    %v3431 = vmul.f32 %v3375, %v3422
    %v3432 = vld [vmem:[%s8] sm:$0xff]
    %v3433 = vld [vmem:[%s8 + $0x8] sm:$0xff]
    %v3434 = vld [vmem:[%s8 + $0x10] sm:$0xff]
    %v3435 = vld [vmem:[%s8 + $0x18] sm:$0xff]
    %v3436 = vld [vmem:[%s8 + $0x20] sm:$0xff]
    %v3437 = vld [vmem:[%s8 + $0x28] sm:$0xff]
    %v3438 = vld [vmem:[%s8 + $0x30] sm:$0xff]
    %v3439 = vld [vmem:[%s8 + $0x38] sm:$0xff]
    %3441 = vset.pattern.permute.xlu0 0
    %3442 = vperm.xlu0 %3441, %v3432
    %v3443 = vpop.permute.xlu0 %3442
    %3446 = vset.pattern.permute.xlu0 0
    %3447 = vperm.xlu0 %3446, %v3433
    %v3448 = vpop.permute.xlu0 %3447
    %3451 = vset.pattern.permute.xlu0 0
    %3452 = vperm.xlu0 %3451, %v3434
    %v3453 = vpop.permute.xlu0 %3452
    %3456 = vset.pattern.permute.xlu0 0
    %3457 = vperm.xlu0 %3456, %v3435
    %v3458 = vpop.permute.xlu0 %3457
    %3461 = vset.pattern.permute.xlu0 0
    %3462 = vperm.xlu0 %3461, %v3436
    %v3463 = vpop.permute.xlu0 %3462
    %3466 = vset.pattern.permute.xlu0 0
    %3467 = vperm.xlu0 %3466, %v3437
    %v3468 = vpop.permute.xlu0 %3467
    %3471 = vset.pattern.permute.xlu0 0
    %3472 = vperm.xlu0 %3471, %v3438
    %v3473 = vpop.permute.xlu0 %3472
    %3476 = vset.pattern.permute.xlu0 0
    %3477 = vperm.xlu0 %3476, %v3439
    %v3478 = vpop.permute.xlu0 %3477
    %v3480 = vadd.f32 %v3424, %v3443
    %v3481 = vadd.f32 %v3425, %v3448
    %v3482 = vadd.f32 %v3426, %v3453
    %v3483 = vadd.f32 %v3427, %v3458
    %v3484 = vadd.f32 %v3428, %v3463
    %v3485 = vadd.f32 %v3429, %v3468
    %v3486 = vadd.f32 %v3430, %v3473
    %v3487 = vadd.f32 %v3431, %v3478
    %v3488 = vmax.f32 %v3480, 0.0
    %v3489 = vmax.f32 %v3481, 0.0
    %v3490 = vmax.f32 %v3482, 0.0
    %v3491 = vmax.f32 %v3483, 0.0
    %v3492 = vmax.f32 %v3484, 0.0
    %v3493 = vmax.f32 %v3485, 0.0
    %v3494 = vmax.f32 %v3486, 0.0
    %v3495 = vmax.f32 %v3487, 0.0
    %v3496 = vld [vmem:[%s9] sm:$0xff]
    %v3497 = vld [vmem:[%s9 + $0x8] sm:$0xff]
    %v3498 = vld [vmem:[%s9 + $0x10] sm:$0xff]
    %v3499 = vld [vmem:[%s9 + $0x18] sm:$0xff]
    %v3500 = vld [vmem:[%s10] sm:$0xff]
    %v3501 = vld [vmem:[%s10 + $0x8] sm:$0xff]
    %v3502 = vld [vmem:[%s10 + $0x10] sm:$0xff]
    %v3503 = vld [vmem:[%s10 + $0x18] sm:$0xff]
    %v3504 = vld [vmem:[%s10 + $0x20] sm:$0xff]
    %v3505 = vld [vmem:[%s10 + $0x28] sm:$0xff]
    %v3506 = vld [vmem:[%s10 + $0x30] sm:$0xff]
    %v3507 = vld [vmem:[%s10 + $0x38] sm:$0xff]
    %v3508 = vld [vmem:[%s10 + $0x40] sm:$0xff]
    %v3509 = vld [vmem:[%s10 + $0x48] sm:$0xff]
    %v3510 = vld [vmem:[%s10 + $0x50] sm:$0xff]
    %v3511 = vld [vmem:[%s10 + $0x58] sm:$0xff]
    %v3512 = vld [vmem:[%s10 + $0x60] sm:$0xff]
    %v3513 = vld [vmem:[%s10 + $0x68] sm:$0xff]
    %v3514 = vld [vmem:[%s10 + $0x70] sm:$0xff]
    %v3515 = vld [vmem:[%s10 + $0x78] sm:$0xff]
    %v3517 = vsel %vm2166, %v3488, 0
    %v3520 = vsel %vm2166, %v3489, 0
    %v3523 = vsel %vm2166, %v3490, 0
    %v3526 = vsel %vm2166, %v3491, 0
    %v3529 = vsel %vm2166, %v3492, 0
    %v3532 = vsel %vm2166, %v3493, 0
    %v3535 = vsel %vm2166, %v3494, 0
    %v3538 = vsel %vm2166, %v3495, 0
    %3540 = vmatpush.msra.mxu0 0.0
    %3541 = vmatpush.msra.mxu0 0.0
    %3542 = vmatpush.msra.mxu0 0.0
    %3543 = vmatpush.msra.mxu0 0.0
    %3544 = vmatpush.msra.mxu0 0.0
    %3545 = vmatpush.msra.mxu0 0.0
    %3546 = vmatpush.msra.mxu0 0.0
    %3547 = vmatpush.msra.mxu0 0.0
    %3548 = vmatpush.msra.mxu0 0.0
    %3549 = vmatpush.msra.mxu0 0.0
    %3550 = vmatpush.msra.mxu0 0.0
    %3551 = vmatpush.msra.mxu0 0.0
    %3552 = vmatpush.msra.mxu0 %v3499
    %3553 = vmatpush.msra.mxu0 %v3498
    %3554 = vmatpush.msra.mxu0 %v3497
    %3555 = vmatpush.msra.mxu0 %v3496
    %3556 = vmatmul.f32.gmra.mxu0 %v3517
    %v3557 = vpop.f32.mrf.mxu0
    %v3558 = vadd.f32 0.0, %v3557
    %3559 = vmatmul.f32.gmra.mxu0 %v3520
    %v3560 = vpop.f32.mrf.mxu0
    %v3561 = vadd.f32 0.0, %v3560
    %3562 = vmatmul.f32.gmra.mxu0 %v3523
    %v3563 = vpop.f32.mrf.mxu0
    %v3564 = vadd.f32 0.0, %v3563
    %3565 = vmatmul.f32.gmra.mxu0 %v3526
    %v3566 = vpop.f32.mrf.mxu0
    %v3567 = vadd.f32 0.0, %v3566
    %3568 = vmatmul.f32.gmra.mxu0 %v3529
    %v3569 = vpop.f32.mrf.mxu0
    %v3570 = vadd.f32 0.0, %v3569
    %3571 = vmatmul.f32.gmra.mxu0 %v3532
    %v3572 = vpop.f32.mrf.mxu0
    %v3573 = vadd.f32 0.0, %v3572
    %3574 = vmatmul.f32.gmra.mxu0 %v3535
    %v3575 = vpop.f32.mrf.mxu0
    %v3576 = vadd.f32 0.0, %v3575
    %3577 = vmatmul.f32.gmra.mxu0 %v3538
    %v3578 = vpop.f32.mrf.mxu0
    %v3579 = vadd.f32 0.0, %v3578
    %3580 = vdwg.mxu0
    %s3581 = scalar_lea.vmem %s9, 32
    %v3582 = vld [vmem:[%s3581] sm:$0xff]
    %v3583 = vld [vmem:[%s3581 + $0x8] sm:$0xff]
    %v3584 = vld [vmem:[%s3581 + $0x10] sm:$0xff]
    %v3585 = vld [vmem:[%s3581 + $0x18] sm:$0xff]
    %s3586 = scalar_lea.vmem %s10, 128
    %v3587 = vld [vmem:[%s3586] sm:$0xff]
    %v3588 = vld [vmem:[%s3586 + $0x8] sm:$0xff]
    %v3589 = vld [vmem:[%s3586 + $0x10] sm:$0xff]
    %v3590 = vld [vmem:[%s3586 + $0x18] sm:$0xff]
    %v3591 = vld [vmem:[%s3586 + $0x20] sm:$0xff]
    %v3592 = vld [vmem:[%s3586 + $0x28] sm:$0xff]
    %v3593 = vld [vmem:[%s3586 + $0x30] sm:$0xff]
    %v3594 = vld [vmem:[%s3586 + $0x38] sm:$0xff]
    %v3595 = vld [vmem:[%s3586 + $0x40] sm:$0xff]
    %v3596 = vld [vmem:[%s3586 + $0x48] sm:$0xff]
    %v3597 = vld [vmem:[%s3586 + $0x50] sm:$0xff]
    %v3598 = vld [vmem:[%s3586 + $0x58] sm:$0xff]
    %v3599 = vld [vmem:[%s3586 + $0x60] sm:$0xff]
    %v3600 = vld [vmem:[%s3586 + $0x68] sm:$0xff]
    %v3601 = vld [vmem:[%s3586 + $0x70] sm:$0xff]
    %v3602 = vld [vmem:[%s3586 + $0x78] sm:$0xff]
    %3603 = vmatpush.msra.mxu0 0.0
    %3604 = vmatpush.msra.mxu0 0.0
    %3605 = vmatpush.msra.mxu0 0.0
    %3606 = vmatpush.msra.mxu0 0.0
    %3607 = vmatpush.msra.mxu0 0.0
    %3608 = vmatpush.msra.mxu0 0.0
    %3609 = vmatpush.msra.mxu0 0.0
    %3610 = vmatpush.msra.mxu0 0.0
    %3611 = vmatpush.msra.mxu0 0.0
    %3612 = vmatpush.msra.mxu0 0.0
    %3613 = vmatpush.msra.mxu0 0.0
    %3614 = vmatpush.msra.mxu0 0.0
    %3615 = vmatpush.msra.mxu0 %v3585
    %3616 = vmatpush.msra.mxu0 %v3584
    %3617 = vmatpush.msra.mxu0 %v3583
    %3618 = vmatpush.msra.mxu0 %v3582
    %3619 = vmatmul.f32.gmra.mxu0 %v3517
    %v3620 = vpop.f32.mrf.mxu0
    %v3621 = vadd.f32 0.0, %v3620
    %3622 = vmatmul.f32.gmra.mxu0 %v3520
    %v3623 = vpop.f32.mrf.mxu0
    %v3624 = vadd.f32 0.0, %v3623
    %3625 = vmatmul.f32.gmra.mxu0 %v3523
    %v3626 = vpop.f32.mrf.mxu0
    %v3627 = vadd.f32 0.0, %v3626
    %3628 = vmatmul.f32.gmra.mxu0 %v3526
    %v3629 = vpop.f32.mrf.mxu0
    %v3630 = vadd.f32 0.0, %v3629
    %3631 = vmatmul.f32.gmra.mxu0 %v3529
    %v3632 = vpop.f32.mrf.mxu0
    %v3633 = vadd.f32 0.0, %v3632
    %3634 = vmatmul.f32.gmra.mxu0 %v3532
    %v3635 = vpop.f32.mrf.mxu0
    %v3636 = vadd.f32 0.0, %v3635
    %3637 = vmatmul.f32.gmra.mxu0 %v3535
    %v3638 = vpop.f32.mrf.mxu0
    %v3639 = vadd.f32 0.0, %v3638
    %3640 = vmatmul.f32.gmra.mxu0 %v3538
    %v3641 = vpop.f32.mrf.mxu0
    %v3642 = vadd.f32 0.0, %v3641
    %3643 = vdwg.mxu0
    %vm3644 = vcmask 523264
    %v3646 = vsel %vm3644, %v3587, 0
    %v3649 = vsel %vm3644, %v3588, 0
    %v3652 = vsel %vm3644, %v3589, 0
    %v3655 = vsel %vm3644, %v3590, 0
    %v3658 = vsel %vm3644, %v3591, 0
    %v3661 = vsel %vm3644, %v3592, 0
    %v3664 = vsel %vm3644, %v3593, 0
    %v3667 = vsel %vm3644, %v3594, 0
    %v3670 = vsel %vm3644, %v3595, 0
    %v3673 = vsel %vm3644, %v3596, 0
    %v3676 = vsel %vm3644, %v3597, 0
    %v3679 = vsel %vm3644, %v3598, 0
    %v3682 = vsel %vm3644, %v3599, 0
    %v3685 = vsel %vm3644, %v3600, 0
    %v3688 = vsel %vm3644, %v3601, 0
    %v3691 = vsel %vm3644, %v3602, 0
    %3693 = vmatpush.msra.mxu0 0.0
    %3694 = vmatpush.msra.mxu0 0.0
    %3695 = vmatpush.msra.mxu0 0.0
    %3696 = vmatpush.msra.mxu0 0.0
    %3697 = vmatpush.msra.mxu0 0.0
    %3698 = vmatpush.msra.mxu0 0.0
    %3699 = vmatpush.msra.mxu0 0.0
    %3700 = vmatpush.msra.mxu0 0.0
    %3701 = vmatpush.msra.mxu0 %v3642
    %3702 = vmatpush.msra.mxu0 %v3639
    %3703 = vmatpush.msra.mxu0 %v3636
    %3704 = vmatpush.msra.mxu0 %v3633
    %3705 = vmatpush.msra.mxu0 %v3630
    %3706 = vmatpush.msra.mxu0 %v3627
    %3707 = vmatpush.msra.mxu0 %v3624
    %3708 = vmatpush.msra.mxu0 %v3621
    %3709 = vmatmul.f32.gmra.mxu0 %v3646
    %v3710 = vpop.f32.mrf.mxu0
    %v3711 = vadd.f32 0.0, %v3710
    %3712 = vmatmul.f32.gmra.mxu0 %v3649
    %v3713 = vpop.f32.mrf.mxu0
    %v3714 = vadd.f32 0.0, %v3713
    %3715 = vmatmul.f32.gmra.mxu0 %v3652
    %v3716 = vpop.f32.mrf.mxu0
    %v3717 = vadd.f32 0.0, %v3716
    %3718 = vmatmul.f32.gmra.mxu0 %v3655
    %v3719 = vpop.f32.mrf.mxu0
    %v3720 = vadd.f32 0.0, %v3719
    %3721 = vmatmul.f32.gmra.mxu0 %v3658
    %v3722 = vpop.f32.mrf.mxu0
    %v3723 = vadd.f32 0.0, %v3722
    %3724 = vmatmul.f32.gmra.mxu0 %v3661
    %v3725 = vpop.f32.mrf.mxu0
    %v3726 = vadd.f32 0.0, %v3725
    %3727 = vmatmul.f32.gmra.mxu0 %v3664
    %v3728 = vpop.f32.mrf.mxu0
    %v3729 = vadd.f32 0.0, %v3728
    %3730 = vmatmul.f32.gmra.mxu0 %v3667
    %v3731 = vpop.f32.mrf.mxu0
    %v3732 = vadd.f32 0.0, %v3731
    %3733 = vmatmul.f32.gmra.mxu0 %v3670
    %v3734 = vpop.f32.mrf.mxu0
    %v3735 = vadd.f32 0.0, %v3734
    %3736 = vmatmul.f32.gmra.mxu0 %v3673
    %v3737 = vpop.f32.mrf.mxu0
    %v3738 = vadd.f32 0.0, %v3737
    %3739 = vmatmul.f32.gmra.mxu0 %v3676
    %v3740 = vpop.f32.mrf.mxu0
    %v3741 = vadd.f32 0.0, %v3740
    %3742 = vmatmul.f32.gmra.mxu0 %v3679
    %v3743 = vpop.f32.mrf.mxu0
    %v3744 = vadd.f32 0.0, %v3743
    %3745 = vmatmul.f32.gmra.mxu0 %v3682
    %v3746 = vpop.f32.mrf.mxu0
    %v3747 = vadd.f32 0.0, %v3746
    %3748 = vmatmul.f32.gmra.mxu0 %v3685
    %v3749 = vpop.f32.mrf.mxu0
    %v3750 = vadd.f32 0.0, %v3749
    %3751 = vmatmul.f32.gmra.mxu0 %v3688
    %v3752 = vpop.f32.mrf.mxu0
    %v3753 = vadd.f32 0.0, %v3752
    %3754 = vmatmul.f32.gmra.mxu0 %v3691
    %v3755 = vpop.f32.mrf.mxu0
    %v3756 = vadd.f32 0.0, %v3755
    %3757 = vdwg.mxu0
    %v3759 = vsel %vm3644, %v3500, 0
    %v3762 = vsel %vm3644, %v3501, 0
    %v3765 = vsel %vm3644, %v3502, 0
    %v3768 = vsel %vm3644, %v3503, 0
    %v3771 = vsel %vm3644, %v3504, 0
    %v3774 = vsel %vm3644, %v3505, 0
    %v3777 = vsel %vm3644, %v3506, 0
    %v3780 = vsel %vm3644, %v3507, 0
    %v3783 = vsel %vm3644, %v3508, 0
    %v3786 = vsel %vm3644, %v3509, 0
    %v3789 = vsel %vm3644, %v3510, 0
    %v3792 = vsel %vm3644, %v3511, 0
    %v3795 = vsel %vm3644, %v3512, 0
    %v3798 = vsel %vm3644, %v3513, 0
    %v3801 = vsel %vm3644, %v3514, 0
    %v3804 = vsel %vm3644, %v3515, 0
    %3806 = vmatpush.msra.mxu0 0.0
    %3807 = vmatpush.msra.mxu0 0.0
    %3808 = vmatpush.msra.mxu0 0.0
    %3809 = vmatpush.msra.mxu0 0.0
    %3810 = vmatpush.msra.mxu0 0.0
    %3811 = vmatpush.msra.mxu0 0.0
    %3812 = vmatpush.msra.mxu0 0.0
    %3813 = vmatpush.msra.mxu0 0.0
    %3814 = vmatpush.msra.mxu0 %v3579
    %3815 = vmatpush.msra.mxu0 %v3576
    %3816 = vmatpush.msra.mxu0 %v3573
    %3817 = vmatpush.msra.mxu0 %v3570
    %3818 = vmatpush.msra.mxu0 %v3567
    %3819 = vmatpush.msra.mxu0 %v3564
    %3820 = vmatpush.msra.mxu0 %v3561
    %3821 = vmatpush.msra.mxu0 %v3558
    %3822 = vmatmul.f32.gmra.mxu0 %v3759
    %v3823 = vpop.f32.mrf.mxu0
    %v3824 = vadd.f32 %v3711, %v3823
    %3825 = vmatmul.f32.gmra.mxu0 %v3762
    %v3826 = vpop.f32.mrf.mxu0
    %v3827 = vadd.f32 %v3714, %v3826
    %3828 = vmatmul.f32.gmra.mxu0 %v3765
    %v3829 = vpop.f32.mrf.mxu0
    %v3830 = vadd.f32 %v3717, %v3829
    %3831 = vmatmul.f32.gmra.mxu0 %v3768
    %v3832 = vpop.f32.mrf.mxu0
    %v3833 = vadd.f32 %v3720, %v3832
    %3834 = vmatmul.f32.gmra.mxu0 %v3771
    %v3835 = vpop.f32.mrf.mxu0
    %v3836 = vadd.f32 %v3723, %v3835
    %3837 = vmatmul.f32.gmra.mxu0 %v3774
    %v3838 = vpop.f32.mrf.mxu0
    %v3839 = vadd.f32 %v3726, %v3838
    %3840 = vmatmul.f32.gmra.mxu0 %v3777
    %v3841 = vpop.f32.mrf.mxu0
    %v3842 = vadd.f32 %v3729, %v3841
    %3843 = vmatmul.f32.gmra.mxu0 %v3780
    %v3844 = vpop.f32.mrf.mxu0
    %v3845 = vadd.f32 %v3732, %v3844
    %3846 = vmatmul.f32.gmra.mxu0 %v3783
    %v3847 = vpop.f32.mrf.mxu0
    %v3848 = vadd.f32 %v3735, %v3847
    %3849 = vmatmul.f32.gmra.mxu0 %v3786
    %v3850 = vpop.f32.mrf.mxu0
    %v3851 = vadd.f32 %v3738, %v3850
    %3852 = vmatmul.f32.gmra.mxu0 %v3789
    %v3853 = vpop.f32.mrf.mxu0
    %v3854 = vadd.f32 %v3741, %v3853
    %3855 = vmatmul.f32.gmra.mxu0 %v3792
    %v3856 = vpop.f32.mrf.mxu0
    %v3857 = vadd.f32 %v3744, %v3856
    %3858 = vmatmul.f32.gmra.mxu0 %v3795
    %v3859 = vpop.f32.mrf.mxu0
    %v3860 = vadd.f32 %v3747, %v3859
    %3861 = vmatmul.f32.gmra.mxu0 %v3798
    %v3862 = vpop.f32.mrf.mxu0
    %v3863 = vadd.f32 %v3750, %v3862
    %3864 = vmatmul.f32.gmra.mxu0 %v3801
    %v3865 = vpop.f32.mrf.mxu0
    %v3866 = vadd.f32 %v3753, %v3865
    %3867 = vmatmul.f32.gmra.mxu0 %v3804
    %v3868 = vpop.f32.mrf.mxu0
    %v3869 = vadd.f32 %v3756, %v3868
    %3870 = vdwg.mxu0
    %s3871 = scalar_lea.vmem %s9, 64
    %v3872 = vld [vmem:[%s3871] sm:$0xff]
    %v3873 = vld [vmem:[%s3871 + $0x8] sm:$0xff]
    %v3874 = vld [vmem:[%s3871 + $0x10] sm:$0xff]
    %v3875 = vld [vmem:[%s3871 + $0x18] sm:$0xff]
    %s3876 = scalar_lea.vmem %s10, 256
    %v3877 = vld [vmem:[%s3876] sm:$0xff]
    %v3878 = vld [vmem:[%s3876 + $0x8] sm:$0xff]
    %v3879 = vld [vmem:[%s3876 + $0x10] sm:$0xff]
    %v3880 = vld [vmem:[%s3876 + $0x18] sm:$0xff]
    %v3881 = vld [vmem:[%s3876 + $0x20] sm:$0xff]
    %v3882 = vld [vmem:[%s3876 + $0x28] sm:$0xff]
    %v3883 = vld [vmem:[%s3876 + $0x30] sm:$0xff]
    %v3884 = vld [vmem:[%s3876 + $0x38] sm:$0xff]
    %v3885 = vld [vmem:[%s3876 + $0x40] sm:$0xff]
    %v3886 = vld [vmem:[%s3876 + $0x48] sm:$0xff]
    %v3887 = vld [vmem:[%s3876 + $0x50] sm:$0xff]
    %v3888 = vld [vmem:[%s3876 + $0x58] sm:$0xff]
    %v3889 = vld [vmem:[%s3876 + $0x60] sm:$0xff]
    %v3890 = vld [vmem:[%s3876 + $0x68] sm:$0xff]
    %v3891 = vld [vmem:[%s3876 + $0x70] sm:$0xff]
    %v3892 = vld [vmem:[%s3876 + $0x78] sm:$0xff]
    %3893 = vmatpush.msra.mxu0 0.0
    %3894 = vmatpush.msra.mxu0 0.0
    %3895 = vmatpush.msra.mxu0 0.0
    %3896 = vmatpush.msra.mxu0 0.0
    %3897 = vmatpush.msra.mxu0 0.0
    %3898 = vmatpush.msra.mxu0 0.0
    %3899 = vmatpush.msra.mxu0 0.0
    %3900 = vmatpush.msra.mxu0 0.0
    %3901 = vmatpush.msra.mxu0 0.0
    %3902 = vmatpush.msra.mxu0 0.0
    %3903 = vmatpush.msra.mxu0 0.0
    %3904 = vmatpush.msra.mxu0 0.0
    %3905 = vmatpush.msra.mxu0 %v3875
    %3906 = vmatpush.msra.mxu0 %v3874
    %3907 = vmatpush.msra.mxu0 %v3873
    %3908 = vmatpush.msra.mxu0 %v3872
    %3909 = vmatmul.f32.gmra.mxu0 %v3517
    %v3910 = vpop.f32.mrf.mxu0
    %v3911 = vadd.f32 0.0, %v3910
    %3912 = vmatmul.f32.gmra.mxu0 %v3520
    %v3913 = vpop.f32.mrf.mxu0
    %v3914 = vadd.f32 0.0, %v3913
    %3915 = vmatmul.f32.gmra.mxu0 %v3523
    %v3916 = vpop.f32.mrf.mxu0
    %v3917 = vadd.f32 0.0, %v3916
    %3918 = vmatmul.f32.gmra.mxu0 %v3526
    %v3919 = vpop.f32.mrf.mxu0
    %v3920 = vadd.f32 0.0, %v3919
    %3921 = vmatmul.f32.gmra.mxu0 %v3529
    %v3922 = vpop.f32.mrf.mxu0
    %v3923 = vadd.f32 0.0, %v3922
    %3924 = vmatmul.f32.gmra.mxu0 %v3532
    %v3925 = vpop.f32.mrf.mxu0
    %v3926 = vadd.f32 0.0, %v3925
    %3927 = vmatmul.f32.gmra.mxu0 %v3535
    %v3928 = vpop.f32.mrf.mxu0
    %v3929 = vadd.f32 0.0, %v3928
    %3930 = vmatmul.f32.gmra.mxu0 %v3538
    %v3931 = vpop.f32.mrf.mxu0
    %v3932 = vadd.f32 0.0, %v3931
    %3933 = vdwg.mxu0
    %v3935 = vsel %vm3644, %v3877, 0
    %v3938 = vsel %vm3644, %v3878, 0
    %v3941 = vsel %vm3644, %v3879, 0
    %v3944 = vsel %vm3644, %v3880, 0
    %v3947 = vsel %vm3644, %v3881, 0
    %v3950 = vsel %vm3644, %v3882, 0
    %v3953 = vsel %vm3644, %v3883, 0
    %v3956 = vsel %vm3644, %v3884, 0
    %v3959 = vsel %vm3644, %v3885, 0
    %v3962 = vsel %vm3644, %v3886, 0
    %v3965 = vsel %vm3644, %v3887, 0
    %v3968 = vsel %vm3644, %v3888, 0
    %v3971 = vsel %vm3644, %v3889, 0
    %v3974 = vsel %vm3644, %v3890, 0
    %v3977 = vsel %vm3644, %v3891, 0
    %v3980 = vsel %vm3644, %v3892, 0
    %3982 = vmatpush.msra.mxu0 0.0
    %3983 = vmatpush.msra.mxu0 0.0
    %3984 = vmatpush.msra.mxu0 0.0
    %3985 = vmatpush.msra.mxu0 0.0
    %3986 = vmatpush.msra.mxu0 0.0
    %3987 = vmatpush.msra.mxu0 0.0
    %3988 = vmatpush.msra.mxu0 0.0
    %3989 = vmatpush.msra.mxu0 0.0
    %3990 = vmatpush.msra.mxu0 %v3932
    %3991 = vmatpush.msra.mxu0 %v3929
    %3992 = vmatpush.msra.mxu0 %v3926
    %3993 = vmatpush.msra.mxu0 %v3923
    %3994 = vmatpush.msra.mxu0 %v3920
    %3995 = vmatpush.msra.mxu0 %v3917
    %3996 = vmatpush.msra.mxu0 %v3914
    %3997 = vmatpush.msra.mxu0 %v3911
    %3998 = vmatmul.f32.gmra.mxu0 %v3935
    %v3999 = vpop.f32.mrf.mxu0
    %v4000 = vadd.f32 0.0, %v3999
    %4001 = vmatmul.f32.gmra.mxu0 %v3938
    %v4002 = vpop.f32.mrf.mxu0
    %v4003 = vadd.f32 0.0, %v4002
    %4004 = vmatmul.f32.gmra.mxu0 %v3941
    %v4005 = vpop.f32.mrf.mxu0
    %v4006 = vadd.f32 0.0, %v4005
    %4007 = vmatmul.f32.gmra.mxu0 %v3944
    %v4008 = vpop.f32.mrf.mxu0
    %v4009 = vadd.f32 0.0, %v4008
    %4010 = vmatmul.f32.gmra.mxu0 %v3947
    %v4011 = vpop.f32.mrf.mxu0
    %v4012 = vadd.f32 0.0, %v4011
    %4013 = vmatmul.f32.gmra.mxu0 %v3950
    %v4014 = vpop.f32.mrf.mxu0
    %v4015 = vadd.f32 0.0, %v4014
    %4016 = vmatmul.f32.gmra.mxu0 %v3953
    %v4017 = vpop.f32.mrf.mxu0
    %v4018 = vadd.f32 0.0, %v4017
    %4019 = vmatmul.f32.gmra.mxu0 %v3956
    %v4020 = vpop.f32.mrf.mxu0
    %v4021 = vadd.f32 0.0, %v4020
    %4022 = vmatmul.f32.gmra.mxu0 %v3959
    %v4023 = vpop.f32.mrf.mxu0
    %v4024 = vadd.f32 0.0, %v4023
    %4025 = vmatmul.f32.gmra.mxu0 %v3962
    %v4026 = vpop.f32.mrf.mxu0
    %v4027 = vadd.f32 0.0, %v4026
    %4028 = vmatmul.f32.gmra.mxu0 %v3965
    %v4029 = vpop.f32.mrf.mxu0
    %v4030 = vadd.f32 0.0, %v4029
    %4031 = vmatmul.f32.gmra.mxu0 %v3968
    %v4032 = vpop.f32.mrf.mxu0
    %v4033 = vadd.f32 0.0, %v4032
    %4034 = vmatmul.f32.gmra.mxu0 %v3971
    %v4035 = vpop.f32.mrf.mxu0
    %v4036 = vadd.f32 0.0, %v4035
    %4037 = vmatmul.f32.gmra.mxu0 %v3974
    %v4038 = vpop.f32.mrf.mxu0
    %v4039 = vadd.f32 0.0, %v4038
    %4040 = vmatmul.f32.gmra.mxu0 %v3977
    %v4041 = vpop.f32.mrf.mxu0
    %v4042 = vadd.f32 0.0, %v4041
    %4043 = vmatmul.f32.gmra.mxu0 %v3980
    %v4044 = vpop.f32.mrf.mxu0
    %v4045 = vadd.f32 0.0, %v4044
    %4046 = vdwg.mxu0
    %v4047 = vadd.f32 %v3824, %v4000
    %v4048 = vadd.f32 %v3827, %v4003
    %v4049 = vadd.f32 %v3830, %v4006
    %v4050 = vadd.f32 %v3833, %v4009
    %v4051 = vadd.f32 %v3836, %v4012
    %v4052 = vadd.f32 %v3839, %v4015
    %v4053 = vadd.f32 %v3842, %v4018
    %v4054 = vadd.f32 %v3845, %v4021
    %v4055 = vadd.f32 %v3848, %v4024
    %v4056 = vadd.f32 %v3851, %v4027
    %v4057 = vadd.f32 %v3854, %v4030
    %v4058 = vadd.f32 %v3857, %v4033
    %v4059 = vadd.f32 %v3860, %v4036
    %v4060 = vadd.f32 %v3863, %v4039
    %v4061 = vadd.f32 %v3866, %v4042
    %v4062 = vadd.f32 %v3869, %v4045
    %s4063 = scalar_lea.vmem %s9, 96
    %v4064 = vld [vmem:[%s4063] sm:$0xff]
    %v4065 = vld [vmem:[%s4063 + $0x8] sm:$0xff]
    %v4066 = vld [vmem:[%s4063 + $0x10] sm:$0xff]
    %v4067 = vld [vmem:[%s4063 + $0x18] sm:$0xff]
    %s4068 = scalar_lea.vmem %s10, 384
    %v4069 = vld [vmem:[%s4068] sm:$0xff]
    %v4070 = vld [vmem:[%s4068 + $0x8] sm:$0xff]
    %v4071 = vld [vmem:[%s4068 + $0x10] sm:$0xff]
    %v4072 = vld [vmem:[%s4068 + $0x18] sm:$0xff]
    %v4073 = vld [vmem:[%s4068 + $0x20] sm:$0xff]
    %v4074 = vld [vmem:[%s4068 + $0x28] sm:$0xff]
    %v4075 = vld [vmem:[%s4068 + $0x30] sm:$0xff]
    %v4076 = vld [vmem:[%s4068 + $0x38] sm:$0xff]
    %v4077 = vld [vmem:[%s4068 + $0x40] sm:$0xff]
    %v4078 = vld [vmem:[%s4068 + $0x48] sm:$0xff]
    %v4079 = vld [vmem:[%s4068 + $0x50] sm:$0xff]
    %v4080 = vld [vmem:[%s4068 + $0x58] sm:$0xff]
    %v4081 = vld [vmem:[%s4068 + $0x60] sm:$0xff]
    %v4082 = vld [vmem:[%s4068 + $0x68] sm:$0xff]
    %v4083 = vld [vmem:[%s4068 + $0x70] sm:$0xff]
    %v4084 = vld [vmem:[%s4068 + $0x78] sm:$0xff]
    %4085 = vmatpush.msra.mxu0 0.0
    %4086 = vmatpush.msra.mxu0 0.0
    %4087 = vmatpush.msra.mxu0 0.0
    %4088 = vmatpush.msra.mxu0 0.0
    %4089 = vmatpush.msra.mxu0 0.0
    %4090 = vmatpush.msra.mxu0 0.0
    %4091 = vmatpush.msra.mxu0 0.0
    %4092 = vmatpush.msra.mxu0 0.0
    %4093 = vmatpush.msra.mxu0 0.0
    %4094 = vmatpush.msra.mxu0 0.0
    %4095 = vmatpush.msra.mxu0 0.0
    %4096 = vmatpush.msra.mxu0 0.0
    %4097 = vmatpush.msra.mxu0 %v4067
    %4098 = vmatpush.msra.mxu0 %v4066
    %4099 = vmatpush.msra.mxu0 %v4065
    %4100 = vmatpush.msra.mxu0 %v4064
    %4101 = vmatmul.f32.gmra.mxu0 %v3517
    %v4102 = vpop.f32.mrf.mxu0
    %v4103 = vadd.f32 0.0, %v4102
    %4104 = vmatmul.f32.gmra.mxu0 %v3520
    %v4105 = vpop.f32.mrf.mxu0
    %v4106 = vadd.f32 0.0, %v4105
    %4107 = vmatmul.f32.gmra.mxu0 %v3523
    %v4108 = vpop.f32.mrf.mxu0
    %v4109 = vadd.f32 0.0, %v4108
    %4110 = vmatmul.f32.gmra.mxu0 %v3526
    %v4111 = vpop.f32.mrf.mxu0
    %v4112 = vadd.f32 0.0, %v4111
    %4113 = vmatmul.f32.gmra.mxu0 %v3529
    %v4114 = vpop.f32.mrf.mxu0
    %v4115 = vadd.f32 0.0, %v4114
    %4116 = vmatmul.f32.gmra.mxu0 %v3532
    %v4117 = vpop.f32.mrf.mxu0
    %v4118 = vadd.f32 0.0, %v4117
    %4119 = vmatmul.f32.gmra.mxu0 %v3535
    %v4120 = vpop.f32.mrf.mxu0
    %v4121 = vadd.f32 0.0, %v4120
    %4122 = vmatmul.f32.gmra.mxu0 %v3538
    %v4123 = vpop.f32.mrf.mxu0
    %v4124 = vadd.f32 0.0, %v4123
    %4125 = vdwg.mxu0
    %v4127 = vsel %vm3644, %v4069, 0
    %v4130 = vsel %vm3644, %v4070, 0
    %v4133 = vsel %vm3644, %v4071, 0
    %v4136 = vsel %vm3644, %v4072, 0
    %v4139 = vsel %vm3644, %v4073, 0
    %v4142 = vsel %vm3644, %v4074, 0
    %v4145 = vsel %vm3644, %v4075, 0
    %v4148 = vsel %vm3644, %v4076, 0
    %v4151 = vsel %vm3644, %v4077, 0
    %v4154 = vsel %vm3644, %v4078, 0
    %v4157 = vsel %vm3644, %v4079, 0
    %v4160 = vsel %vm3644, %v4080, 0
    %v4163 = vsel %vm3644, %v4081, 0
    %v4166 = vsel %vm3644, %v4082, 0
    %v4169 = vsel %vm3644, %v4083, 0
    %v4172 = vsel %vm3644, %v4084, 0
    %4174 = vmatpush.msra.mxu0 0.0
    %4175 = vmatpush.msra.mxu0 0.0
    %4176 = vmatpush.msra.mxu0 0.0
    %4177 = vmatpush.msra.mxu0 0.0
    %4178 = vmatpush.msra.mxu0 0.0
    %4179 = vmatpush.msra.mxu0 0.0
    %4180 = vmatpush.msra.mxu0 0.0
    %4181 = vmatpush.msra.mxu0 0.0
    %4182 = vmatpush.msra.mxu0 %v4124
    %4183 = vmatpush.msra.mxu0 %v4121
    %4184 = vmatpush.msra.mxu0 %v4118
    %4185 = vmatpush.msra.mxu0 %v4115
    %4186 = vmatpush.msra.mxu0 %v4112
    %4187 = vmatpush.msra.mxu0 %v4109
    %4188 = vmatpush.msra.mxu0 %v4106
    %4189 = vmatpush.msra.mxu0 %v4103
    %4190 = vmatmul.f32.gmra.mxu0 %v4127
    %v4191 = vpop.f32.mrf.mxu0
    %v4192 = vadd.f32 0.0, %v4191
    %4193 = vmatmul.f32.gmra.mxu0 %v4130
    %v4194 = vpop.f32.mrf.mxu0
    %v4195 = vadd.f32 0.0, %v4194
    %4196 = vmatmul.f32.gmra.mxu0 %v4133
    %v4197 = vpop.f32.mrf.mxu0
    %v4198 = vadd.f32 0.0, %v4197
    %4199 = vmatmul.f32.gmra.mxu0 %v4136
    %v4200 = vpop.f32.mrf.mxu0
    %v4201 = vadd.f32 0.0, %v4200
    %4202 = vmatmul.f32.gmra.mxu0 %v4139
    %v4203 = vpop.f32.mrf.mxu0
    %v4204 = vadd.f32 0.0, %v4203
    %4205 = vmatmul.f32.gmra.mxu0 %v4142
    %v4206 = vpop.f32.mrf.mxu0
    %v4207 = vadd.f32 0.0, %v4206
    %4208 = vmatmul.f32.gmra.mxu0 %v4145
    %v4209 = vpop.f32.mrf.mxu0
    %v4210 = vadd.f32 0.0, %v4209
    %4211 = vmatmul.f32.gmra.mxu0 %v4148
    %v4212 = vpop.f32.mrf.mxu0
    %v4213 = vadd.f32 0.0, %v4212
    %4214 = vmatmul.f32.gmra.mxu0 %v4151
    %v4215 = vpop.f32.mrf.mxu0
    %v4216 = vadd.f32 0.0, %v4215
    %4217 = vmatmul.f32.gmra.mxu0 %v4154
    %v4218 = vpop.f32.mrf.mxu0
    %v4219 = vadd.f32 0.0, %v4218
    %4220 = vmatmul.f32.gmra.mxu0 %v4157
    %v4221 = vpop.f32.mrf.mxu0
    %v4222 = vadd.f32 0.0, %v4221
    %4223 = vmatmul.f32.gmra.mxu0 %v4160
    %v4224 = vpop.f32.mrf.mxu0
    %v4225 = vadd.f32 0.0, %v4224
    %4226 = vmatmul.f32.gmra.mxu0 %v4163
    %v4227 = vpop.f32.mrf.mxu0
    %v4228 = vadd.f32 0.0, %v4227
    %4229 = vmatmul.f32.gmra.mxu0 %v4166
    %v4230 = vpop.f32.mrf.mxu0
    %v4231 = vadd.f32 0.0, %v4230
    %4232 = vmatmul.f32.gmra.mxu0 %v4169
    %v4233 = vpop.f32.mrf.mxu0
    %v4234 = vadd.f32 0.0, %v4233
    %4235 = vmatmul.f32.gmra.mxu0 %v4172
    %v4236 = vpop.f32.mrf.mxu0
    %v4237 = vadd.f32 0.0, %v4236
    %4238 = vdwg.mxu0
    %v4239 = vadd.f32 %v4047, %v4192
    %v4240 = vadd.f32 %v4048, %v4195
    %v4241 = vadd.f32 %v4049, %v4198
    %v4242 = vadd.f32 %v4050, %v4201
    %v4243 = vadd.f32 %v4051, %v4204
    %v4244 = vadd.f32 %v4052, %v4207
    %v4245 = vadd.f32 %v4053, %v4210
    %v4246 = vadd.f32 %v4054, %v4213
    %v4247 = vadd.f32 %v4055, %v4216
    %v4248 = vadd.f32 %v4056, %v4219
    %v4249 = vadd.f32 %v4057, %v4222
    %v4250 = vadd.f32 %v4058, %v4225
    %v4251 = vadd.f32 %v4059, %v4228
    %v4252 = vadd.f32 %v4060, %v4231
    %v4253 = vadd.f32 %v4061, %v4234
    %v4254 = vadd.f32 %v4062, %v4237
    %s4255 = scalar_lea.vmem %s9, 128
    %v4256 = vld [vmem:[%s4255] sm:$0xff]
    %v4257 = vld [vmem:[%s4255 + $0x8] sm:$0xff]
    %v4258 = vld [vmem:[%s4255 + $0x10] sm:$0xff]
    %v4259 = vld [vmem:[%s4255 + $0x18] sm:$0xff]
    %s4260 = scalar_lea.vmem %s10, 512
    %v4261 = vld [vmem:[%s4260] sm:$0xff]
    %v4262 = vld [vmem:[%s4260 + $0x8] sm:$0xff]
    %v4263 = vld [vmem:[%s4260 + $0x10] sm:$0xff]
    %v4264 = vld [vmem:[%s4260 + $0x18] sm:$0xff]
    %v4265 = vld [vmem:[%s4260 + $0x20] sm:$0xff]
    %v4266 = vld [vmem:[%s4260 + $0x28] sm:$0xff]
    %v4267 = vld [vmem:[%s4260 + $0x30] sm:$0xff]
    %v4268 = vld [vmem:[%s4260 + $0x38] sm:$0xff]
    %v4269 = vld [vmem:[%s4260 + $0x40] sm:$0xff]
    %v4270 = vld [vmem:[%s4260 + $0x48] sm:$0xff]
    %v4271 = vld [vmem:[%s4260 + $0x50] sm:$0xff]
    %v4272 = vld [vmem:[%s4260 + $0x58] sm:$0xff]
    %v4273 = vld [vmem:[%s4260 + $0x60] sm:$0xff]
    %v4274 = vld [vmem:[%s4260 + $0x68] sm:$0xff]
    %v4275 = vld [vmem:[%s4260 + $0x70] sm:$0xff]
    %v4276 = vld [vmem:[%s4260 + $0x78] sm:$0xff]
    %4277 = vmatpush.msra.mxu0 0.0
    %4278 = vmatpush.msra.mxu0 0.0
    %4279 = vmatpush.msra.mxu0 0.0
    %4280 = vmatpush.msra.mxu0 0.0
    %4281 = vmatpush.msra.mxu0 0.0
    %4282 = vmatpush.msra.mxu0 0.0
    %4283 = vmatpush.msra.mxu0 0.0
    %4284 = vmatpush.msra.mxu0 0.0
    %4285 = vmatpush.msra.mxu0 0.0
    %4286 = vmatpush.msra.mxu0 0.0
    %4287 = vmatpush.msra.mxu0 0.0
    %4288 = vmatpush.msra.mxu0 0.0
    %4289 = vmatpush.msra.mxu0 %v4259
    %4290 = vmatpush.msra.mxu0 %v4258
    %4291 = vmatpush.msra.mxu0 %v4257
    %4292 = vmatpush.msra.mxu0 %v4256
    %4293 = vmatmul.f32.gmra.mxu0 %v3517
    %v4294 = vpop.f32.mrf.mxu0
    %v4295 = vadd.f32 0.0, %v4294
    %4296 = vmatmul.f32.gmra.mxu0 %v3520
    %v4297 = vpop.f32.mrf.mxu0
    %v4298 = vadd.f32 0.0, %v4297
    %4299 = vmatmul.f32.gmra.mxu0 %v3523
    %v4300 = vpop.f32.mrf.mxu0
    %v4301 = vadd.f32 0.0, %v4300
    %4302 = vmatmul.f32.gmra.mxu0 %v3526
    %v4303 = vpop.f32.mrf.mxu0
    %v4304 = vadd.f32 0.0, %v4303
    %4305 = vmatmul.f32.gmra.mxu0 %v3529
    %v4306 = vpop.f32.mrf.mxu0
    %v4307 = vadd.f32 0.0, %v4306
    %4308 = vmatmul.f32.gmra.mxu0 %v3532
    %v4309 = vpop.f32.mrf.mxu0
    %v4310 = vadd.f32 0.0, %v4309
    %4311 = vmatmul.f32.gmra.mxu0 %v3535
    %v4312 = vpop.f32.mrf.mxu0
    %v4313 = vadd.f32 0.0, %v4312
    %4314 = vmatmul.f32.gmra.mxu0 %v3538
    %v4315 = vpop.f32.mrf.mxu0
    %v4316 = vadd.f32 0.0, %v4315
    %4317 = vdwg.mxu0
    %v4319 = vsel %vm3644, %v4261, 0
    %v4322 = vsel %vm3644, %v4262, 0
    %v4325 = vsel %vm3644, %v4263, 0
    %v4328 = vsel %vm3644, %v4264, 0
    %v4331 = vsel %vm3644, %v4265, 0
    %v4334 = vsel %vm3644, %v4266, 0
    %v4337 = vsel %vm3644, %v4267, 0
    %v4340 = vsel %vm3644, %v4268, 0
    %v4343 = vsel %vm3644, %v4269, 0
    %v4346 = vsel %vm3644, %v4270, 0
    %v4349 = vsel %vm3644, %v4271, 0
    %v4352 = vsel %vm3644, %v4272, 0
    %v4355 = vsel %vm3644, %v4273, 0
    %v4358 = vsel %vm3644, %v4274, 0
    %v4361 = vsel %vm3644, %v4275, 0
    %v4364 = vsel %vm3644, %v4276, 0
    %4366 = vmatpush.msra.mxu0 0.0
    %4367 = vmatpush.msra.mxu0 0.0
    %4368 = vmatpush.msra.mxu0 0.0
    %4369 = vmatpush.msra.mxu0 0.0
    %4370 = vmatpush.msra.mxu0 0.0
    %4371 = vmatpush.msra.mxu0 0.0
    %4372 = vmatpush.msra.mxu0 0.0
    %4373 = vmatpush.msra.mxu0 0.0
    %4374 = vmatpush.msra.mxu0 %v4316
    %4375 = vmatpush.msra.mxu0 %v4313
    %4376 = vmatpush.msra.mxu0 %v4310
    %4377 = vmatpush.msra.mxu0 %v4307
    %4378 = vmatpush.msra.mxu0 %v4304
    %4379 = vmatpush.msra.mxu0 %v4301
    %4380 = vmatpush.msra.mxu0 %v4298
    %4381 = vmatpush.msra.mxu0 %v4295
    %4382 = vmatmul.f32.gmra.mxu0 %v4319
    %v4383 = vpop.f32.mrf.mxu0
    %v4384 = vadd.f32 0.0, %v4383
    %4385 = vmatmul.f32.gmra.mxu0 %v4322
    %v4386 = vpop.f32.mrf.mxu0
    %v4387 = vadd.f32 0.0, %v4386
    %4388 = vmatmul.f32.gmra.mxu0 %v4325
    %v4389 = vpop.f32.mrf.mxu0
    %v4390 = vadd.f32 0.0, %v4389
    %4391 = vmatmul.f32.gmra.mxu0 %v4328
    %v4392 = vpop.f32.mrf.mxu0
    %v4393 = vadd.f32 0.0, %v4392
    %4394 = vmatmul.f32.gmra.mxu0 %v4331
    %v4395 = vpop.f32.mrf.mxu0
    %v4396 = vadd.f32 0.0, %v4395
    %4397 = vmatmul.f32.gmra.mxu0 %v4334
    %v4398 = vpop.f32.mrf.mxu0
    %v4399 = vadd.f32 0.0, %v4398
    %4400 = vmatmul.f32.gmra.mxu0 %v4337
    %v4401 = vpop.f32.mrf.mxu0
    %v4402 = vadd.f32 0.0, %v4401
    %4403 = vmatmul.f32.gmra.mxu0 %v4340
    %v4404 = vpop.f32.mrf.mxu0
    %v4405 = vadd.f32 0.0, %v4404
    %4406 = vmatmul.f32.gmra.mxu0 %v4343
    %v4407 = vpop.f32.mrf.mxu0
    %v4408 = vadd.f32 0.0, %v4407
    %4409 = vmatmul.f32.gmra.mxu0 %v4346
    %v4410 = vpop.f32.mrf.mxu0
    %v4411 = vadd.f32 0.0, %v4410
    %4412 = vmatmul.f32.gmra.mxu0 %v4349
    %v4413 = vpop.f32.mrf.mxu0
    %v4414 = vadd.f32 0.0, %v4413
    %4415 = vmatmul.f32.gmra.mxu0 %v4352
    %v4416 = vpop.f32.mrf.mxu0
    %v4417 = vadd.f32 0.0, %v4416
    %4418 = vmatmul.f32.gmra.mxu0 %v4355
    %v4419 = vpop.f32.mrf.mxu0
    %v4420 = vadd.f32 0.0, %v4419
    %4421 = vmatmul.f32.gmra.mxu0 %v4358
    %v4422 = vpop.f32.mrf.mxu0
    %v4423 = vadd.f32 0.0, %v4422
    %4424 = vmatmul.f32.gmra.mxu0 %v4361
    %v4425 = vpop.f32.mrf.mxu0
    %v4426 = vadd.f32 0.0, %v4425
    %4427 = vmatmul.f32.gmra.mxu0 %v4364
    %v4428 = vpop.f32.mrf.mxu0
    %v4429 = vadd.f32 0.0, %v4428
    %4430 = vdwg.mxu0
    %v4431 = vadd.f32 %v4239, %v4384
    %v4432 = vadd.f32 %v4240, %v4387
    %v4433 = vadd.f32 %v4241, %v4390
    %v4434 = vadd.f32 %v4242, %v4393
    %v4435 = vadd.f32 %v4243, %v4396
    %v4436 = vadd.f32 %v4244, %v4399
    %v4437 = vadd.f32 %v4245, %v4402
    %v4438 = vadd.f32 %v4246, %v4405
    %v4439 = vadd.f32 %v4247, %v4408
    %v4440 = vadd.f32 %v4248, %v4411
    %v4441 = vadd.f32 %v4249, %v4414
    %v4442 = vadd.f32 %v4250, %v4417
    %v4443 = vadd.f32 %v4251, %v4420
    %v4444 = vadd.f32 %v4252, %v4423
    %v4445 = vadd.f32 %v4253, %v4426
    %v4446 = vadd.f32 %v4254, %v4429
    %s4447 = scalar_lea.vmem %s9, 160
    %v4448 = vld [vmem:[%s4447] sm:$0xff]
    %v4449 = vld [vmem:[%s4447 + $0x8] sm:$0xff]
    %v4450 = vld [vmem:[%s4447 + $0x10] sm:$0xff]
    %v4451 = vld [vmem:[%s4447 + $0x18] sm:$0xff]
    %s4452 = scalar_lea.vmem %s10, 640
    %v4453 = vld [vmem:[%s4452] sm:$0xff]
    %v4454 = vld [vmem:[%s4452 + $0x8] sm:$0xff]
    %v4455 = vld [vmem:[%s4452 + $0x10] sm:$0xff]
    %v4456 = vld [vmem:[%s4452 + $0x18] sm:$0xff]
    %v4457 = vld [vmem:[%s4452 + $0x20] sm:$0xff]
    %v4458 = vld [vmem:[%s4452 + $0x28] sm:$0xff]
    %v4459 = vld [vmem:[%s4452 + $0x30] sm:$0xff]
    %v4460 = vld [vmem:[%s4452 + $0x38] sm:$0xff]
    %v4461 = vld [vmem:[%s4452 + $0x40] sm:$0xff]
    %v4462 = vld [vmem:[%s4452 + $0x48] sm:$0xff]
    %v4463 = vld [vmem:[%s4452 + $0x50] sm:$0xff]
    %v4464 = vld [vmem:[%s4452 + $0x58] sm:$0xff]
    %v4465 = vld [vmem:[%s4452 + $0x60] sm:$0xff]
    %v4466 = vld [vmem:[%s4452 + $0x68] sm:$0xff]
    %v4467 = vld [vmem:[%s4452 + $0x70] sm:$0xff]
    %v4468 = vld [vmem:[%s4452 + $0x78] sm:$0xff]
    %4469 = vmatpush.msra.mxu0 0.0
    %4470 = vmatpush.msra.mxu0 0.0
    %4471 = vmatpush.msra.mxu0 0.0
    %4472 = vmatpush.msra.mxu0 0.0
    %4473 = vmatpush.msra.mxu0 0.0
    %4474 = vmatpush.msra.mxu0 0.0
    %4475 = vmatpush.msra.mxu0 0.0
    %4476 = vmatpush.msra.mxu0 0.0
    %4477 = vmatpush.msra.mxu0 0.0
    %4478 = vmatpush.msra.mxu0 0.0
    %4479 = vmatpush.msra.mxu0 0.0
    %4480 = vmatpush.msra.mxu0 0.0
    %4481 = vmatpush.msra.mxu0 %v4451
    %4482 = vmatpush.msra.mxu0 %v4450
    %4483 = vmatpush.msra.mxu0 %v4449
    %4484 = vmatpush.msra.mxu0 %v4448
    %4485 = vmatmul.f32.gmra.mxu0 %v3517
    %v4486 = vpop.f32.mrf.mxu0
    %v4487 = vadd.f32 0.0, %v4486
    %4488 = vmatmul.f32.gmra.mxu0 %v3520
    %v4489 = vpop.f32.mrf.mxu0
    %v4490 = vadd.f32 0.0, %v4489
    %4491 = vmatmul.f32.gmra.mxu0 %v3523
    %v4492 = vpop.f32.mrf.mxu0
    %v4493 = vadd.f32 0.0, %v4492
    %4494 = vmatmul.f32.gmra.mxu0 %v3526
    %v4495 = vpop.f32.mrf.mxu0
    %v4496 = vadd.f32 0.0, %v4495
    %4497 = vmatmul.f32.gmra.mxu0 %v3529
    %v4498 = vpop.f32.mrf.mxu0
    %v4499 = vadd.f32 0.0, %v4498
    %4500 = vmatmul.f32.gmra.mxu0 %v3532
    %v4501 = vpop.f32.mrf.mxu0
    %v4502 = vadd.f32 0.0, %v4501
    %4503 = vmatmul.f32.gmra.mxu0 %v3535
    %v4504 = vpop.f32.mrf.mxu0
    %v4505 = vadd.f32 0.0, %v4504
    %4506 = vmatmul.f32.gmra.mxu0 %v3538
    %v4507 = vpop.f32.mrf.mxu0
    %v4508 = vadd.f32 0.0, %v4507
    %4509 = vdwg.mxu0
    %v4511 = vsel %vm3644, %v4453, 0
    %v4514 = vsel %vm3644, %v4454, 0
    %v4517 = vsel %vm3644, %v4455, 0
    %v4520 = vsel %vm3644, %v4456, 0
    %v4523 = vsel %vm3644, %v4457, 0
    %v4526 = vsel %vm3644, %v4458, 0
    %v4529 = vsel %vm3644, %v4459, 0
    %v4532 = vsel %vm3644, %v4460, 0
    %v4535 = vsel %vm3644, %v4461, 0
    %v4538 = vsel %vm3644, %v4462, 0
    %v4541 = vsel %vm3644, %v4463, 0
    %v4544 = vsel %vm3644, %v4464, 0
    %v4547 = vsel %vm3644, %v4465, 0
    %v4550 = vsel %vm3644, %v4466, 0
    %v4553 = vsel %vm3644, %v4467, 0
    %v4556 = vsel %vm3644, %v4468, 0
    %4558 = vmatpush.msra.mxu0 0.0
    %4559 = vmatpush.msra.mxu0 0.0
    %4560 = vmatpush.msra.mxu0 0.0
    %4561 = vmatpush.msra.mxu0 0.0
    %4562 = vmatpush.msra.mxu0 0.0
    %4563 = vmatpush.msra.mxu0 0.0
    %4564 = vmatpush.msra.mxu0 0.0
    %4565 = vmatpush.msra.mxu0 0.0
    %4566 = vmatpush.msra.mxu0 %v4508
    %4567 = vmatpush.msra.mxu0 %v4505
    %4568 = vmatpush.msra.mxu0 %v4502
    %4569 = vmatpush.msra.mxu0 %v4499
    %4570 = vmatpush.msra.mxu0 %v4496
    %4571 = vmatpush.msra.mxu0 %v4493
    %4572 = vmatpush.msra.mxu0 %v4490
    %4573 = vmatpush.msra.mxu0 %v4487
    %4574 = vmatmul.f32.gmra.mxu0 %v4511
    %v4575 = vpop.f32.mrf.mxu0
    %v4576 = vadd.f32 0.0, %v4575
    %4577 = vmatmul.f32.gmra.mxu0 %v4514
    %v4578 = vpop.f32.mrf.mxu0
    %v4579 = vadd.f32 0.0, %v4578
    %4580 = vmatmul.f32.gmra.mxu0 %v4517
    %v4581 = vpop.f32.mrf.mxu0
    %v4582 = vadd.f32 0.0, %v4581
    %4583 = vmatmul.f32.gmra.mxu0 %v4520
    %v4584 = vpop.f32.mrf.mxu0
    %v4585 = vadd.f32 0.0, %v4584
    %4586 = vmatmul.f32.gmra.mxu0 %v4523
    %v4587 = vpop.f32.mrf.mxu0
    %v4588 = vadd.f32 0.0, %v4587
    %4589 = vmatmul.f32.gmra.mxu0 %v4526
    %v4590 = vpop.f32.mrf.mxu0
    %v4591 = vadd.f32 0.0, %v4590
    %4592 = vmatmul.f32.gmra.mxu0 %v4529
    %v4593 = vpop.f32.mrf.mxu0
    %v4594 = vadd.f32 0.0, %v4593
    %4595 = vmatmul.f32.gmra.mxu0 %v4532
    %v4596 = vpop.f32.mrf.mxu0
    %v4597 = vadd.f32 0.0, %v4596
    %4598 = vmatmul.f32.gmra.mxu0 %v4535
    %v4599 = vpop.f32.mrf.mxu0
    %v4600 = vadd.f32 0.0, %v4599
    %4601 = vmatmul.f32.gmra.mxu0 %v4538
    %v4602 = vpop.f32.mrf.mxu0
    %v4603 = vadd.f32 0.0, %v4602
    %4604 = vmatmul.f32.gmra.mxu0 %v4541
    %v4605 = vpop.f32.mrf.mxu0
    %v4606 = vadd.f32 0.0, %v4605
    %4607 = vmatmul.f32.gmra.mxu0 %v4544
    %v4608 = vpop.f32.mrf.mxu0
    %v4609 = vadd.f32 0.0, %v4608
    %4610 = vmatmul.f32.gmra.mxu0 %v4547
    %v4611 = vpop.f32.mrf.mxu0
    %v4612 = vadd.f32 0.0, %v4611
    %4613 = vmatmul.f32.gmra.mxu0 %v4550
    %v4614 = vpop.f32.mrf.mxu0
    %v4615 = vadd.f32 0.0, %v4614
    %4616 = vmatmul.f32.gmra.mxu0 %v4553
    %v4617 = vpop.f32.mrf.mxu0
    %v4618 = vadd.f32 0.0, %v4617
    %4619 = vmatmul.f32.gmra.mxu0 %v4556
    %v4620 = vpop.f32.mrf.mxu0
    %v4621 = vadd.f32 0.0, %v4620
    %4622 = vdwg.mxu0
    %v4623 = vadd.f32 %v4431, %v4576
    %v4624 = vadd.f32 %v4432, %v4579
    %v4625 = vadd.f32 %v4433, %v4582
    %v4626 = vadd.f32 %v4434, %v4585
    %v4627 = vadd.f32 %v4435, %v4588
    %v4628 = vadd.f32 %v4436, %v4591
    %v4629 = vadd.f32 %v4437, %v4594
    %v4630 = vadd.f32 %v4438, %v4597
    %v4631 = vadd.f32 %v4439, %v4600
    %v4632 = vadd.f32 %v4440, %v4603
    %v4633 = vadd.f32 %v4441, %v4606
    %v4634 = vadd.f32 %v4442, %v4609
    %v4635 = vadd.f32 %v4443, %v4612
    %v4636 = vadd.f32 %v4444, %v4615
    %v4637 = vadd.f32 %v4445, %v4618
    %v4638 = vadd.f32 %v4446, %v4621
    %s4639 = scalar_lea.vmem %s9, 192
    %v4640 = vld [vmem:[%s4639] sm:$0xff]
    %v4641 = vld [vmem:[%s4639 + $0x8] sm:$0xff]
    %v4642 = vld [vmem:[%s4639 + $0x10] sm:$0xff]
    %v4643 = vld [vmem:[%s4639 + $0x18] sm:$0xff]
    %s4644 = scalar_lea.vmem %s10, 768
    %v4645 = vld [vmem:[%s4644] sm:$0xff]
    %v4646 = vld [vmem:[%s4644 + $0x8] sm:$0xff]
    %v4647 = vld [vmem:[%s4644 + $0x10] sm:$0xff]
    %v4648 = vld [vmem:[%s4644 + $0x18] sm:$0xff]
    %v4649 = vld [vmem:[%s4644 + $0x20] sm:$0xff]
    %v4650 = vld [vmem:[%s4644 + $0x28] sm:$0xff]
    %v4651 = vld [vmem:[%s4644 + $0x30] sm:$0xff]
    %v4652 = vld [vmem:[%s4644 + $0x38] sm:$0xff]
    %v4653 = vld [vmem:[%s4644 + $0x40] sm:$0xff]
    %v4654 = vld [vmem:[%s4644 + $0x48] sm:$0xff]
    %v4655 = vld [vmem:[%s4644 + $0x50] sm:$0xff]
    %v4656 = vld [vmem:[%s4644 + $0x58] sm:$0xff]
    %v4657 = vld [vmem:[%s4644 + $0x60] sm:$0xff]
    %v4658 = vld [vmem:[%s4644 + $0x68] sm:$0xff]
    %v4659 = vld [vmem:[%s4644 + $0x70] sm:$0xff]
    %v4660 = vld [vmem:[%s4644 + $0x78] sm:$0xff]
    %4661 = vmatpush.msra.mxu0 0.0
    %4662 = vmatpush.msra.mxu0 0.0
    %4663 = vmatpush.msra.mxu0 0.0
    %4664 = vmatpush.msra.mxu0 0.0
    %4665 = vmatpush.msra.mxu0 0.0
    %4666 = vmatpush.msra.mxu0 0.0
    %4667 = vmatpush.msra.mxu0 0.0
    %4668 = vmatpush.msra.mxu0 0.0
    %4669 = vmatpush.msra.mxu0 0.0
    %4670 = vmatpush.msra.mxu0 0.0
    %4671 = vmatpush.msra.mxu0 0.0
    %4672 = vmatpush.msra.mxu0 0.0
    %4673 = vmatpush.msra.mxu0 %v4643
    %4674 = vmatpush.msra.mxu0 %v4642
    %4675 = vmatpush.msra.mxu0 %v4641
    %4676 = vmatpush.msra.mxu0 %v4640
    %4677 = vmatmul.f32.gmra.mxu0 %v3517
    %v4678 = vpop.f32.mrf.mxu0
    %v4679 = vadd.f32 0.0, %v4678
    %4680 = vmatmul.f32.gmra.mxu0 %v3520
    %v4681 = vpop.f32.mrf.mxu0
    %v4682 = vadd.f32 0.0, %v4681
    %4683 = vmatmul.f32.gmra.mxu0 %v3523
    %v4684 = vpop.f32.mrf.mxu0
    %v4685 = vadd.f32 0.0, %v4684
    %4686 = vmatmul.f32.gmra.mxu0 %v3526
    %v4687 = vpop.f32.mrf.mxu0
    %v4688 = vadd.f32 0.0, %v4687
    %4689 = vmatmul.f32.gmra.mxu0 %v3529
    %v4690 = vpop.f32.mrf.mxu0
    %v4691 = vadd.f32 0.0, %v4690
    %4692 = vmatmul.f32.gmra.mxu0 %v3532
    %v4693 = vpop.f32.mrf.mxu0
    %v4694 = vadd.f32 0.0, %v4693
    %4695 = vmatmul.f32.gmra.mxu0 %v3535
    %v4696 = vpop.f32.mrf.mxu0
    %v4697 = vadd.f32 0.0, %v4696
    %4698 = vmatmul.f32.gmra.mxu0 %v3538
    %v4699 = vpop.f32.mrf.mxu0
    %v4700 = vadd.f32 0.0, %v4699
    %4701 = vdwg.mxu0
    %v4703 = vsel %vm3644, %v4645, 0
    %v4706 = vsel %vm3644, %v4646, 0
    %v4709 = vsel %vm3644, %v4647, 0
    %v4712 = vsel %vm3644, %v4648, 0
    %v4715 = vsel %vm3644, %v4649, 0
    %v4718 = vsel %vm3644, %v4650, 0
    %v4721 = vsel %vm3644, %v4651, 0
    %v4724 = vsel %vm3644, %v4652, 0
    %v4727 = vsel %vm3644, %v4653, 0
    %v4730 = vsel %vm3644, %v4654, 0
    %v4733 = vsel %vm3644, %v4655, 0
    %v4736 = vsel %vm3644, %v4656, 0
    %v4739 = vsel %vm3644, %v4657, 0
    %v4742 = vsel %vm3644, %v4658, 0
    %v4745 = vsel %vm3644, %v4659, 0
    %v4748 = vsel %vm3644, %v4660, 0
    %4750 = vmatpush.msra.mxu0 0.0
    %4751 = vmatpush.msra.mxu0 0.0
    %4752 = vmatpush.msra.mxu0 0.0
    %4753 = vmatpush.msra.mxu0 0.0
    %4754 = vmatpush.msra.mxu0 0.0
    %4755 = vmatpush.msra.mxu0 0.0
    %4756 = vmatpush.msra.mxu0 0.0
    %4757 = vmatpush.msra.mxu0 0.0
    %4758 = vmatpush.msra.mxu0 %v4700
    %4759 = vmatpush.msra.mxu0 %v4697
    %4760 = vmatpush.msra.mxu0 %v4694
    %4761 = vmatpush.msra.mxu0 %v4691
    %4762 = vmatpush.msra.mxu0 %v4688
    %4763 = vmatpush.msra.mxu0 %v4685
    %4764 = vmatpush.msra.mxu0 %v4682
    %4765 = vmatpush.msra.mxu0 %v4679
    %4766 = vmatmul.f32.gmra.mxu0 %v4703
    %v4767 = vpop.f32.mrf.mxu0
    %v4768 = vadd.f32 0.0, %v4767
    %4769 = vmatmul.f32.gmra.mxu0 %v4706
    %v4770 = vpop.f32.mrf.mxu0
    %v4771 = vadd.f32 0.0, %v4770
    %4772 = vmatmul.f32.gmra.mxu0 %v4709
    %v4773 = vpop.f32.mrf.mxu0
    %v4774 = vadd.f32 0.0, %v4773
    %4775 = vmatmul.f32.gmra.mxu0 %v4712
    %v4776 = vpop.f32.mrf.mxu0
    %v4777 = vadd.f32 0.0, %v4776
    %4778 = vmatmul.f32.gmra.mxu0 %v4715
    %v4779 = vpop.f32.mrf.mxu0
    %v4780 = vadd.f32 0.0, %v4779
    %4781 = vmatmul.f32.gmra.mxu0 %v4718
    %v4782 = vpop.f32.mrf.mxu0
    %v4783 = vadd.f32 0.0, %v4782
    %4784 = vmatmul.f32.gmra.mxu0 %v4721
    %v4785 = vpop.f32.mrf.mxu0
    %v4786 = vadd.f32 0.0, %v4785
    %4787 = vmatmul.f32.gmra.mxu0 %v4724
    %v4788 = vpop.f32.mrf.mxu0
    %v4789 = vadd.f32 0.0, %v4788
    %4790 = vmatmul.f32.gmra.mxu0 %v4727
    %v4791 = vpop.f32.mrf.mxu0
    %v4792 = vadd.f32 0.0, %v4791
    %4793 = vmatmul.f32.gmra.mxu0 %v4730
    %v4794 = vpop.f32.mrf.mxu0
    %v4795 = vadd.f32 0.0, %v4794
    %4796 = vmatmul.f32.gmra.mxu0 %v4733
    %v4797 = vpop.f32.mrf.mxu0
    %v4798 = vadd.f32 0.0, %v4797
    %4799 = vmatmul.f32.gmra.mxu0 %v4736
    %v4800 = vpop.f32.mrf.mxu0
    %v4801 = vadd.f32 0.0, %v4800
    %4802 = vmatmul.f32.gmra.mxu0 %v4739
    %v4803 = vpop.f32.mrf.mxu0
    %v4804 = vadd.f32 0.0, %v4803
    %4805 = vmatmul.f32.gmra.mxu0 %v4742
    %v4806 = vpop.f32.mrf.mxu0
    %v4807 = vadd.f32 0.0, %v4806
    %4808 = vmatmul.f32.gmra.mxu0 %v4745
    %v4809 = vpop.f32.mrf.mxu0
    %v4810 = vadd.f32 0.0, %v4809
    %4811 = vmatmul.f32.gmra.mxu0 %v4748
    %v4812 = vpop.f32.mrf.mxu0
    %v4813 = vadd.f32 0.0, %v4812
    %4814 = vdwg.mxu0
    %v4815 = vadd.f32 %v4623, %v4768
    %v4816 = vadd.f32 %v4624, %v4771
    %v4817 = vadd.f32 %v4625, %v4774
    %v4818 = vadd.f32 %v4626, %v4777
    %v4819 = vadd.f32 %v4627, %v4780
    %v4820 = vadd.f32 %v4628, %v4783
    %v4821 = vadd.f32 %v4629, %v4786
    %v4822 = vadd.f32 %v4630, %v4789
    %v4823 = vadd.f32 %v4631, %v4792
    %v4824 = vadd.f32 %v4632, %v4795
    %v4825 = vadd.f32 %v4633, %v4798
    %v4826 = vadd.f32 %v4634, %v4801
    %v4827 = vadd.f32 %v4635, %v4804
    %v4828 = vadd.f32 %v4636, %v4807
    %v4829 = vadd.f32 %v4637, %v4810
    %v4830 = vadd.f32 %v4638, %v4813
    %s4831 = scalar_lea.vmem %s9, 224
    %v4832 = vld [vmem:[%s4831] sm:$0xff]
    %v4833 = vld [vmem:[%s4831 + $0x8] sm:$0xff]
    %v4834 = vld [vmem:[%s4831 + $0x10] sm:$0xff]
    %v4835 = vld [vmem:[%s4831 + $0x18] sm:$0xff]
    %s4836 = scalar_lea.vmem %s10, 896
    %v4837 = vld [vmem:[%s4836] sm:$0xff]
    %v4838 = vld [vmem:[%s4836 + $0x8] sm:$0xff]
    %v4839 = vld [vmem:[%s4836 + $0x10] sm:$0xff]
    %v4840 = vld [vmem:[%s4836 + $0x18] sm:$0xff]
    %v4841 = vld [vmem:[%s4836 + $0x20] sm:$0xff]
    %v4842 = vld [vmem:[%s4836 + $0x28] sm:$0xff]
    %v4843 = vld [vmem:[%s4836 + $0x30] sm:$0xff]
    %v4844 = vld [vmem:[%s4836 + $0x38] sm:$0xff]
    %v4845 = vld [vmem:[%s4836 + $0x40] sm:$0xff]
    %v4846 = vld [vmem:[%s4836 + $0x48] sm:$0xff]
    %v4847 = vld [vmem:[%s4836 + $0x50] sm:$0xff]
    %v4848 = vld [vmem:[%s4836 + $0x58] sm:$0xff]
    %v4849 = vld [vmem:[%s4836 + $0x60] sm:$0xff]
    %v4850 = vld [vmem:[%s4836 + $0x68] sm:$0xff]
    %v4851 = vld [vmem:[%s4836 + $0x70] sm:$0xff]
    %v4852 = vld [vmem:[%s4836 + $0x78] sm:$0xff]
    %4853 = vmatpush.msra.mxu0 0.0
    %4854 = vmatpush.msra.mxu0 0.0
    %4855 = vmatpush.msra.mxu0 0.0
    %4856 = vmatpush.msra.mxu0 0.0
    %4857 = vmatpush.msra.mxu0 0.0
    %4858 = vmatpush.msra.mxu0 0.0
    %4859 = vmatpush.msra.mxu0 0.0
    %4860 = vmatpush.msra.mxu0 0.0
    %4861 = vmatpush.msra.mxu0 0.0
    %4862 = vmatpush.msra.mxu0 0.0
    %4863 = vmatpush.msra.mxu0 0.0
    %4864 = vmatpush.msra.mxu0 0.0
    %4865 = vmatpush.msra.mxu0 %v4835
    %4866 = vmatpush.msra.mxu0 %v4834
    %4867 = vmatpush.msra.mxu0 %v4833
    %4868 = vmatpush.msra.mxu0 %v4832
    %4869 = vmatmul.f32.gmra.mxu0 %v3517
    %v4870 = vpop.f32.mrf.mxu0
    %v4871 = vadd.f32 0.0, %v4870
    %4872 = vmatmul.f32.gmra.mxu0 %v3520
    %v4873 = vpop.f32.mrf.mxu0
    %v4874 = vadd.f32 0.0, %v4873
    %4875 = vmatmul.f32.gmra.mxu0 %v3523
    %v4876 = vpop.f32.mrf.mxu0
    %v4877 = vadd.f32 0.0, %v4876
    %4878 = vmatmul.f32.gmra.mxu0 %v3526
    %v4879 = vpop.f32.mrf.mxu0
    %v4880 = vadd.f32 0.0, %v4879
    %4881 = vmatmul.f32.gmra.mxu0 %v3529
    %v4882 = vpop.f32.mrf.mxu0
    %v4883 = vadd.f32 0.0, %v4882
    %4884 = vmatmul.f32.gmra.mxu0 %v3532
    %v4885 = vpop.f32.mrf.mxu0
    %v4886 = vadd.f32 0.0, %v4885
    %4887 = vmatmul.f32.gmra.mxu0 %v3535
    %v4888 = vpop.f32.mrf.mxu0
    %v4889 = vadd.f32 0.0, %v4888
    %4890 = vmatmul.f32.gmra.mxu0 %v3538
    %v4891 = vpop.f32.mrf.mxu0
    %v4892 = vadd.f32 0.0, %v4891
    %4893 = vdwg.mxu0
    %v4895 = vsel %vm3644, %v4837, 0
    %v4898 = vsel %vm3644, %v4838, 0
    %v4901 = vsel %vm3644, %v4839, 0
    %v4904 = vsel %vm3644, %v4840, 0
    %v4907 = vsel %vm3644, %v4841, 0
    %v4910 = vsel %vm3644, %v4842, 0
    %v4913 = vsel %vm3644, %v4843, 0
    %v4916 = vsel %vm3644, %v4844, 0
    %v4919 = vsel %vm3644, %v4845, 0
    %v4922 = vsel %vm3644, %v4846, 0
    %v4925 = vsel %vm3644, %v4847, 0
    %v4928 = vsel %vm3644, %v4848, 0
    %v4931 = vsel %vm3644, %v4849, 0
    %v4934 = vsel %vm3644, %v4850, 0
    %v4937 = vsel %vm3644, %v4851, 0
    %v4940 = vsel %vm3644, %v4852, 0
    %4942 = vmatpush.msra.mxu0 0.0
    %4943 = vmatpush.msra.mxu0 0.0
    %4944 = vmatpush.msra.mxu0 0.0
    %4945 = vmatpush.msra.mxu0 0.0
    %4946 = vmatpush.msra.mxu0 0.0
    %4947 = vmatpush.msra.mxu0 0.0
    %4948 = vmatpush.msra.mxu0 0.0
    %4949 = vmatpush.msra.mxu0 0.0
    %4950 = vmatpush.msra.mxu0 %v4892
    %4951 = vmatpush.msra.mxu0 %v4889
    %4952 = vmatpush.msra.mxu0 %v4886
    %4953 = vmatpush.msra.mxu0 %v4883
    %4954 = vmatpush.msra.mxu0 %v4880
    %4955 = vmatpush.msra.mxu0 %v4877
    %4956 = vmatpush.msra.mxu0 %v4874
    %4957 = vmatpush.msra.mxu0 %v4871
    %4958 = vmatmul.f32.gmra.mxu0 %v4895
    %v4959 = vpop.f32.mrf.mxu0
    %v4960 = vadd.f32 0.0, %v4959
    %4961 = vmatmul.f32.gmra.mxu0 %v4898
    %v4962 = vpop.f32.mrf.mxu0
    %v4963 = vadd.f32 0.0, %v4962
    %4964 = vmatmul.f32.gmra.mxu0 %v4901
    %v4965 = vpop.f32.mrf.mxu0
    %v4966 = vadd.f32 0.0, %v4965
    %4967 = vmatmul.f32.gmra.mxu0 %v4904
    %v4968 = vpop.f32.mrf.mxu0
    %v4969 = vadd.f32 0.0, %v4968
    %4970 = vmatmul.f32.gmra.mxu0 %v4907
    %v4971 = vpop.f32.mrf.mxu0
    %v4972 = vadd.f32 0.0, %v4971
    %4973 = vmatmul.f32.gmra.mxu0 %v4910
    %v4974 = vpop.f32.mrf.mxu0
    %v4975 = vadd.f32 0.0, %v4974
    %4976 = vmatmul.f32.gmra.mxu0 %v4913
    %v4977 = vpop.f32.mrf.mxu0
    %v4978 = vadd.f32 0.0, %v4977
    %4979 = vmatmul.f32.gmra.mxu0 %v4916
    %v4980 = vpop.f32.mrf.mxu0
    %v4981 = vadd.f32 0.0, %v4980
    %4982 = vmatmul.f32.gmra.mxu0 %v4919
    %v4983 = vpop.f32.mrf.mxu0
    %v4984 = vadd.f32 0.0, %v4983
    %4985 = vmatmul.f32.gmra.mxu0 %v4922
    %v4986 = vpop.f32.mrf.mxu0
    %v4987 = vadd.f32 0.0, %v4986
    %4988 = vmatmul.f32.gmra.mxu0 %v4925
    %v4989 = vpop.f32.mrf.mxu0
    %v4990 = vadd.f32 0.0, %v4989
    %4991 = vmatmul.f32.gmra.mxu0 %v4928
    %v4992 = vpop.f32.mrf.mxu0
    %v4993 = vadd.f32 0.0, %v4992
    %4994 = vmatmul.f32.gmra.mxu0 %v4931
    %v4995 = vpop.f32.mrf.mxu0
    %v4996 = vadd.f32 0.0, %v4995
    %4997 = vmatmul.f32.gmra.mxu0 %v4934
    %v4998 = vpop.f32.mrf.mxu0
    %v4999 = vadd.f32 0.0, %v4998
    %5000 = vmatmul.f32.gmra.mxu0 %v4937
    %v5001 = vpop.f32.mrf.mxu0
    %v5002 = vadd.f32 0.0, %v5001
    %5003 = vmatmul.f32.gmra.mxu0 %v4940
    %v5004 = vpop.f32.mrf.mxu0
    %v5005 = vadd.f32 0.0, %v5004
    %5006 = vdwg.mxu0
    %v5007 = vadd.f32 %v4815, %v4960
    %v5008 = vadd.f32 %v4816, %v4963
    %v5009 = vadd.f32 %v4817, %v4966
    %v5010 = vadd.f32 %v4818, %v4969
    %v5011 = vadd.f32 %v4819, %v4972
    %v5012 = vadd.f32 %v4820, %v4975
    %v5013 = vadd.f32 %v4821, %v4978
    %v5014 = vadd.f32 %v4822, %v4981
    %v5015 = vadd.f32 %v4823, %v4984
    %v5016 = vadd.f32 %v4824, %v4987
    %v5017 = vadd.f32 %v4825, %v4990
    %v5018 = vadd.f32 %v4826, %v4993
    %v5019 = vadd.f32 %v4827, %v4996
    %v5020 = vadd.f32 %v4828, %v4999
    %v5021 = vadd.f32 %v4829, %v5002
    %v5022 = vadd.f32 %v4830, %v5005
    %s5023 = scalar_lea.vmem %s9, 256
    %v5024 = vld [vmem:[%s5023] sm:$0xff]
    %v5025 = vld [vmem:[%s5023 + $0x8] sm:$0xff]
    %v5026 = vld [vmem:[%s5023 + $0x10] sm:$0xff]
    %v5027 = vld [vmem:[%s5023 + $0x18] sm:$0xff]
    %s5028 = scalar_lea.vmem %s10, 1024
    %v5029 = vld [vmem:[%s5028] sm:$0xff]
    %v5030 = vld [vmem:[%s5028 + $0x8] sm:$0xff]
    %v5031 = vld [vmem:[%s5028 + $0x10] sm:$0xff]
    %v5032 = vld [vmem:[%s5028 + $0x18] sm:$0xff]
    %v5033 = vld [vmem:[%s5028 + $0x20] sm:$0xff]
    %v5034 = vld [vmem:[%s5028 + $0x28] sm:$0xff]
    %v5035 = vld [vmem:[%s5028 + $0x30] sm:$0xff]
    %v5036 = vld [vmem:[%s5028 + $0x38] sm:$0xff]
    %v5037 = vld [vmem:[%s5028 + $0x40] sm:$0xff]
    %v5038 = vld [vmem:[%s5028 + $0x48] sm:$0xff]
    %v5039 = vld [vmem:[%s5028 + $0x50] sm:$0xff]
    %v5040 = vld [vmem:[%s5028 + $0x58] sm:$0xff]
    %v5041 = vld [vmem:[%s5028 + $0x60] sm:$0xff]
    %v5042 = vld [vmem:[%s5028 + $0x68] sm:$0xff]
    %v5043 = vld [vmem:[%s5028 + $0x70] sm:$0xff]
    %v5044 = vld [vmem:[%s5028 + $0x78] sm:$0xff]
    %5045 = vmatpush.msra.mxu0 0.0
    %5046 = vmatpush.msra.mxu0 0.0
    %5047 = vmatpush.msra.mxu0 0.0
    %5048 = vmatpush.msra.mxu0 0.0
    %5049 = vmatpush.msra.mxu0 0.0
    %5050 = vmatpush.msra.mxu0 0.0
    %5051 = vmatpush.msra.mxu0 0.0
    %5052 = vmatpush.msra.mxu0 0.0
    %5053 = vmatpush.msra.mxu0 0.0
    %5054 = vmatpush.msra.mxu0 0.0
    %5055 = vmatpush.msra.mxu0 0.0
    %5056 = vmatpush.msra.mxu0 0.0
    %5057 = vmatpush.msra.mxu0 %v5027
    %5058 = vmatpush.msra.mxu0 %v5026
    %5059 = vmatpush.msra.mxu0 %v5025
    %5060 = vmatpush.msra.mxu0 %v5024
    %5061 = vmatmul.f32.gmra.mxu0 %v3517
    %v5062 = vpop.f32.mrf.mxu0
    %v5063 = vadd.f32 0.0, %v5062
    %5064 = vmatmul.f32.gmra.mxu0 %v3520
    %v5065 = vpop.f32.mrf.mxu0
    %v5066 = vadd.f32 0.0, %v5065
    %5067 = vmatmul.f32.gmra.mxu0 %v3523
    %v5068 = vpop.f32.mrf.mxu0
    %v5069 = vadd.f32 0.0, %v5068
    %5070 = vmatmul.f32.gmra.mxu0 %v3526
    %v5071 = vpop.f32.mrf.mxu0
    %v5072 = vadd.f32 0.0, %v5071
    %5073 = vmatmul.f32.gmra.mxu0 %v3529
    %v5074 = vpop.f32.mrf.mxu0
    %v5075 = vadd.f32 0.0, %v5074
    %5076 = vmatmul.f32.gmra.mxu0 %v3532
    %v5077 = vpop.f32.mrf.mxu0
    %v5078 = vadd.f32 0.0, %v5077
    %5079 = vmatmul.f32.gmra.mxu0 %v3535
    %v5080 = vpop.f32.mrf.mxu0
    %v5081 = vadd.f32 0.0, %v5080
    %5082 = vmatmul.f32.gmra.mxu0 %v3538
    %v5083 = vpop.f32.mrf.mxu0
    %v5084 = vadd.f32 0.0, %v5083
    %5085 = vdwg.mxu0
    %v5087 = vsel %vm3644, %v5029, 0
    %v5090 = vsel %vm3644, %v5030, 0
    %v5093 = vsel %vm3644, %v5031, 0
    %v5096 = vsel %vm3644, %v5032, 0
    %v5099 = vsel %vm3644, %v5033, 0
    %v5102 = vsel %vm3644, %v5034, 0
    %v5105 = vsel %vm3644, %v5035, 0
    %v5108 = vsel %vm3644, %v5036, 0
    %v5111 = vsel %vm3644, %v5037, 0
    %v5114 = vsel %vm3644, %v5038, 0
    %v5117 = vsel %vm3644, %v5039, 0
    %v5120 = vsel %vm3644, %v5040, 0
    %v5123 = vsel %vm3644, %v5041, 0
    %v5126 = vsel %vm3644, %v5042, 0
    %v5129 = vsel %vm3644, %v5043, 0
    %v5132 = vsel %vm3644, %v5044, 0
    %5134 = vmatpush.msra.mxu0 0.0
    %5135 = vmatpush.msra.mxu0 0.0
    %5136 = vmatpush.msra.mxu0 0.0
    %5137 = vmatpush.msra.mxu0 0.0
    %5138 = vmatpush.msra.mxu0 0.0
    %5139 = vmatpush.msra.mxu0 0.0
    %5140 = vmatpush.msra.mxu0 0.0
    %5141 = vmatpush.msra.mxu0 0.0
    %5142 = vmatpush.msra.mxu0 %v5084
    %5143 = vmatpush.msra.mxu0 %v5081
    %5144 = vmatpush.msra.mxu0 %v5078
    %5145 = vmatpush.msra.mxu0 %v5075
    %5146 = vmatpush.msra.mxu0 %v5072
    %5147 = vmatpush.msra.mxu0 %v5069
    %5148 = vmatpush.msra.mxu0 %v5066
    %5149 = vmatpush.msra.mxu0 %v5063
    %5150 = vmatmul.f32.gmra.mxu0 %v5087
    %v5151 = vpop.f32.mrf.mxu0
    %v5152 = vadd.f32 0.0, %v5151
    %5153 = vmatmul.f32.gmra.mxu0 %v5090
    %v5154 = vpop.f32.mrf.mxu0
    %v5155 = vadd.f32 0.0, %v5154
    %5156 = vmatmul.f32.gmra.mxu0 %v5093
    %v5157 = vpop.f32.mrf.mxu0
    %v5158 = vadd.f32 0.0, %v5157
    %5159 = vmatmul.f32.gmra.mxu0 %v5096
    %v5160 = vpop.f32.mrf.mxu0
    %v5161 = vadd.f32 0.0, %v5160
    %5162 = vmatmul.f32.gmra.mxu0 %v5099
    %v5163 = vpop.f32.mrf.mxu0
    %v5164 = vadd.f32 0.0, %v5163
    %5165 = vmatmul.f32.gmra.mxu0 %v5102
    %v5166 = vpop.f32.mrf.mxu0
    %v5167 = vadd.f32 0.0, %v5166
    %5168 = vmatmul.f32.gmra.mxu0 %v5105
    %v5169 = vpop.f32.mrf.mxu0
    %v5170 = vadd.f32 0.0, %v5169
    %5171 = vmatmul.f32.gmra.mxu0 %v5108
    %v5172 = vpop.f32.mrf.mxu0
    %v5173 = vadd.f32 0.0, %v5172
    %5174 = vmatmul.f32.gmra.mxu0 %v5111
    %v5175 = vpop.f32.mrf.mxu0
    %v5176 = vadd.f32 0.0, %v5175
    %5177 = vmatmul.f32.gmra.mxu0 %v5114
    %v5178 = vpop.f32.mrf.mxu0
    %v5179 = vadd.f32 0.0, %v5178
    %5180 = vmatmul.f32.gmra.mxu0 %v5117
    %v5181 = vpop.f32.mrf.mxu0
    %v5182 = vadd.f32 0.0, %v5181
    %5183 = vmatmul.f32.gmra.mxu0 %v5120
    %v5184 = vpop.f32.mrf.mxu0
    %v5185 = vadd.f32 0.0, %v5184
    %5186 = vmatmul.f32.gmra.mxu0 %v5123
    %v5187 = vpop.f32.mrf.mxu0
    %v5188 = vadd.f32 0.0, %v5187
    %5189 = vmatmul.f32.gmra.mxu0 %v5126
    %v5190 = vpop.f32.mrf.mxu0
    %v5191 = vadd.f32 0.0, %v5190
    %5192 = vmatmul.f32.gmra.mxu0 %v5129
    %v5193 = vpop.f32.mrf.mxu0
    %v5194 = vadd.f32 0.0, %v5193
    %5195 = vmatmul.f32.gmra.mxu0 %v5132
    %v5196 = vpop.f32.mrf.mxu0
    %v5197 = vadd.f32 0.0, %v5196
    %5198 = vdwg.mxu0
    %v5199 = vadd.f32 %v5007, %v5152
    %v5200 = vadd.f32 %v5008, %v5155
    %v5201 = vadd.f32 %v5009, %v5158
    %v5202 = vadd.f32 %v5010, %v5161
    %v5203 = vadd.f32 %v5011, %v5164
    %v5204 = vadd.f32 %v5012, %v5167
    %v5205 = vadd.f32 %v5013, %v5170
    %v5206 = vadd.f32 %v5014, %v5173
    %v5207 = vadd.f32 %v5015, %v5176
    %v5208 = vadd.f32 %v5016, %v5179
    %v5209 = vadd.f32 %v5017, %v5182
    %v5210 = vadd.f32 %v5018, %v5185
    %v5211 = vadd.f32 %v5019, %v5188
    %v5212 = vadd.f32 %v5020, %v5191
    %v5213 = vadd.f32 %v5021, %v5194
    %v5214 = vadd.f32 %v5022, %v5197
    %vm5215 = vcmask 64512
    %v5216 = vsel %vm5215, %v5199, 0.0
    %5217 = vadd.xlane.f32.xlu0 %v5216
    %v5218 = vpop.xlane.xlu0 %5217
    %v5219 = vsel %vm5215, %v5200, 0.0
    %5220 = vadd.xlane.f32.xlu0 %v5219
    %v5221 = vpop.xlane.xlu0 %5220
    %v5222 = vsel %vm5215, %v5201, 0.0
    %5223 = vadd.xlane.f32.xlu0 %v5222
    %v5224 = vpop.xlane.xlu0 %5223
    %v5225 = vsel %vm5215, %v5202, 0.0
    %5226 = vadd.xlane.f32.xlu0 %v5225
    %v5227 = vpop.xlane.xlu0 %5226
    %v5228 = vsel %vm5215, %v5203, 0.0
    %5229 = vadd.xlane.f32.xlu0 %v5228
    %v5230 = vpop.xlane.xlu0 %5229
    %v5231 = vsel %vm5215, %v5204, 0.0
    %5232 = vadd.xlane.f32.xlu0 %v5231
    %v5233 = vpop.xlane.xlu0 %5232
    %v5234 = vsel %vm5215, %v5205, 0.0
    %5235 = vadd.xlane.f32.xlu0 %v5234
    %v5236 = vpop.xlane.xlu0 %5235
    %v5237 = vsel %vm5215, %v5206, 0.0
    %5238 = vadd.xlane.f32.xlu0 %v5237
    %v5239 = vpop.xlane.xlu0 %5238
    %v5240 = vsel %vm5215, %v5207, 0.0
    %5241 = vadd.xlane.f32.xlu0 %v5240
    %v5242 = vpop.xlane.xlu0 %5241
    %v5243 = vsel %vm5215, %v5208, 0.0
    %5244 = vadd.xlane.f32.xlu0 %v5243
    %v5245 = vpop.xlane.xlu0 %5244
    %v5246 = vsel %vm5215, %v5209, 0.0
    %5247 = vadd.xlane.f32.xlu0 %v5246
    %v5248 = vpop.xlane.xlu0 %5247
    %v5249 = vsel %vm5215, %v5210, 0.0
    %5250 = vadd.xlane.f32.xlu0 %v5249
    %v5251 = vpop.xlane.xlu0 %5250
    %v5252 = vsel %vm5215, %v5211, 0.0
    %5253 = vadd.xlane.f32.xlu0 %v5252
    %v5254 = vpop.xlane.xlu0 %5253
    %v5255 = vsel %vm5215, %v5212, 0.0
    %5256 = vadd.xlane.f32.xlu0 %v5255
    %v5257 = vpop.xlane.xlu0 %5256
    %v5258 = vsel %vm5215, %v5213, 0.0
    %5259 = vadd.xlane.f32.xlu0 %v5258
    %v5260 = vpop.xlane.xlu0 %5259
    %v5261 = vsel %vm5215, %v5214, 0.0
    %5262 = vadd.xlane.f32.xlu0 %v5261
    %v5263 = vpop.xlane.xlu0 %5262
    %v5264 = vrcp.pop 8.0
    %v5265 = vmul.f32 8.0, %v5264
    %v5266 = vsub.f32 1.0, %v5265
    %v5267 = vmul.f32 %v5264, %v5266
    %v5268 = vadd.f32 %v5264, %v5267
    %vm5269 = vweird.f32 %v5264
    %v5270 = vsel %vm5269, %v5264, %v5268
    %v5271 = vmul.f32 %v5218, %v5270
    %v5272 = vmul.f32 %v5221, %v5270
    %v5273 = vmul.f32 %v5224, %v5270
    %v5274 = vmul.f32 %v5227, %v5270
    %v5275 = vmul.f32 %v5230, %v5270
    %v5276 = vmul.f32 %v5233, %v5270
    %v5277 = vmul.f32 %v5236, %v5270
    %v5278 = vmul.f32 %v5239, %v5270
    %v5279 = vmul.f32 %v5242, %v5270
    %v5280 = vmul.f32 %v5245, %v5270
    %v5281 = vmul.f32 %v5248, %v5270
    %v5282 = vmul.f32 %v5251, %v5270
    %v5283 = vmul.f32 %v5254, %v5270
    %v5284 = vmul.f32 %v5257, %v5270
    %v5285 = vmul.f32 %v5260, %v5270
    %v5286 = vmul.f32 %v5263, %v5270
    %v5287 = vsub.f32 %v5199, %v5271
    %v5288 = vsub.f32 %v5200, %v5272
    %v5289 = vsub.f32 %v5201, %v5273
    %v5290 = vsub.f32 %v5202, %v5274
    %v5291 = vsub.f32 %v5203, %v5275
    %v5292 = vsub.f32 %v5204, %v5276
    %v5293 = vsub.f32 %v5205, %v5277
    %v5294 = vsub.f32 %v5206, %v5278
    %v5295 = vsub.f32 %v5207, %v5279
    %v5296 = vsub.f32 %v5208, %v5280
    %v5297 = vsub.f32 %v5209, %v5281
    %v5298 = vsub.f32 %v5210, %v5282
    %v5299 = vsub.f32 %v5211, %v5283
    %v5300 = vsub.f32 %v5212, %v5284
    %v5301 = vsub.f32 %v5213, %v5285
    %v5302 = vsub.f32 %v5214, %v5286
    %v5303 = vmul.f32 %v5287, %v5287
    %v5304 = vmul.f32 %v5288, %v5288
    %v5305 = vmul.f32 %v5289, %v5289
    %v5306 = vmul.f32 %v5290, %v5290
    %v5307 = vmul.f32 %v5291, %v5291
    %v5308 = vmul.f32 %v5292, %v5292
    %v5309 = vmul.f32 %v5293, %v5293
    %v5310 = vmul.f32 %v5294, %v5294
    %v5311 = vmul.f32 %v5295, %v5295
    %v5312 = vmul.f32 %v5296, %v5296
    %v5313 = vmul.f32 %v5297, %v5297
    %v5314 = vmul.f32 %v5298, %v5298
    %v5315 = vmul.f32 %v5299, %v5299
    %v5316 = vmul.f32 %v5300, %v5300
    %v5317 = vmul.f32 %v5301, %v5301
    %v5318 = vmul.f32 %v5302, %v5302
    %v5319 = vsel %vm5215, %v5303, 0.0
    %5320 = vadd.xlane.f32.xlu0 %v5319
    %v5321 = vpop.xlane.xlu0 %5320
    %v5322 = vsel %vm5215, %v5304, 0.0
    %5323 = vadd.xlane.f32.xlu0 %v5322
    %v5324 = vpop.xlane.xlu0 %5323
    %v5325 = vsel %vm5215, %v5305, 0.0
    %5326 = vadd.xlane.f32.xlu0 %v5325
    %v5327 = vpop.xlane.xlu0 %5326
    %v5328 = vsel %vm5215, %v5306, 0.0
    %5329 = vadd.xlane.f32.xlu0 %v5328
    %v5330 = vpop.xlane.xlu0 %5329
    %v5331 = vsel %vm5215, %v5307, 0.0
    %5332 = vadd.xlane.f32.xlu0 %v5331
    %v5333 = vpop.xlane.xlu0 %5332
    %v5334 = vsel %vm5215, %v5308, 0.0
    %5335 = vadd.xlane.f32.xlu0 %v5334
    %v5336 = vpop.xlane.xlu0 %5335
    %v5337 = vsel %vm5215, %v5309, 0.0
    %5338 = vadd.xlane.f32.xlu0 %v5337
    %v5339 = vpop.xlane.xlu0 %5338
    %v5340 = vsel %vm5215, %v5310, 0.0
    %5341 = vadd.xlane.f32.xlu0 %v5340
    %v5342 = vpop.xlane.xlu0 %5341
    %v5343 = vsel %vm5215, %v5311, 0.0
    %5344 = vadd.xlane.f32.xlu0 %v5343
    %v5345 = vpop.xlane.xlu0 %5344
    %v5346 = vsel %vm5215, %v5312, 0.0
    %5347 = vadd.xlane.f32.xlu0 %v5346
    %v5348 = vpop.xlane.xlu0 %5347
    %v5349 = vsel %vm5215, %v5313, 0.0
    %5350 = vadd.xlane.f32.xlu0 %v5349
    %v5351 = vpop.xlane.xlu0 %5350
    %v5352 = vsel %vm5215, %v5314, 0.0
    %5353 = vadd.xlane.f32.xlu0 %v5352
    %v5354 = vpop.xlane.xlu0 %5353
    %v5355 = vsel %vm5215, %v5315, 0.0
    %5356 = vadd.xlane.f32.xlu0 %v5355
    %v5357 = vpop.xlane.xlu0 %5356
    %v5358 = vsel %vm5215, %v5316, 0.0
    %5359 = vadd.xlane.f32.xlu0 %v5358
    %v5360 = vpop.xlane.xlu0 %5359
    %v5361 = vsel %vm5215, %v5317, 0.0
    %5362 = vadd.xlane.f32.xlu0 %v5361
    %v5363 = vpop.xlane.xlu0 %5362
    %v5364 = vsel %vm5215, %v5318, 0.0
    %5365 = vadd.xlane.f32.xlu0 %v5364
    %v5366 = vpop.xlane.xlu0 %5365
    %v5367 = vmul.f32 %v5321, %v5270
    %v5368 = vmul.f32 %v5324, %v5270
    %v5369 = vmul.f32 %v5327, %v5270
    %v5370 = vmul.f32 %v5330, %v5270
    %v5371 = vmul.f32 %v5333, %v5270
    %v5372 = vmul.f32 %v5336, %v5270
    %v5373 = vmul.f32 %v5339, %v5270
    %v5374 = vmul.f32 %v5342, %v5270
    %v5375 = vmul.f32 %v5345, %v5270
    %v5376 = vmul.f32 %v5348, %v5270
    %v5377 = vmul.f32 %v5351, %v5270
    %v5378 = vmul.f32 %v5354, %v5270
    %v5379 = vmul.f32 %v5357, %v5270
    %v5380 = vmul.f32 %v5360, %v5270
    %v5381 = vmul.f32 %v5363, %v5270
    %v5382 = vmul.f32 %v5366, %v5270
    %v5383 = vadd.f32 %v5367, 1e-05
    %v5384 = vadd.f32 %v5368, 1e-05
    %v5385 = vadd.f32 %v5369, 1e-05
    %v5386 = vadd.f32 %v5370, 1e-05
    %v5387 = vadd.f32 %v5371, 1e-05
    %v5388 = vadd.f32 %v5372, 1e-05
    %v5389 = vadd.f32 %v5373, 1e-05
    %v5390 = vadd.f32 %v5374, 1e-05
    %v5391 = vadd.f32 %v5375, 1e-05
    %v5392 = vadd.f32 %v5376, 1e-05
    %v5393 = vadd.f32 %v5377, 1e-05
    %v5394 = vadd.f32 %v5378, 1e-05
    %v5395 = vadd.f32 %v5379, 1e-05
    %v5396 = vadd.f32 %v5380, 1e-05
    %v5397 = vadd.f32 %v5381, 1e-05
    %v5398 = vadd.f32 %v5382, 1e-05
    %v5399 = vrsqrt.pop %v5383
    %v5400 = vmul.f32 %v5399, %v5383
    %v5401 = vmul.f32 %v5400, %v5399
    %v5402 = vmul.f32 0.5, %v5401
    %v5403 = vsub.f32 1.5, %v5402
    %v5404 = vmul.f32 %v5399, %v5403
    %vm5405 = vweird.f32 %v5383
    %vm5406 = vweird.f32 %v5399
    %vm5407 = vmor %vm5405, %vm5406
    %v5408 = vsel %vm5407, %v5399, %v5404
    %v5409 = vrsqrt.pop %v5384
    %v5410 = vmul.f32 %v5409, %v5384
    %v5411 = vmul.f32 %v5410, %v5409
    %v5412 = vmul.f32 0.5, %v5411
    %v5413 = vsub.f32 1.5, %v5412
    %v5414 = vmul.f32 %v5409, %v5413
    %vm5415 = vweird.f32 %v5384
    %vm5416 = vweird.f32 %v5409
    %vm5417 = vmor %vm5415, %vm5416
    %v5418 = vsel %vm5417, %v5409, %v5414
    %v5419 = vrsqrt.pop %v5385
    %v5420 = vmul.f32 %v5419, %v5385
    %v5421 = vmul.f32 %v5420, %v5419
    %v5422 = vmul.f32 0.5, %v5421
    %v5423 = vsub.f32 1.5, %v5422
    %v5424 = vmul.f32 %v5419, %v5423
    %vm5425 = vweird.f32 %v5385
    %vm5426 = vweird.f32 %v5419
    %vm5427 = vmor %vm5425, %vm5426
    %v5428 = vsel %vm5427, %v5419, %v5424
    %v5429 = vrsqrt.pop %v5386
    %v5430 = vmul.f32 %v5429, %v5386
    %v5431 = vmul.f32 %v5430, %v5429
    %v5432 = vmul.f32 0.5, %v5431
    %v5433 = vsub.f32 1.5, %v5432
    %v5434 = vmul.f32 %v5429, %v5433
    %vm5435 = vweird.f32 %v5386
    %vm5436 = vweird.f32 %v5429
    %vm5437 = vmor %vm5435, %vm5436
    %v5438 = vsel %vm5437, %v5429, %v5434
    %v5439 = vrsqrt.pop %v5387
    %v5440 = vmul.f32 %v5439, %v5387
    %v5441 = vmul.f32 %v5440, %v5439
    %v5442 = vmul.f32 0.5, %v5441
    %v5443 = vsub.f32 1.5, %v5442
    %v5444 = vmul.f32 %v5439, %v5443
    %vm5445 = vweird.f32 %v5387
    %vm5446 = vweird.f32 %v5439
    %vm5447 = vmor %vm5445, %vm5446
    %v5448 = vsel %vm5447, %v5439, %v5444
    %v5449 = vrsqrt.pop %v5388
    %v5450 = vmul.f32 %v5449, %v5388
    %v5451 = vmul.f32 %v5450, %v5449
    %v5452 = vmul.f32 0.5, %v5451
    %v5453 = vsub.f32 1.5, %v5452
    %v5454 = vmul.f32 %v5449, %v5453
    %vm5455 = vweird.f32 %v5388
    %vm5456 = vweird.f32 %v5449
    %vm5457 = vmor %vm5455, %vm5456
    %v5458 = vsel %vm5457, %v5449, %v5454
    %v5459 = vrsqrt.pop %v5389
    %v5460 = vmul.f32 %v5459, %v5389
    %v5461 = vmul.f32 %v5460, %v5459
    %v5462 = vmul.f32 0.5, %v5461
    %v5463 = vsub.f32 1.5, %v5462
    %v5464 = vmul.f32 %v5459, %v5463
    %vm5465 = vweird.f32 %v5389
    %vm5466 = vweird.f32 %v5459
    %vm5467 = vmor %vm5465, %vm5466
    %v5468 = vsel %vm5467, %v5459, %v5464
    %v5469 = vrsqrt.pop %v5390
    %v5470 = vmul.f32 %v5469, %v5390
    %v5471 = vmul.f32 %v5470, %v5469
    %v5472 = vmul.f32 0.5, %v5471
    %v5473 = vsub.f32 1.5, %v5472
    %v5474 = vmul.f32 %v5469, %v5473
    %vm5475 = vweird.f32 %v5390
    %vm5476 = vweird.f32 %v5469
    %vm5477 = vmor %vm5475, %vm5476
    %v5478 = vsel %vm5477, %v5469, %v5474
    %v5479 = vrsqrt.pop %v5391
    %v5480 = vmul.f32 %v5479, %v5391
    %v5481 = vmul.f32 %v5480, %v5479
    %v5482 = vmul.f32 0.5, %v5481
    %v5483 = vsub.f32 1.5, %v5482
    %v5484 = vmul.f32 %v5479, %v5483
    %vm5485 = vweird.f32 %v5391
    %vm5486 = vweird.f32 %v5479
    %vm5487 = vmor %vm5485, %vm5486
    %v5488 = vsel %vm5487, %v5479, %v5484
    %v5489 = vrsqrt.pop %v5392
    %v5490 = vmul.f32 %v5489, %v5392
    %v5491 = vmul.f32 %v5490, %v5489
    %v5492 = vmul.f32 0.5, %v5491
    %v5493 = vsub.f32 1.5, %v5492
    %v5494 = vmul.f32 %v5489, %v5493
    %vm5495 = vweird.f32 %v5392
    %vm5496 = vweird.f32 %v5489
    %vm5497 = vmor %vm5495, %vm5496
    %v5498 = vsel %vm5497, %v5489, %v5494
    %v5499 = vrsqrt.pop %v5393
    %v5500 = vmul.f32 %v5499, %v5393
    %v5501 = vmul.f32 %v5500, %v5499
    %v5502 = vmul.f32 0.5, %v5501
    %v5503 = vsub.f32 1.5, %v5502
    %v5504 = vmul.f32 %v5499, %v5503
    %vm5505 = vweird.f32 %v5393
    %vm5506 = vweird.f32 %v5499
    %vm5507 = vmor %vm5505, %vm5506
    %v5508 = vsel %vm5507, %v5499, %v5504
    %v5509 = vrsqrt.pop %v5394
    %v5510 = vmul.f32 %v5509, %v5394
    %v5511 = vmul.f32 %v5510, %v5509
    %v5512 = vmul.f32 0.5, %v5511
    %v5513 = vsub.f32 1.5, %v5512
    %v5514 = vmul.f32 %v5509, %v5513
    %vm5515 = vweird.f32 %v5394
    %vm5516 = vweird.f32 %v5509
    %vm5517 = vmor %vm5515, %vm5516
    %v5518 = vsel %vm5517, %v5509, %v5514
    %v5519 = vrsqrt.pop %v5395
    %v5520 = vmul.f32 %v5519, %v5395
    %v5521 = vmul.f32 %v5520, %v5519
    %v5522 = vmul.f32 0.5, %v5521
    %v5523 = vsub.f32 1.5, %v5522
    %v5524 = vmul.f32 %v5519, %v5523
    %vm5525 = vweird.f32 %v5395
    %vm5526 = vweird.f32 %v5519
    %vm5527 = vmor %vm5525, %vm5526
    %v5528 = vsel %vm5527, %v5519, %v5524
    %v5529 = vrsqrt.pop %v5396
    %v5530 = vmul.f32 %v5529, %v5396
    %v5531 = vmul.f32 %v5530, %v5529
    %v5532 = vmul.f32 0.5, %v5531
    %v5533 = vsub.f32 1.5, %v5532
    %v5534 = vmul.f32 %v5529, %v5533
    %vm5535 = vweird.f32 %v5396
    %vm5536 = vweird.f32 %v5529
    %vm5537 = vmor %vm5535, %vm5536
    %v5538 = vsel %vm5537, %v5529, %v5534
    %v5539 = vrsqrt.pop %v5397
    %v5540 = vmul.f32 %v5539, %v5397
    %v5541 = vmul.f32 %v5540, %v5539
    %v5542 = vmul.f32 0.5, %v5541
    %v5543 = vsub.f32 1.5, %v5542
    %v5544 = vmul.f32 %v5539, %v5543
    %vm5545 = vweird.f32 %v5397
    %vm5546 = vweird.f32 %v5539
    %vm5547 = vmor %vm5545, %vm5546
    %v5548 = vsel %vm5547, %v5539, %v5544
    %v5549 = vrsqrt.pop %v5398
    %v5550 = vmul.f32 %v5549, %v5398
    %v5551 = vmul.f32 %v5550, %v5549
    %v5552 = vmul.f32 0.5, %v5551
    %v5553 = vsub.f32 1.5, %v5552
    %v5554 = vmul.f32 %v5549, %v5553
    %vm5555 = vweird.f32 %v5398
    %vm5556 = vweird.f32 %v5549
    %vm5557 = vmor %vm5555, %vm5556
    %v5558 = vsel %vm5557, %v5549, %v5554
    %v5559 = vmul.f32 %v5287, %v5408
    %v5560 = vmul.f32 %v5288, %v5418
    %v5561 = vmul.f32 %v5289, %v5428
    %v5562 = vmul.f32 %v5290, %v5438
    %v5563 = vmul.f32 %v5291, %v5448
    %v5564 = vmul.f32 %v5292, %v5458
    %v5565 = vmul.f32 %v5293, %v5468
    %v5566 = vmul.f32 %v5294, %v5478
    %v5567 = vmul.f32 %v5295, %v5488
    %v5568 = vmul.f32 %v5296, %v5498
    %v5569 = vmul.f32 %v5297, %v5508
    %v5570 = vmul.f32 %v5298, %v5518
    %v5571 = vmul.f32 %v5299, %v5528
    %v5572 = vmul.f32 %v5300, %v5538
    %v5573 = vmul.f32 %v5301, %v5548
    %v5574 = vmul.f32 %v5302, %v5558
    %v5575 = vld [vmem:[%s11] sm:$0xff]
    %v5576 = vld [vmem:[%s11 + $0x8] sm:$0xff]
    %v5577 = vld [vmem:[%s11 + $0x10] sm:$0xff]
    %v5578 = vld [vmem:[%s11 + $0x18] sm:$0xff]
    %v5579 = vld [vmem:[%s11 + $0x20] sm:$0xff]
    %v5580 = vld [vmem:[%s11 + $0x28] sm:$0xff]
    %v5581 = vld [vmem:[%s11 + $0x30] sm:$0xff]
    %v5582 = vld [vmem:[%s11 + $0x38] sm:$0xff]
    %v5583 = vld [vmem:[%s11 + $0x40] sm:$0xff]
    %v5584 = vld [vmem:[%s11 + $0x48] sm:$0xff]
    %v5585 = vld [vmem:[%s11 + $0x50] sm:$0xff]
    %v5586 = vld [vmem:[%s11 + $0x58] sm:$0xff]
    %v5587 = vld [vmem:[%s11 + $0x60] sm:$0xff]
    %v5588 = vld [vmem:[%s11 + $0x68] sm:$0xff]
    %v5589 = vld [vmem:[%s11 + $0x70] sm:$0xff]
    %v5590 = vld [vmem:[%s11 + $0x78] sm:$0xff]
    %5592 = vset.pattern.permute.xlu0 0
    %5593 = vperm.xlu0 %5592, %v5575
    %v5594 = vpop.permute.xlu0 %5593
    %5597 = vset.pattern.permute.xlu0 0
    %5598 = vperm.xlu0 %5597, %v5576
    %v5599 = vpop.permute.xlu0 %5598
    %5602 = vset.pattern.permute.xlu0 0
    %5603 = vperm.xlu0 %5602, %v5577
    %v5604 = vpop.permute.xlu0 %5603
    %5607 = vset.pattern.permute.xlu0 0
    %5608 = vperm.xlu0 %5607, %v5578
    %v5609 = vpop.permute.xlu0 %5608
    %5612 = vset.pattern.permute.xlu0 0
    %5613 = vperm.xlu0 %5612, %v5579
    %v5614 = vpop.permute.xlu0 %5613
    %5617 = vset.pattern.permute.xlu0 0
    %5618 = vperm.xlu0 %5617, %v5580
    %v5619 = vpop.permute.xlu0 %5618
    %5622 = vset.pattern.permute.xlu0 0
    %5623 = vperm.xlu0 %5622, %v5581
    %v5624 = vpop.permute.xlu0 %5623
    %5627 = vset.pattern.permute.xlu0 0
    %5628 = vperm.xlu0 %5627, %v5582
    %v5629 = vpop.permute.xlu0 %5628
    %5632 = vset.pattern.permute.xlu0 0
    %5633 = vperm.xlu0 %5632, %v5583
    %v5634 = vpop.permute.xlu0 %5633
    %5637 = vset.pattern.permute.xlu0 0
    %5638 = vperm.xlu0 %5637, %v5584
    %v5639 = vpop.permute.xlu0 %5638
    %5642 = vset.pattern.permute.xlu0 0
    %5643 = vperm.xlu0 %5642, %v5585
    %v5644 = vpop.permute.xlu0 %5643
    %5647 = vset.pattern.permute.xlu0 0
    %5648 = vperm.xlu0 %5647, %v5586
    %v5649 = vpop.permute.xlu0 %5648
    %5652 = vset.pattern.permute.xlu0 0
    %5653 = vperm.xlu0 %5652, %v5587
    %v5654 = vpop.permute.xlu0 %5653
    %5657 = vset.pattern.permute.xlu0 0
    %5658 = vperm.xlu0 %5657, %v5588
    %v5659 = vpop.permute.xlu0 %5658
    %5662 = vset.pattern.permute.xlu0 0
    %5663 = vperm.xlu0 %5662, %v5589
    %v5664 = vpop.permute.xlu0 %5663
    %5667 = vset.pattern.permute.xlu0 0
    %5668 = vperm.xlu0 %5667, %v5590
    %v5669 = vpop.permute.xlu0 %5668
    %v5671 = vmul.f32 %v5559, %v5594
    %v5672 = vmul.f32 %v5560, %v5599
    %v5673 = vmul.f32 %v5561, %v5604
    %v5674 = vmul.f32 %v5562, %v5609
    %v5675 = vmul.f32 %v5563, %v5614
    %v5676 = vmul.f32 %v5564, %v5619
    %v5677 = vmul.f32 %v5565, %v5624
    %v5678 = vmul.f32 %v5566, %v5629
    %v5679 = vmul.f32 %v5567, %v5634
    %v5680 = vmul.f32 %v5568, %v5639
    %v5681 = vmul.f32 %v5569, %v5644
    %v5682 = vmul.f32 %v5570, %v5649
    %v5683 = vmul.f32 %v5571, %v5654
    %v5684 = vmul.f32 %v5572, %v5659
    %v5685 = vmul.f32 %v5573, %v5664
    %v5686 = vmul.f32 %v5574, %v5669
    %v5687 = vld [vmem:[%s12] sm:$0xff]
    %v5688 = vld [vmem:[%s12 + $0x8] sm:$0xff]
    %v5689 = vld [vmem:[%s12 + $0x10] sm:$0xff]
    %v5690 = vld [vmem:[%s12 + $0x18] sm:$0xff]
    %v5691 = vld [vmem:[%s12 + $0x20] sm:$0xff]
    %v5692 = vld [vmem:[%s12 + $0x28] sm:$0xff]
    %v5693 = vld [vmem:[%s12 + $0x30] sm:$0xff]
    %v5694 = vld [vmem:[%s12 + $0x38] sm:$0xff]
    %v5695 = vld [vmem:[%s12 + $0x40] sm:$0xff]
    %v5696 = vld [vmem:[%s12 + $0x48] sm:$0xff]
    %v5697 = vld [vmem:[%s12 + $0x50] sm:$0xff]
    %v5698 = vld [vmem:[%s12 + $0x58] sm:$0xff]
    %v5699 = vld [vmem:[%s12 + $0x60] sm:$0xff]
    %v5700 = vld [vmem:[%s12 + $0x68] sm:$0xff]
    %v5701 = vld [vmem:[%s12 + $0x70] sm:$0xff]
    %v5702 = vld [vmem:[%s12 + $0x78] sm:$0xff]
    %5704 = vset.pattern.permute.xlu0 0
    %5705 = vperm.xlu0 %5704, %v5687
    %v5706 = vpop.permute.xlu0 %5705
    %5709 = vset.pattern.permute.xlu0 0
    %5710 = vperm.xlu0 %5709, %v5688
    %v5711 = vpop.permute.xlu0 %5710
    %5714 = vset.pattern.permute.xlu0 0
    %5715 = vperm.xlu0 %5714, %v5689
    %v5716 = vpop.permute.xlu0 %5715
    %5719 = vset.pattern.permute.xlu0 0
    %5720 = vperm.xlu0 %5719, %v5690
    %v5721 = vpop.permute.xlu0 %5720
    %5724 = vset.pattern.permute.xlu0 0
    %5725 = vperm.xlu0 %5724, %v5691
    %v5726 = vpop.permute.xlu0 %5725
    %5729 = vset.pattern.permute.xlu0 0
    %5730 = vperm.xlu0 %5729, %v5692
    %v5731 = vpop.permute.xlu0 %5730
    %5734 = vset.pattern.permute.xlu0 0
    %5735 = vperm.xlu0 %5734, %v5693
    %v5736 = vpop.permute.xlu0 %5735
    %5739 = vset.pattern.permute.xlu0 0
    %5740 = vperm.xlu0 %5739, %v5694
    %v5741 = vpop.permute.xlu0 %5740
    %5744 = vset.pattern.permute.xlu0 0
    %5745 = vperm.xlu0 %5744, %v5695
    %v5746 = vpop.permute.xlu0 %5745
    %5749 = vset.pattern.permute.xlu0 0
    %5750 = vperm.xlu0 %5749, %v5696
    %v5751 = vpop.permute.xlu0 %5750
    %5754 = vset.pattern.permute.xlu0 0
    %5755 = vperm.xlu0 %5754, %v5697
    %v5756 = vpop.permute.xlu0 %5755
    %5759 = vset.pattern.permute.xlu0 0
    %5760 = vperm.xlu0 %5759, %v5698
    %v5761 = vpop.permute.xlu0 %5760
    %5764 = vset.pattern.permute.xlu0 0
    %5765 = vperm.xlu0 %5764, %v5699
    %v5766 = vpop.permute.xlu0 %5765
    %5769 = vset.pattern.permute.xlu0 0
    %5770 = vperm.xlu0 %5769, %v5700
    %v5771 = vpop.permute.xlu0 %5770
    %5774 = vset.pattern.permute.xlu0 0
    %5775 = vperm.xlu0 %5774, %v5701
    %v5776 = vpop.permute.xlu0 %5775
    %5779 = vset.pattern.permute.xlu0 0
    %5780 = vperm.xlu0 %5779, %v5702
    %v5781 = vpop.permute.xlu0 %5780
    %v5783 = vadd.f32 %v5671, %v5706
    %v5784 = vadd.f32 %v5672, %v5711
    %v5785 = vadd.f32 %v5673, %v5716
    %v5786 = vadd.f32 %v5674, %v5721
    %v5787 = vadd.f32 %v5675, %v5726
    %v5788 = vadd.f32 %v5676, %v5731
    %v5789 = vadd.f32 %v5677, %v5736
    %v5790 = vadd.f32 %v5678, %v5741
    %v5791 = vadd.f32 %v5679, %v5746
    %v5792 = vadd.f32 %v5680, %v5751
    %v5793 = vadd.f32 %v5681, %v5756
    %v5794 = vadd.f32 %v5682, %v5761
    %v5795 = vadd.f32 %v5683, %v5766
    %v5796 = vadd.f32 %v5684, %v5771
    %v5797 = vadd.f32 %v5685, %v5776
    %v5798 = vadd.f32 %v5686, %v5781
    %v5799 = vmax.f32 %v5783, 0.0
    %v5800 = vmax.f32 %v5784, 0.0
    %v5801 = vmax.f32 %v5785, 0.0
    %v5802 = vmax.f32 %v5786, 0.0
    %v5803 = vmax.f32 %v5787, 0.0
    %v5804 = vmax.f32 %v5788, 0.0
    %v5805 = vmax.f32 %v5789, 0.0
    %v5806 = vmax.f32 %v5790, 0.0
    %v5807 = vmax.f32 %v5791, 0.0
    %v5808 = vmax.f32 %v5792, 0.0
    %v5809 = vmax.f32 %v5793, 0.0
    %v5810 = vmax.f32 %v5794, 0.0
    %v5811 = vmax.f32 %v5795, 0.0
    %v5812 = vmax.f32 %v5796, 0.0
    %v5813 = vmax.f32 %v5797, 0.0
    %v5814 = vmax.f32 %v5798, 0.0
    %v5815 = vld [vmem:[#allocation2] sm:$0xff]
    %v5816 = vld [vmem:[%s14] sm:$0xff]
    %v5817 = vld [vmem:[%s14 + $0x8] sm:$0xff]
    %v5818 = vld [vmem:[%s14 + $0x10] sm:$0xff]
    %v5819 = vld [vmem:[%s14 + $0x18] sm:$0xff]
    %v5820 = vld [vmem:[%s14 + $0x20] sm:$0xff]
    %v5821 = vld [vmem:[%s14 + $0x28] sm:$0xff]
    %v5822 = vld [vmem:[%s14 + $0x30] sm:$0xff]
    %v5823 = vld [vmem:[%s14 + $0x38] sm:$0xff]
    %5824 = vmatpush.msra.mxu0 %v5814
    %5825 = vmatpush.msra.mxu0 %v5813
    %5826 = vmatpush.msra.mxu0 %v5812
    %5827 = vmatpush.msra.mxu0 %v5811
    %5828 = vmatpush.msra.mxu0 %v5810
    %5829 = vmatpush.msra.mxu0 %v5809
    %5830 = vmatpush.msra.mxu0 %v5808
    %5831 = vmatpush.msra.mxu0 %v5807
    %5832 = vmatpush.msra.mxu0 %v5806
    %5833 = vmatpush.msra.mxu0 %v5805
    %5834 = vmatpush.msra.mxu0 %v5804
    %5835 = vmatpush.msra.mxu0 %v5803
    %5836 = vmatpush.msra.mxu0 %v5802
    %5837 = vmatpush.msra.mxu0 %v5801
    %5838 = vmatpush.msra.mxu0 %v5800
    %5839 = vmatpush.msra.mxu0 %v5799
    %5840 = vmatmul.f32.gmra.mxu0 %v5816
    %v5841 = vpop.f32.mrf.mxu0
    %v5842 = vadd.f32 0.0, %v5841
    %5843 = vmatmul.f32.gmra.mxu0 %v5817
    %v5844 = vpop.f32.mrf.mxu0
    %v5845 = vadd.f32 0.0, %v5844
    %5846 = vmatmul.f32.gmra.mxu0 %v5818
    %v5847 = vpop.f32.mrf.mxu0
    %v5848 = vadd.f32 0.0, %v5847
    %5849 = vmatmul.f32.gmra.mxu0 %v5819
    %v5850 = vpop.f32.mrf.mxu0
    %v5851 = vadd.f32 0.0, %v5850
    %5852 = vmatmul.f32.gmra.mxu0 %v5820
    %v5853 = vpop.f32.mrf.mxu0
    %v5854 = vadd.f32 0.0, %v5853
    %5855 = vmatmul.f32.gmra.mxu0 %v5821
    %v5856 = vpop.f32.mrf.mxu0
    %v5857 = vadd.f32 0.0, %v5856
    %5858 = vmatmul.f32.gmra.mxu0 %v5822
    %v5859 = vpop.f32.mrf.mxu0
    %v5860 = vadd.f32 0.0, %v5859
    %5861 = vmatmul.f32.gmra.mxu0 %v5823
    %v5862 = vpop.f32.mrf.mxu0
    %v5863 = vadd.f32 0.0, %v5862
    %5864 = vdwg.mxu0
    %s5865 = scalar_lea.vmem [#allocation2], 8
    %v5866 = vld [vmem:[%s5865] sm:$0xff]
    %s5867 = scalar_lea.vmem %s14, 64
    %v5868 = vld [vmem:[%s5867] sm:$0xff]
    %v5869 = vld [vmem:[%s5867 + $0x8] sm:$0xff]
    %v5870 = vld [vmem:[%s5867 + $0x10] sm:$0xff]
    %v5871 = vld [vmem:[%s5867 + $0x18] sm:$0xff]
    %v5872 = vld [vmem:[%s5867 + $0x20] sm:$0xff]
    %v5873 = vld [vmem:[%s5867 + $0x28] sm:$0xff]
    %v5874 = vld [vmem:[%s5867 + $0x30] sm:$0xff]
    %v5875 = vld [vmem:[%s5867 + $0x38] sm:$0xff]
    %5876 = vmatpush.msra.mxu0 %v5814
    %5877 = vmatpush.msra.mxu0 %v5813
    %5878 = vmatpush.msra.mxu0 %v5812
    %5879 = vmatpush.msra.mxu0 %v5811
    %5880 = vmatpush.msra.mxu0 %v5810
    %5881 = vmatpush.msra.mxu0 %v5809
    %5882 = vmatpush.msra.mxu0 %v5808
    %5883 = vmatpush.msra.mxu0 %v5807
    %5884 = vmatpush.msra.mxu0 %v5806
    %5885 = vmatpush.msra.mxu0 %v5805
    %5886 = vmatpush.msra.mxu0 %v5804
    %5887 = vmatpush.msra.mxu0 %v5803
    %5888 = vmatpush.msra.mxu0 %v5802
    %5889 = vmatpush.msra.mxu0 %v5801
    %5890 = vmatpush.msra.mxu0 %v5800
    %5891 = vmatpush.msra.mxu0 %v5799
    %5892 = vmatmul.f32.gmra.mxu0 %v5868
    %v5893 = vpop.f32.mrf.mxu0
    %v5894 = vadd.f32 0.0, %v5893
    %5895 = vmatmul.f32.gmra.mxu0 %v5869
    %v5896 = vpop.f32.mrf.mxu0
    %v5897 = vadd.f32 0.0, %v5896
    %5898 = vmatmul.f32.gmra.mxu0 %v5870
    %v5899 = vpop.f32.mrf.mxu0
    %v5900 = vadd.f32 0.0, %v5899
    %5901 = vmatmul.f32.gmra.mxu0 %v5871
    %v5902 = vpop.f32.mrf.mxu0
    %v5903 = vadd.f32 0.0, %v5902
    %5904 = vmatmul.f32.gmra.mxu0 %v5872
    %v5905 = vpop.f32.mrf.mxu0
    %v5906 = vadd.f32 0.0, %v5905
    %5907 = vmatmul.f32.gmra.mxu0 %v5873
    %v5908 = vpop.f32.mrf.mxu0
    %v5909 = vadd.f32 0.0, %v5908
    %5910 = vmatmul.f32.gmra.mxu0 %v5874
    %v5911 = vpop.f32.mrf.mxu0
    %v5912 = vadd.f32 0.0, %v5911
    %5913 = vmatmul.f32.gmra.mxu0 %v5875
    %v5914 = vpop.f32.mrf.mxu0
    %v5915 = vadd.f32 0.0, %v5914
    %5916 = vdwg.mxu0
    %v5918 = vsel %vm5215, %v5894, 0
    %v5921 = vsel %vm5215, %v5897, 0
    %v5924 = vsel %vm5215, %v5900, 0
    %v5927 = vsel %vm5215, %v5903, 0
    %v5930 = vsel %vm5215, %v5906, 0
    %v5933 = vsel %vm5215, %v5909, 0
    %v5936 = vsel %vm5215, %v5912, 0
    %v5939 = vsel %vm5215, %v5915, 0
    %5941 = vmatpush.msra.mxu0 0.0
    %5942 = vmatpush.msra.mxu0 0.0
    %5943 = vmatpush.msra.mxu0 0.0
    %5944 = vmatpush.msra.mxu0 0.0
    %5945 = vmatpush.msra.mxu0 0.0
    %5946 = vmatpush.msra.mxu0 0.0
    %5947 = vmatpush.msra.mxu0 0.0
    %5948 = vmatpush.msra.mxu0 0.0
    %5949 = vmatpush.msra.mxu0 0.0
    %5950 = vmatpush.msra.mxu0 0.0
    %5951 = vmatpush.msra.mxu0 0.0
    %5952 = vmatpush.msra.mxu0 0.0
    %5953 = vmatpush.msra.mxu0 0.0
    %5954 = vmatpush.msra.mxu0 0.0
    %5955 = vmatpush.msra.mxu0 0.0
    %5956 = vmatpush.msra.mxu0 %v5866
    %5957 = vmatmul.f32.gmra.mxu0 %v5918
    %v5958 = vpop.f32.mrf.mxu0
    %v5959 = vadd.f32 0.0, %v5958
    %5960 = vmatmul.f32.gmra.mxu0 %v5921
    %v5961 = vpop.f32.mrf.mxu0
    %v5962 = vadd.f32 0.0, %v5961
    %5963 = vmatmul.f32.gmra.mxu0 %v5924
    %v5964 = vpop.f32.mrf.mxu0
    %v5965 = vadd.f32 0.0, %v5964
    %5966 = vmatmul.f32.gmra.mxu0 %v5927
    %v5967 = vpop.f32.mrf.mxu0
    %v5968 = vadd.f32 0.0, %v5967
    %5969 = vmatmul.f32.gmra.mxu0 %v5930
    %v5970 = vpop.f32.mrf.mxu0
    %v5971 = vadd.f32 0.0, %v5970
    %5972 = vmatmul.f32.gmra.mxu0 %v5933
    %v5973 = vpop.f32.mrf.mxu0
    %v5974 = vadd.f32 0.0, %v5973
    %5975 = vmatmul.f32.gmra.mxu0 %v5936
    %v5976 = vpop.f32.mrf.mxu0
    %v5977 = vadd.f32 0.0, %v5976
    %5978 = vmatmul.f32.gmra.mxu0 %v5939
    %v5979 = vpop.f32.mrf.mxu0
    %v5980 = vadd.f32 0.0, %v5979
    %5981 = vdwg.mxu0
    %v5983 = vsel %vm5215, %v5842, 0
    %v5986 = vsel %vm5215, %v5845, 0
    %v5989 = vsel %vm5215, %v5848, 0
    %v5992 = vsel %vm5215, %v5851, 0
    %v5995 = vsel %vm5215, %v5854, 0
    %v5998 = vsel %vm5215, %v5857, 0
    %v6001 = vsel %vm5215, %v5860, 0
    %v6004 = vsel %vm5215, %v5863, 0
    %6006 = vmatpush.msra.mxu0 0.0
    %6007 = vmatpush.msra.mxu0 0.0
    %6008 = vmatpush.msra.mxu0 0.0
    %6009 = vmatpush.msra.mxu0 0.0
    %6010 = vmatpush.msra.mxu0 0.0
    %6011 = vmatpush.msra.mxu0 0.0
    %6012 = vmatpush.msra.mxu0 0.0
    %6013 = vmatpush.msra.mxu0 0.0
    %6014 = vmatpush.msra.mxu0 0.0
    %6015 = vmatpush.msra.mxu0 0.0
    %6016 = vmatpush.msra.mxu0 0.0
    %6017 = vmatpush.msra.mxu0 0.0
    %6018 = vmatpush.msra.mxu0 0.0
    %6019 = vmatpush.msra.mxu0 0.0
    %6020 = vmatpush.msra.mxu0 0.0
    %6021 = vmatpush.msra.mxu0 %v5815
    %6022 = vmatmul.f32.gmra.mxu0 %v5983
    %v6023 = vpop.f32.mrf.mxu0
    %v6024 = vadd.f32 %v5959, %v6023
    %6025 = vmatmul.f32.gmra.mxu0 %v5986
    %v6026 = vpop.f32.mrf.mxu0
    %v6027 = vadd.f32 %v5962, %v6026
    %6028 = vmatmul.f32.gmra.mxu0 %v5989
    %v6029 = vpop.f32.mrf.mxu0
    %v6030 = vadd.f32 %v5965, %v6029
    %6031 = vmatmul.f32.gmra.mxu0 %v5992
    %v6032 = vpop.f32.mrf.mxu0
    %v6033 = vadd.f32 %v5968, %v6032
    %6034 = vmatmul.f32.gmra.mxu0 %v5995
    %v6035 = vpop.f32.mrf.mxu0
    %v6036 = vadd.f32 %v5971, %v6035
    %6037 = vmatmul.f32.gmra.mxu0 %v5998
    %v6038 = vpop.f32.mrf.mxu0
    %v6039 = vadd.f32 %v5974, %v6038
    %6040 = vmatmul.f32.gmra.mxu0 %v6001
    %v6041 = vpop.f32.mrf.mxu0
    %v6042 = vadd.f32 %v5977, %v6041
    %6043 = vmatmul.f32.gmra.mxu0 %v6004
    %v6044 = vpop.f32.mrf.mxu0
    %v6045 = vadd.f32 %v5980, %v6044
    %6046 = vdwg.mxu0
    %s6047 = scalar_lea.vmem [#allocation2], 16
    %v6048 = vld [vmem:[%s6047] sm:$0xff]
    %s6049 = scalar_lea.vmem %s14, 128
    %v6050 = vld [vmem:[%s6049] sm:$0xff]
    %v6051 = vld [vmem:[%s6049 + $0x8] sm:$0xff]
    %v6052 = vld [vmem:[%s6049 + $0x10] sm:$0xff]
    %v6053 = vld [vmem:[%s6049 + $0x18] sm:$0xff]
    %v6054 = vld [vmem:[%s6049 + $0x20] sm:$0xff]
    %v6055 = vld [vmem:[%s6049 + $0x28] sm:$0xff]
    %v6056 = vld [vmem:[%s6049 + $0x30] sm:$0xff]
    %v6057 = vld [vmem:[%s6049 + $0x38] sm:$0xff]
    %6058 = vmatpush.msra.mxu0 %v5814
    %6059 = vmatpush.msra.mxu0 %v5813
    %6060 = vmatpush.msra.mxu0 %v5812
    %6061 = vmatpush.msra.mxu0 %v5811
    %6062 = vmatpush.msra.mxu0 %v5810
    %6063 = vmatpush.msra.mxu0 %v5809
    %6064 = vmatpush.msra.mxu0 %v5808
    %6065 = vmatpush.msra.mxu0 %v5807
    %6066 = vmatpush.msra.mxu0 %v5806
    %6067 = vmatpush.msra.mxu0 %v5805
    %6068 = vmatpush.msra.mxu0 %v5804
    %6069 = vmatpush.msra.mxu0 %v5803
    %6070 = vmatpush.msra.mxu0 %v5802
    %6071 = vmatpush.msra.mxu0 %v5801
    %6072 = vmatpush.msra.mxu0 %v5800
    %6073 = vmatpush.msra.mxu0 %v5799
    %6074 = vmatmul.f32.gmra.mxu0 %v6050
    %v6075 = vpop.f32.mrf.mxu0
    %v6076 = vadd.f32 0.0, %v6075
    %6077 = vmatmul.f32.gmra.mxu0 %v6051
    %v6078 = vpop.f32.mrf.mxu0
    %v6079 = vadd.f32 0.0, %v6078
    %6080 = vmatmul.f32.gmra.mxu0 %v6052
    %v6081 = vpop.f32.mrf.mxu0
    %v6082 = vadd.f32 0.0, %v6081
    %6083 = vmatmul.f32.gmra.mxu0 %v6053
    %v6084 = vpop.f32.mrf.mxu0
    %v6085 = vadd.f32 0.0, %v6084
    %6086 = vmatmul.f32.gmra.mxu0 %v6054
    %v6087 = vpop.f32.mrf.mxu0
    %v6088 = vadd.f32 0.0, %v6087
    %6089 = vmatmul.f32.gmra.mxu0 %v6055
    %v6090 = vpop.f32.mrf.mxu0
    %v6091 = vadd.f32 0.0, %v6090
    %6092 = vmatmul.f32.gmra.mxu0 %v6056
    %v6093 = vpop.f32.mrf.mxu0
    %v6094 = vadd.f32 0.0, %v6093
    %6095 = vmatmul.f32.gmra.mxu0 %v6057
    %v6096 = vpop.f32.mrf.mxu0
    %v6097 = vadd.f32 0.0, %v6096
    %6098 = vdwg.mxu0
    %v6100 = vsel %vm5215, %v6076, 0
    %v6103 = vsel %vm5215, %v6079, 0
    %v6106 = vsel %vm5215, %v6082, 0
    %v6109 = vsel %vm5215, %v6085, 0
    %v6112 = vsel %vm5215, %v6088, 0
    %v6115 = vsel %vm5215, %v6091, 0
    %v6118 = vsel %vm5215, %v6094, 0
    %v6121 = vsel %vm5215, %v6097, 0
    %6123 = vmatpush.msra.mxu0 0.0
    %6124 = vmatpush.msra.mxu0 0.0
    %6125 = vmatpush.msra.mxu0 0.0
    %6126 = vmatpush.msra.mxu0 0.0
    %6127 = vmatpush.msra.mxu0 0.0
    %6128 = vmatpush.msra.mxu0 0.0
    %6129 = vmatpush.msra.mxu0 0.0
    %6130 = vmatpush.msra.mxu0 0.0
    %6131 = vmatpush.msra.mxu0 0.0
    %6132 = vmatpush.msra.mxu0 0.0
    %6133 = vmatpush.msra.mxu0 0.0
    %6134 = vmatpush.msra.mxu0 0.0
    %6135 = vmatpush.msra.mxu0 0.0
    %6136 = vmatpush.msra.mxu0 0.0
    %6137 = vmatpush.msra.mxu0 0.0
    %6138 = vmatpush.msra.mxu0 %v6048
    %6139 = vmatmul.f32.gmra.mxu0 %v6100
    %v6140 = vpop.f32.mrf.mxu0
    %v6141 = vadd.f32 0.0, %v6140
    %6142 = vmatmul.f32.gmra.mxu0 %v6103
    %v6143 = vpop.f32.mrf.mxu0
    %v6144 = vadd.f32 0.0, %v6143
    %6145 = vmatmul.f32.gmra.mxu0 %v6106
    %v6146 = vpop.f32.mrf.mxu0
    %v6147 = vadd.f32 0.0, %v6146
    %6148 = vmatmul.f32.gmra.mxu0 %v6109
    %v6149 = vpop.f32.mrf.mxu0
    %v6150 = vadd.f32 0.0, %v6149
    %6151 = vmatmul.f32.gmra.mxu0 %v6112
    %v6152 = vpop.f32.mrf.mxu0
    %v6153 = vadd.f32 0.0, %v6152
    %6154 = vmatmul.f32.gmra.mxu0 %v6115
    %v6155 = vpop.f32.mrf.mxu0
    %v6156 = vadd.f32 0.0, %v6155
    %6157 = vmatmul.f32.gmra.mxu0 %v6118
    %v6158 = vpop.f32.mrf.mxu0
    %v6159 = vadd.f32 0.0, %v6158
    %6160 = vmatmul.f32.gmra.mxu0 %v6121
    %v6161 = vpop.f32.mrf.mxu0
    %v6162 = vadd.f32 0.0, %v6161
    %6163 = vdwg.mxu0
    %v6164 = vadd.f32 %v6024, %v6141
    %v6165 = vadd.f32 %v6027, %v6144
    %v6166 = vadd.f32 %v6030, %v6147
    %v6167 = vadd.f32 %v6033, %v6150
    %v6168 = vadd.f32 %v6036, %v6153
    %v6169 = vadd.f32 %v6039, %v6156
    %v6170 = vadd.f32 %v6042, %v6159
    %v6171 = vadd.f32 %v6045, %v6162
    %s6172 = scalar_lea.vmem [#allocation2], 24
    %v6173 = vld [vmem:[%s6172] sm:$0xff]
    %s6174 = scalar_lea.vmem %s14, 192
    %v6175 = vld [vmem:[%s6174] sm:$0xff]
    %v6176 = vld [vmem:[%s6174 + $0x8] sm:$0xff]
    %v6177 = vld [vmem:[%s6174 + $0x10] sm:$0xff]
    %v6178 = vld [vmem:[%s6174 + $0x18] sm:$0xff]
    %v6179 = vld [vmem:[%s6174 + $0x20] sm:$0xff]
    %v6180 = vld [vmem:[%s6174 + $0x28] sm:$0xff]
    %v6181 = vld [vmem:[%s6174 + $0x30] sm:$0xff]
    %v6182 = vld [vmem:[%s6174 + $0x38] sm:$0xff]
    %6183 = vmatpush.msra.mxu0 %v5814
    %6184 = vmatpush.msra.mxu0 %v5813
    %6185 = vmatpush.msra.mxu0 %v5812
    %6186 = vmatpush.msra.mxu0 %v5811
    %6187 = vmatpush.msra.mxu0 %v5810
    %6188 = vmatpush.msra.mxu0 %v5809
    %6189 = vmatpush.msra.mxu0 %v5808
    %6190 = vmatpush.msra.mxu0 %v5807
    %6191 = vmatpush.msra.mxu0 %v5806
    %6192 = vmatpush.msra.mxu0 %v5805
    %6193 = vmatpush.msra.mxu0 %v5804
    %6194 = vmatpush.msra.mxu0 %v5803
    %6195 = vmatpush.msra.mxu0 %v5802
    %6196 = vmatpush.msra.mxu0 %v5801
    %6197 = vmatpush.msra.mxu0 %v5800
    %6198 = vmatpush.msra.mxu0 %v5799
    %6199 = vmatmul.f32.gmra.mxu0 %v6175
    %v6200 = vpop.f32.mrf.mxu0
    %v6201 = vadd.f32 0.0, %v6200
    %6202 = vmatmul.f32.gmra.mxu0 %v6176
    %v6203 = vpop.f32.mrf.mxu0
    %v6204 = vadd.f32 0.0, %v6203
    %6205 = vmatmul.f32.gmra.mxu0 %v6177
    %v6206 = vpop.f32.mrf.mxu0
    %v6207 = vadd.f32 0.0, %v6206
    %6208 = vmatmul.f32.gmra.mxu0 %v6178
    %v6209 = vpop.f32.mrf.mxu0
    %v6210 = vadd.f32 0.0, %v6209
    %6211 = vmatmul.f32.gmra.mxu0 %v6179
    %v6212 = vpop.f32.mrf.mxu0
    %v6213 = vadd.f32 0.0, %v6212
    %6214 = vmatmul.f32.gmra.mxu0 %v6180
    %v6215 = vpop.f32.mrf.mxu0
    %v6216 = vadd.f32 0.0, %v6215
    %6217 = vmatmul.f32.gmra.mxu0 %v6181
    %v6218 = vpop.f32.mrf.mxu0
    %v6219 = vadd.f32 0.0, %v6218
    %6220 = vmatmul.f32.gmra.mxu0 %v6182
    %v6221 = vpop.f32.mrf.mxu0
    %v6222 = vadd.f32 0.0, %v6221
    %6223 = vdwg.mxu0
    %v6225 = vsel %vm5215, %v6201, 0
    %v6228 = vsel %vm5215, %v6204, 0
    %v6231 = vsel %vm5215, %v6207, 0
    %v6234 = vsel %vm5215, %v6210, 0
    %v6237 = vsel %vm5215, %v6213, 0
    %v6240 = vsel %vm5215, %v6216, 0
    %v6243 = vsel %vm5215, %v6219, 0
    %v6246 = vsel %vm5215, %v6222, 0
    %6248 = vmatpush.msra.mxu0 0.0
    %6249 = vmatpush.msra.mxu0 0.0
    %6250 = vmatpush.msra.mxu0 0.0
    %6251 = vmatpush.msra.mxu0 0.0
    %6252 = vmatpush.msra.mxu0 0.0
    %6253 = vmatpush.msra.mxu0 0.0
    %6254 = vmatpush.msra.mxu0 0.0
    %6255 = vmatpush.msra.mxu0 0.0
    %6256 = vmatpush.msra.mxu0 0.0
    %6257 = vmatpush.msra.mxu0 0.0
    %6258 = vmatpush.msra.mxu0 0.0
    %6259 = vmatpush.msra.mxu0 0.0
    %6260 = vmatpush.msra.mxu0 0.0
    %6261 = vmatpush.msra.mxu0 0.0
    %6262 = vmatpush.msra.mxu0 0.0
    %6263 = vmatpush.msra.mxu0 %v6173
    %6264 = vmatmul.f32.gmra.mxu0 %v6225
    %v6265 = vpop.f32.mrf.mxu0
    %v6266 = vadd.f32 0.0, %v6265
    %6267 = vmatmul.f32.gmra.mxu0 %v6228
    %v6268 = vpop.f32.mrf.mxu0
    %v6269 = vadd.f32 0.0, %v6268
    %6270 = vmatmul.f32.gmra.mxu0 %v6231
    %v6271 = vpop.f32.mrf.mxu0
    %v6272 = vadd.f32 0.0, %v6271
    %6273 = vmatmul.f32.gmra.mxu0 %v6234
    %v6274 = vpop.f32.mrf.mxu0
    %v6275 = vadd.f32 0.0, %v6274
    %6276 = vmatmul.f32.gmra.mxu0 %v6237
    %v6277 = vpop.f32.mrf.mxu0
    %v6278 = vadd.f32 0.0, %v6277
    %6279 = vmatmul.f32.gmra.mxu0 %v6240
    %v6280 = vpop.f32.mrf.mxu0
    %v6281 = vadd.f32 0.0, %v6280
    %6282 = vmatmul.f32.gmra.mxu0 %v6243
    %v6283 = vpop.f32.mrf.mxu0
    %v6284 = vadd.f32 0.0, %v6283
    %6285 = vmatmul.f32.gmra.mxu0 %v6246
    %v6286 = vpop.f32.mrf.mxu0
    %v6287 = vadd.f32 0.0, %v6286
    %6288 = vdwg.mxu0
    %v6289 = vadd.f32 %v6164, %v6266
    %v6290 = vadd.f32 %v6165, %v6269
    %v6291 = vadd.f32 %v6166, %v6272
    %v6292 = vadd.f32 %v6167, %v6275
    %v6293 = vadd.f32 %v6168, %v6278
    %v6294 = vadd.f32 %v6169, %v6281
    %v6295 = vadd.f32 %v6170, %v6284
    %v6296 = vadd.f32 %v6171, %v6287
    %s6297 = scalar_lea.vmem [#allocation2], 32
    %v6298 = vld [vmem:[%s6297] sm:$0xff]
    %s6299 = scalar_lea.vmem %s14, 256
    %v6300 = vld [vmem:[%s6299] sm:$0xff]
    %v6301 = vld [vmem:[%s6299 + $0x8] sm:$0xff]
    %v6302 = vld [vmem:[%s6299 + $0x10] sm:$0xff]
    %v6303 = vld [vmem:[%s6299 + $0x18] sm:$0xff]
    %v6304 = vld [vmem:[%s6299 + $0x20] sm:$0xff]
    %v6305 = vld [vmem:[%s6299 + $0x28] sm:$0xff]
    %v6306 = vld [vmem:[%s6299 + $0x30] sm:$0xff]
    %v6307 = vld [vmem:[%s6299 + $0x38] sm:$0xff]
    %6308 = vmatpush.msra.mxu0 %v5814
    %6309 = vmatpush.msra.mxu0 %v5813
    %6310 = vmatpush.msra.mxu0 %v5812
    %6311 = vmatpush.msra.mxu0 %v5811
    %6312 = vmatpush.msra.mxu0 %v5810
    %6313 = vmatpush.msra.mxu0 %v5809
    %6314 = vmatpush.msra.mxu0 %v5808
    %6315 = vmatpush.msra.mxu0 %v5807
    %6316 = vmatpush.msra.mxu0 %v5806
    %6317 = vmatpush.msra.mxu0 %v5805
    %6318 = vmatpush.msra.mxu0 %v5804
    %6319 = vmatpush.msra.mxu0 %v5803
    %6320 = vmatpush.msra.mxu0 %v5802
    %6321 = vmatpush.msra.mxu0 %v5801
    %6322 = vmatpush.msra.mxu0 %v5800
    %6323 = vmatpush.msra.mxu0 %v5799
    %6324 = vmatmul.f32.gmra.mxu0 %v6300
    %v6325 = vpop.f32.mrf.mxu0
    %v6326 = vadd.f32 0.0, %v6325
    %6327 = vmatmul.f32.gmra.mxu0 %v6301
    %v6328 = vpop.f32.mrf.mxu0
    %v6329 = vadd.f32 0.0, %v6328
    %6330 = vmatmul.f32.gmra.mxu0 %v6302
    %v6331 = vpop.f32.mrf.mxu0
    %v6332 = vadd.f32 0.0, %v6331
    %6333 = vmatmul.f32.gmra.mxu0 %v6303
    %v6334 = vpop.f32.mrf.mxu0
    %v6335 = vadd.f32 0.0, %v6334
    %6336 = vmatmul.f32.gmra.mxu0 %v6304
    %v6337 = vpop.f32.mrf.mxu0
    %v6338 = vadd.f32 0.0, %v6337
    %6339 = vmatmul.f32.gmra.mxu0 %v6305
    %v6340 = vpop.f32.mrf.mxu0
    %v6341 = vadd.f32 0.0, %v6340
    %6342 = vmatmul.f32.gmra.mxu0 %v6306
    %v6343 = vpop.f32.mrf.mxu0
    %v6344 = vadd.f32 0.0, %v6343
    %6345 = vmatmul.f32.gmra.mxu0 %v6307
    %v6346 = vpop.f32.mrf.mxu0
    %v6347 = vadd.f32 0.0, %v6346
    %6348 = vdwg.mxu0
    %v6350 = vsel %vm5215, %v6326, 0
    %v6353 = vsel %vm5215, %v6329, 0
    %v6356 = vsel %vm5215, %v6332, 0
    %v6359 = vsel %vm5215, %v6335, 0
    %v6362 = vsel %vm5215, %v6338, 0
    %v6365 = vsel %vm5215, %v6341, 0
    %v6368 = vsel %vm5215, %v6344, 0
    %v6371 = vsel %vm5215, %v6347, 0
    %6373 = vmatpush.msra.mxu0 0.0
    %6374 = vmatpush.msra.mxu0 0.0
    %6375 = vmatpush.msra.mxu0 0.0
    %6376 = vmatpush.msra.mxu0 0.0
    %6377 = vmatpush.msra.mxu0 0.0
    %6378 = vmatpush.msra.mxu0 0.0
    %6379 = vmatpush.msra.mxu0 0.0
    %6380 = vmatpush.msra.mxu0 0.0
    %6381 = vmatpush.msra.mxu0 0.0
    %6382 = vmatpush.msra.mxu0 0.0
    %6383 = vmatpush.msra.mxu0 0.0
    %6384 = vmatpush.msra.mxu0 0.0
    %6385 = vmatpush.msra.mxu0 0.0
    %6386 = vmatpush.msra.mxu0 0.0
    %6387 = vmatpush.msra.mxu0 0.0
    %6388 = vmatpush.msra.mxu0 %v6298
    %6389 = vmatmul.f32.gmra.mxu0 %v6350
    %v6390 = vpop.f32.mrf.mxu0
    %v6391 = vadd.f32 0.0, %v6390
    %6392 = vmatmul.f32.gmra.mxu0 %v6353
    %v6393 = vpop.f32.mrf.mxu0
    %v6394 = vadd.f32 0.0, %v6393
    %6395 = vmatmul.f32.gmra.mxu0 %v6356
    %v6396 = vpop.f32.mrf.mxu0
    %v6397 = vadd.f32 0.0, %v6396
    %6398 = vmatmul.f32.gmra.mxu0 %v6359
    %v6399 = vpop.f32.mrf.mxu0
    %v6400 = vadd.f32 0.0, %v6399
    %6401 = vmatmul.f32.gmra.mxu0 %v6362
    %v6402 = vpop.f32.mrf.mxu0
    %v6403 = vadd.f32 0.0, %v6402
    %6404 = vmatmul.f32.gmra.mxu0 %v6365
    %v6405 = vpop.f32.mrf.mxu0
    %v6406 = vadd.f32 0.0, %v6405
    %6407 = vmatmul.f32.gmra.mxu0 %v6368
    %v6408 = vpop.f32.mrf.mxu0
    %v6409 = vadd.f32 0.0, %v6408
    %6410 = vmatmul.f32.gmra.mxu0 %v6371
    %v6411 = vpop.f32.mrf.mxu0
    %v6412 = vadd.f32 0.0, %v6411
    %6413 = vdwg.mxu0
    %v6414 = vadd.f32 %v6289, %v6391
    %v6415 = vadd.f32 %v6290, %v6394
    %v6416 = vadd.f32 %v6291, %v6397
    %v6417 = vadd.f32 %v6292, %v6400
    %v6418 = vadd.f32 %v6293, %v6403
    %v6419 = vadd.f32 %v6294, %v6406
    %v6420 = vadd.f32 %v6295, %v6409
    %v6421 = vadd.f32 %v6296, %v6412
    %s6422 = scalar_lea.vmem [#allocation2], 40
    %v6423 = vld [vmem:[%s6422] sm:$0xff]
    %s6424 = scalar_lea.vmem %s14, 320
    %v6425 = vld [vmem:[%s6424] sm:$0xff]
    %v6426 = vld [vmem:[%s6424 + $0x8] sm:$0xff]
    %v6427 = vld [vmem:[%s6424 + $0x10] sm:$0xff]
    %v6428 = vld [vmem:[%s6424 + $0x18] sm:$0xff]
    %v6429 = vld [vmem:[%s6424 + $0x20] sm:$0xff]
    %v6430 = vld [vmem:[%s6424 + $0x28] sm:$0xff]
    %v6431 = vld [vmem:[%s6424 + $0x30] sm:$0xff]
    %v6432 = vld [vmem:[%s6424 + $0x38] sm:$0xff]
    %6433 = vmatpush.msra.mxu0 %v5814
    %6434 = vmatpush.msra.mxu0 %v5813
    %6435 = vmatpush.msra.mxu0 %v5812
    %6436 = vmatpush.msra.mxu0 %v5811
    %6437 = vmatpush.msra.mxu0 %v5810
    %6438 = vmatpush.msra.mxu0 %v5809
    %6439 = vmatpush.msra.mxu0 %v5808
    %6440 = vmatpush.msra.mxu0 %v5807
    %6441 = vmatpush.msra.mxu0 %v5806
    %6442 = vmatpush.msra.mxu0 %v5805
    %6443 = vmatpush.msra.mxu0 %v5804
    %6444 = vmatpush.msra.mxu0 %v5803
    %6445 = vmatpush.msra.mxu0 %v5802
    %6446 = vmatpush.msra.mxu0 %v5801
    %6447 = vmatpush.msra.mxu0 %v5800
    %6448 = vmatpush.msra.mxu0 %v5799
    %6449 = vmatmul.f32.gmra.mxu0 %v6425
    %v6450 = vpop.f32.mrf.mxu0
    %v6451 = vadd.f32 0.0, %v6450
    %6452 = vmatmul.f32.gmra.mxu0 %v6426
    %v6453 = vpop.f32.mrf.mxu0
    %v6454 = vadd.f32 0.0, %v6453
    %6455 = vmatmul.f32.gmra.mxu0 %v6427
    %v6456 = vpop.f32.mrf.mxu0
    %v6457 = vadd.f32 0.0, %v6456
    %6458 = vmatmul.f32.gmra.mxu0 %v6428
    %v6459 = vpop.f32.mrf.mxu0
    %v6460 = vadd.f32 0.0, %v6459
    %6461 = vmatmul.f32.gmra.mxu0 %v6429
    %v6462 = vpop.f32.mrf.mxu0
    %v6463 = vadd.f32 0.0, %v6462
    %6464 = vmatmul.f32.gmra.mxu0 %v6430
    %v6465 = vpop.f32.mrf.mxu0
    %v6466 = vadd.f32 0.0, %v6465
    %6467 = vmatmul.f32.gmra.mxu0 %v6431
    %v6468 = vpop.f32.mrf.mxu0
    %v6469 = vadd.f32 0.0, %v6468
    %6470 = vmatmul.f32.gmra.mxu0 %v6432
    %v6471 = vpop.f32.mrf.mxu0
    %v6472 = vadd.f32 0.0, %v6471
    %6473 = vdwg.mxu0
    %v6475 = vsel %vm5215, %v6451, 0
    %v6478 = vsel %vm5215, %v6454, 0
    %v6481 = vsel %vm5215, %v6457, 0
    %v6484 = vsel %vm5215, %v6460, 0
    %v6487 = vsel %vm5215, %v6463, 0
    %v6490 = vsel %vm5215, %v6466, 0
    %v6493 = vsel %vm5215, %v6469, 0
    %v6496 = vsel %vm5215, %v6472, 0
    %6498 = vmatpush.msra.mxu0 0.0
    %6499 = vmatpush.msra.mxu0 0.0
    %6500 = vmatpush.msra.mxu0 0.0
    %6501 = vmatpush.msra.mxu0 0.0
    %6502 = vmatpush.msra.mxu0 0.0
    %6503 = vmatpush.msra.mxu0 0.0
    %6504 = vmatpush.msra.mxu0 0.0
    %6505 = vmatpush.msra.mxu0 0.0
    %6506 = vmatpush.msra.mxu0 0.0
    %6507 = vmatpush.msra.mxu0 0.0
    %6508 = vmatpush.msra.mxu0 0.0
    %6509 = vmatpush.msra.mxu0 0.0
    %6510 = vmatpush.msra.mxu0 0.0
    %6511 = vmatpush.msra.mxu0 0.0
    %6512 = vmatpush.msra.mxu0 0.0
    %6513 = vmatpush.msra.mxu0 %v6423
    %6514 = vmatmul.f32.gmra.mxu0 %v6475
    %v6515 = vpop.f32.mrf.mxu0
    %v6516 = vadd.f32 0.0, %v6515
    %6517 = vmatmul.f32.gmra.mxu0 %v6478
    %v6518 = vpop.f32.mrf.mxu0
    %v6519 = vadd.f32 0.0, %v6518
    %6520 = vmatmul.f32.gmra.mxu0 %v6481
    %v6521 = vpop.f32.mrf.mxu0
    %v6522 = vadd.f32 0.0, %v6521
    %6523 = vmatmul.f32.gmra.mxu0 %v6484
    %v6524 = vpop.f32.mrf.mxu0
    %v6525 = vadd.f32 0.0, %v6524
    %6526 = vmatmul.f32.gmra.mxu0 %v6487
    %v6527 = vpop.f32.mrf.mxu0
    %v6528 = vadd.f32 0.0, %v6527
    %6529 = vmatmul.f32.gmra.mxu0 %v6490
    %v6530 = vpop.f32.mrf.mxu0
    %v6531 = vadd.f32 0.0, %v6530
    %6532 = vmatmul.f32.gmra.mxu0 %v6493
    %v6533 = vpop.f32.mrf.mxu0
    %v6534 = vadd.f32 0.0, %v6533
    %6535 = vmatmul.f32.gmra.mxu0 %v6496
    %v6536 = vpop.f32.mrf.mxu0
    %v6537 = vadd.f32 0.0, %v6536
    %6538 = vdwg.mxu0
    %v6539 = vadd.f32 %v6414, %v6516
    %v6540 = vadd.f32 %v6415, %v6519
    %v6541 = vadd.f32 %v6416, %v6522
    %v6542 = vadd.f32 %v6417, %v6525
    %v6543 = vadd.f32 %v6418, %v6528
    %v6544 = vadd.f32 %v6419, %v6531
    %v6545 = vadd.f32 %v6420, %v6534
    %v6546 = vadd.f32 %v6421, %v6537
    %s6547 = scalar_lea.vmem [#allocation2], 48
    %v6548 = vld [vmem:[%s6547] sm:$0xff]
    %s6549 = scalar_lea.vmem %s14, 384
    %v6550 = vld [vmem:[%s6549] sm:$0xff]
    %v6551 = vld [vmem:[%s6549 + $0x8] sm:$0xff]
    %v6552 = vld [vmem:[%s6549 + $0x10] sm:$0xff]
    %v6553 = vld [vmem:[%s6549 + $0x18] sm:$0xff]
    %v6554 = vld [vmem:[%s6549 + $0x20] sm:$0xff]
    %v6555 = vld [vmem:[%s6549 + $0x28] sm:$0xff]
    %v6556 = vld [vmem:[%s6549 + $0x30] sm:$0xff]
    %v6557 = vld [vmem:[%s6549 + $0x38] sm:$0xff]
    %6558 = vmatpush.msra.mxu0 %v5814
    %6559 = vmatpush.msra.mxu0 %v5813
    %6560 = vmatpush.msra.mxu0 %v5812
    %6561 = vmatpush.msra.mxu0 %v5811
    %6562 = vmatpush.msra.mxu0 %v5810
    %6563 = vmatpush.msra.mxu0 %v5809
    %6564 = vmatpush.msra.mxu0 %v5808
    %6565 = vmatpush.msra.mxu0 %v5807
    %6566 = vmatpush.msra.mxu0 %v5806
    %6567 = vmatpush.msra.mxu0 %v5805
    %6568 = vmatpush.msra.mxu0 %v5804
    %6569 = vmatpush.msra.mxu0 %v5803
    %6570 = vmatpush.msra.mxu0 %v5802
    %6571 = vmatpush.msra.mxu0 %v5801
    %6572 = vmatpush.msra.mxu0 %v5800
    %6573 = vmatpush.msra.mxu0 %v5799
    %6574 = vmatmul.f32.gmra.mxu0 %v6550
    %v6575 = vpop.f32.mrf.mxu0
    %v6576 = vadd.f32 0.0, %v6575
    %6577 = vmatmul.f32.gmra.mxu0 %v6551
    %v6578 = vpop.f32.mrf.mxu0
    %v6579 = vadd.f32 0.0, %v6578
    %6580 = vmatmul.f32.gmra.mxu0 %v6552
    %v6581 = vpop.f32.mrf.mxu0
    %v6582 = vadd.f32 0.0, %v6581
    %6583 = vmatmul.f32.gmra.mxu0 %v6553
    %v6584 = vpop.f32.mrf.mxu0
    %v6585 = vadd.f32 0.0, %v6584
    %6586 = vmatmul.f32.gmra.mxu0 %v6554
    %v6587 = vpop.f32.mrf.mxu0
    %v6588 = vadd.f32 0.0, %v6587
    %6589 = vmatmul.f32.gmra.mxu0 %v6555
    %v6590 = vpop.f32.mrf.mxu0
    %v6591 = vadd.f32 0.0, %v6590
    %6592 = vmatmul.f32.gmra.mxu0 %v6556
    %v6593 = vpop.f32.mrf.mxu0
    %v6594 = vadd.f32 0.0, %v6593
    %6595 = vmatmul.f32.gmra.mxu0 %v6557
    %v6596 = vpop.f32.mrf.mxu0
    %v6597 = vadd.f32 0.0, %v6596
    %6598 = vdwg.mxu0
    %v6600 = vsel %vm5215, %v6576, 0
    %v6603 = vsel %vm5215, %v6579, 0
    %v6606 = vsel %vm5215, %v6582, 0
    %v6609 = vsel %vm5215, %v6585, 0
    %v6612 = vsel %vm5215, %v6588, 0
    %v6615 = vsel %vm5215, %v6591, 0
    %v6618 = vsel %vm5215, %v6594, 0
    %v6621 = vsel %vm5215, %v6597, 0
    %6623 = vmatpush.msra.mxu0 0.0
    %6624 = vmatpush.msra.mxu0 0.0
    %6625 = vmatpush.msra.mxu0 0.0
    %6626 = vmatpush.msra.mxu0 0.0
    %6627 = vmatpush.msra.mxu0 0.0
    %6628 = vmatpush.msra.mxu0 0.0
    %6629 = vmatpush.msra.mxu0 0.0
    %6630 = vmatpush.msra.mxu0 0.0
    %6631 = vmatpush.msra.mxu0 0.0
    %6632 = vmatpush.msra.mxu0 0.0
    %6633 = vmatpush.msra.mxu0 0.0
    %6634 = vmatpush.msra.mxu0 0.0
    %6635 = vmatpush.msra.mxu0 0.0
    %6636 = vmatpush.msra.mxu0 0.0
    %6637 = vmatpush.msra.mxu0 0.0
    %6638 = vmatpush.msra.mxu0 %v6548
    %6639 = vmatmul.f32.gmra.mxu0 %v6600
    %v6640 = vpop.f32.mrf.mxu0
    %v6641 = vadd.f32 0.0, %v6640
    %6642 = vmatmul.f32.gmra.mxu0 %v6603
    %v6643 = vpop.f32.mrf.mxu0
    %v6644 = vadd.f32 0.0, %v6643
    %6645 = vmatmul.f32.gmra.mxu0 %v6606
    %v6646 = vpop.f32.mrf.mxu0
    %v6647 = vadd.f32 0.0, %v6646
    %6648 = vmatmul.f32.gmra.mxu0 %v6609
    %v6649 = vpop.f32.mrf.mxu0
    %v6650 = vadd.f32 0.0, %v6649
    %6651 = vmatmul.f32.gmra.mxu0 %v6612
    %v6652 = vpop.f32.mrf.mxu0
    %v6653 = vadd.f32 0.0, %v6652
    %6654 = vmatmul.f32.gmra.mxu0 %v6615
    %v6655 = vpop.f32.mrf.mxu0
    %v6656 = vadd.f32 0.0, %v6655
    %6657 = vmatmul.f32.gmra.mxu0 %v6618
    %v6658 = vpop.f32.mrf.mxu0
    %v6659 = vadd.f32 0.0, %v6658
    %6660 = vmatmul.f32.gmra.mxu0 %v6621
    %v6661 = vpop.f32.mrf.mxu0
    %v6662 = vadd.f32 0.0, %v6661
    %6663 = vdwg.mxu0
    %v6664 = vadd.f32 %v6539, %v6641
    %v6665 = vadd.f32 %v6540, %v6644
    %v6666 = vadd.f32 %v6541, %v6647
    %v6667 = vadd.f32 %v6542, %v6650
    %v6668 = vadd.f32 %v6543, %v6653
    %v6669 = vadd.f32 %v6544, %v6656
    %v6670 = vadd.f32 %v6545, %v6659
    %v6671 = vadd.f32 %v6546, %v6662
    %s6672 = scalar_lea.vmem [#allocation2], 56
    %v6673 = vld [vmem:[%s6672] sm:$0xff]
    %s6674 = scalar_lea.vmem %s14, 448
    %v6675 = vld [vmem:[%s6674] sm:$0xff]
    %v6676 = vld [vmem:[%s6674 + $0x8] sm:$0xff]
    %v6677 = vld [vmem:[%s6674 + $0x10] sm:$0xff]
    %v6678 = vld [vmem:[%s6674 + $0x18] sm:$0xff]
    %v6679 = vld [vmem:[%s6674 + $0x20] sm:$0xff]
    %v6680 = vld [vmem:[%s6674 + $0x28] sm:$0xff]
    %v6681 = vld [vmem:[%s6674 + $0x30] sm:$0xff]
    %v6682 = vld [vmem:[%s6674 + $0x38] sm:$0xff]
    %6683 = vmatpush.msra.mxu0 %v5814
    %6684 = vmatpush.msra.mxu0 %v5813
    %6685 = vmatpush.msra.mxu0 %v5812
    %6686 = vmatpush.msra.mxu0 %v5811
    %6687 = vmatpush.msra.mxu0 %v5810
    %6688 = vmatpush.msra.mxu0 %v5809
    %6689 = vmatpush.msra.mxu0 %v5808
    %6690 = vmatpush.msra.mxu0 %v5807
    %6691 = vmatpush.msra.mxu0 %v5806
    %6692 = vmatpush.msra.mxu0 %v5805
    %6693 = vmatpush.msra.mxu0 %v5804
    %6694 = vmatpush.msra.mxu0 %v5803
    %6695 = vmatpush.msra.mxu0 %v5802
    %6696 = vmatpush.msra.mxu0 %v5801
    %6697 = vmatpush.msra.mxu0 %v5800
    %6698 = vmatpush.msra.mxu0 %v5799
    %6699 = vmatmul.f32.gmra.mxu0 %v6675
    %v6700 = vpop.f32.mrf.mxu0
    %v6701 = vadd.f32 0.0, %v6700
    %6702 = vmatmul.f32.gmra.mxu0 %v6676
    %v6703 = vpop.f32.mrf.mxu0
    %v6704 = vadd.f32 0.0, %v6703
    %6705 = vmatmul.f32.gmra.mxu0 %v6677
    %v6706 = vpop.f32.mrf.mxu0
    %v6707 = vadd.f32 0.0, %v6706
    %6708 = vmatmul.f32.gmra.mxu0 %v6678
    %v6709 = vpop.f32.mrf.mxu0
    %v6710 = vadd.f32 0.0, %v6709
    %6711 = vmatmul.f32.gmra.mxu0 %v6679
    %v6712 = vpop.f32.mrf.mxu0
    %v6713 = vadd.f32 0.0, %v6712
    %6714 = vmatmul.f32.gmra.mxu0 %v6680
    %v6715 = vpop.f32.mrf.mxu0
    %v6716 = vadd.f32 0.0, %v6715
    %6717 = vmatmul.f32.gmra.mxu0 %v6681
    %v6718 = vpop.f32.mrf.mxu0
    %v6719 = vadd.f32 0.0, %v6718
    %6720 = vmatmul.f32.gmra.mxu0 %v6682
    %v6721 = vpop.f32.mrf.mxu0
    %v6722 = vadd.f32 0.0, %v6721
    %6723 = vdwg.mxu0
    %v6725 = vsel %vm5215, %v6701, 0
    %v6728 = vsel %vm5215, %v6704, 0
    %v6731 = vsel %vm5215, %v6707, 0
    %v6734 = vsel %vm5215, %v6710, 0
    %v6737 = vsel %vm5215, %v6713, 0
    %v6740 = vsel %vm5215, %v6716, 0
    %v6743 = vsel %vm5215, %v6719, 0
    %v6746 = vsel %vm5215, %v6722, 0
    %6748 = vmatpush.msra.mxu0 0.0
    %6749 = vmatpush.msra.mxu0 0.0
    %6750 = vmatpush.msra.mxu0 0.0
    %6751 = vmatpush.msra.mxu0 0.0
    %6752 = vmatpush.msra.mxu0 0.0
    %6753 = vmatpush.msra.mxu0 0.0
    %6754 = vmatpush.msra.mxu0 0.0
    %6755 = vmatpush.msra.mxu0 0.0
    %6756 = vmatpush.msra.mxu0 0.0
    %6757 = vmatpush.msra.mxu0 0.0
    %6758 = vmatpush.msra.mxu0 0.0
    %6759 = vmatpush.msra.mxu0 0.0
    %6760 = vmatpush.msra.mxu0 0.0
    %6761 = vmatpush.msra.mxu0 0.0
    %6762 = vmatpush.msra.mxu0 0.0
    %6763 = vmatpush.msra.mxu0 %v6673
    %6764 = vmatmul.f32.gmra.mxu0 %v6725
    %v6765 = vpop.f32.mrf.mxu0
    %v6766 = vadd.f32 0.0, %v6765
    %6767 = vmatmul.f32.gmra.mxu0 %v6728
    %v6768 = vpop.f32.mrf.mxu0
    %v6769 = vadd.f32 0.0, %v6768
    %6770 = vmatmul.f32.gmra.mxu0 %v6731
    %v6771 = vpop.f32.mrf.mxu0
    %v6772 = vadd.f32 0.0, %v6771
    %6773 = vmatmul.f32.gmra.mxu0 %v6734
    %v6774 = vpop.f32.mrf.mxu0
    %v6775 = vadd.f32 0.0, %v6774
    %6776 = vmatmul.f32.gmra.mxu0 %v6737
    %v6777 = vpop.f32.mrf.mxu0
    %v6778 = vadd.f32 0.0, %v6777
    %6779 = vmatmul.f32.gmra.mxu0 %v6740
    %v6780 = vpop.f32.mrf.mxu0
    %v6781 = vadd.f32 0.0, %v6780
    %6782 = vmatmul.f32.gmra.mxu0 %v6743
    %v6783 = vpop.f32.mrf.mxu0
    %v6784 = vadd.f32 0.0, %v6783
    %6785 = vmatmul.f32.gmra.mxu0 %v6746
    %v6786 = vpop.f32.mrf.mxu0
    %v6787 = vadd.f32 0.0, %v6786
    %6788 = vdwg.mxu0
    %v6789 = vadd.f32 %v6664, %v6766
    %v6790 = vadd.f32 %v6665, %v6769
    %v6791 = vadd.f32 %v6666, %v6772
    %v6792 = vadd.f32 %v6667, %v6775
    %v6793 = vadd.f32 %v6668, %v6778
    %v6794 = vadd.f32 %v6669, %v6781
    %v6795 = vadd.f32 %v6670, %v6784
    %v6796 = vadd.f32 %v6671, %v6787
    %s6797 = scalar_lea.vmem [#allocation2], 64
    %v6798 = vld [vmem:[%s6797] sm:$0xff]
    %s6799 = scalar_lea.vmem %s14, 512
    %v6800 = vld [vmem:[%s6799] sm:$0xff]
    %v6801 = vld [vmem:[%s6799 + $0x8] sm:$0xff]
    %v6802 = vld [vmem:[%s6799 + $0x10] sm:$0xff]
    %v6803 = vld [vmem:[%s6799 + $0x18] sm:$0xff]
    %v6804 = vld [vmem:[%s6799 + $0x20] sm:$0xff]
    %v6805 = vld [vmem:[%s6799 + $0x28] sm:$0xff]
    %v6806 = vld [vmem:[%s6799 + $0x30] sm:$0xff]
    %v6807 = vld [vmem:[%s6799 + $0x38] sm:$0xff]
    %6808 = vmatpush.msra.mxu0 %v5814
    %6809 = vmatpush.msra.mxu0 %v5813
    %6810 = vmatpush.msra.mxu0 %v5812
    %6811 = vmatpush.msra.mxu0 %v5811
    %6812 = vmatpush.msra.mxu0 %v5810
    %6813 = vmatpush.msra.mxu0 %v5809
    %6814 = vmatpush.msra.mxu0 %v5808
    %6815 = vmatpush.msra.mxu0 %v5807
    %6816 = vmatpush.msra.mxu0 %v5806
    %6817 = vmatpush.msra.mxu0 %v5805
    %6818 = vmatpush.msra.mxu0 %v5804
    %6819 = vmatpush.msra.mxu0 %v5803
    %6820 = vmatpush.msra.mxu0 %v5802
    %6821 = vmatpush.msra.mxu0 %v5801
    %6822 = vmatpush.msra.mxu0 %v5800
    %6823 = vmatpush.msra.mxu0 %v5799
    %6824 = vmatmul.f32.gmra.mxu0 %v6800
    %v6825 = vpop.f32.mrf.mxu0
    %v6826 = vadd.f32 0.0, %v6825
    %6827 = vmatmul.f32.gmra.mxu0 %v6801
    %v6828 = vpop.f32.mrf.mxu0
    %v6829 = vadd.f32 0.0, %v6828
    %6830 = vmatmul.f32.gmra.mxu0 %v6802
    %v6831 = vpop.f32.mrf.mxu0
    %v6832 = vadd.f32 0.0, %v6831
    %6833 = vmatmul.f32.gmra.mxu0 %v6803
    %v6834 = vpop.f32.mrf.mxu0
    %v6835 = vadd.f32 0.0, %v6834
    %6836 = vmatmul.f32.gmra.mxu0 %v6804
    %v6837 = vpop.f32.mrf.mxu0
    %v6838 = vadd.f32 0.0, %v6837
    %6839 = vmatmul.f32.gmra.mxu0 %v6805
    %v6840 = vpop.f32.mrf.mxu0
    %v6841 = vadd.f32 0.0, %v6840
    %6842 = vmatmul.f32.gmra.mxu0 %v6806
    %v6843 = vpop.f32.mrf.mxu0
    %v6844 = vadd.f32 0.0, %v6843
    %6845 = vmatmul.f32.gmra.mxu0 %v6807
    %v6846 = vpop.f32.mrf.mxu0
    %v6847 = vadd.f32 0.0, %v6846
    %6848 = vdwg.mxu0
    %v6850 = vsel %vm5215, %v6826, 0
    %v6853 = vsel %vm5215, %v6829, 0
    %v6856 = vsel %vm5215, %v6832, 0
    %v6859 = vsel %vm5215, %v6835, 0
    %v6862 = vsel %vm5215, %v6838, 0
    %v6865 = vsel %vm5215, %v6841, 0
    %v6868 = vsel %vm5215, %v6844, 0
    %v6871 = vsel %vm5215, %v6847, 0
    %6873 = vmatpush.msra.mxu0 0.0
    %6874 = vmatpush.msra.mxu0 0.0
    %6875 = vmatpush.msra.mxu0 0.0
    %6876 = vmatpush.msra.mxu0 0.0
    %6877 = vmatpush.msra.mxu0 0.0
    %6878 = vmatpush.msra.mxu0 0.0
    %6879 = vmatpush.msra.mxu0 0.0
    %6880 = vmatpush.msra.mxu0 0.0
    %6881 = vmatpush.msra.mxu0 0.0
    %6882 = vmatpush.msra.mxu0 0.0
    %6883 = vmatpush.msra.mxu0 0.0
    %6884 = vmatpush.msra.mxu0 0.0
    %6885 = vmatpush.msra.mxu0 0.0
    %6886 = vmatpush.msra.mxu0 0.0
    %6887 = vmatpush.msra.mxu0 0.0
    %6888 = vmatpush.msra.mxu0 %v6798
    %6889 = vmatmul.f32.gmra.mxu0 %v6850
    %v6890 = vpop.f32.mrf.mxu0
    %v6891 = vadd.f32 0.0, %v6890
    %6892 = vmatmul.f32.gmra.mxu0 %v6853
    %v6893 = vpop.f32.mrf.mxu0
    %v6894 = vadd.f32 0.0, %v6893
    %6895 = vmatmul.f32.gmra.mxu0 %v6856
    %v6896 = vpop.f32.mrf.mxu0
    %v6897 = vadd.f32 0.0, %v6896
    %6898 = vmatmul.f32.gmra.mxu0 %v6859
    %v6899 = vpop.f32.mrf.mxu0
    %v6900 = vadd.f32 0.0, %v6899
    %6901 = vmatmul.f32.gmra.mxu0 %v6862
    %v6902 = vpop.f32.mrf.mxu0
    %v6903 = vadd.f32 0.0, %v6902
    %6904 = vmatmul.f32.gmra.mxu0 %v6865
    %v6905 = vpop.f32.mrf.mxu0
    %v6906 = vadd.f32 0.0, %v6905
    %6907 = vmatmul.f32.gmra.mxu0 %v6868
    %v6908 = vpop.f32.mrf.mxu0
    %v6909 = vadd.f32 0.0, %v6908
    %6910 = vmatmul.f32.gmra.mxu0 %v6871
    %v6911 = vpop.f32.mrf.mxu0
    %v6912 = vadd.f32 0.0, %v6911
    %6913 = vdwg.mxu0
    %v6914 = vadd.f32 %v6789, %v6891
    %v6915 = vadd.f32 %v6790, %v6894
    %v6916 = vadd.f32 %v6791, %v6897
    %v6917 = vadd.f32 %v6792, %v6900
    %v6918 = vadd.f32 %v6793, %v6903
    %v6919 = vadd.f32 %v6794, %v6906
    %v6920 = vadd.f32 %v6795, %v6909
    %v6921 = vadd.f32 %v6796, %v6912
    %v6922 = vsel %vm2166, %v6914, 0.0
    %6923 = vadd.xlane.f32.xlu0 %v6922
    %v6924 = vpop.xlane.xlu0 %6923
    %v6925 = vsel %vm2166, %v6915, 0.0
    %6926 = vadd.xlane.f32.xlu0 %v6925
    %v6927 = vpop.xlane.xlu0 %6926
    %v6928 = vsel %vm2166, %v6916, 0.0
    %6929 = vadd.xlane.f32.xlu0 %v6928
    %v6930 = vpop.xlane.xlu0 %6929
    %v6931 = vsel %vm2166, %v6917, 0.0
    %6932 = vadd.xlane.f32.xlu0 %v6931
    %v6933 = vpop.xlane.xlu0 %6932
    %v6934 = vsel %vm2166, %v6918, 0.0
    %6935 = vadd.xlane.f32.xlu0 %v6934
    %v6936 = vpop.xlane.xlu0 %6935
    %v6937 = vsel %vm2166, %v6919, 0.0
    %6938 = vadd.xlane.f32.xlu0 %v6937
    %v6939 = vpop.xlane.xlu0 %6938
    %v6940 = vsel %vm2166, %v6920, 0.0
    %6941 = vadd.xlane.f32.xlu0 %v6940
    %v6942 = vpop.xlane.xlu0 %6941
    %v6943 = vsel %vm2166, %v6921, 0.0
    %6944 = vadd.xlane.f32.xlu0 %v6943
    %v6945 = vpop.xlane.xlu0 %6944
    %v6946 = vmul.f32 %v6924, %v3223
    %v6947 = vmul.f32 %v6927, %v3223
    %v6948 = vmul.f32 %v6930, %v3223
    %v6949 = vmul.f32 %v6933, %v3223
    %v6950 = vmul.f32 %v6936, %v3223
    %v6951 = vmul.f32 %v6939, %v3223
    %v6952 = vmul.f32 %v6942, %v3223
    %v6953 = vmul.f32 %v6945, %v3223
    %v6954 = vsub.f32 %v6914, %v6946
    %v6955 = vsub.f32 %v6915, %v6947
    %v6956 = vsub.f32 %v6916, %v6948
    %v6957 = vsub.f32 %v6917, %v6949
    %v6958 = vsub.f32 %v6918, %v6950
    %v6959 = vsub.f32 %v6919, %v6951
    %v6960 = vsub.f32 %v6920, %v6952
    %v6961 = vsub.f32 %v6921, %v6953
    %v6962 = vmul.f32 %v6954, %v6954
    %v6963 = vmul.f32 %v6955, %v6955
    %v6964 = vmul.f32 %v6956, %v6956
    %v6965 = vmul.f32 %v6957, %v6957
    %v6966 = vmul.f32 %v6958, %v6958
    %v6967 = vmul.f32 %v6959, %v6959
    %v6968 = vmul.f32 %v6960, %v6960
    %v6969 = vmul.f32 %v6961, %v6961
    %v6970 = vsel %vm2166, %v6962, 0.0
    %6971 = vadd.xlane.f32.xlu0 %v6970
    %v6972 = vpop.xlane.xlu0 %6971
    %v6973 = vsel %vm2166, %v6963, 0.0
    %6974 = vadd.xlane.f32.xlu0 %v6973
    %v6975 = vpop.xlane.xlu0 %6974
    %v6976 = vsel %vm2166, %v6964, 0.0
    %6977 = vadd.xlane.f32.xlu0 %v6976
    %v6978 = vpop.xlane.xlu0 %6977
    %v6979 = vsel %vm2166, %v6965, 0.0
    %6980 = vadd.xlane.f32.xlu0 %v6979
    %v6981 = vpop.xlane.xlu0 %6980
    %v6982 = vsel %vm2166, %v6966, 0.0
    %6983 = vadd.xlane.f32.xlu0 %v6982
    %v6984 = vpop.xlane.xlu0 %6983
    %v6985 = vsel %vm2166, %v6967, 0.0
    %6986 = vadd.xlane.f32.xlu0 %v6985
    %v6987 = vpop.xlane.xlu0 %6986
    %v6988 = vsel %vm2166, %v6968, 0.0
    %6989 = vadd.xlane.f32.xlu0 %v6988
    %v6990 = vpop.xlane.xlu0 %6989
    %v6991 = vsel %vm2166, %v6969, 0.0
    %6992 = vadd.xlane.f32.xlu0 %v6991
    %v6993 = vpop.xlane.xlu0 %6992
    %v6994 = vmul.f32 %v6972, %v3223
    %v6995 = vmul.f32 %v6975, %v3223
    %v6996 = vmul.f32 %v6978, %v3223
    %v6997 = vmul.f32 %v6981, %v3223
    %v6998 = vmul.f32 %v6984, %v3223
    %v6999 = vmul.f32 %v6987, %v3223
    %v7000 = vmul.f32 %v6990, %v3223
    %v7001 = vmul.f32 %v6993, %v3223
    %v7002 = vadd.f32 %v6994, 1e-05
    %v7003 = vadd.f32 %v6995, 1e-05
    %v7004 = vadd.f32 %v6996, 1e-05
    %v7005 = vadd.f32 %v6997, 1e-05
    %v7006 = vadd.f32 %v6998, 1e-05
    %v7007 = vadd.f32 %v6999, 1e-05
    %v7008 = vadd.f32 %v7000, 1e-05
    %v7009 = vadd.f32 %v7001, 1e-05
    %v7010 = vrsqrt.pop %v7002
    %v7011 = vmul.f32 %v7010, %v7002
    %v7012 = vmul.f32 %v7011, %v7010
    %v7013 = vmul.f32 0.5, %v7012
    %v7014 = vsub.f32 1.5, %v7013
    %v7015 = vmul.f32 %v7010, %v7014
    %vm7016 = vweird.f32 %v7002
    %vm7017 = vweird.f32 %v7010
    %vm7018 = vmor %vm7016, %vm7017
    %v7019 = vsel %vm7018, %v7010, %v7015
    %v7020 = vrsqrt.pop %v7003
    %v7021 = vmul.f32 %v7020, %v7003
    %v7022 = vmul.f32 %v7021, %v7020
    %v7023 = vmul.f32 0.5, %v7022
    %v7024 = vsub.f32 1.5, %v7023
    %v7025 = vmul.f32 %v7020, %v7024
    %vm7026 = vweird.f32 %v7003
    %vm7027 = vweird.f32 %v7020
    %vm7028 = vmor %vm7026, %vm7027
    %v7029 = vsel %vm7028, %v7020, %v7025
    %v7030 = vrsqrt.pop %v7004
    %v7031 = vmul.f32 %v7030, %v7004
    %v7032 = vmul.f32 %v7031, %v7030
    %v7033 = vmul.f32 0.5, %v7032
    %v7034 = vsub.f32 1.5, %v7033
    %v7035 = vmul.f32 %v7030, %v7034
    %vm7036 = vweird.f32 %v7004
    %vm7037 = vweird.f32 %v7030
    %vm7038 = vmor %vm7036, %vm7037
    %v7039 = vsel %vm7038, %v7030, %v7035
    %v7040 = vrsqrt.pop %v7005
    %v7041 = vmul.f32 %v7040, %v7005
    %v7042 = vmul.f32 %v7041, %v7040
    %v7043 = vmul.f32 0.5, %v7042
    %v7044 = vsub.f32 1.5, %v7043
    %v7045 = vmul.f32 %v7040, %v7044
    %vm7046 = vweird.f32 %v7005
    %vm7047 = vweird.f32 %v7040
    %vm7048 = vmor %vm7046, %vm7047
    %v7049 = vsel %vm7048, %v7040, %v7045
    %v7050 = vrsqrt.pop %v7006
    %v7051 = vmul.f32 %v7050, %v7006
    %v7052 = vmul.f32 %v7051, %v7050
    %v7053 = vmul.f32 0.5, %v7052
    %v7054 = vsub.f32 1.5, %v7053
    %v7055 = vmul.f32 %v7050, %v7054
    %vm7056 = vweird.f32 %v7006
    %vm7057 = vweird.f32 %v7050
    %vm7058 = vmor %vm7056, %vm7057
    %v7059 = vsel %vm7058, %v7050, %v7055
    %v7060 = vrsqrt.pop %v7007
    %v7061 = vmul.f32 %v7060, %v7007
    %v7062 = vmul.f32 %v7061, %v7060
    %v7063 = vmul.f32 0.5, %v7062
    %v7064 = vsub.f32 1.5, %v7063
    %v7065 = vmul.f32 %v7060, %v7064
    %vm7066 = vweird.f32 %v7007
    %vm7067 = vweird.f32 %v7060
    %vm7068 = vmor %vm7066, %vm7067
    %v7069 = vsel %vm7068, %v7060, %v7065
    %v7070 = vrsqrt.pop %v7008
    %v7071 = vmul.f32 %v7070, %v7008
    %v7072 = vmul.f32 %v7071, %v7070
    %v7073 = vmul.f32 0.5, %v7072
    %v7074 = vsub.f32 1.5, %v7073
    %v7075 = vmul.f32 %v7070, %v7074
    %vm7076 = vweird.f32 %v7008
    %vm7077 = vweird.f32 %v7070
    %vm7078 = vmor %vm7076, %vm7077
    %v7079 = vsel %vm7078, %v7070, %v7075
    %v7080 = vrsqrt.pop %v7009
    %v7081 = vmul.f32 %v7080, %v7009
    %v7082 = vmul.f32 %v7081, %v7080
    %v7083 = vmul.f32 0.5, %v7082
    %v7084 = vsub.f32 1.5, %v7083
    %v7085 = vmul.f32 %v7080, %v7084
    %vm7086 = vweird.f32 %v7009
    %vm7087 = vweird.f32 %v7080
    %vm7088 = vmor %vm7086, %vm7087
    %v7089 = vsel %vm7088, %v7080, %v7085
    %v7090 = vmul.f32 %v6954, %v7019
    %v7091 = vmul.f32 %v6955, %v7029
    %v7092 = vmul.f32 %v6956, %v7039
    %v7093 = vmul.f32 %v6957, %v7049
    %v7094 = vmul.f32 %v6958, %v7059
    %v7095 = vmul.f32 %v6959, %v7069
    %v7096 = vmul.f32 %v6960, %v7079
    %v7097 = vmul.f32 %v6961, %v7089
    %v7098 = vld [vmem:[%s15] sm:$0xff]
    %v7099 = vld [vmem:[%s15 + $0x8] sm:$0xff]
    %v7100 = vld [vmem:[%s15 + $0x10] sm:$0xff]
    %v7101 = vld [vmem:[%s15 + $0x18] sm:$0xff]
    %v7102 = vld [vmem:[%s15 + $0x20] sm:$0xff]
    %v7103 = vld [vmem:[%s15 + $0x28] sm:$0xff]
    %v7104 = vld [vmem:[%s15 + $0x30] sm:$0xff]
    %v7105 = vld [vmem:[%s15 + $0x38] sm:$0xff]
    %7107 = vset.pattern.permute.xlu0 0
    %7108 = vperm.xlu0 %7107, %v7098
    %v7109 = vpop.permute.xlu0 %7108
    %7112 = vset.pattern.permute.xlu0 0
    %7113 = vperm.xlu0 %7112, %v7099
    %v7114 = vpop.permute.xlu0 %7113
    %7117 = vset.pattern.permute.xlu0 0
    %7118 = vperm.xlu0 %7117, %v7100
    %v7119 = vpop.permute.xlu0 %7118
    %7122 = vset.pattern.permute.xlu0 0
    %7123 = vperm.xlu0 %7122, %v7101
    %v7124 = vpop.permute.xlu0 %7123
    %7127 = vset.pattern.permute.xlu0 0
    %7128 = vperm.xlu0 %7127, %v7102
    %v7129 = vpop.permute.xlu0 %7128
    %7132 = vset.pattern.permute.xlu0 0
    %7133 = vperm.xlu0 %7132, %v7103
    %v7134 = vpop.permute.xlu0 %7133
    %7137 = vset.pattern.permute.xlu0 0
    %7138 = vperm.xlu0 %7137, %v7104
    %v7139 = vpop.permute.xlu0 %7138
    %7142 = vset.pattern.permute.xlu0 0
    %7143 = vperm.xlu0 %7142, %v7105
    %v7144 = vpop.permute.xlu0 %7143
    %v7146 = vmul.f32 %v7090, %v7109
    %v7147 = vmul.f32 %v7091, %v7114
    %v7148 = vmul.f32 %v7092, %v7119
    %v7149 = vmul.f32 %v7093, %v7124
    %v7150 = vmul.f32 %v7094, %v7129
    %v7151 = vmul.f32 %v7095, %v7134
    %v7152 = vmul.f32 %v7096, %v7139
    %v7153 = vmul.f32 %v7097, %v7144
    %v7154 = vld [vmem:[%s16] sm:$0xff]
    %v7155 = vld [vmem:[%s16 + $0x8] sm:$0xff]
    %v7156 = vld [vmem:[%s16 + $0x10] sm:$0xff]
    %v7157 = vld [vmem:[%s16 + $0x18] sm:$0xff]
    %v7158 = vld [vmem:[%s16 + $0x20] sm:$0xff]
    %v7159 = vld [vmem:[%s16 + $0x28] sm:$0xff]
    %v7160 = vld [vmem:[%s16 + $0x30] sm:$0xff]
    %v7161 = vld [vmem:[%s16 + $0x38] sm:$0xff]
    %7163 = vset.pattern.permute.xlu0 0
    %7164 = vperm.xlu0 %7163, %v7154
    %v7165 = vpop.permute.xlu0 %7164
    %7168 = vset.pattern.permute.xlu0 0
    %7169 = vperm.xlu0 %7168, %v7155
    %v7170 = vpop.permute.xlu0 %7169
    %7173 = vset.pattern.permute.xlu0 0
    %7174 = vperm.xlu0 %7173, %v7156
    %v7175 = vpop.permute.xlu0 %7174
    %7178 = vset.pattern.permute.xlu0 0
    %7179 = vperm.xlu0 %7178, %v7157
    %v7180 = vpop.permute.xlu0 %7179
    %7183 = vset.pattern.permute.xlu0 0
    %7184 = vperm.xlu0 %7183, %v7158
    %v7185 = vpop.permute.xlu0 %7184
    %7188 = vset.pattern.permute.xlu0 0
    %7189 = vperm.xlu0 %7188, %v7159
    %v7190 = vpop.permute.xlu0 %7189
    %7193 = vset.pattern.permute.xlu0 0
    %7194 = vperm.xlu0 %7193, %v7160
    %v7195 = vpop.permute.xlu0 %7194
    %7198 = vset.pattern.permute.xlu0 0
    %7199 = vperm.xlu0 %7198, %v7161
    %v7200 = vpop.permute.xlu0 %7199
    %v7202 = vadd.f32 %v7146, %v7165
    %v7203 = vadd.f32 %v7147, %v7170
    %v7204 = vadd.f32 %v7148, %v7175
    %v7205 = vadd.f32 %v7149, %v7180
    %v7206 = vadd.f32 %v7150, %v7185
    %v7207 = vadd.f32 %v7151, %v7190
    %v7208 = vadd.f32 %v7152, %v7195
    %v7209 = vadd.f32 %v7153, %v7200
    %v7210 = vmax.f32 %v7202, 0.0
    %v7211 = vmax.f32 %v7203, 0.0
    %v7212 = vmax.f32 %v7204, 0.0
    %v7213 = vmax.f32 %v7205, 0.0
    %v7214 = vmax.f32 %v7206, 0.0
    %v7215 = vmax.f32 %v7207, 0.0
    %v7216 = vmax.f32 %v7208, 0.0
    %v7217 = vmax.f32 %v7209, 0.0
    %v7218 = vld [vmem:[%s17] sm:$0xff]
    %v7219 = vld [vmem:[%s17 + $0x8] sm:$0xff]
    %v7220 = vld [vmem:[%s17 + $0x10] sm:$0xff]
    %v7221 = vld [vmem:[%s17 + $0x18] sm:$0xff]
    %v7222 = vld [vmem:[#allocation4] sm:$0xff]
    %v7223 = vld [vmem:[#allocation4 + $0x8] sm:$0xff]
    %v7224 = vld [vmem:[#allocation4 + $0x10] sm:$0xff]
    %v7225 = vld [vmem:[#allocation4 + $0x18] sm:$0xff]
    %v7227 = vsel %vm3644, %v7222, 0
    %v7230 = vsel %vm3644, %v7223, 0
    %v7233 = vsel %vm3644, %v7224, 0
    %v7236 = vsel %vm3644, %v7225, 0
    %7238 = vmatpush.msra.mxu0 0.0
    %7239 = vmatpush.msra.mxu0 0.0
    %7240 = vmatpush.msra.mxu0 0.0
    %7241 = vmatpush.msra.mxu0 0.0
    %7242 = vmatpush.msra.mxu0 0.0
    %7243 = vmatpush.msra.mxu0 0.0
    %7244 = vmatpush.msra.mxu0 0.0
    %7245 = vmatpush.msra.mxu0 0.0
    %7246 = vmatpush.msra.mxu0 %v7217
    %7247 = vmatpush.msra.mxu0 %v7216
    %7248 = vmatpush.msra.mxu0 %v7215
    %7249 = vmatpush.msra.mxu0 %v7214
    %7250 = vmatpush.msra.mxu0 %v7213
    %7251 = vmatpush.msra.mxu0 %v7212
    %7252 = vmatpush.msra.mxu0 %v7211
    %7253 = vmatpush.msra.mxu0 %v7210
    %7254 = vmatmul.f32.gmra.mxu0 %v7227
    %v7255 = vpop.f32.mrf.mxu0
    %v7256 = vadd.f32 0.0, %v7255
    %7257 = vmatmul.f32.gmra.mxu0 %v7230
    %v7258 = vpop.f32.mrf.mxu0
    %v7259 = vadd.f32 0.0, %v7258
    %7260 = vmatmul.f32.gmra.mxu0 %v7233
    %v7261 = vpop.f32.mrf.mxu0
    %v7262 = vadd.f32 0.0, %v7261
    %7263 = vmatmul.f32.gmra.mxu0 %v7236
    %v7264 = vpop.f32.mrf.mxu0
    %v7265 = vadd.f32 0.0, %v7264
    %7266 = vdwg.mxu0
    %s7267 = scalar_lea.vmem %s17, 32
    %v7268 = vld [vmem:[%s7267] sm:$0xff]
    %v7269 = vld [vmem:[%s7267 + $0x8] sm:$0xff]
    %v7270 = vld [vmem:[%s7267 + $0x10] sm:$0xff]
    %v7271 = vld [vmem:[%s7267 + $0x18] sm:$0xff]
    %s7272 = scalar_lea.vmem [#allocation4], 32
    %v7273 = vld [vmem:[%s7272] sm:$0xff]
    %v7274 = vld [vmem:[%s7272 + $0x8] sm:$0xff]
    %v7275 = vld [vmem:[%s7272 + $0x10] sm:$0xff]
    %v7276 = vld [vmem:[%s7272 + $0x18] sm:$0xff]
    %v7278 = vsel %vm3644, %v7273, 0
    %v7281 = vsel %vm3644, %v7274, 0
    %v7284 = vsel %vm3644, %v7275, 0
    %v7287 = vsel %vm3644, %v7276, 0
    %7289 = vmatpush.msra.mxu0 0.0
    %7290 = vmatpush.msra.mxu0 0.0
    %7291 = vmatpush.msra.mxu0 0.0
    %7292 = vmatpush.msra.mxu0 0.0
    %7293 = vmatpush.msra.mxu0 0.0
    %7294 = vmatpush.msra.mxu0 0.0
    %7295 = vmatpush.msra.mxu0 0.0
    %7296 = vmatpush.msra.mxu0 0.0
    %7297 = vmatpush.msra.mxu0 %v7217
    %7298 = vmatpush.msra.mxu0 %v7216
    %7299 = vmatpush.msra.mxu0 %v7215
    %7300 = vmatpush.msra.mxu0 %v7214
    %7301 = vmatpush.msra.mxu0 %v7213
    %7302 = vmatpush.msra.mxu0 %v7212
    %7303 = vmatpush.msra.mxu0 %v7211
    %7304 = vmatpush.msra.mxu0 %v7210
    %7305 = vmatmul.f32.gmra.mxu0 %v7278
    %v7306 = vpop.f32.mrf.mxu0
    %v7307 = vadd.f32 0.0, %v7306
    %7308 = vmatmul.f32.gmra.mxu0 %v7281
    %v7309 = vpop.f32.mrf.mxu0
    %v7310 = vadd.f32 0.0, %v7309
    %7311 = vmatmul.f32.gmra.mxu0 %v7284
    %v7312 = vpop.f32.mrf.mxu0
    %v7313 = vadd.f32 0.0, %v7312
    %7314 = vmatmul.f32.gmra.mxu0 %v7287
    %v7315 = vpop.f32.mrf.mxu0
    %v7316 = vadd.f32 0.0, %v7315
    %7317 = vdwg.mxu0
    %v7319 = vsel %vm2166, %v7307, 0
    %v7322 = vsel %vm2166, %v7310, 0
    %v7325 = vsel %vm2166, %v7313, 0
    %v7328 = vsel %vm2166, %v7316, 0
    %7330 = vmatpush.msra.mxu0 0.0
    %7331 = vmatpush.msra.mxu0 0.0
    %7332 = vmatpush.msra.mxu0 0.0
    %7333 = vmatpush.msra.mxu0 0.0
    %7334 = vmatpush.msra.mxu0 0.0
    %7335 = vmatpush.msra.mxu0 0.0
    %7336 = vmatpush.msra.mxu0 0.0
    %7337 = vmatpush.msra.mxu0 0.0
    %7338 = vmatpush.msra.mxu0 0.0
    %7339 = vmatpush.msra.mxu0 0.0
    %7340 = vmatpush.msra.mxu0 0.0
    %7341 = vmatpush.msra.mxu0 0.0
    %7342 = vmatpush.msra.mxu0 %v7271
    %7343 = vmatpush.msra.mxu0 %v7270
    %7344 = vmatpush.msra.mxu0 %v7269
    %7345 = vmatpush.msra.mxu0 %v7268
    %7346 = vmatmul.f32.gmra.mxu0 %v7319
    %v7347 = vpop.f32.mrf.mxu0
    %v7348 = vadd.f32 0.0, %v7347
    %7349 = vmatmul.f32.gmra.mxu0 %v7322
    %v7350 = vpop.f32.mrf.mxu0
    %v7351 = vadd.f32 0.0, %v7350
    %7352 = vmatmul.f32.gmra.mxu0 %v7325
    %v7353 = vpop.f32.mrf.mxu0
    %v7354 = vadd.f32 0.0, %v7353
    %7355 = vmatmul.f32.gmra.mxu0 %v7328
    %v7356 = vpop.f32.mrf.mxu0
    %v7357 = vadd.f32 0.0, %v7356
    %7358 = vdwg.mxu0
    %v7360 = vsel %vm2166, %v7256, 0
    %v7363 = vsel %vm2166, %v7259, 0
    %v7366 = vsel %vm2166, %v7262, 0
    %v7369 = vsel %vm2166, %v7265, 0
    %7371 = vmatpush.msra.mxu0 0.0
    %7372 = vmatpush.msra.mxu0 0.0
    %7373 = vmatpush.msra.mxu0 0.0
    %7374 = vmatpush.msra.mxu0 0.0
    %7375 = vmatpush.msra.mxu0 0.0
    %7376 = vmatpush.msra.mxu0 0.0
    %7377 = vmatpush.msra.mxu0 0.0
    %7378 = vmatpush.msra.mxu0 0.0
    %7379 = vmatpush.msra.mxu0 0.0
    %7380 = vmatpush.msra.mxu0 0.0
    %7381 = vmatpush.msra.mxu0 0.0
    %7382 = vmatpush.msra.mxu0 0.0
    %7383 = vmatpush.msra.mxu0 %v7221
    %7384 = vmatpush.msra.mxu0 %v7220
    %7385 = vmatpush.msra.mxu0 %v7219
    %7386 = vmatpush.msra.mxu0 %v7218
    %7387 = vmatmul.f32.gmra.mxu0 %v7360
    %v7388 = vpop.f32.mrf.mxu0
    %v7389 = vadd.f32 %v7348, %v7388
    %7390 = vmatmul.f32.gmra.mxu0 %v7363
    %v7391 = vpop.f32.mrf.mxu0
    %v7392 = vadd.f32 %v7351, %v7391
    %7393 = vmatmul.f32.gmra.mxu0 %v7366
    %v7394 = vpop.f32.mrf.mxu0
    %v7395 = vadd.f32 %v7354, %v7394
    %7396 = vmatmul.f32.gmra.mxu0 %v7369
    %v7397 = vpop.f32.mrf.mxu0
    %v7398 = vadd.f32 %v7357, %v7397
    %7399 = vdwg.mxu0
    %s7400 = scalar_lea.vmem %s17, 64
    %v7401 = vld [vmem:[%s7400] sm:$0xff]
    %v7402 = vld [vmem:[%s7400 + $0x8] sm:$0xff]
    %v7403 = vld [vmem:[%s7400 + $0x10] sm:$0xff]
    %v7404 = vld [vmem:[%s7400 + $0x18] sm:$0xff]
    %s7405 = scalar_lea.vmem [#allocation4], 64
    %v7406 = vld [vmem:[%s7405] sm:$0xff]
    %v7407 = vld [vmem:[%s7405 + $0x8] sm:$0xff]
    %v7408 = vld [vmem:[%s7405 + $0x10] sm:$0xff]
    %v7409 = vld [vmem:[%s7405 + $0x18] sm:$0xff]
    %v7411 = vsel %vm3644, %v7406, 0
    %v7414 = vsel %vm3644, %v7407, 0
    %v7417 = vsel %vm3644, %v7408, 0
    %v7420 = vsel %vm3644, %v7409, 0
    %7422 = vmatpush.msra.mxu0 0.0
    %7423 = vmatpush.msra.mxu0 0.0
    %7424 = vmatpush.msra.mxu0 0.0
    %7425 = vmatpush.msra.mxu0 0.0
    %7426 = vmatpush.msra.mxu0 0.0
    %7427 = vmatpush.msra.mxu0 0.0
    %7428 = vmatpush.msra.mxu0 0.0
    %7429 = vmatpush.msra.mxu0 0.0
    %7430 = vmatpush.msra.mxu0 %v7217
    %7431 = vmatpush.msra.mxu0 %v7216
    %7432 = vmatpush.msra.mxu0 %v7215
    %7433 = vmatpush.msra.mxu0 %v7214
    %7434 = vmatpush.msra.mxu0 %v7213
    %7435 = vmatpush.msra.mxu0 %v7212
    %7436 = vmatpush.msra.mxu0 %v7211
    %7437 = vmatpush.msra.mxu0 %v7210
    %7438 = vmatmul.f32.gmra.mxu0 %v7411
    %v7439 = vpop.f32.mrf.mxu0
    %v7440 = vadd.f32 0.0, %v7439
    %7441 = vmatmul.f32.gmra.mxu0 %v7414
    %v7442 = vpop.f32.mrf.mxu0
    %v7443 = vadd.f32 0.0, %v7442
    %7444 = vmatmul.f32.gmra.mxu0 %v7417
    %v7445 = vpop.f32.mrf.mxu0
    %v7446 = vadd.f32 0.0, %v7445
    %7447 = vmatmul.f32.gmra.mxu0 %v7420
    %v7448 = vpop.f32.mrf.mxu0
    %v7449 = vadd.f32 0.0, %v7448
    %7450 = vdwg.mxu0
    %v7452 = vsel %vm2166, %v7440, 0
    %v7455 = vsel %vm2166, %v7443, 0
    %v7458 = vsel %vm2166, %v7446, 0
    %v7461 = vsel %vm2166, %v7449, 0
    %7463 = vmatpush.msra.mxu0 0.0
    %7464 = vmatpush.msra.mxu0 0.0
    %7465 = vmatpush.msra.mxu0 0.0
    %7466 = vmatpush.msra.mxu0 0.0
    %7467 = vmatpush.msra.mxu0 0.0
    %7468 = vmatpush.msra.mxu0 0.0
    %7469 = vmatpush.msra.mxu0 0.0
    %7470 = vmatpush.msra.mxu0 0.0
    %7471 = vmatpush.msra.mxu0 0.0
    %7472 = vmatpush.msra.mxu0 0.0
    %7473 = vmatpush.msra.mxu0 0.0
    %7474 = vmatpush.msra.mxu0 0.0
    %7475 = vmatpush.msra.mxu0 %v7404
    %7476 = vmatpush.msra.mxu0 %v7403
    %7477 = vmatpush.msra.mxu0 %v7402
    %7478 = vmatpush.msra.mxu0 %v7401
    %7479 = vmatmul.f32.gmra.mxu0 %v7452
    %v7480 = vpop.f32.mrf.mxu0
    %v7481 = vadd.f32 0.0, %v7480
    %7482 = vmatmul.f32.gmra.mxu0 %v7455
    %v7483 = vpop.f32.mrf.mxu0
    %v7484 = vadd.f32 0.0, %v7483
    %7485 = vmatmul.f32.gmra.mxu0 %v7458
    %v7486 = vpop.f32.mrf.mxu0
    %v7487 = vadd.f32 0.0, %v7486
    %7488 = vmatmul.f32.gmra.mxu0 %v7461
    %v7489 = vpop.f32.mrf.mxu0
    %v7490 = vadd.f32 0.0, %v7489
    %7491 = vdwg.mxu0
    %v7492 = vadd.f32 %v7389, %v7481
    %v7493 = vadd.f32 %v7392, %v7484
    %v7494 = vadd.f32 %v7395, %v7487
    %v7495 = vadd.f32 %v7398, %v7490
    %s7496 = scalar_lea.vmem %s17, 96
    %v7497 = vld [vmem:[%s7496] sm:$0xff]
    %v7498 = vld [vmem:[%s7496 + $0x8] sm:$0xff]
    %v7499 = vld [vmem:[%s7496 + $0x10] sm:$0xff]
    %v7500 = vld [vmem:[%s7496 + $0x18] sm:$0xff]
    %s7501 = scalar_lea.vmem [#allocation4], 96
    %v7502 = vld [vmem:[%s7501] sm:$0xff]
    %v7503 = vld [vmem:[%s7501 + $0x8] sm:$0xff]
    %v7504 = vld [vmem:[%s7501 + $0x10] sm:$0xff]
    %v7505 = vld [vmem:[%s7501 + $0x18] sm:$0xff]
    %v7507 = vsel %vm3644, %v7502, 0
    %v7510 = vsel %vm3644, %v7503, 0
    %v7513 = vsel %vm3644, %v7504, 0
    %v7516 = vsel %vm3644, %v7505, 0
    %7518 = vmatpush.msra.mxu0 0.0
    %7519 = vmatpush.msra.mxu0 0.0
    %7520 = vmatpush.msra.mxu0 0.0
    %7521 = vmatpush.msra.mxu0 0.0
    %7522 = vmatpush.msra.mxu0 0.0
    %7523 = vmatpush.msra.mxu0 0.0
    %7524 = vmatpush.msra.mxu0 0.0
    %7525 = vmatpush.msra.mxu0 0.0
    %7526 = vmatpush.msra.mxu0 %v7217
    %7527 = vmatpush.msra.mxu0 %v7216
    %7528 = vmatpush.msra.mxu0 %v7215
    %7529 = vmatpush.msra.mxu0 %v7214
    %7530 = vmatpush.msra.mxu0 %v7213
    %7531 = vmatpush.msra.mxu0 %v7212
    %7532 = vmatpush.msra.mxu0 %v7211
    %7533 = vmatpush.msra.mxu0 %v7210
    %7534 = vmatmul.f32.gmra.mxu0 %v7507
    %v7535 = vpop.f32.mrf.mxu0
    %v7536 = vadd.f32 0.0, %v7535
    %7537 = vmatmul.f32.gmra.mxu0 %v7510
    %v7538 = vpop.f32.mrf.mxu0
    %v7539 = vadd.f32 0.0, %v7538
    %7540 = vmatmul.f32.gmra.mxu0 %v7513
    %v7541 = vpop.f32.mrf.mxu0
    %v7542 = vadd.f32 0.0, %v7541
    %7543 = vmatmul.f32.gmra.mxu0 %v7516
    %v7544 = vpop.f32.mrf.mxu0
    %v7545 = vadd.f32 0.0, %v7544
    %7546 = vdwg.mxu0
    %v7548 = vsel %vm2166, %v7536, 0
    %v7551 = vsel %vm2166, %v7539, 0
    %v7554 = vsel %vm2166, %v7542, 0
    %v7557 = vsel %vm2166, %v7545, 0
    %7559 = vmatpush.msra.mxu0 0.0
    %7560 = vmatpush.msra.mxu0 0.0
    %7561 = vmatpush.msra.mxu0 0.0
    %7562 = vmatpush.msra.mxu0 0.0
    %7563 = vmatpush.msra.mxu0 0.0
    %7564 = vmatpush.msra.mxu0 0.0
    %7565 = vmatpush.msra.mxu0 0.0
    %7566 = vmatpush.msra.mxu0 0.0
    %7567 = vmatpush.msra.mxu0 0.0
    %7568 = vmatpush.msra.mxu0 0.0
    %7569 = vmatpush.msra.mxu0 0.0
    %7570 = vmatpush.msra.mxu0 0.0
    %7571 = vmatpush.msra.mxu0 %v7500
    %7572 = vmatpush.msra.mxu0 %v7499
    %7573 = vmatpush.msra.mxu0 %v7498
    %7574 = vmatpush.msra.mxu0 %v7497
    %7575 = vmatmul.f32.gmra.mxu0 %v7548
    %v7576 = vpop.f32.mrf.mxu0
    %v7577 = vadd.f32 0.0, %v7576
    %7578 = vmatmul.f32.gmra.mxu0 %v7551
    %v7579 = vpop.f32.mrf.mxu0
    %v7580 = vadd.f32 0.0, %v7579
    %7581 = vmatmul.f32.gmra.mxu0 %v7554
    %v7582 = vpop.f32.mrf.mxu0
    %v7583 = vadd.f32 0.0, %v7582
    %7584 = vmatmul.f32.gmra.mxu0 %v7557
    %v7585 = vpop.f32.mrf.mxu0
    %v7586 = vadd.f32 0.0, %v7585
    %7587 = vdwg.mxu0
    %v7588 = vadd.f32 %v7492, %v7577
    %v7589 = vadd.f32 %v7493, %v7580
    %v7590 = vadd.f32 %v7494, %v7583
    %v7591 = vadd.f32 %v7495, %v7586
    %s7592 = scalar_lea.vmem %s17, 128
    %v7593 = vld [vmem:[%s7592] sm:$0xff]
    %v7594 = vld [vmem:[%s7592 + $0x8] sm:$0xff]
    %v7595 = vld [vmem:[%s7592 + $0x10] sm:$0xff]
    %v7596 = vld [vmem:[%s7592 + $0x18] sm:$0xff]
    %s7597 = scalar_lea.vmem [#allocation4], 128
    %v7598 = vld [vmem:[%s7597] sm:$0xff]
    %v7599 = vld [vmem:[%s7597 + $0x8] sm:$0xff]
    %v7600 = vld [vmem:[%s7597 + $0x10] sm:$0xff]
    %v7601 = vld [vmem:[%s7597 + $0x18] sm:$0xff]
    %v7603 = vsel %vm3644, %v7598, 0
    %v7606 = vsel %vm3644, %v7599, 0
    %v7609 = vsel %vm3644, %v7600, 0
    %v7612 = vsel %vm3644, %v7601, 0
    %7614 = vmatpush.msra.mxu0 0.0
    %7615 = vmatpush.msra.mxu0 0.0
    %7616 = vmatpush.msra.mxu0 0.0
    %7617 = vmatpush.msra.mxu0 0.0
    %7618 = vmatpush.msra.mxu0 0.0
    %7619 = vmatpush.msra.mxu0 0.0
    %7620 = vmatpush.msra.mxu0 0.0
    %7621 = vmatpush.msra.mxu0 0.0
    %7622 = vmatpush.msra.mxu0 %v7217
    %7623 = vmatpush.msra.mxu0 %v7216
    %7624 = vmatpush.msra.mxu0 %v7215
    %7625 = vmatpush.msra.mxu0 %v7214
    %7626 = vmatpush.msra.mxu0 %v7213
    %7627 = vmatpush.msra.mxu0 %v7212
    %7628 = vmatpush.msra.mxu0 %v7211
    %7629 = vmatpush.msra.mxu0 %v7210
    %7630 = vmatmul.f32.gmra.mxu0 %v7603
    %v7631 = vpop.f32.mrf.mxu0
    %v7632 = vadd.f32 0.0, %v7631
    %7633 = vmatmul.f32.gmra.mxu0 %v7606
    %v7634 = vpop.f32.mrf.mxu0
    %v7635 = vadd.f32 0.0, %v7634
    %7636 = vmatmul.f32.gmra.mxu0 %v7609
    %v7637 = vpop.f32.mrf.mxu0
    %v7638 = vadd.f32 0.0, %v7637
    %7639 = vmatmul.f32.gmra.mxu0 %v7612
    %v7640 = vpop.f32.mrf.mxu0
    %v7641 = vadd.f32 0.0, %v7640
    %7642 = vdwg.mxu0
    %v7644 = vsel %vm2166, %v7632, 0
    %v7647 = vsel %vm2166, %v7635, 0
    %v7650 = vsel %vm2166, %v7638, 0
    %v7653 = vsel %vm2166, %v7641, 0
    %7655 = vmatpush.msra.mxu0 0.0
    %7656 = vmatpush.msra.mxu0 0.0
    %7657 = vmatpush.msra.mxu0 0.0
    %7658 = vmatpush.msra.mxu0 0.0
    %7659 = vmatpush.msra.mxu0 0.0
    %7660 = vmatpush.msra.mxu0 0.0
    %7661 = vmatpush.msra.mxu0 0.0
    %7662 = vmatpush.msra.mxu0 0.0
    %7663 = vmatpush.msra.mxu0 0.0
    %7664 = vmatpush.msra.mxu0 0.0
    %7665 = vmatpush.msra.mxu0 0.0
    %7666 = vmatpush.msra.mxu0 0.0
    %7667 = vmatpush.msra.mxu0 %v7596
    %7668 = vmatpush.msra.mxu0 %v7595
    %7669 = vmatpush.msra.mxu0 %v7594
    %7670 = vmatpush.msra.mxu0 %v7593
    %7671 = vmatmul.f32.gmra.mxu0 %v7644
    %v7672 = vpop.f32.mrf.mxu0
    %v7673 = vadd.f32 0.0, %v7672
    %7674 = vmatmul.f32.gmra.mxu0 %v7647
    %v7675 = vpop.f32.mrf.mxu0
    %v7676 = vadd.f32 0.0, %v7675
    %7677 = vmatmul.f32.gmra.mxu0 %v7650
    %v7678 = vpop.f32.mrf.mxu0
    %v7679 = vadd.f32 0.0, %v7678
    %7680 = vmatmul.f32.gmra.mxu0 %v7653
    %v7681 = vpop.f32.mrf.mxu0
    %v7682 = vadd.f32 0.0, %v7681
    %7683 = vdwg.mxu0
    %v7684 = vadd.f32 %v7588, %v7673
    %v7685 = vadd.f32 %v7589, %v7676
    %v7686 = vadd.f32 %v7590, %v7679
    %v7687 = vadd.f32 %v7591, %v7682
    %s7688 = scalar_lea.vmem %s17, 160
    %v7689 = vld [vmem:[%s7688] sm:$0xff]
    %v7690 = vld [vmem:[%s7688 + $0x8] sm:$0xff]
    %v7691 = vld [vmem:[%s7688 + $0x10] sm:$0xff]
    %v7692 = vld [vmem:[%s7688 + $0x18] sm:$0xff]
    %s7693 = scalar_lea.vmem [#allocation4], 160
    %v7694 = vld [vmem:[%s7693] sm:$0xff]
    %v7695 = vld [vmem:[%s7693 + $0x8] sm:$0xff]
    %v7696 = vld [vmem:[%s7693 + $0x10] sm:$0xff]
    %v7697 = vld [vmem:[%s7693 + $0x18] sm:$0xff]
    %v7699 = vsel %vm3644, %v7694, 0
    %v7702 = vsel %vm3644, %v7695, 0
    %v7705 = vsel %vm3644, %v7696, 0
    %v7708 = vsel %vm3644, %v7697, 0
    %7710 = vmatpush.msra.mxu0 0.0
    %7711 = vmatpush.msra.mxu0 0.0
    %7712 = vmatpush.msra.mxu0 0.0
    %7713 = vmatpush.msra.mxu0 0.0
    %7714 = vmatpush.msra.mxu0 0.0
    %7715 = vmatpush.msra.mxu0 0.0
    %7716 = vmatpush.msra.mxu0 0.0
    %7717 = vmatpush.msra.mxu0 0.0
    %7718 = vmatpush.msra.mxu0 %v7217
    %7719 = vmatpush.msra.mxu0 %v7216
    %7720 = vmatpush.msra.mxu0 %v7215
    %7721 = vmatpush.msra.mxu0 %v7214
    %7722 = vmatpush.msra.mxu0 %v7213
    %7723 = vmatpush.msra.mxu0 %v7212
    %7724 = vmatpush.msra.mxu0 %v7211
    %7725 = vmatpush.msra.mxu0 %v7210
    %7726 = vmatmul.f32.gmra.mxu0 %v7699
    %v7727 = vpop.f32.mrf.mxu0
    %v7728 = vadd.f32 0.0, %v7727
    %7729 = vmatmul.f32.gmra.mxu0 %v7702
    %v7730 = vpop.f32.mrf.mxu0
    %v7731 = vadd.f32 0.0, %v7730
    %7732 = vmatmul.f32.gmra.mxu0 %v7705
    %v7733 = vpop.f32.mrf.mxu0
    %v7734 = vadd.f32 0.0, %v7733
    %7735 = vmatmul.f32.gmra.mxu0 %v7708
    %v7736 = vpop.f32.mrf.mxu0
    %v7737 = vadd.f32 0.0, %v7736
    %7738 = vdwg.mxu0
    %v7740 = vsel %vm2166, %v7728, 0
    %v7743 = vsel %vm2166, %v7731, 0
    %v7746 = vsel %vm2166, %v7734, 0
    %v7749 = vsel %vm2166, %v7737, 0
    %7751 = vmatpush.msra.mxu0 0.0
    %7752 = vmatpush.msra.mxu0 0.0
    %7753 = vmatpush.msra.mxu0 0.0
    %7754 = vmatpush.msra.mxu0 0.0
    %7755 = vmatpush.msra.mxu0 0.0
    %7756 = vmatpush.msra.mxu0 0.0
    %7757 = vmatpush.msra.mxu0 0.0
    %7758 = vmatpush.msra.mxu0 0.0
    %7759 = vmatpush.msra.mxu0 0.0
    %7760 = vmatpush.msra.mxu0 0.0
    %7761 = vmatpush.msra.mxu0 0.0
    %7762 = vmatpush.msra.mxu0 0.0
    %7763 = vmatpush.msra.mxu0 %v7692
    %7764 = vmatpush.msra.mxu0 %v7691
    %7765 = vmatpush.msra.mxu0 %v7690
    %7766 = vmatpush.msra.mxu0 %v7689
    %7767 = vmatmul.f32.gmra.mxu0 %v7740
    %v7768 = vpop.f32.mrf.mxu0
    %v7769 = vadd.f32 0.0, %v7768
    %7770 = vmatmul.f32.gmra.mxu0 %v7743
    %v7771 = vpop.f32.mrf.mxu0
    %v7772 = vadd.f32 0.0, %v7771
    %7773 = vmatmul.f32.gmra.mxu0 %v7746
    %v7774 = vpop.f32.mrf.mxu0
    %v7775 = vadd.f32 0.0, %v7774
    %7776 = vmatmul.f32.gmra.mxu0 %v7749
    %v7777 = vpop.f32.mrf.mxu0
    %v7778 = vadd.f32 0.0, %v7777
    %7779 = vdwg.mxu0
    %v7780 = vadd.f32 %v7684, %v7769
    %v7781 = vadd.f32 %v7685, %v7772
    %v7782 = vadd.f32 %v7686, %v7775
    %v7783 = vadd.f32 %v7687, %v7778
    %s7784 = scalar_lea.vmem %s17, 192
    %v7785 = vld [vmem:[%s7784] sm:$0xff]
    %v7786 = vld [vmem:[%s7784 + $0x8] sm:$0xff]
    %v7787 = vld [vmem:[%s7784 + $0x10] sm:$0xff]
    %v7788 = vld [vmem:[%s7784 + $0x18] sm:$0xff]
    %s7789 = scalar_lea.vmem [#allocation4], 192
    %v7790 = vld [vmem:[%s7789] sm:$0xff]
    %v7791 = vld [vmem:[%s7789 + $0x8] sm:$0xff]
    %v7792 = vld [vmem:[%s7789 + $0x10] sm:$0xff]
    %v7793 = vld [vmem:[%s7789 + $0x18] sm:$0xff]
    %v7795 = vsel %vm3644, %v7790, 0
    %v7798 = vsel %vm3644, %v7791, 0
    %v7801 = vsel %vm3644, %v7792, 0
    %v7804 = vsel %vm3644, %v7793, 0
    %7806 = vmatpush.msra.mxu0 0.0
    %7807 = vmatpush.msra.mxu0 0.0
    %7808 = vmatpush.msra.mxu0 0.0
    %7809 = vmatpush.msra.mxu0 0.0
    %7810 = vmatpush.msra.mxu0 0.0
    %7811 = vmatpush.msra.mxu0 0.0
    %7812 = vmatpush.msra.mxu0 0.0
    %7813 = vmatpush.msra.mxu0 0.0
    %7814 = vmatpush.msra.mxu0 %v7217
    %7815 = vmatpush.msra.mxu0 %v7216
    %7816 = vmatpush.msra.mxu0 %v7215
    %7817 = vmatpush.msra.mxu0 %v7214
    %7818 = vmatpush.msra.mxu0 %v7213
    %7819 = vmatpush.msra.mxu0 %v7212
    %7820 = vmatpush.msra.mxu0 %v7211
    %7821 = vmatpush.msra.mxu0 %v7210
    %7822 = vmatmul.f32.gmra.mxu0 %v7795
    %v7823 = vpop.f32.mrf.mxu0
    %v7824 = vadd.f32 0.0, %v7823
    %7825 = vmatmul.f32.gmra.mxu0 %v7798
    %v7826 = vpop.f32.mrf.mxu0
    %v7827 = vadd.f32 0.0, %v7826
    %7828 = vmatmul.f32.gmra.mxu0 %v7801
    %v7829 = vpop.f32.mrf.mxu0
    %v7830 = vadd.f32 0.0, %v7829
    %7831 = vmatmul.f32.gmra.mxu0 %v7804
    %v7832 = vpop.f32.mrf.mxu0
    %v7833 = vadd.f32 0.0, %v7832
    %7834 = vdwg.mxu0
    %v7836 = vsel %vm2166, %v7824, 0
    %v7839 = vsel %vm2166, %v7827, 0
    %v7842 = vsel %vm2166, %v7830, 0
    %v7845 = vsel %vm2166, %v7833, 0
    %7847 = vmatpush.msra.mxu0 0.0
    %7848 = vmatpush.msra.mxu0 0.0
    %7849 = vmatpush.msra.mxu0 0.0
    %7850 = vmatpush.msra.mxu0 0.0
    %7851 = vmatpush.msra.mxu0 0.0
    %7852 = vmatpush.msra.mxu0 0.0
    %7853 = vmatpush.msra.mxu0 0.0
    %7854 = vmatpush.msra.mxu0 0.0
    %7855 = vmatpush.msra.mxu0 0.0
    %7856 = vmatpush.msra.mxu0 0.0
    %7857 = vmatpush.msra.mxu0 0.0
    %7858 = vmatpush.msra.mxu0 0.0
    %7859 = vmatpush.msra.mxu0 %v7788
    %7860 = vmatpush.msra.mxu0 %v7787
    %7861 = vmatpush.msra.mxu0 %v7786
    %7862 = vmatpush.msra.mxu0 %v7785
    %7863 = vmatmul.f32.gmra.mxu0 %v7836
    %v7864 = vpop.f32.mrf.mxu0
    %v7865 = vadd.f32 0.0, %v7864
    %7866 = vmatmul.f32.gmra.mxu0 %v7839
    %v7867 = vpop.f32.mrf.mxu0
    %v7868 = vadd.f32 0.0, %v7867
    %7869 = vmatmul.f32.gmra.mxu0 %v7842
    %v7870 = vpop.f32.mrf.mxu0
    %v7871 = vadd.f32 0.0, %v7870
    %7872 = vmatmul.f32.gmra.mxu0 %v7845
    %v7873 = vpop.f32.mrf.mxu0
    %v7874 = vadd.f32 0.0, %v7873
    %7875 = vdwg.mxu0
    %v7876 = vadd.f32 %v7780, %v7865
    %v7877 = vadd.f32 %v7781, %v7868
    %v7878 = vadd.f32 %v7782, %v7871
    %v7879 = vadd.f32 %v7783, %v7874
    %s7880 = scalar_lea.vmem %s17, 224
    %v7881 = vld [vmem:[%s7880] sm:$0xff]
    %v7882 = vld [vmem:[%s7880 + $0x8] sm:$0xff]
    %v7883 = vld [vmem:[%s7880 + $0x10] sm:$0xff]
    %v7884 = vld [vmem:[%s7880 + $0x18] sm:$0xff]
    %s7885 = scalar_lea.vmem [#allocation4], 224
    %v7886 = vld [vmem:[%s7885] sm:$0xff]
    %v7887 = vld [vmem:[%s7885 + $0x8] sm:$0xff]
    %v7888 = vld [vmem:[%s7885 + $0x10] sm:$0xff]
    %v7889 = vld [vmem:[%s7885 + $0x18] sm:$0xff]
    %v7891 = vsel %vm3644, %v7886, 0
    %v7894 = vsel %vm3644, %v7887, 0
    %v7897 = vsel %vm3644, %v7888, 0
    %v7900 = vsel %vm3644, %v7889, 0
    %7902 = vmatpush.msra.mxu0 0.0
    %7903 = vmatpush.msra.mxu0 0.0
    %7904 = vmatpush.msra.mxu0 0.0
    %7905 = vmatpush.msra.mxu0 0.0
    %7906 = vmatpush.msra.mxu0 0.0
    %7907 = vmatpush.msra.mxu0 0.0
    %7908 = vmatpush.msra.mxu0 0.0
    %7909 = vmatpush.msra.mxu0 0.0
    %7910 = vmatpush.msra.mxu0 %v7217
    %7911 = vmatpush.msra.mxu0 %v7216
    %7912 = vmatpush.msra.mxu0 %v7215
    %7913 = vmatpush.msra.mxu0 %v7214
    %7914 = vmatpush.msra.mxu0 %v7213
    %7915 = vmatpush.msra.mxu0 %v7212
    %7916 = vmatpush.msra.mxu0 %v7211
    %7917 = vmatpush.msra.mxu0 %v7210
    %7918 = vmatmul.f32.gmra.mxu0 %v7891
    %v7919 = vpop.f32.mrf.mxu0
    %v7920 = vadd.f32 0.0, %v7919
    %7921 = vmatmul.f32.gmra.mxu0 %v7894
    %v7922 = vpop.f32.mrf.mxu0
    %v7923 = vadd.f32 0.0, %v7922
    %7924 = vmatmul.f32.gmra.mxu0 %v7897
    %v7925 = vpop.f32.mrf.mxu0
    %v7926 = vadd.f32 0.0, %v7925
    %7927 = vmatmul.f32.gmra.mxu0 %v7900
    %v7928 = vpop.f32.mrf.mxu0
    %v7929 = vadd.f32 0.0, %v7928
    %7930 = vdwg.mxu0
    %v7932 = vsel %vm2166, %v7920, 0
    %v7935 = vsel %vm2166, %v7923, 0
    %v7938 = vsel %vm2166, %v7926, 0
    %v7941 = vsel %vm2166, %v7929, 0
    %7943 = vmatpush.msra.mxu0 0.0
    %7944 = vmatpush.msra.mxu0 0.0
    %7945 = vmatpush.msra.mxu0 0.0
    %7946 = vmatpush.msra.mxu0 0.0
    %7947 = vmatpush.msra.mxu0 0.0
    %7948 = vmatpush.msra.mxu0 0.0
    %7949 = vmatpush.msra.mxu0 0.0
    %7950 = vmatpush.msra.mxu0 0.0
    %7951 = vmatpush.msra.mxu0 0.0
    %7952 = vmatpush.msra.mxu0 0.0
    %7953 = vmatpush.msra.mxu0 0.0
    %7954 = vmatpush.msra.mxu0 0.0
    %7955 = vmatpush.msra.mxu0 %v7884
    %7956 = vmatpush.msra.mxu0 %v7883
    %7957 = vmatpush.msra.mxu0 %v7882
    %7958 = vmatpush.msra.mxu0 %v7881
    %7959 = vmatmul.f32.gmra.mxu0 %v7932
    %v7960 = vpop.f32.mrf.mxu0
    %v7961 = vadd.f32 0.0, %v7960
    %7962 = vmatmul.f32.gmra.mxu0 %v7935
    %v7963 = vpop.f32.mrf.mxu0
    %v7964 = vadd.f32 0.0, %v7963
    %7965 = vmatmul.f32.gmra.mxu0 %v7938
    %v7966 = vpop.f32.mrf.mxu0
    %v7967 = vadd.f32 0.0, %v7966
    %7968 = vmatmul.f32.gmra.mxu0 %v7941
    %v7969 = vpop.f32.mrf.mxu0
    %v7970 = vadd.f32 0.0, %v7969
    %7971 = vdwg.mxu0
    %v7972 = vadd.f32 %v7876, %v7961
    %v7973 = vadd.f32 %v7877, %v7964
    %v7974 = vadd.f32 %v7878, %v7967
    %v7975 = vadd.f32 %v7879, %v7970
    %s7976 = scalar_lea.vmem %s17, 256
    %v7977 = vld [vmem:[%s7976] sm:$0xff]
    %v7978 = vld [vmem:[%s7976 + $0x8] sm:$0xff]
    %v7979 = vld [vmem:[%s7976 + $0x10] sm:$0xff]
    %v7980 = vld [vmem:[%s7976 + $0x18] sm:$0xff]
    %s7981 = scalar_lea.vmem [#allocation4], 256
    %v7982 = vld [vmem:[%s7981] sm:$0xff]
    %v7983 = vld [vmem:[%s7981 + $0x8] sm:$0xff]
    %v7984 = vld [vmem:[%s7981 + $0x10] sm:$0xff]
    %v7985 = vld [vmem:[%s7981 + $0x18] sm:$0xff]
    %v7987 = vsel %vm3644, %v7982, 0
    %v7990 = vsel %vm3644, %v7983, 0
    %v7993 = vsel %vm3644, %v7984, 0
    %v7996 = vsel %vm3644, %v7985, 0
    %7998 = vmatpush.msra.mxu0 0.0
    %7999 = vmatpush.msra.mxu0 0.0
    %8000 = vmatpush.msra.mxu0 0.0
    %8001 = vmatpush.msra.mxu0 0.0
    %8002 = vmatpush.msra.mxu0 0.0
    %8003 = vmatpush.msra.mxu0 0.0
    %8004 = vmatpush.msra.mxu0 0.0
    %8005 = vmatpush.msra.mxu0 0.0
    %8006 = vmatpush.msra.mxu0 %v7217
    %8007 = vmatpush.msra.mxu0 %v7216
    %8008 = vmatpush.msra.mxu0 %v7215
    %8009 = vmatpush.msra.mxu0 %v7214
    %8010 = vmatpush.msra.mxu0 %v7213
    %8011 = vmatpush.msra.mxu0 %v7212
    %8012 = vmatpush.msra.mxu0 %v7211
    %8013 = vmatpush.msra.mxu0 %v7210
    %8014 = vmatmul.f32.gmra.mxu0 %v7987
    %v8015 = vpop.f32.mrf.mxu0
    %v8016 = vadd.f32 0.0, %v8015
    %8017 = vmatmul.f32.gmra.mxu0 %v7990
    %v8018 = vpop.f32.mrf.mxu0
    %v8019 = vadd.f32 0.0, %v8018
    %8020 = vmatmul.f32.gmra.mxu0 %v7993
    %v8021 = vpop.f32.mrf.mxu0
    %v8022 = vadd.f32 0.0, %v8021
    %8023 = vmatmul.f32.gmra.mxu0 %v7996
    %v8024 = vpop.f32.mrf.mxu0
    %v8025 = vadd.f32 0.0, %v8024
    %8026 = vdwg.mxu0
    %v8028 = vsel %vm2166, %v8016, 0
    %v8031 = vsel %vm2166, %v8019, 0
    %v8034 = vsel %vm2166, %v8022, 0
    %v8037 = vsel %vm2166, %v8025, 0
    %8039 = vmatpush.msra.mxu0 0.0
    %8040 = vmatpush.msra.mxu0 0.0
    %8041 = vmatpush.msra.mxu0 0.0
    %8042 = vmatpush.msra.mxu0 0.0
    %8043 = vmatpush.msra.mxu0 0.0
    %8044 = vmatpush.msra.mxu0 0.0
    %8045 = vmatpush.msra.mxu0 0.0
    %8046 = vmatpush.msra.mxu0 0.0
    %8047 = vmatpush.msra.mxu0 0.0
    %8048 = vmatpush.msra.mxu0 0.0
    %8049 = vmatpush.msra.mxu0 0.0
    %8050 = vmatpush.msra.mxu0 0.0
    %8051 = vmatpush.msra.mxu0 %v7980
    %8052 = vmatpush.msra.mxu0 %v7979
    %8053 = vmatpush.msra.mxu0 %v7978
    %8054 = vmatpush.msra.mxu0 %v7977
    %8055 = vmatmul.f32.gmra.mxu0 %v8028
    %v8056 = vpop.f32.mrf.mxu0
    %v8057 = vadd.f32 0.0, %v8056
    %8058 = vmatmul.f32.gmra.mxu0 %v8031
    %v8059 = vpop.f32.mrf.mxu0
    %v8060 = vadd.f32 0.0, %v8059
    %8061 = vmatmul.f32.gmra.mxu0 %v8034
    %v8062 = vpop.f32.mrf.mxu0
    %v8063 = vadd.f32 0.0, %v8062
    %8064 = vmatmul.f32.gmra.mxu0 %v8037
    %v8065 = vpop.f32.mrf.mxu0
    %v8066 = vadd.f32 0.0, %v8065
    %8067 = vdwg.mxu0
    %v8068 = vadd.f32 %v7972, %v8057
    %v8069 = vadd.f32 %v7973, %v8060
    %v8070 = vadd.f32 %v7974, %v8063
    %v8071 = vadd.f32 %v7975, %v8066
    %8072 = vadd.xlane.f32.xlu0 %v8068
    %v8073 = vpop.xlane.xlu0 %8072
    %8074 = vadd.xlane.f32.xlu0 %v8069
    %v8075 = vpop.xlane.xlu0 %8074
    %8076 = vadd.xlane.f32.xlu0 %v8070
    %v8077 = vpop.xlane.xlu0 %8076
    %8078 = vadd.xlane.f32.xlu0 %v8071
    %v8079 = vpop.xlane.xlu0 %8078
    %v8080 = vmul.f32 %v8073, %v1925
    %v8081 = vmul.f32 %v8075, %v1925
    %v8082 = vmul.f32 %v8077, %v1925
    %v8083 = vmul.f32 %v8079, %v1925
    %v8084 = vsub.f32 %v8068, %v8080
    %v8085 = vsub.f32 %v8069, %v8081
    %v8086 = vsub.f32 %v8070, %v8082
    %v8087 = vsub.f32 %v8071, %v8083
    %v8088 = vmul.f32 %v8084, %v8084
    %v8089 = vmul.f32 %v8085, %v8085
    %v8090 = vmul.f32 %v8086, %v8086
    %v8091 = vmul.f32 %v8087, %v8087
    %8092 = vadd.xlane.f32.xlu0 %v8088
    %v8093 = vpop.xlane.xlu0 %8092
    %8094 = vadd.xlane.f32.xlu0 %v8089
    %v8095 = vpop.xlane.xlu0 %8094
    %8096 = vadd.xlane.f32.xlu0 %v8090
    %v8097 = vpop.xlane.xlu0 %8096
    %8098 = vadd.xlane.f32.xlu0 %v8091
    %v8099 = vpop.xlane.xlu0 %8098
    %v8100 = vmul.f32 %v8093, %v1925
    %v8101 = vmul.f32 %v8095, %v1925
    %v8102 = vmul.f32 %v8097, %v1925
    %v8103 = vmul.f32 %v8099, %v1925
    %v8104 = vadd.f32 %v8100, 1e-05
    %v8105 = vadd.f32 %v8101, 1e-05
    %v8106 = vadd.f32 %v8102, 1e-05
    %v8107 = vadd.f32 %v8103, 1e-05
    %v8108 = vrsqrt.pop %v8104
    %v8109 = vmul.f32 %v8108, %v8104
    %v8110 = vmul.f32 %v8109, %v8108
    %v8111 = vmul.f32 0.5, %v8110
    %v8112 = vsub.f32 1.5, %v8111
    %v8113 = vmul.f32 %v8108, %v8112
    %vm8114 = vweird.f32 %v8104
    %vm8115 = vweird.f32 %v8108
    %vm8116 = vmor %vm8114, %vm8115
    %v8117 = vsel %vm8116, %v8108, %v8113
    %v8118 = vrsqrt.pop %v8105
    %v8119 = vmul.f32 %v8118, %v8105
    %v8120 = vmul.f32 %v8119, %v8118
    %v8121 = vmul.f32 0.5, %v8120
    %v8122 = vsub.f32 1.5, %v8121
    %v8123 = vmul.f32 %v8118, %v8122
    %vm8124 = vweird.f32 %v8105
    %vm8125 = vweird.f32 %v8118
    %vm8126 = vmor %vm8124, %vm8125
    %v8127 = vsel %vm8126, %v8118, %v8123
    %v8128 = vrsqrt.pop %v8106
    %v8129 = vmul.f32 %v8128, %v8106
    %v8130 = vmul.f32 %v8129, %v8128
    %v8131 = vmul.f32 0.5, %v8130
    %v8132 = vsub.f32 1.5, %v8131
    %v8133 = vmul.f32 %v8128, %v8132
    %vm8134 = vweird.f32 %v8106
    %vm8135 = vweird.f32 %v8128
    %vm8136 = vmor %vm8134, %vm8135
    %v8137 = vsel %vm8136, %v8128, %v8133
    %v8138 = vrsqrt.pop %v8107
    %v8139 = vmul.f32 %v8138, %v8107
    %v8140 = vmul.f32 %v8139, %v8138
    %v8141 = vmul.f32 0.5, %v8140
    %v8142 = vsub.f32 1.5, %v8141
    %v8143 = vmul.f32 %v8138, %v8142
    %vm8144 = vweird.f32 %v8107
    %vm8145 = vweird.f32 %v8138
    %vm8146 = vmor %vm8144, %vm8145
    %v8147 = vsel %vm8146, %v8138, %v8143
    %v8148 = vmul.f32 %v8084, %v8117
    %v8149 = vmul.f32 %v8085, %v8127
    %v8150 = vmul.f32 %v8086, %v8137
    %v8151 = vmul.f32 %v8087, %v8147
    %v8152 = vld [vmem:[%s19] sm:$0xff]
    %v8153 = vld [vmem:[%s19 + $0x8] sm:$0xff]
    %v8154 = vld [vmem:[%s19 + $0x10] sm:$0xff]
    %v8155 = vld [vmem:[%s19 + $0x18] sm:$0xff]
    %8157 = vset.pattern.permute.xlu0 0
    %8158 = vperm.xlu0 %8157, %v8152
    %v8159 = vpop.permute.xlu0 %8158
    %8162 = vset.pattern.permute.xlu0 0
    %8163 = vperm.xlu0 %8162, %v8153
    %v8164 = vpop.permute.xlu0 %8163
    %8167 = vset.pattern.permute.xlu0 0
    %8168 = vperm.xlu0 %8167, %v8154
    %v8169 = vpop.permute.xlu0 %8168
    %8172 = vset.pattern.permute.xlu0 0
    %8173 = vperm.xlu0 %8172, %v8155
    %v8174 = vpop.permute.xlu0 %8173
    %v8176 = vmul.f32 %v8148, %v8159
    %v8177 = vmul.f32 %v8149, %v8164
    %v8178 = vmul.f32 %v8150, %v8169
    %v8179 = vmul.f32 %v8151, %v8174
    %v8180 = vld [vmem:[%s20] sm:$0xff]
    %v8181 = vld [vmem:[%s20 + $0x8] sm:$0xff]
    %v8182 = vld [vmem:[%s20 + $0x10] sm:$0xff]
    %v8183 = vld [vmem:[%s20 + $0x18] sm:$0xff]
    %8185 = vset.pattern.permute.xlu0 0
    %8186 = vperm.xlu0 %8185, %v8180
    %v8187 = vpop.permute.xlu0 %8186
    %8190 = vset.pattern.permute.xlu0 0
    %8191 = vperm.xlu0 %8190, %v8181
    %v8192 = vpop.permute.xlu0 %8191
    %8195 = vset.pattern.permute.xlu0 0
    %8196 = vperm.xlu0 %8195, %v8182
    %v8197 = vpop.permute.xlu0 %8196
    %8200 = vset.pattern.permute.xlu0 0
    %8201 = vperm.xlu0 %8200, %v8183
    %v8202 = vpop.permute.xlu0 %8201
    %v8204 = vadd.f32 %v8176, %v8187
    %v8205 = vadd.f32 %v8177, %v8192
    %v8206 = vadd.f32 %v8178, %v8197
    %v8207 = vadd.f32 %v8179, %v8202
    %v8208 = vmax.f32 %v8204, 0.0
    %v8209 = vmax.f32 %v8205, 0.0
    %v8210 = vmax.f32 %v8206, 0.0
    %v8211 = vmax.f32 %v8207, 0.0
    %v8212 = vld [vmem:[#allocation6] sm:$0xff]
    %v8213 = vld [vmem:[#allocation6 + $0x8] sm:$0xff]
    %v8214 = vld [vmem:[#allocation6 + $0x10] sm:$0xff]
    %v8215 = vld [vmem:[#allocation6 + $0x18] sm:$0xff]
    %v8216 = vld [vmem:[#allocation6 + $0x20] sm:$0xff]
    %v8217 = vld [vmem:[#allocation6 + $0x28] sm:$0xff]
    %v8218 = vld [vmem:[#allocation6 + $0x30] sm:$0xff]
    %v8219 = vld [vmem:[#allocation6 + $0x38] sm:$0xff]
    %v8220 = vld [vmem:[#allocation6 + $0x40] sm:$0xff]
    %v8221 = vld [vmem:[#allocation6 + $0x48] sm:$0xff]
    %v8222 = vld [vmem:[#allocation6 + $0x50] sm:$0xff]
    %v8223 = vld [vmem:[#allocation6 + $0x58] sm:$0xff]
    %v8224 = vld [vmem:[#allocation6 + $0x60] sm:$0xff]
    %v8225 = vld [vmem:[#allocation6 + $0x68] sm:$0xff]
    %v8226 = vld [vmem:[#allocation6 + $0x70] sm:$0xff]
    %v8227 = vld [vmem:[#allocation6 + $0x78] sm:$0xff]
    %v8228 = vld [vmem:[#allocation6 + $0x80] sm:$0xff]
    %v8229 = vld [vmem:[#allocation6 + $0x88] sm:$0xff]
    %v8230 = vld [vmem:[#allocation6 + $0x90] sm:$0xff]
    %v8231 = vld [vmem:[#allocation6 + $0x98] sm:$0xff]
    %v8232 = vld [vmem:[#allocation6 + $0xa0] sm:$0xff]
    %v8233 = vld [vmem:[#allocation6 + $0xa8] sm:$0xff]
    %v8234 = vld [vmem:[#allocation6 + $0xb0] sm:$0xff]
    %v8235 = vld [vmem:[#allocation6 + $0xb8] sm:$0xff]
    %v8236 = vld [vmem:[#allocation6 + $0xc0] sm:$0xff]
    %v8237 = vld [vmem:[#allocation6 + $0xc8] sm:$0xff]
    %v8238 = vld [vmem:[#allocation6 + $0xd0] sm:$0xff]
    %v8239 = vld [vmem:[#allocation6 + $0xd8] sm:$0xff]
    %v8240 = vld [vmem:[#allocation6 + $0xe0] sm:$0xff]
    %v8241 = vld [vmem:[#allocation6 + $0xe8] sm:$0xff]
    %v8242 = vld [vmem:[#allocation6 + $0xf0] sm:$0xff]
    %v8243 = vld [vmem:[#allocation6 + $0xf8] sm:$0xff]
    %v8244 = vld [vmem:[#allocation6 + $0x100] sm:$0xff]
    %v8245 = vld [vmem:[#allocation6 + $0x108] sm:$0xff]
    %v8246 = vld [vmem:[#allocation6 + $0x110] sm:$0xff]
    %v8247 = vld [vmem:[#allocation6 + $0x118] sm:$0xff]
    %v8248 = vld [vmem:[#allocation6 + $0x120] sm:$0xff]
    %v8249 = vld [vmem:[#allocation6 + $0x128] sm:$0xff]
    %v8250 = vld [vmem:[#allocation6 + $0x130] sm:$0xff]
    %v8251 = vld [vmem:[#allocation6 + $0x138] sm:$0xff]
    %v8252 = vld [vmem:[#allocation6 + $0x140] sm:$0xff]
    %v8253 = vld [vmem:[#allocation6 + $0x148] sm:$0xff]
    %v8254 = vld [vmem:[#allocation6 + $0x150] sm:$0xff]
    %v8255 = vld [vmem:[#allocation6 + $0x158] sm:$0xff]
    %v8256 = vld [vmem:[#allocation6 + $0x160] sm:$0xff]
    %v8257 = vld [vmem:[#allocation6 + $0x168] sm:$0xff]
    %v8258 = vld [vmem:[#allocation6 + $0x170] sm:$0xff]
    %v8259 = vld [vmem:[#allocation6 + $0x178] sm:$0xff]
    %v8260 = vld [vmem:[#allocation6 + $0x180] sm:$0xff]
    %v8261 = vld [vmem:[#allocation6 + $0x188] sm:$0xff]
    %v8262 = vld [vmem:[#allocation6 + $0x190] sm:$0xff]
    %v8263 = vld [vmem:[#allocation6 + $0x198] sm:$0xff]
    %v8264 = vld [vmem:[#allocation6 + $0x1a0] sm:$0xff]
    %v8265 = vld [vmem:[#allocation6 + $0x1a8] sm:$0xff]
    %v8266 = vld [vmem:[#allocation6 + $0x1b0] sm:$0xff]
    %v8267 = vld [vmem:[#allocation6 + $0x1b8] sm:$0xff]
    %v8268 = vld [vmem:[#allocation6 + $0x1c0] sm:$0xff]
    %v8269 = vld [vmem:[#allocation6 + $0x1c8] sm:$0xff]
    %v8270 = vld [vmem:[#allocation6 + $0x1d0] sm:$0xff]
    %v8271 = vld [vmem:[#allocation6 + $0x1d8] sm:$0xff]
    %v8272 = vld [vmem:[#allocation6 + $0x1e0] sm:$0xff]
    %v8273 = vld [vmem:[#allocation6 + $0x1e8] sm:$0xff]
    %v8274 = vld [vmem:[#allocation6 + $0x1f0] sm:$0xff]
    %v8275 = vld [vmem:[#allocation6 + $0x1f8] sm:$0xff]
    %v8276 = vld [vmem:[%s22] sm:$0xf]
    %v8278 = vsel %vm2166, %v8276, 0
    %8280 = vmatpush.msra.mxu0 0.0
    %8281 = vmatpush.msra.mxu0 0.0
    %8282 = vmatpush.msra.mxu0 0.0
    %8283 = vmatpush.msra.mxu0 0.0
    %8284 = vmatpush.msra.mxu0 0.0
    %8285 = vmatpush.msra.mxu0 0.0
    %8286 = vmatpush.msra.mxu0 0.0
    %8287 = vmatpush.msra.mxu0 0.0
    %8288 = vmatpush.msra.mxu0 0.0
    %8289 = vmatpush.msra.mxu0 0.0
    %8290 = vmatpush.msra.mxu0 0.0
    %8291 = vmatpush.msra.mxu0 0.0
    %8292 = vmatpush.msra.mxu0 %v8211
    %8293 = vmatpush.msra.mxu0 %v8210
    %8294 = vmatpush.msra.mxu0 %v8209
    %8295 = vmatpush.msra.mxu0 %v8208
    %8296 = vmatmul.f32.gmra.mxu0 %v8278
    %v8297 = vpop.f32.mrf.mxu0
    %v8298 = vadd.f32 0.0, %v8297
    %8299 = vdwg.mxu0
    %s8300 = scalar_lea.vmem [#allocation6], 512
    %v8301 = vld [vmem:[%s8300] sm:$0xff]
    %v8302 = vld [vmem:[%s8300 + $0x8] sm:$0xff]
    %v8303 = vld [vmem:[%s8300 + $0x10] sm:$0xff]
    %v8304 = vld [vmem:[%s8300 + $0x18] sm:$0xff]
    %v8305 = vld [vmem:[%s8300 + $0x20] sm:$0xff]
    %v8306 = vld [vmem:[%s8300 + $0x28] sm:$0xff]
    %v8307 = vld [vmem:[%s8300 + $0x30] sm:$0xff]
    %v8308 = vld [vmem:[%s8300 + $0x38] sm:$0xff]
    %v8309 = vld [vmem:[%s8300 + $0x40] sm:$0xff]
    %v8310 = vld [vmem:[%s8300 + $0x48] sm:$0xff]
    %v8311 = vld [vmem:[%s8300 + $0x50] sm:$0xff]
    %v8312 = vld [vmem:[%s8300 + $0x58] sm:$0xff]
    %v8313 = vld [vmem:[%s8300 + $0x60] sm:$0xff]
    %v8314 = vld [vmem:[%s8300 + $0x68] sm:$0xff]
    %v8315 = vld [vmem:[%s8300 + $0x70] sm:$0xff]
    %v8316 = vld [vmem:[%s8300 + $0x78] sm:$0xff]
    %v8317 = vld [vmem:[%s8300 + $0x80] sm:$0xff]
    %v8318 = vld [vmem:[%s8300 + $0x88] sm:$0xff]
    %v8319 = vld [vmem:[%s8300 + $0x90] sm:$0xff]
    %v8320 = vld [vmem:[%s8300 + $0x98] sm:$0xff]
    %v8321 = vld [vmem:[%s8300 + $0xa0] sm:$0xff]
    %v8322 = vld [vmem:[%s8300 + $0xa8] sm:$0xff]
    %v8323 = vld [vmem:[%s8300 + $0xb0] sm:$0xff]
    %v8324 = vld [vmem:[%s8300 + $0xb8] sm:$0xff]
    %v8325 = vld [vmem:[%s8300 + $0xc0] sm:$0xff]
    %v8326 = vld [vmem:[%s8300 + $0xc8] sm:$0xff]
    %v8327 = vld [vmem:[%s8300 + $0xd0] sm:$0xff]
    %v8328 = vld [vmem:[%s8300 + $0xd8] sm:$0xff]
    %v8329 = vld [vmem:[%s8300 + $0xe0] sm:$0xff]
    %v8330 = vld [vmem:[%s8300 + $0xe8] sm:$0xff]
    %v8331 = vld [vmem:[%s8300 + $0xf0] sm:$0xff]
    %v8332 = vld [vmem:[%s8300 + $0xf8] sm:$0xff]
    %v8333 = vld [vmem:[%s8300 + $0x100] sm:$0xff]
    %v8334 = vld [vmem:[%s8300 + $0x108] sm:$0xff]
    %v8335 = vld [vmem:[%s8300 + $0x110] sm:$0xff]
    %v8336 = vld [vmem:[%s8300 + $0x118] sm:$0xff]
    %v8337 = vld [vmem:[%s8300 + $0x120] sm:$0xff]
    %v8338 = vld [vmem:[%s8300 + $0x128] sm:$0xff]
    %v8339 = vld [vmem:[%s8300 + $0x130] sm:$0xff]
    %v8340 = vld [vmem:[%s8300 + $0x138] sm:$0xff]
    %v8341 = vld [vmem:[%s8300 + $0x140] sm:$0xff]
    %v8342 = vld [vmem:[%s8300 + $0x148] sm:$0xff]
    %v8343 = vld [vmem:[%s8300 + $0x150] sm:$0xff]
    %v8344 = vld [vmem:[%s8300 + $0x158] sm:$0xff]
    %v8345 = vld [vmem:[%s8300 + $0x160] sm:$0xff]
    %v8346 = vld [vmem:[%s8300 + $0x168] sm:$0xff]
    %v8347 = vld [vmem:[%s8300 + $0x170] sm:$0xff]
    %v8348 = vld [vmem:[%s8300 + $0x178] sm:$0xff]
    %v8349 = vld [vmem:[%s8300 + $0x180] sm:$0xff]
    %v8350 = vld [vmem:[%s8300 + $0x188] sm:$0xff]
    %v8351 = vld [vmem:[%s8300 + $0x190] sm:$0xff]
    %v8352 = vld [vmem:[%s8300 + $0x198] sm:$0xff]
    %v8353 = vld [vmem:[%s8300 + $0x1a0] sm:$0xff]
    %v8354 = vld [vmem:[%s8300 + $0x1a8] sm:$0xff]
    %v8355 = vld [vmem:[%s8300 + $0x1b0] sm:$0xff]
    %v8356 = vld [vmem:[%s8300 + $0x1b8] sm:$0xff]
    %v8357 = vld [vmem:[%s8300 + $0x1c0] sm:$0xff]
    %v8358 = vld [vmem:[%s8300 + $0x1c8] sm:$0xff]
    %v8359 = vld [vmem:[%s8300 + $0x1d0] sm:$0xff]
    %v8360 = vld [vmem:[%s8300 + $0x1d8] sm:$0xff]
    %v8361 = vld [vmem:[%s8300 + $0x1e0] sm:$0xff]
    %v8362 = vld [vmem:[%s8300 + $0x1e8] sm:$0xff]
    %v8363 = vld [vmem:[%s8300 + $0x1f0] sm:$0xff]
    %v8364 = vld [vmem:[%s8300 + $0x1f8] sm:$0xff]
    %s8365 = scalar_lea.vmem %s22, 4
    %v8366 = vld [vmem:[%s8365] sm:$0xf]
    %v8368 = vsel %vm2166, %v8366, 0
    %8370 = vmatpush.msra.mxu0 0.0
    %8371 = vmatpush.msra.mxu0 0.0
    %8372 = vmatpush.msra.mxu0 0.0
    %8373 = vmatpush.msra.mxu0 0.0
    %8374 = vmatpush.msra.mxu0 0.0
    %8375 = vmatpush.msra.mxu0 0.0
    %8376 = vmatpush.msra.mxu0 0.0
    %8377 = vmatpush.msra.mxu0 0.0
    %8378 = vmatpush.msra.mxu0 0.0
    %8379 = vmatpush.msra.mxu0 0.0
    %8380 = vmatpush.msra.mxu0 0.0
    %8381 = vmatpush.msra.mxu0 0.0
    %8382 = vmatpush.msra.mxu0 %v8211
    %8383 = vmatpush.msra.mxu0 %v8210
    %8384 = vmatpush.msra.mxu0 %v8209
    %8385 = vmatpush.msra.mxu0 %v8208
    %8386 = vmatmul.f32.gmra.mxu0 %v8368
    %v8387 = vpop.f32.mrf.mxu0
    %v8388 = vadd.f32 0.0, %v8387
    %8389 = vdwg.mxu0
    %8390 = vmatpush.msra.mxu0 %v8361
    %8391 = vmatpush.msra.mxu0 %v8357
    %8392 = vmatpush.msra.mxu0 %v8353
    %8393 = vmatpush.msra.mxu0 %v8349
    %8394 = vmatpush.msra.mxu0 %v8345
    %8395 = vmatpush.msra.mxu0 %v8341
    %8396 = vmatpush.msra.mxu0 %v8337
    %8397 = vmatpush.msra.mxu0 %v8333
    %8398 = vmatpush.msra.mxu0 %v8329
    %8399 = vmatpush.msra.mxu0 %v8325
    %8400 = vmatpush.msra.mxu0 %v8321
    %8401 = vmatpush.msra.mxu0 %v8317
    %8402 = vmatpush.msra.mxu0 %v8313
    %8403 = vmatpush.msra.mxu0 %v8309
    %8404 = vmatpush.msra.mxu0 %v8305
    %8405 = vmatpush.msra.mxu0 %v8301
    %8406 = vmatmul.f32.gmra.mxu0 %v8388
    %v8407 = vpop.f32.mrf.mxu0
    %v8408 = vadd.f32 0.0, %v8407
    %8409 = vdwg.mxu0
    %8410 = vmatpush.msra.mxu0 %v8362
    %8411 = vmatpush.msra.mxu0 %v8358
    %8412 = vmatpush.msra.mxu0 %v8354
    %8413 = vmatpush.msra.mxu0 %v8350
    %8414 = vmatpush.msra.mxu0 %v8346
    %8415 = vmatpush.msra.mxu0 %v8342
    %8416 = vmatpush.msra.mxu0 %v8338
    %8417 = vmatpush.msra.mxu0 %v8334
    %8418 = vmatpush.msra.mxu0 %v8330
    %8419 = vmatpush.msra.mxu0 %v8326
    %8420 = vmatpush.msra.mxu0 %v8322
    %8421 = vmatpush.msra.mxu0 %v8318
    %8422 = vmatpush.msra.mxu0 %v8314
    %8423 = vmatpush.msra.mxu0 %v8310
    %8424 = vmatpush.msra.mxu0 %v8306
    %8425 = vmatpush.msra.mxu0 %v8302
    %8426 = vmatmul.f32.gmra.mxu0 %v8388
    %v8427 = vpop.f32.mrf.mxu0
    %v8428 = vadd.f32 0.0, %v8427
    %8429 = vdwg.mxu0
    %8430 = vmatpush.msra.mxu0 %v8363
    %8431 = vmatpush.msra.mxu0 %v8359
    %8432 = vmatpush.msra.mxu0 %v8355
    %8433 = vmatpush.msra.mxu0 %v8351
    %8434 = vmatpush.msra.mxu0 %v8347
    %8435 = vmatpush.msra.mxu0 %v8343
    %8436 = vmatpush.msra.mxu0 %v8339
    %8437 = vmatpush.msra.mxu0 %v8335
    %8438 = vmatpush.msra.mxu0 %v8331
    %8439 = vmatpush.msra.mxu0 %v8327
    %8440 = vmatpush.msra.mxu0 %v8323
    %8441 = vmatpush.msra.mxu0 %v8319
    %8442 = vmatpush.msra.mxu0 %v8315
    %8443 = vmatpush.msra.mxu0 %v8311
    %8444 = vmatpush.msra.mxu0 %v8307
    %8445 = vmatpush.msra.mxu0 %v8303
    %8446 = vmatmul.f32.gmra.mxu0 %v8388
    %v8447 = vpop.f32.mrf.mxu0
    %v8448 = vadd.f32 0.0, %v8447
    %8449 = vdwg.mxu0
    %8450 = vmatpush.msra.mxu0 %v8364
    %8451 = vmatpush.msra.mxu0 %v8360
    %8452 = vmatpush.msra.mxu0 %v8356
    %8453 = vmatpush.msra.mxu0 %v8352
    %8454 = vmatpush.msra.mxu0 %v8348
    %8455 = vmatpush.msra.mxu0 %v8344
    %8456 = vmatpush.msra.mxu0 %v8340
    %8457 = vmatpush.msra.mxu0 %v8336
    %8458 = vmatpush.msra.mxu0 %v8332
    %8459 = vmatpush.msra.mxu0 %v8328
    %8460 = vmatpush.msra.mxu0 %v8324
    %8461 = vmatpush.msra.mxu0 %v8320
    %8462 = vmatpush.msra.mxu0 %v8316
    %8463 = vmatpush.msra.mxu0 %v8312
    %8464 = vmatpush.msra.mxu0 %v8308
    %8465 = vmatpush.msra.mxu0 %v8304
    %8466 = vmatmul.f32.gmra.mxu0 %v8388
    %v8467 = vpop.f32.mrf.mxu0
    %v8468 = vadd.f32 0.0, %v8467
    %8469 = vdwg.mxu0
    %8470 = vmatpush.msra.mxu0 %v8272
    %8471 = vmatpush.msra.mxu0 %v8268
    %8472 = vmatpush.msra.mxu0 %v8264
    %8473 = vmatpush.msra.mxu0 %v8260
    %8474 = vmatpush.msra.mxu0 %v8256
    %8475 = vmatpush.msra.mxu0 %v8252
    %8476 = vmatpush.msra.mxu0 %v8248
    %8477 = vmatpush.msra.mxu0 %v8244
    %8478 = vmatpush.msra.mxu0 %v8240
    %8479 = vmatpush.msra.mxu0 %v8236
    %8480 = vmatpush.msra.mxu0 %v8232
    %8481 = vmatpush.msra.mxu0 %v8228
    %8482 = vmatpush.msra.mxu0 %v8224
    %8483 = vmatpush.msra.mxu0 %v8220
    %8484 = vmatpush.msra.mxu0 %v8216
    %8485 = vmatpush.msra.mxu0 %v8212
    %8486 = vmatmul.f32.gmra.mxu0 %v8298
    %v8487 = vpop.f32.mrf.mxu0
    %v8488 = vadd.f32 %v8408, %v8487
    %8489 = vdwg.mxu0
    %8490 = vmatpush.msra.mxu0 %v8273
    %8491 = vmatpush.msra.mxu0 %v8269
    %8492 = vmatpush.msra.mxu0 %v8265
    %8493 = vmatpush.msra.mxu0 %v8261
    %8494 = vmatpush.msra.mxu0 %v8257
    %8495 = vmatpush.msra.mxu0 %v8253
    %8496 = vmatpush.msra.mxu0 %v8249
    %8497 = vmatpush.msra.mxu0 %v8245
    %8498 = vmatpush.msra.mxu0 %v8241
    %8499 = vmatpush.msra.mxu0 %v8237
    %8500 = vmatpush.msra.mxu0 %v8233
    %8501 = vmatpush.msra.mxu0 %v8229
    %8502 = vmatpush.msra.mxu0 %v8225
    %8503 = vmatpush.msra.mxu0 %v8221
    %8504 = vmatpush.msra.mxu0 %v8217
    %8505 = vmatpush.msra.mxu0 %v8213
    %8506 = vmatmul.f32.gmra.mxu0 %v8298
    %v8507 = vpop.f32.mrf.mxu0
    %v8508 = vadd.f32 %v8428, %v8507
    %8509 = vdwg.mxu0
    %8510 = vmatpush.msra.mxu0 %v8274
    %8511 = vmatpush.msra.mxu0 %v8270
    %8512 = vmatpush.msra.mxu0 %v8266
    %8513 = vmatpush.msra.mxu0 %v8262
    %8514 = vmatpush.msra.mxu0 %v8258
    %8515 = vmatpush.msra.mxu0 %v8254
    %8516 = vmatpush.msra.mxu0 %v8250
    %8517 = vmatpush.msra.mxu0 %v8246
    %8518 = vmatpush.msra.mxu0 %v8242
    %8519 = vmatpush.msra.mxu0 %v8238
    %8520 = vmatpush.msra.mxu0 %v8234
    %8521 = vmatpush.msra.mxu0 %v8230
    %8522 = vmatpush.msra.mxu0 %v8226
    %8523 = vmatpush.msra.mxu0 %v8222
    %8524 = vmatpush.msra.mxu0 %v8218
    %8525 = vmatpush.msra.mxu0 %v8214
    %8526 = vmatmul.f32.gmra.mxu0 %v8298
    %v8527 = vpop.f32.mrf.mxu0
    %v8528 = vadd.f32 %v8448, %v8527
    %8529 = vdwg.mxu0
    %8530 = vmatpush.msra.mxu0 %v8275
    %8531 = vmatpush.msra.mxu0 %v8271
    %8532 = vmatpush.msra.mxu0 %v8267
    %8533 = vmatpush.msra.mxu0 %v8263
    %8534 = vmatpush.msra.mxu0 %v8259
    %8535 = vmatpush.msra.mxu0 %v8255
    %8536 = vmatpush.msra.mxu0 %v8251
    %8537 = vmatpush.msra.mxu0 %v8247
    %8538 = vmatpush.msra.mxu0 %v8243
    %8539 = vmatpush.msra.mxu0 %v8239
    %8540 = vmatpush.msra.mxu0 %v8235
    %8541 = vmatpush.msra.mxu0 %v8231
    %8542 = vmatpush.msra.mxu0 %v8227
    %8543 = vmatpush.msra.mxu0 %v8223
    %8544 = vmatpush.msra.mxu0 %v8219
    %8545 = vmatpush.msra.mxu0 %v8215
    %8546 = vmatmul.f32.gmra.mxu0 %v8298
    %v8547 = vpop.f32.mrf.mxu0
    %v8548 = vadd.f32 %v8468, %v8547
    %8549 = vdwg.mxu0
    %s8550 = scalar_lea.vmem [#allocation6], 1024
    %v8551 = vld [vmem:[%s8550] sm:$0xff]
    %v8552 = vld [vmem:[%s8550 + $0x8] sm:$0xff]
    %v8553 = vld [vmem:[%s8550 + $0x10] sm:$0xff]
    %v8554 = vld [vmem:[%s8550 + $0x18] sm:$0xff]
    %v8555 = vld [vmem:[%s8550 + $0x20] sm:$0xff]
    %v8556 = vld [vmem:[%s8550 + $0x28] sm:$0xff]
    %v8557 = vld [vmem:[%s8550 + $0x30] sm:$0xff]
    %v8558 = vld [vmem:[%s8550 + $0x38] sm:$0xff]
    %v8559 = vld [vmem:[%s8550 + $0x40] sm:$0xff]
    %v8560 = vld [vmem:[%s8550 + $0x48] sm:$0xff]
    %v8561 = vld [vmem:[%s8550 + $0x50] sm:$0xff]
    %v8562 = vld [vmem:[%s8550 + $0x58] sm:$0xff]
    %v8563 = vld [vmem:[%s8550 + $0x60] sm:$0xff]
    %v8564 = vld [vmem:[%s8550 + $0x68] sm:$0xff]
    %v8565 = vld [vmem:[%s8550 + $0x70] sm:$0xff]
    %v8566 = vld [vmem:[%s8550 + $0x78] sm:$0xff]
    %v8567 = vld [vmem:[%s8550 + $0x80] sm:$0xff]
    %v8568 = vld [vmem:[%s8550 + $0x88] sm:$0xff]
    %v8569 = vld [vmem:[%s8550 + $0x90] sm:$0xff]
    %v8570 = vld [vmem:[%s8550 + $0x98] sm:$0xff]
    %v8571 = vld [vmem:[%s8550 + $0xa0] sm:$0xff]
    %v8572 = vld [vmem:[%s8550 + $0xa8] sm:$0xff]
    %v8573 = vld [vmem:[%s8550 + $0xb0] sm:$0xff]
    %v8574 = vld [vmem:[%s8550 + $0xb8] sm:$0xff]
    %v8575 = vld [vmem:[%s8550 + $0xc0] sm:$0xff]
    %v8576 = vld [vmem:[%s8550 + $0xc8] sm:$0xff]
    %v8577 = vld [vmem:[%s8550 + $0xd0] sm:$0xff]
    %v8578 = vld [vmem:[%s8550 + $0xd8] sm:$0xff]
    %v8579 = vld [vmem:[%s8550 + $0xe0] sm:$0xff]
    %v8580 = vld [vmem:[%s8550 + $0xe8] sm:$0xff]
    %v8581 = vld [vmem:[%s8550 + $0xf0] sm:$0xff]
    %v8582 = vld [vmem:[%s8550 + $0xf8] sm:$0xff]
    %v8583 = vld [vmem:[%s8550 + $0x100] sm:$0xff]
    %v8584 = vld [vmem:[%s8550 + $0x108] sm:$0xff]
    %v8585 = vld [vmem:[%s8550 + $0x110] sm:$0xff]
    %v8586 = vld [vmem:[%s8550 + $0x118] sm:$0xff]
    %v8587 = vld [vmem:[%s8550 + $0x120] sm:$0xff]
    %v8588 = vld [vmem:[%s8550 + $0x128] sm:$0xff]
    %v8589 = vld [vmem:[%s8550 + $0x130] sm:$0xff]
    %v8590 = vld [vmem:[%s8550 + $0x138] sm:$0xff]
    %v8591 = vld [vmem:[%s8550 + $0x140] sm:$0xff]
    %v8592 = vld [vmem:[%s8550 + $0x148] sm:$0xff]
    %v8593 = vld [vmem:[%s8550 + $0x150] sm:$0xff]
    %v8594 = vld [vmem:[%s8550 + $0x158] sm:$0xff]
    %v8595 = vld [vmem:[%s8550 + $0x160] sm:$0xff]
    %v8596 = vld [vmem:[%s8550 + $0x168] sm:$0xff]
    %v8597 = vld [vmem:[%s8550 + $0x170] sm:$0xff]
    %v8598 = vld [vmem:[%s8550 + $0x178] sm:$0xff]
    %v8599 = vld [vmem:[%s8550 + $0x180] sm:$0xff]
    %v8600 = vld [vmem:[%s8550 + $0x188] sm:$0xff]
    %v8601 = vld [vmem:[%s8550 + $0x190] sm:$0xff]
    %v8602 = vld [vmem:[%s8550 + $0x198] sm:$0xff]
    %v8603 = vld [vmem:[%s8550 + $0x1a0] sm:$0xff]
    %v8604 = vld [vmem:[%s8550 + $0x1a8] sm:$0xff]
    %v8605 = vld [vmem:[%s8550 + $0x1b0] sm:$0xff]
    %v8606 = vld [vmem:[%s8550 + $0x1b8] sm:$0xff]
    %v8607 = vld [vmem:[%s8550 + $0x1c0] sm:$0xff]
    %v8608 = vld [vmem:[%s8550 + $0x1c8] sm:$0xff]
    %v8609 = vld [vmem:[%s8550 + $0x1d0] sm:$0xff]
    %v8610 = vld [vmem:[%s8550 + $0x1d8] sm:$0xff]
    %v8611 = vld [vmem:[%s8550 + $0x1e0] sm:$0xff]
    %v8612 = vld [vmem:[%s8550 + $0x1e8] sm:$0xff]
    %v8613 = vld [vmem:[%s8550 + $0x1f0] sm:$0xff]
    %v8614 = vld [vmem:[%s8550 + $0x1f8] sm:$0xff]
    %s8615 = scalar_lea.vmem %s22, 8
    %v8616 = vld [vmem:[%s8615] sm:$0xf]
    %v8618 = vsel %vm2166, %v8616, 0
    %8620 = vmatpush.msra.mxu0 0.0
    %8621 = vmatpush.msra.mxu0 0.0
    %8622 = vmatpush.msra.mxu0 0.0
    %8623 = vmatpush.msra.mxu0 0.0
    %8624 = vmatpush.msra.mxu0 0.0
    %8625 = vmatpush.msra.mxu0 0.0
    %8626 = vmatpush.msra.mxu0 0.0
    %8627 = vmatpush.msra.mxu0 0.0
    %8628 = vmatpush.msra.mxu0 0.0
    %8629 = vmatpush.msra.mxu0 0.0
    %8630 = vmatpush.msra.mxu0 0.0
    %8631 = vmatpush.msra.mxu0 0.0
    %8632 = vmatpush.msra.mxu0 %v8211
    %8633 = vmatpush.msra.mxu0 %v8210
    %8634 = vmatpush.msra.mxu0 %v8209
    %8635 = vmatpush.msra.mxu0 %v8208
    %8636 = vmatmul.f32.gmra.mxu0 %v8618
    %v8637 = vpop.f32.mrf.mxu0
    %v8638 = vadd.f32 0.0, %v8637
    %8639 = vdwg.mxu0
    %8640 = vmatpush.msra.mxu0 %v8611
    %8641 = vmatpush.msra.mxu0 %v8607
    %8642 = vmatpush.msra.mxu0 %v8603
    %8643 = vmatpush.msra.mxu0 %v8599
    %8644 = vmatpush.msra.mxu0 %v8595
    %8645 = vmatpush.msra.mxu0 %v8591
    %8646 = vmatpush.msra.mxu0 %v8587
    %8647 = vmatpush.msra.mxu0 %v8583
    %8648 = vmatpush.msra.mxu0 %v8579
    %8649 = vmatpush.msra.mxu0 %v8575
    %8650 = vmatpush.msra.mxu0 %v8571
    %8651 = vmatpush.msra.mxu0 %v8567
    %8652 = vmatpush.msra.mxu0 %v8563
    %8653 = vmatpush.msra.mxu0 %v8559
    %8654 = vmatpush.msra.mxu0 %v8555
    %8655 = vmatpush.msra.mxu0 %v8551
    %8656 = vmatmul.f32.gmra.mxu0 %v8638
    %v8657 = vpop.f32.mrf.mxu0
    %v8658 = vadd.f32 0.0, %v8657
    %8659 = vdwg.mxu0
    %8660 = vmatpush.msra.mxu0 %v8612
    %8661 = vmatpush.msra.mxu0 %v8608
    %8662 = vmatpush.msra.mxu0 %v8604
    %8663 = vmatpush.msra.mxu0 %v8600
    %8664 = vmatpush.msra.mxu0 %v8596
    %8665 = vmatpush.msra.mxu0 %v8592
    %8666 = vmatpush.msra.mxu0 %v8588
    %8667 = vmatpush.msra.mxu0 %v8584
    %8668 = vmatpush.msra.mxu0 %v8580
    %8669 = vmatpush.msra.mxu0 %v8576
    %8670 = vmatpush.msra.mxu0 %v8572
    %8671 = vmatpush.msra.mxu0 %v8568
    %8672 = vmatpush.msra.mxu0 %v8564
    %8673 = vmatpush.msra.mxu0 %v8560
    %8674 = vmatpush.msra.mxu0 %v8556
    %8675 = vmatpush.msra.mxu0 %v8552
    %8676 = vmatmul.f32.gmra.mxu0 %v8638
    %v8677 = vpop.f32.mrf.mxu0
    %v8678 = vadd.f32 0.0, %v8677
    %8679 = vdwg.mxu0
    %8680 = vmatpush.msra.mxu0 %v8613
    %8681 = vmatpush.msra.mxu0 %v8609
    %8682 = vmatpush.msra.mxu0 %v8605
    %8683 = vmatpush.msra.mxu0 %v8601
    %8684 = vmatpush.msra.mxu0 %v8597
    %8685 = vmatpush.msra.mxu0 %v8593
    %8686 = vmatpush.msra.mxu0 %v8589
    %8687 = vmatpush.msra.mxu0 %v8585
    %8688 = vmatpush.msra.mxu0 %v8581
    %8689 = vmatpush.msra.mxu0 %v8577
    %8690 = vmatpush.msra.mxu0 %v8573
    %8691 = vmatpush.msra.mxu0 %v8569
    %8692 = vmatpush.msra.mxu0 %v8565
    %8693 = vmatpush.msra.mxu0 %v8561
    %8694 = vmatpush.msra.mxu0 %v8557
    %8695 = vmatpush.msra.mxu0 %v8553
    %8696 = vmatmul.f32.gmra.mxu0 %v8638
    %v8697 = vpop.f32.mrf.mxu0
    %v8698 = vadd.f32 0.0, %v8697
    %8699 = vdwg.mxu0
    %8700 = vmatpush.msra.mxu0 %v8614
    %8701 = vmatpush.msra.mxu0 %v8610
    %8702 = vmatpush.msra.mxu0 %v8606
    %8703 = vmatpush.msra.mxu0 %v8602
    %8704 = vmatpush.msra.mxu0 %v8598
    %8705 = vmatpush.msra.mxu0 %v8594
    %8706 = vmatpush.msra.mxu0 %v8590
    %8707 = vmatpush.msra.mxu0 %v8586
    %8708 = vmatpush.msra.mxu0 %v8582
    %8709 = vmatpush.msra.mxu0 %v8578
    %8710 = vmatpush.msra.mxu0 %v8574
    %8711 = vmatpush.msra.mxu0 %v8570
    %8712 = vmatpush.msra.mxu0 %v8566
    %8713 = vmatpush.msra.mxu0 %v8562
    %8714 = vmatpush.msra.mxu0 %v8558
    %8715 = vmatpush.msra.mxu0 %v8554
    %8716 = vmatmul.f32.gmra.mxu0 %v8638
    %v8717 = vpop.f32.mrf.mxu0
    %v8718 = vadd.f32 0.0, %v8717
    %8719 = vdwg.mxu0
    %v8720 = vadd.f32 %v8488, %v8658
    %v8721 = vadd.f32 %v8508, %v8678
    %v8722 = vadd.f32 %v8528, %v8698
    %v8723 = vadd.f32 %v8548, %v8718
    %s8724 = scalar_lea.vmem [#allocation6], 1536
    %v8725 = vld [vmem:[%s8724] sm:$0xff]
    %v8726 = vld [vmem:[%s8724 + $0x8] sm:$0xff]
    %v8727 = vld [vmem:[%s8724 + $0x10] sm:$0xff]
    %v8728 = vld [vmem:[%s8724 + $0x18] sm:$0xff]
    %v8729 = vld [vmem:[%s8724 + $0x20] sm:$0xff]
    %v8730 = vld [vmem:[%s8724 + $0x28] sm:$0xff]
    %v8731 = vld [vmem:[%s8724 + $0x30] sm:$0xff]
    %v8732 = vld [vmem:[%s8724 + $0x38] sm:$0xff]
    %v8733 = vld [vmem:[%s8724 + $0x40] sm:$0xff]
    %v8734 = vld [vmem:[%s8724 + $0x48] sm:$0xff]
    %v8735 = vld [vmem:[%s8724 + $0x50] sm:$0xff]
    %v8736 = vld [vmem:[%s8724 + $0x58] sm:$0xff]
    %v8737 = vld [vmem:[%s8724 + $0x60] sm:$0xff]
    %v8738 = vld [vmem:[%s8724 + $0x68] sm:$0xff]
    %v8739 = vld [vmem:[%s8724 + $0x70] sm:$0xff]
    %v8740 = vld [vmem:[%s8724 + $0x78] sm:$0xff]
    %v8741 = vld [vmem:[%s8724 + $0x80] sm:$0xff]
    %v8742 = vld [vmem:[%s8724 + $0x88] sm:$0xff]
    %v8743 = vld [vmem:[%s8724 + $0x90] sm:$0xff]
    %v8744 = vld [vmem:[%s8724 + $0x98] sm:$0xff]
    %v8745 = vld [vmem:[%s8724 + $0xa0] sm:$0xff]
    %v8746 = vld [vmem:[%s8724 + $0xa8] sm:$0xff]
    %v8747 = vld [vmem:[%s8724 + $0xb0] sm:$0xff]
    %v8748 = vld [vmem:[%s8724 + $0xb8] sm:$0xff]
    %v8749 = vld [vmem:[%s8724 + $0xc0] sm:$0xff]
    %v8750 = vld [vmem:[%s8724 + $0xc8] sm:$0xff]
    %v8751 = vld [vmem:[%s8724 + $0xd0] sm:$0xff]
    %v8752 = vld [vmem:[%s8724 + $0xd8] sm:$0xff]
    %v8753 = vld [vmem:[%s8724 + $0xe0] sm:$0xff]
    %v8754 = vld [vmem:[%s8724 + $0xe8] sm:$0xff]
    %v8755 = vld [vmem:[%s8724 + $0xf0] sm:$0xff]
    %v8756 = vld [vmem:[%s8724 + $0xf8] sm:$0xff]
    %v8757 = vld [vmem:[%s8724 + $0x100] sm:$0xff]
    %v8758 = vld [vmem:[%s8724 + $0x108] sm:$0xff]
    %v8759 = vld [vmem:[%s8724 + $0x110] sm:$0xff]
    %v8760 = vld [vmem:[%s8724 + $0x118] sm:$0xff]
    %v8761 = vld [vmem:[%s8724 + $0x120] sm:$0xff]
    %v8762 = vld [vmem:[%s8724 + $0x128] sm:$0xff]
    %v8763 = vld [vmem:[%s8724 + $0x130] sm:$0xff]
    %v8764 = vld [vmem:[%s8724 + $0x138] sm:$0xff]
    %v8765 = vld [vmem:[%s8724 + $0x140] sm:$0xff]
    %v8766 = vld [vmem:[%s8724 + $0x148] sm:$0xff]
    %v8767 = vld [vmem:[%s8724 + $0x150] sm:$0xff]
    %v8768 = vld [vmem:[%s8724 + $0x158] sm:$0xff]
    %v8769 = vld [vmem:[%s8724 + $0x160] sm:$0xff]
    %v8770 = vld [vmem:[%s8724 + $0x168] sm:$0xff]
    %v8771 = vld [vmem:[%s8724 + $0x170] sm:$0xff]
    %v8772 = vld [vmem:[%s8724 + $0x178] sm:$0xff]
    %v8773 = vld [vmem:[%s8724 + $0x180] sm:$0xff]
    %v8774 = vld [vmem:[%s8724 + $0x188] sm:$0xff]
    %v8775 = vld [vmem:[%s8724 + $0x190] sm:$0xff]
    %v8776 = vld [vmem:[%s8724 + $0x198] sm:$0xff]
    %v8777 = vld [vmem:[%s8724 + $0x1a0] sm:$0xff]
    %v8778 = vld [vmem:[%s8724 + $0x1a8] sm:$0xff]
    %v8779 = vld [vmem:[%s8724 + $0x1b0] sm:$0xff]
    %v8780 = vld [vmem:[%s8724 + $0x1b8] sm:$0xff]
    %v8781 = vld [vmem:[%s8724 + $0x1c0] sm:$0xff]
    %v8782 = vld [vmem:[%s8724 + $0x1c8] sm:$0xff]
    %v8783 = vld [vmem:[%s8724 + $0x1d0] sm:$0xff]
    %v8784 = vld [vmem:[%s8724 + $0x1d8] sm:$0xff]
    %v8785 = vld [vmem:[%s8724 + $0x1e0] sm:$0xff]
    %v8786 = vld [vmem:[%s8724 + $0x1e8] sm:$0xff]
    %v8787 = vld [vmem:[%s8724 + $0x1f0] sm:$0xff]
    %v8788 = vld [vmem:[%s8724 + $0x1f8] sm:$0xff]
    %s8789 = scalar_lea.vmem %s22, 12
    %v8790 = vld [vmem:[%s8789] sm:$0xf]
    %v8792 = vsel %vm2166, %v8790, 0
    %8794 = vmatpush.msra.mxu0 0.0
    %8795 = vmatpush.msra.mxu0 0.0
    %8796 = vmatpush.msra.mxu0 0.0
    %8797 = vmatpush.msra.mxu0 0.0
    %8798 = vmatpush.msra.mxu0 0.0
    %8799 = vmatpush.msra.mxu0 0.0
    %8800 = vmatpush.msra.mxu0 0.0
    %8801 = vmatpush.msra.mxu0 0.0
    %8802 = vmatpush.msra.mxu0 0.0
    %8803 = vmatpush.msra.mxu0 0.0
    %8804 = vmatpush.msra.mxu0 0.0
    %8805 = vmatpush.msra.mxu0 0.0
    %8806 = vmatpush.msra.mxu0 %v8211
    %8807 = vmatpush.msra.mxu0 %v8210
    %8808 = vmatpush.msra.mxu0 %v8209
    %8809 = vmatpush.msra.mxu0 %v8208
    %8810 = vmatmul.f32.gmra.mxu0 %v8792
    %v8811 = vpop.f32.mrf.mxu0
    %v8812 = vadd.f32 0.0, %v8811
    %8813 = vdwg.mxu0
    %8814 = vmatpush.msra.mxu0 %v8785
    %8815 = vmatpush.msra.mxu0 %v8781
    %8816 = vmatpush.msra.mxu0 %v8777
    %8817 = vmatpush.msra.mxu0 %v8773
    %8818 = vmatpush.msra.mxu0 %v8769
    %8819 = vmatpush.msra.mxu0 %v8765
    %8820 = vmatpush.msra.mxu0 %v8761
    %8821 = vmatpush.msra.mxu0 %v8757
    %8822 = vmatpush.msra.mxu0 %v8753
    %8823 = vmatpush.msra.mxu0 %v8749
    %8824 = vmatpush.msra.mxu0 %v8745
    %8825 = vmatpush.msra.mxu0 %v8741
    %8826 = vmatpush.msra.mxu0 %v8737
    %8827 = vmatpush.msra.mxu0 %v8733
    %8828 = vmatpush.msra.mxu0 %v8729
    %8829 = vmatpush.msra.mxu0 %v8725
    %8830 = vmatmul.f32.gmra.mxu0 %v8812
    %v8831 = vpop.f32.mrf.mxu0
    %v8832 = vadd.f32 0.0, %v8831
    %8833 = vdwg.mxu0
    %8834 = vmatpush.msra.mxu0 %v8786
    %8835 = vmatpush.msra.mxu0 %v8782
    %8836 = vmatpush.msra.mxu0 %v8778
    %8837 = vmatpush.msra.mxu0 %v8774
    %8838 = vmatpush.msra.mxu0 %v8770
    %8839 = vmatpush.msra.mxu0 %v8766
    %8840 = vmatpush.msra.mxu0 %v8762
    %8841 = vmatpush.msra.mxu0 %v8758
    %8842 = vmatpush.msra.mxu0 %v8754
    %8843 = vmatpush.msra.mxu0 %v8750
    %8844 = vmatpush.msra.mxu0 %v8746
    %8845 = vmatpush.msra.mxu0 %v8742
    %8846 = vmatpush.msra.mxu0 %v8738
    %8847 = vmatpush.msra.mxu0 %v8734
    %8848 = vmatpush.msra.mxu0 %v8730
    %8849 = vmatpush.msra.mxu0 %v8726
    %8850 = vmatmul.f32.gmra.mxu0 %v8812
    %v8851 = vpop.f32.mrf.mxu0
    %v8852 = vadd.f32 0.0, %v8851
    %8853 = vdwg.mxu0
    %8854 = vmatpush.msra.mxu0 %v8787
    %8855 = vmatpush.msra.mxu0 %v8783
    %8856 = vmatpush.msra.mxu0 %v8779
    %8857 = vmatpush.msra.mxu0 %v8775
    %8858 = vmatpush.msra.mxu0 %v8771
    %8859 = vmatpush.msra.mxu0 %v8767
    %8860 = vmatpush.msra.mxu0 %v8763
    %8861 = vmatpush.msra.mxu0 %v8759
    %8862 = vmatpush.msra.mxu0 %v8755
    %8863 = vmatpush.msra.mxu0 %v8751
    %8864 = vmatpush.msra.mxu0 %v8747
    %8865 = vmatpush.msra.mxu0 %v8743
    %8866 = vmatpush.msra.mxu0 %v8739
    %8867 = vmatpush.msra.mxu0 %v8735
    %8868 = vmatpush.msra.mxu0 %v8731
    %8869 = vmatpush.msra.mxu0 %v8727
    %8870 = vmatmul.f32.gmra.mxu0 %v8812
    %v8871 = vpop.f32.mrf.mxu0
    %v8872 = vadd.f32 0.0, %v8871
    %8873 = vdwg.mxu0
    %8874 = vmatpush.msra.mxu0 %v8788
    %8875 = vmatpush.msra.mxu0 %v8784
    %8876 = vmatpush.msra.mxu0 %v8780
    %8877 = vmatpush.msra.mxu0 %v8776
    %8878 = vmatpush.msra.mxu0 %v8772
    %8879 = vmatpush.msra.mxu0 %v8768
    %8880 = vmatpush.msra.mxu0 %v8764
    %8881 = vmatpush.msra.mxu0 %v8760
    %8882 = vmatpush.msra.mxu0 %v8756
    %8883 = vmatpush.msra.mxu0 %v8752
    %8884 = vmatpush.msra.mxu0 %v8748
    %8885 = vmatpush.msra.mxu0 %v8744
    %8886 = vmatpush.msra.mxu0 %v8740
    %8887 = vmatpush.msra.mxu0 %v8736
    %8888 = vmatpush.msra.mxu0 %v8732
    %8889 = vmatpush.msra.mxu0 %v8728
    %8890 = vmatmul.f32.gmra.mxu0 %v8812
    %v8891 = vpop.f32.mrf.mxu0
    %v8892 = vadd.f32 0.0, %v8891
    %8893 = vdwg.mxu0
    %v8894 = vadd.f32 %v8720, %v8832
    %v8895 = vadd.f32 %v8721, %v8852
    %v8896 = vadd.f32 %v8722, %v8872
    %v8897 = vadd.f32 %v8723, %v8892
    %s8898 = scalar_lea.vmem [#allocation6], 2048
    %v8899 = vld [vmem:[%s8898] sm:$0xff]
    %v8900 = vld [vmem:[%s8898 + $0x8] sm:$0xff]
    %v8901 = vld [vmem:[%s8898 + $0x10] sm:$0xff]
    %v8902 = vld [vmem:[%s8898 + $0x18] sm:$0xff]
    %v8903 = vld [vmem:[%s8898 + $0x20] sm:$0xff]
    %v8904 = vld [vmem:[%s8898 + $0x28] sm:$0xff]
    %v8905 = vld [vmem:[%s8898 + $0x30] sm:$0xff]
    %v8906 = vld [vmem:[%s8898 + $0x38] sm:$0xff]
    %v8907 = vld [vmem:[%s8898 + $0x40] sm:$0xff]
    %v8908 = vld [vmem:[%s8898 + $0x48] sm:$0xff]
    %v8909 = vld [vmem:[%s8898 + $0x50] sm:$0xff]
    %v8910 = vld [vmem:[%s8898 + $0x58] sm:$0xff]
    %v8911 = vld [vmem:[%s8898 + $0x60] sm:$0xff]
    %v8912 = vld [vmem:[%s8898 + $0x68] sm:$0xff]
    %v8913 = vld [vmem:[%s8898 + $0x70] sm:$0xff]
    %v8914 = vld [vmem:[%s8898 + $0x78] sm:$0xff]
    %v8915 = vld [vmem:[%s8898 + $0x80] sm:$0xff]
    %v8916 = vld [vmem:[%s8898 + $0x88] sm:$0xff]
    %v8917 = vld [vmem:[%s8898 + $0x90] sm:$0xff]
    %v8918 = vld [vmem:[%s8898 + $0x98] sm:$0xff]
    %v8919 = vld [vmem:[%s8898 + $0xa0] sm:$0xff]
    %v8920 = vld [vmem:[%s8898 + $0xa8] sm:$0xff]
    %v8921 = vld [vmem:[%s8898 + $0xb0] sm:$0xff]
    %v8922 = vld [vmem:[%s8898 + $0xb8] sm:$0xff]
    %v8923 = vld [vmem:[%s8898 + $0xc0] sm:$0xff]
    %v8924 = vld [vmem:[%s8898 + $0xc8] sm:$0xff]
    %v8925 = vld [vmem:[%s8898 + $0xd0] sm:$0xff]
    %v8926 = vld [vmem:[%s8898 + $0xd8] sm:$0xff]
    %v8927 = vld [vmem:[%s8898 + $0xe0] sm:$0xff]
    %v8928 = vld [vmem:[%s8898 + $0xe8] sm:$0xff]
    %v8929 = vld [vmem:[%s8898 + $0xf0] sm:$0xff]
    %v8930 = vld [vmem:[%s8898 + $0xf8] sm:$0xff]
    %v8931 = vld [vmem:[%s8898 + $0x100] sm:$0xff]
    %v8932 = vld [vmem:[%s8898 + $0x108] sm:$0xff]
    %v8933 = vld [vmem:[%s8898 + $0x110] sm:$0xff]
    %v8934 = vld [vmem:[%s8898 + $0x118] sm:$0xff]
    %v8935 = vld [vmem:[%s8898 + $0x120] sm:$0xff]
    %v8936 = vld [vmem:[%s8898 + $0x128] sm:$0xff]
    %v8937 = vld [vmem:[%s8898 + $0x130] sm:$0xff]
    %v8938 = vld [vmem:[%s8898 + $0x138] sm:$0xff]
    %v8939 = vld [vmem:[%s8898 + $0x140] sm:$0xff]
    %v8940 = vld [vmem:[%s8898 + $0x148] sm:$0xff]
    %v8941 = vld [vmem:[%s8898 + $0x150] sm:$0xff]
    %v8942 = vld [vmem:[%s8898 + $0x158] sm:$0xff]
    %v8943 = vld [vmem:[%s8898 + $0x160] sm:$0xff]
    %v8944 = vld [vmem:[%s8898 + $0x168] sm:$0xff]
    %v8945 = vld [vmem:[%s8898 + $0x170] sm:$0xff]
    %v8946 = vld [vmem:[%s8898 + $0x178] sm:$0xff]
    %v8947 = vld [vmem:[%s8898 + $0x180] sm:$0xff]
    %v8948 = vld [vmem:[%s8898 + $0x188] sm:$0xff]
    %v8949 = vld [vmem:[%s8898 + $0x190] sm:$0xff]
    %v8950 = vld [vmem:[%s8898 + $0x198] sm:$0xff]
    %v8951 = vld [vmem:[%s8898 + $0x1a0] sm:$0xff]
    %v8952 = vld [vmem:[%s8898 + $0x1a8] sm:$0xff]
    %v8953 = vld [vmem:[%s8898 + $0x1b0] sm:$0xff]
    %v8954 = vld [vmem:[%s8898 + $0x1b8] sm:$0xff]
    %v8955 = vld [vmem:[%s8898 + $0x1c0] sm:$0xff]
    %v8956 = vld [vmem:[%s8898 + $0x1c8] sm:$0xff]
    %v8957 = vld [vmem:[%s8898 + $0x1d0] sm:$0xff]
    %v8958 = vld [vmem:[%s8898 + $0x1d8] sm:$0xff]
    %v8959 = vld [vmem:[%s8898 + $0x1e0] sm:$0xff]
    %v8960 = vld [vmem:[%s8898 + $0x1e8] sm:$0xff]
    %v8961 = vld [vmem:[%s8898 + $0x1f0] sm:$0xff]
    %v8962 = vld [vmem:[%s8898 + $0x1f8] sm:$0xff]
    %s8963 = scalar_lea.vmem %s22, 16
    %v8964 = vld [vmem:[%s8963] sm:$0xf]
    %v8966 = vsel %vm2166, %v8964, 0
    %8968 = vmatpush.msra.mxu0 0.0
    %8969 = vmatpush.msra.mxu0 0.0
    %8970 = vmatpush.msra.mxu0 0.0
    %8971 = vmatpush.msra.mxu0 0.0
    %8972 = vmatpush.msra.mxu0 0.0
    %8973 = vmatpush.msra.mxu0 0.0
    %8974 = vmatpush.msra.mxu0 0.0
    %8975 = vmatpush.msra.mxu0 0.0
    %8976 = vmatpush.msra.mxu0 0.0
    %8977 = vmatpush.msra.mxu0 0.0
    %8978 = vmatpush.msra.mxu0 0.0
    %8979 = vmatpush.msra.mxu0 0.0
    %8980 = vmatpush.msra.mxu0 %v8211
    %8981 = vmatpush.msra.mxu0 %v8210
    %8982 = vmatpush.msra.mxu0 %v8209
    %8983 = vmatpush.msra.mxu0 %v8208
    %8984 = vmatmul.f32.gmra.mxu0 %v8966
    %v8985 = vpop.f32.mrf.mxu0
    %v8986 = vadd.f32 0.0, %v8985
    %8987 = vdwg.mxu0
    %8988 = vmatpush.msra.mxu0 %v8959
    %8989 = vmatpush.msra.mxu0 %v8955
    %8990 = vmatpush.msra.mxu0 %v8951
    %8991 = vmatpush.msra.mxu0 %v8947
    %8992 = vmatpush.msra.mxu0 %v8943
    %8993 = vmatpush.msra.mxu0 %v8939
    %8994 = vmatpush.msra.mxu0 %v8935
    %8995 = vmatpush.msra.mxu0 %v8931
    %8996 = vmatpush.msra.mxu0 %v8927
    %8997 = vmatpush.msra.mxu0 %v8923
    %8998 = vmatpush.msra.mxu0 %v8919
    %8999 = vmatpush.msra.mxu0 %v8915
    %9000 = vmatpush.msra.mxu0 %v8911
    %9001 = vmatpush.msra.mxu0 %v8907
    %9002 = vmatpush.msra.mxu0 %v8903
    %9003 = vmatpush.msra.mxu0 %v8899
    %9004 = vmatmul.f32.gmra.mxu0 %v8986
    %v9005 = vpop.f32.mrf.mxu0
    %v9006 = vadd.f32 0.0, %v9005
    %9007 = vdwg.mxu0
    %9008 = vmatpush.msra.mxu0 %v8960
    %9009 = vmatpush.msra.mxu0 %v8956
    %9010 = vmatpush.msra.mxu0 %v8952
    %9011 = vmatpush.msra.mxu0 %v8948
    %9012 = vmatpush.msra.mxu0 %v8944
    %9013 = vmatpush.msra.mxu0 %v8940
    %9014 = vmatpush.msra.mxu0 %v8936
    %9015 = vmatpush.msra.mxu0 %v8932
    %9016 = vmatpush.msra.mxu0 %v8928
    %9017 = vmatpush.msra.mxu0 %v8924
    %9018 = vmatpush.msra.mxu0 %v8920
    %9019 = vmatpush.msra.mxu0 %v8916
    %9020 = vmatpush.msra.mxu0 %v8912
    %9021 = vmatpush.msra.mxu0 %v8908
    %9022 = vmatpush.msra.mxu0 %v8904
    %9023 = vmatpush.msra.mxu0 %v8900
    %9024 = vmatmul.f32.gmra.mxu0 %v8986
    %v9025 = vpop.f32.mrf.mxu0
    %v9026 = vadd.f32 0.0, %v9025
    %9027 = vdwg.mxu0
    %9028 = vmatpush.msra.mxu0 %v8961
    %9029 = vmatpush.msra.mxu0 %v8957
    %9030 = vmatpush.msra.mxu0 %v8953
    %9031 = vmatpush.msra.mxu0 %v8949
    %9032 = vmatpush.msra.mxu0 %v8945
    %9033 = vmatpush.msra.mxu0 %v8941
    %9034 = vmatpush.msra.mxu0 %v8937
    %9035 = vmatpush.msra.mxu0 %v8933
    %9036 = vmatpush.msra.mxu0 %v8929
    %9037 = vmatpush.msra.mxu0 %v8925
    %9038 = vmatpush.msra.mxu0 %v8921
    %9039 = vmatpush.msra.mxu0 %v8917
    %9040 = vmatpush.msra.mxu0 %v8913
    %9041 = vmatpush.msra.mxu0 %v8909
    %9042 = vmatpush.msra.mxu0 %v8905
    %9043 = vmatpush.msra.mxu0 %v8901
    %9044 = vmatmul.f32.gmra.mxu0 %v8986
    %v9045 = vpop.f32.mrf.mxu0
    %v9046 = vadd.f32 0.0, %v9045
    %9047 = vdwg.mxu0
    %9048 = vmatpush.msra.mxu0 %v8962
    %9049 = vmatpush.msra.mxu0 %v8958
    %9050 = vmatpush.msra.mxu0 %v8954
    %9051 = vmatpush.msra.mxu0 %v8950
    %9052 = vmatpush.msra.mxu0 %v8946
    %9053 = vmatpush.msra.mxu0 %v8942
    %9054 = vmatpush.msra.mxu0 %v8938
    %9055 = vmatpush.msra.mxu0 %v8934
    %9056 = vmatpush.msra.mxu0 %v8930
    %9057 = vmatpush.msra.mxu0 %v8926
    %9058 = vmatpush.msra.mxu0 %v8922
    %9059 = vmatpush.msra.mxu0 %v8918
    %9060 = vmatpush.msra.mxu0 %v8914
    %9061 = vmatpush.msra.mxu0 %v8910
    %9062 = vmatpush.msra.mxu0 %v8906
    %9063 = vmatpush.msra.mxu0 %v8902
    %9064 = vmatmul.f32.gmra.mxu0 %v8986
    %v9065 = vpop.f32.mrf.mxu0
    %v9066 = vadd.f32 0.0, %v9065
    %9067 = vdwg.mxu0
    %v9068 = vadd.f32 %v8894, %v9006
    %v9069 = vadd.f32 %v8895, %v9026
    %v9070 = vadd.f32 %v8896, %v9046
    %v9071 = vadd.f32 %v8897, %v9066
    %s9072 = scalar_lea.vmem [#allocation6], 2560
    %v9073 = vld [vmem:[%s9072] sm:$0xff]
    %v9074 = vld [vmem:[%s9072 + $0x8] sm:$0xff]
    %v9075 = vld [vmem:[%s9072 + $0x10] sm:$0xff]
    %v9076 = vld [vmem:[%s9072 + $0x18] sm:$0xff]
    %v9077 = vld [vmem:[%s9072 + $0x20] sm:$0xff]
    %v9078 = vld [vmem:[%s9072 + $0x28] sm:$0xff]
    %v9079 = vld [vmem:[%s9072 + $0x30] sm:$0xff]
    %v9080 = vld [vmem:[%s9072 + $0x38] sm:$0xff]
    %v9081 = vld [vmem:[%s9072 + $0x40] sm:$0xff]
    %v9082 = vld [vmem:[%s9072 + $0x48] sm:$0xff]
    %v9083 = vld [vmem:[%s9072 + $0x50] sm:$0xff]
    %v9084 = vld [vmem:[%s9072 + $0x58] sm:$0xff]
    %v9085 = vld [vmem:[%s9072 + $0x60] sm:$0xff]
    %v9086 = vld [vmem:[%s9072 + $0x68] sm:$0xff]
    %v9087 = vld [vmem:[%s9072 + $0x70] sm:$0xff]
    %v9088 = vld [vmem:[%s9072 + $0x78] sm:$0xff]
    %v9089 = vld [vmem:[%s9072 + $0x80] sm:$0xff]
    %v9090 = vld [vmem:[%s9072 + $0x88] sm:$0xff]
    %v9091 = vld [vmem:[%s9072 + $0x90] sm:$0xff]
    %v9092 = vld [vmem:[%s9072 + $0x98] sm:$0xff]
    %v9093 = vld [vmem:[%s9072 + $0xa0] sm:$0xff]
    %v9094 = vld [vmem:[%s9072 + $0xa8] sm:$0xff]
    %v9095 = vld [vmem:[%s9072 + $0xb0] sm:$0xff]
    %v9096 = vld [vmem:[%s9072 + $0xb8] sm:$0xff]
    %v9097 = vld [vmem:[%s9072 + $0xc0] sm:$0xff]
    %v9098 = vld [vmem:[%s9072 + $0xc8] sm:$0xff]
    %v9099 = vld [vmem:[%s9072 + $0xd0] sm:$0xff]
    %v9100 = vld [vmem:[%s9072 + $0xd8] sm:$0xff]
    %v9101 = vld [vmem:[%s9072 + $0xe0] sm:$0xff]
    %v9102 = vld [vmem:[%s9072 + $0xe8] sm:$0xff]
    %v9103 = vld [vmem:[%s9072 + $0xf0] sm:$0xff]
    %v9104 = vld [vmem:[%s9072 + $0xf8] sm:$0xff]
    %v9105 = vld [vmem:[%s9072 + $0x100] sm:$0xff]
    %v9106 = vld [vmem:[%s9072 + $0x108] sm:$0xff]
    %v9107 = vld [vmem:[%s9072 + $0x110] sm:$0xff]
    %v9108 = vld [vmem:[%s9072 + $0x118] sm:$0xff]
    %v9109 = vld [vmem:[%s9072 + $0x120] sm:$0xff]
    %v9110 = vld [vmem:[%s9072 + $0x128] sm:$0xff]
    %v9111 = vld [vmem:[%s9072 + $0x130] sm:$0xff]
    %v9112 = vld [vmem:[%s9072 + $0x138] sm:$0xff]
    %v9113 = vld [vmem:[%s9072 + $0x140] sm:$0xff]
    %v9114 = vld [vmem:[%s9072 + $0x148] sm:$0xff]
    %v9115 = vld [vmem:[%s9072 + $0x150] sm:$0xff]
    %v9116 = vld [vmem:[%s9072 + $0x158] sm:$0xff]
    %v9117 = vld [vmem:[%s9072 + $0x160] sm:$0xff]
    %v9118 = vld [vmem:[%s9072 + $0x168] sm:$0xff]
    %v9119 = vld [vmem:[%s9072 + $0x170] sm:$0xff]
    %v9120 = vld [vmem:[%s9072 + $0x178] sm:$0xff]
    %v9121 = vld [vmem:[%s9072 + $0x180] sm:$0xff]
    %v9122 = vld [vmem:[%s9072 + $0x188] sm:$0xff]
    %v9123 = vld [vmem:[%s9072 + $0x190] sm:$0xff]
    %v9124 = vld [vmem:[%s9072 + $0x198] sm:$0xff]
    %v9125 = vld [vmem:[%s9072 + $0x1a0] sm:$0xff]
    %v9126 = vld [vmem:[%s9072 + $0x1a8] sm:$0xff]
    %v9127 = vld [vmem:[%s9072 + $0x1b0] sm:$0xff]
    %v9128 = vld [vmem:[%s9072 + $0x1b8] sm:$0xff]
    %v9129 = vld [vmem:[%s9072 + $0x1c0] sm:$0xff]
    %v9130 = vld [vmem:[%s9072 + $0x1c8] sm:$0xff]
    %v9131 = vld [vmem:[%s9072 + $0x1d0] sm:$0xff]
    %v9132 = vld [vmem:[%s9072 + $0x1d8] sm:$0xff]
    %v9133 = vld [vmem:[%s9072 + $0x1e0] sm:$0xff]
    %v9134 = vld [vmem:[%s9072 + $0x1e8] sm:$0xff]
    %v9135 = vld [vmem:[%s9072 + $0x1f0] sm:$0xff]
    %v9136 = vld [vmem:[%s9072 + $0x1f8] sm:$0xff]
    %s9137 = scalar_lea.vmem %s22, 20
    %v9138 = vld [vmem:[%s9137] sm:$0xf]
    %v9140 = vsel %vm2166, %v9138, 0
    %9142 = vmatpush.msra.mxu0 0.0
    %9143 = vmatpush.msra.mxu0 0.0
    %9144 = vmatpush.msra.mxu0 0.0
    %9145 = vmatpush.msra.mxu0 0.0
    %9146 = vmatpush.msra.mxu0 0.0
    %9147 = vmatpush.msra.mxu0 0.0
    %9148 = vmatpush.msra.mxu0 0.0
    %9149 = vmatpush.msra.mxu0 0.0
    %9150 = vmatpush.msra.mxu0 0.0
    %9151 = vmatpush.msra.mxu0 0.0
    %9152 = vmatpush.msra.mxu0 0.0
    %9153 = vmatpush.msra.mxu0 0.0
    %9154 = vmatpush.msra.mxu0 %v8211
    %9155 = vmatpush.msra.mxu0 %v8210
    %9156 = vmatpush.msra.mxu0 %v8209
    %9157 = vmatpush.msra.mxu0 %v8208
    %9158 = vmatmul.f32.gmra.mxu0 %v9140
    %v9159 = vpop.f32.mrf.mxu0
    %v9160 = vadd.f32 0.0, %v9159
    %9161 = vdwg.mxu0
    %9162 = vmatpush.msra.mxu0 %v9133
    %9163 = vmatpush.msra.mxu0 %v9129
    %9164 = vmatpush.msra.mxu0 %v9125
    %9165 = vmatpush.msra.mxu0 %v9121
    %9166 = vmatpush.msra.mxu0 %v9117
    %9167 = vmatpush.msra.mxu0 %v9113
    %9168 = vmatpush.msra.mxu0 %v9109
    %9169 = vmatpush.msra.mxu0 %v9105
    %9170 = vmatpush.msra.mxu0 %v9101
    %9171 = vmatpush.msra.mxu0 %v9097
    %9172 = vmatpush.msra.mxu0 %v9093
    %9173 = vmatpush.msra.mxu0 %v9089
    %9174 = vmatpush.msra.mxu0 %v9085
    %9175 = vmatpush.msra.mxu0 %v9081
    %9176 = vmatpush.msra.mxu0 %v9077
    %9177 = vmatpush.msra.mxu0 %v9073
    %9178 = vmatmul.f32.gmra.mxu0 %v9160
    %v9179 = vpop.f32.mrf.mxu0
    %v9180 = vadd.f32 0.0, %v9179
    %9181 = vdwg.mxu0
    %9182 = vmatpush.msra.mxu0 %v9134
    %9183 = vmatpush.msra.mxu0 %v9130
    %9184 = vmatpush.msra.mxu0 %v9126
    %9185 = vmatpush.msra.mxu0 %v9122
    %9186 = vmatpush.msra.mxu0 %v9118
    %9187 = vmatpush.msra.mxu0 %v9114
    %9188 = vmatpush.msra.mxu0 %v9110
    %9189 = vmatpush.msra.mxu0 %v9106
    %9190 = vmatpush.msra.mxu0 %v9102
    %9191 = vmatpush.msra.mxu0 %v9098
    %9192 = vmatpush.msra.mxu0 %v9094
    %9193 = vmatpush.msra.mxu0 %v9090
    %9194 = vmatpush.msra.mxu0 %v9086
    %9195 = vmatpush.msra.mxu0 %v9082
    %9196 = vmatpush.msra.mxu0 %v9078
    %9197 = vmatpush.msra.mxu0 %v9074
    %9198 = vmatmul.f32.gmra.mxu0 %v9160
    %v9199 = vpop.f32.mrf.mxu0
    %v9200 = vadd.f32 0.0, %v9199
    %9201 = vdwg.mxu0
    %9202 = vmatpush.msra.mxu0 %v9135
    %9203 = vmatpush.msra.mxu0 %v9131
    %9204 = vmatpush.msra.mxu0 %v9127
    %9205 = vmatpush.msra.mxu0 %v9123
    %9206 = vmatpush.msra.mxu0 %v9119
    %9207 = vmatpush.msra.mxu0 %v9115
    %9208 = vmatpush.msra.mxu0 %v9111
    %9209 = vmatpush.msra.mxu0 %v9107
    %9210 = vmatpush.msra.mxu0 %v9103
    %9211 = vmatpush.msra.mxu0 %v9099
    %9212 = vmatpush.msra.mxu0 %v9095
    %9213 = vmatpush.msra.mxu0 %v9091
    %9214 = vmatpush.msra.mxu0 %v9087
    %9215 = vmatpush.msra.mxu0 %v9083
    %9216 = vmatpush.msra.mxu0 %v9079
    %9217 = vmatpush.msra.mxu0 %v9075
    %9218 = vmatmul.f32.gmra.mxu0 %v9160
    %v9219 = vpop.f32.mrf.mxu0
    %v9220 = vadd.f32 0.0, %v9219
    %9221 = vdwg.mxu0
    %9222 = vmatpush.msra.mxu0 %v9136
    %9223 = vmatpush.msra.mxu0 %v9132
    %9224 = vmatpush.msra.mxu0 %v9128
    %9225 = vmatpush.msra.mxu0 %v9124
    %9226 = vmatpush.msra.mxu0 %v9120
    %9227 = vmatpush.msra.mxu0 %v9116
    %9228 = vmatpush.msra.mxu0 %v9112
    %9229 = vmatpush.msra.mxu0 %v9108
    %9230 = vmatpush.msra.mxu0 %v9104
    %9231 = vmatpush.msra.mxu0 %v9100
    %9232 = vmatpush.msra.mxu0 %v9096
    %9233 = vmatpush.msra.mxu0 %v9092
    %9234 = vmatpush.msra.mxu0 %v9088
    %9235 = vmatpush.msra.mxu0 %v9084
    %9236 = vmatpush.msra.mxu0 %v9080
    %9237 = vmatpush.msra.mxu0 %v9076
    %9238 = vmatmul.f32.gmra.mxu0 %v9160
    %v9239 = vpop.f32.mrf.mxu0
    %v9240 = vadd.f32 0.0, %v9239
    %9241 = vdwg.mxu0
    %v9242 = vadd.f32 %v9068, %v9180
    %v9243 = vadd.f32 %v9069, %v9200
    %v9244 = vadd.f32 %v9070, %v9220
    %v9245 = vadd.f32 %v9071, %v9240
    %s9246 = scalar_lea.vmem [#allocation6], 3072
    %v9247 = vld [vmem:[%s9246] sm:$0xff]
    %v9248 = vld [vmem:[%s9246 + $0x8] sm:$0xff]
    %v9249 = vld [vmem:[%s9246 + $0x10] sm:$0xff]
    %v9250 = vld [vmem:[%s9246 + $0x18] sm:$0xff]
    %v9251 = vld [vmem:[%s9246 + $0x20] sm:$0xff]
    %v9252 = vld [vmem:[%s9246 + $0x28] sm:$0xff]
    %v9253 = vld [vmem:[%s9246 + $0x30] sm:$0xff]
    %v9254 = vld [vmem:[%s9246 + $0x38] sm:$0xff]
    %v9255 = vld [vmem:[%s9246 + $0x40] sm:$0xff]
    %v9256 = vld [vmem:[%s9246 + $0x48] sm:$0xff]
    %v9257 = vld [vmem:[%s9246 + $0x50] sm:$0xff]
    %v9258 = vld [vmem:[%s9246 + $0x58] sm:$0xff]
    %v9259 = vld [vmem:[%s9246 + $0x60] sm:$0xff]
    %v9260 = vld [vmem:[%s9246 + $0x68] sm:$0xff]
    %v9261 = vld [vmem:[%s9246 + $0x70] sm:$0xff]
    %v9262 = vld [vmem:[%s9246 + $0x78] sm:$0xff]
    %v9263 = vld [vmem:[%s9246 + $0x80] sm:$0xff]
    %v9264 = vld [vmem:[%s9246 + $0x88] sm:$0xff]
    %v9265 = vld [vmem:[%s9246 + $0x90] sm:$0xff]
    %v9266 = vld [vmem:[%s9246 + $0x98] sm:$0xff]
    %v9267 = vld [vmem:[%s9246 + $0xa0] sm:$0xff]
    %v9268 = vld [vmem:[%s9246 + $0xa8] sm:$0xff]
    %v9269 = vld [vmem:[%s9246 + $0xb0] sm:$0xff]
    %v9270 = vld [vmem:[%s9246 + $0xb8] sm:$0xff]
    %v9271 = vld [vmem:[%s9246 + $0xc0] sm:$0xff]
    %v9272 = vld [vmem:[%s9246 + $0xc8] sm:$0xff]
    %v9273 = vld [vmem:[%s9246 + $0xd0] sm:$0xff]
    %v9274 = vld [vmem:[%s9246 + $0xd8] sm:$0xff]
    %v9275 = vld [vmem:[%s9246 + $0xe0] sm:$0xff]
    %v9276 = vld [vmem:[%s9246 + $0xe8] sm:$0xff]
    %v9277 = vld [vmem:[%s9246 + $0xf0] sm:$0xff]
    %v9278 = vld [vmem:[%s9246 + $0xf8] sm:$0xff]
    %v9279 = vld [vmem:[%s9246 + $0x100] sm:$0xff]
    %v9280 = vld [vmem:[%s9246 + $0x108] sm:$0xff]
    %v9281 = vld [vmem:[%s9246 + $0x110] sm:$0xff]
    %v9282 = vld [vmem:[%s9246 + $0x118] sm:$0xff]
    %v9283 = vld [vmem:[%s9246 + $0x120] sm:$0xff]
    %v9284 = vld [vmem:[%s9246 + $0x128] sm:$0xff]
    %v9285 = vld [vmem:[%s9246 + $0x130] sm:$0xff]
    %v9286 = vld [vmem:[%s9246 + $0x138] sm:$0xff]
    %v9287 = vld [vmem:[%s9246 + $0x140] sm:$0xff]
    %v9288 = vld [vmem:[%s9246 + $0x148] sm:$0xff]
    %v9289 = vld [vmem:[%s9246 + $0x150] sm:$0xff]
    %v9290 = vld [vmem:[%s9246 + $0x158] sm:$0xff]
    %v9291 = vld [vmem:[%s9246 + $0x160] sm:$0xff]
    %v9292 = vld [vmem:[%s9246 + $0x168] sm:$0xff]
    %v9293 = vld [vmem:[%s9246 + $0x170] sm:$0xff]
    %v9294 = vld [vmem:[%s9246 + $0x178] sm:$0xff]
    %v9295 = vld [vmem:[%s9246 + $0x180] sm:$0xff]
    %v9296 = vld [vmem:[%s9246 + $0x188] sm:$0xff]
    %v9297 = vld [vmem:[%s9246 + $0x190] sm:$0xff]
    %v9298 = vld [vmem:[%s9246 + $0x198] sm:$0xff]
    %v9299 = vld [vmem:[%s9246 + $0x1a0] sm:$0xff]
    %v9300 = vld [vmem:[%s9246 + $0x1a8] sm:$0xff]
    %v9301 = vld [vmem:[%s9246 + $0x1b0] sm:$0xff]
    %v9302 = vld [vmem:[%s9246 + $0x1b8] sm:$0xff]
    %v9303 = vld [vmem:[%s9246 + $0x1c0] sm:$0xff]
    %v9304 = vld [vmem:[%s9246 + $0x1c8] sm:$0xff]
    %v9305 = vld [vmem:[%s9246 + $0x1d0] sm:$0xff]
    %v9306 = vld [vmem:[%s9246 + $0x1d8] sm:$0xff]
    %v9307 = vld [vmem:[%s9246 + $0x1e0] sm:$0xff]
    %v9308 = vld [vmem:[%s9246 + $0x1e8] sm:$0xff]
    %v9309 = vld [vmem:[%s9246 + $0x1f0] sm:$0xff]
    %v9310 = vld [vmem:[%s9246 + $0x1f8] sm:$0xff]
    %s9311 = scalar_lea.vmem %s22, 24
    %v9312 = vld [vmem:[%s9311] sm:$0xf]
    %v9314 = vsel %vm2166, %v9312, 0
    %9316 = vmatpush.msra.mxu0 0.0
    %9317 = vmatpush.msra.mxu0 0.0
    %9318 = vmatpush.msra.mxu0 0.0
    %9319 = vmatpush.msra.mxu0 0.0
    %9320 = vmatpush.msra.mxu0 0.0
    %9321 = vmatpush.msra.mxu0 0.0
    %9322 = vmatpush.msra.mxu0 0.0
    %9323 = vmatpush.msra.mxu0 0.0
    %9324 = vmatpush.msra.mxu0 0.0
    %9325 = vmatpush.msra.mxu0 0.0
    %9326 = vmatpush.msra.mxu0 0.0
    %9327 = vmatpush.msra.mxu0 0.0
    %9328 = vmatpush.msra.mxu0 %v8211
    %9329 = vmatpush.msra.mxu0 %v8210
    %9330 = vmatpush.msra.mxu0 %v8209
    %9331 = vmatpush.msra.mxu0 %v8208
    %9332 = vmatmul.f32.gmra.mxu0 %v9314
    %v9333 = vpop.f32.mrf.mxu0
    %v9334 = vadd.f32 0.0, %v9333
    %9335 = vdwg.mxu0
    %9336 = vmatpush.msra.mxu0 %v9307
    %9337 = vmatpush.msra.mxu0 %v9303
    %9338 = vmatpush.msra.mxu0 %v9299
    %9339 = vmatpush.msra.mxu0 %v9295
    %9340 = vmatpush.msra.mxu0 %v9291
    %9341 = vmatpush.msra.mxu0 %v9287
    %9342 = vmatpush.msra.mxu0 %v9283
    %9343 = vmatpush.msra.mxu0 %v9279
    %9344 = vmatpush.msra.mxu0 %v9275
    %9345 = vmatpush.msra.mxu0 %v9271
    %9346 = vmatpush.msra.mxu0 %v9267
    %9347 = vmatpush.msra.mxu0 %v9263
    %9348 = vmatpush.msra.mxu0 %v9259
    %9349 = vmatpush.msra.mxu0 %v9255
    %9350 = vmatpush.msra.mxu0 %v9251
    %9351 = vmatpush.msra.mxu0 %v9247
    %9352 = vmatmul.f32.gmra.mxu0 %v9334
    %v9353 = vpop.f32.mrf.mxu0
    %v9354 = vadd.f32 0.0, %v9353
    %9355 = vdwg.mxu0
    %9356 = vmatpush.msra.mxu0 %v9308
    %9357 = vmatpush.msra.mxu0 %v9304
    %9358 = vmatpush.msra.mxu0 %v9300
    %9359 = vmatpush.msra.mxu0 %v9296
    %9360 = vmatpush.msra.mxu0 %v9292
    %9361 = vmatpush.msra.mxu0 %v9288
    %9362 = vmatpush.msra.mxu0 %v9284
    %9363 = vmatpush.msra.mxu0 %v9280
    %9364 = vmatpush.msra.mxu0 %v9276
    %9365 = vmatpush.msra.mxu0 %v9272
    %9366 = vmatpush.msra.mxu0 %v9268
    %9367 = vmatpush.msra.mxu0 %v9264
    %9368 = vmatpush.msra.mxu0 %v9260
    %9369 = vmatpush.msra.mxu0 %v9256
    %9370 = vmatpush.msra.mxu0 %v9252
    %9371 = vmatpush.msra.mxu0 %v9248
    %9372 = vmatmul.f32.gmra.mxu0 %v9334
    %v9373 = vpop.f32.mrf.mxu0
    %v9374 = vadd.f32 0.0, %v9373
    %9375 = vdwg.mxu0
    %9376 = vmatpush.msra.mxu0 %v9309
    %9377 = vmatpush.msra.mxu0 %v9305
    %9378 = vmatpush.msra.mxu0 %v9301
    %9379 = vmatpush.msra.mxu0 %v9297
    %9380 = vmatpush.msra.mxu0 %v9293
    %9381 = vmatpush.msra.mxu0 %v9289
    %9382 = vmatpush.msra.mxu0 %v9285
    %9383 = vmatpush.msra.mxu0 %v9281
    %9384 = vmatpush.msra.mxu0 %v9277
    %9385 = vmatpush.msra.mxu0 %v9273
    %9386 = vmatpush.msra.mxu0 %v9269
    %9387 = vmatpush.msra.mxu0 %v9265
    %9388 = vmatpush.msra.mxu0 %v9261
    %9389 = vmatpush.msra.mxu0 %v9257
    %9390 = vmatpush.msra.mxu0 %v9253
    %9391 = vmatpush.msra.mxu0 %v9249
    %9392 = vmatmul.f32.gmra.mxu0 %v9334
    %v9393 = vpop.f32.mrf.mxu0
    %v9394 = vadd.f32 0.0, %v9393
    %9395 = vdwg.mxu0
    %9396 = vmatpush.msra.mxu0 %v9310
    %9397 = vmatpush.msra.mxu0 %v9306
    %9398 = vmatpush.msra.mxu0 %v9302
    %9399 = vmatpush.msra.mxu0 %v9298
    %9400 = vmatpush.msra.mxu0 %v9294
    %9401 = vmatpush.msra.mxu0 %v9290
    %9402 = vmatpush.msra.mxu0 %v9286
    %9403 = vmatpush.msra.mxu0 %v9282
    %9404 = vmatpush.msra.mxu0 %v9278
    %9405 = vmatpush.msra.mxu0 %v9274
    %9406 = vmatpush.msra.mxu0 %v9270
    %9407 = vmatpush.msra.mxu0 %v9266
    %9408 = vmatpush.msra.mxu0 %v9262
    %9409 = vmatpush.msra.mxu0 %v9258
    %9410 = vmatpush.msra.mxu0 %v9254
    %9411 = vmatpush.msra.mxu0 %v9250
    %9412 = vmatmul.f32.gmra.mxu0 %v9334
    %v9413 = vpop.f32.mrf.mxu0
    %v9414 = vadd.f32 0.0, %v9413
    %9415 = vdwg.mxu0
    %v9416 = vadd.f32 %v9242, %v9354
    %v9417 = vadd.f32 %v9243, %v9374
    %v9418 = vadd.f32 %v9244, %v9394
    %v9419 = vadd.f32 %v9245, %v9414
    %s9420 = scalar_lea.vmem [#allocation6], 3584
    %v9421 = vld [vmem:[%s9420] sm:$0xff]
    %v9422 = vld [vmem:[%s9420 + $0x8] sm:$0xff]
    %v9423 = vld [vmem:[%s9420 + $0x10] sm:$0xff]
    %v9424 = vld [vmem:[%s9420 + $0x18] sm:$0xff]
    %v9425 = vld [vmem:[%s9420 + $0x20] sm:$0xff]
    %v9426 = vld [vmem:[%s9420 + $0x28] sm:$0xff]
    %v9427 = vld [vmem:[%s9420 + $0x30] sm:$0xff]
    %v9428 = vld [vmem:[%s9420 + $0x38] sm:$0xff]
    %v9429 = vld [vmem:[%s9420 + $0x40] sm:$0xff]
    %v9430 = vld [vmem:[%s9420 + $0x48] sm:$0xff]
    %v9431 = vld [vmem:[%s9420 + $0x50] sm:$0xff]
    %v9432 = vld [vmem:[%s9420 + $0x58] sm:$0xff]
    %v9433 = vld [vmem:[%s9420 + $0x60] sm:$0xff]
    %v9434 = vld [vmem:[%s9420 + $0x68] sm:$0xff]
    %v9435 = vld [vmem:[%s9420 + $0x70] sm:$0xff]
    %v9436 = vld [vmem:[%s9420 + $0x78] sm:$0xff]
    %v9437 = vld [vmem:[%s9420 + $0x80] sm:$0xff]
    %v9438 = vld [vmem:[%s9420 + $0x88] sm:$0xff]
    %v9439 = vld [vmem:[%s9420 + $0x90] sm:$0xff]
    %v9440 = vld [vmem:[%s9420 + $0x98] sm:$0xff]
    %v9441 = vld [vmem:[%s9420 + $0xa0] sm:$0xff]
    %v9442 = vld [vmem:[%s9420 + $0xa8] sm:$0xff]
    %v9443 = vld [vmem:[%s9420 + $0xb0] sm:$0xff]
    %v9444 = vld [vmem:[%s9420 + $0xb8] sm:$0xff]
    %v9445 = vld [vmem:[%s9420 + $0xc0] sm:$0xff]
    %v9446 = vld [vmem:[%s9420 + $0xc8] sm:$0xff]
    %v9447 = vld [vmem:[%s9420 + $0xd0] sm:$0xff]
    %v9448 = vld [vmem:[%s9420 + $0xd8] sm:$0xff]
    %v9449 = vld [vmem:[%s9420 + $0xe0] sm:$0xff]
    %v9450 = vld [vmem:[%s9420 + $0xe8] sm:$0xff]
    %v9451 = vld [vmem:[%s9420 + $0xf0] sm:$0xff]
    %v9452 = vld [vmem:[%s9420 + $0xf8] sm:$0xff]
    %v9453 = vld [vmem:[%s9420 + $0x100] sm:$0xff]
    %v9454 = vld [vmem:[%s9420 + $0x108] sm:$0xff]
    %v9455 = vld [vmem:[%s9420 + $0x110] sm:$0xff]
    %v9456 = vld [vmem:[%s9420 + $0x118] sm:$0xff]
    %v9457 = vld [vmem:[%s9420 + $0x120] sm:$0xff]
    %v9458 = vld [vmem:[%s9420 + $0x128] sm:$0xff]
    %v9459 = vld [vmem:[%s9420 + $0x130] sm:$0xff]
    %v9460 = vld [vmem:[%s9420 + $0x138] sm:$0xff]
    %v9461 = vld [vmem:[%s9420 + $0x140] sm:$0xff]
    %v9462 = vld [vmem:[%s9420 + $0x148] sm:$0xff]
    %v9463 = vld [vmem:[%s9420 + $0x150] sm:$0xff]
    %v9464 = vld [vmem:[%s9420 + $0x158] sm:$0xff]
    %v9465 = vld [vmem:[%s9420 + $0x160] sm:$0xff]
    %v9466 = vld [vmem:[%s9420 + $0x168] sm:$0xff]
    %v9467 = vld [vmem:[%s9420 + $0x170] sm:$0xff]
    %v9468 = vld [vmem:[%s9420 + $0x178] sm:$0xff]
    %v9469 = vld [vmem:[%s9420 + $0x180] sm:$0xff]
    %v9470 = vld [vmem:[%s9420 + $0x188] sm:$0xff]
    %v9471 = vld [vmem:[%s9420 + $0x190] sm:$0xff]
    %v9472 = vld [vmem:[%s9420 + $0x198] sm:$0xff]
    %v9473 = vld [vmem:[%s9420 + $0x1a0] sm:$0xff]
    %v9474 = vld [vmem:[%s9420 + $0x1a8] sm:$0xff]
    %v9475 = vld [vmem:[%s9420 + $0x1b0] sm:$0xff]
    %v9476 = vld [vmem:[%s9420 + $0x1b8] sm:$0xff]
    %v9477 = vld [vmem:[%s9420 + $0x1c0] sm:$0xff]
    %v9478 = vld [vmem:[%s9420 + $0x1c8] sm:$0xff]
    %v9479 = vld [vmem:[%s9420 + $0x1d0] sm:$0xff]
    %v9480 = vld [vmem:[%s9420 + $0x1d8] sm:$0xff]
    %v9481 = vld [vmem:[%s9420 + $0x1e0] sm:$0xff]
    %v9482 = vld [vmem:[%s9420 + $0x1e8] sm:$0xff]
    %v9483 = vld [vmem:[%s9420 + $0x1f0] sm:$0xff]
    %v9484 = vld [vmem:[%s9420 + $0x1f8] sm:$0xff]
    %s9485 = scalar_lea.vmem %s22, 28
    %v9486 = vld [vmem:[%s9485] sm:$0xf]
    %v9488 = vsel %vm2166, %v9486, 0
    %9490 = vmatpush.msra.mxu0 0.0
    %9491 = vmatpush.msra.mxu0 0.0
    %9492 = vmatpush.msra.mxu0 0.0
    %9493 = vmatpush.msra.mxu0 0.0
    %9494 = vmatpush.msra.mxu0 0.0
    %9495 = vmatpush.msra.mxu0 0.0
    %9496 = vmatpush.msra.mxu0 0.0
    %9497 = vmatpush.msra.mxu0 0.0
    %9498 = vmatpush.msra.mxu0 0.0
    %9499 = vmatpush.msra.mxu0 0.0
    %9500 = vmatpush.msra.mxu0 0.0
    %9501 = vmatpush.msra.mxu0 0.0
    %9502 = vmatpush.msra.mxu0 %v8211
    %9503 = vmatpush.msra.mxu0 %v8210
    %9504 = vmatpush.msra.mxu0 %v8209
    %9505 = vmatpush.msra.mxu0 %v8208
    %9506 = vmatmul.f32.gmra.mxu0 %v9488
    %v9507 = vpop.f32.mrf.mxu0
    %v9508 = vadd.f32 0.0, %v9507
    %9509 = vdwg.mxu0
    %9510 = vmatpush.msra.mxu0 %v9481
    %9511 = vmatpush.msra.mxu0 %v9477
    %9512 = vmatpush.msra.mxu0 %v9473
    %9513 = vmatpush.msra.mxu0 %v9469
    %9514 = vmatpush.msra.mxu0 %v9465
    %9515 = vmatpush.msra.mxu0 %v9461
    %9516 = vmatpush.msra.mxu0 %v9457
    %9517 = vmatpush.msra.mxu0 %v9453
    %9518 = vmatpush.msra.mxu0 %v9449
    %9519 = vmatpush.msra.mxu0 %v9445
    %9520 = vmatpush.msra.mxu0 %v9441
    %9521 = vmatpush.msra.mxu0 %v9437
    %9522 = vmatpush.msra.mxu0 %v9433
    %9523 = vmatpush.msra.mxu0 %v9429
    %9524 = vmatpush.msra.mxu0 %v9425
    %9525 = vmatpush.msra.mxu0 %v9421
    %9526 = vmatmul.f32.gmra.mxu0 %v9508
    %v9527 = vpop.f32.mrf.mxu0
    %v9528 = vadd.f32 0.0, %v9527
    %9529 = vdwg.mxu0
    %9530 = vmatpush.msra.mxu0 %v9482
    %9531 = vmatpush.msra.mxu0 %v9478
    %9532 = vmatpush.msra.mxu0 %v9474
    %9533 = vmatpush.msra.mxu0 %v9470
    %9534 = vmatpush.msra.mxu0 %v9466
    %9535 = vmatpush.msra.mxu0 %v9462
    %9536 = vmatpush.msra.mxu0 %v9458
    %9537 = vmatpush.msra.mxu0 %v9454
    %9538 = vmatpush.msra.mxu0 %v9450
    %9539 = vmatpush.msra.mxu0 %v9446
    %9540 = vmatpush.msra.mxu0 %v9442
    %9541 = vmatpush.msra.mxu0 %v9438
    %9542 = vmatpush.msra.mxu0 %v9434
    %9543 = vmatpush.msra.mxu0 %v9430
    %9544 = vmatpush.msra.mxu0 %v9426
    %9545 = vmatpush.msra.mxu0 %v9422
    %9546 = vmatmul.f32.gmra.mxu0 %v9508
    %v9547 = vpop.f32.mrf.mxu0
    %v9548 = vadd.f32 0.0, %v9547
    %9549 = vdwg.mxu0
    %9550 = vmatpush.msra.mxu0 %v9483
    %9551 = vmatpush.msra.mxu0 %v9479
    %9552 = vmatpush.msra.mxu0 %v9475
    %9553 = vmatpush.msra.mxu0 %v9471
    %9554 = vmatpush.msra.mxu0 %v9467
    %9555 = vmatpush.msra.mxu0 %v9463
    %9556 = vmatpush.msra.mxu0 %v9459
    %9557 = vmatpush.msra.mxu0 %v9455
    %9558 = vmatpush.msra.mxu0 %v9451
    %9559 = vmatpush.msra.mxu0 %v9447
    %9560 = vmatpush.msra.mxu0 %v9443
    %9561 = vmatpush.msra.mxu0 %v9439
    %9562 = vmatpush.msra.mxu0 %v9435
    %9563 = vmatpush.msra.mxu0 %v9431
    %9564 = vmatpush.msra.mxu0 %v9427
    %9565 = vmatpush.msra.mxu0 %v9423
    %9566 = vmatmul.f32.gmra.mxu0 %v9508
    %v9567 = vpop.f32.mrf.mxu0
    %v9568 = vadd.f32 0.0, %v9567
    %9569 = vdwg.mxu0
    %9570 = vmatpush.msra.mxu0 %v9484
    %9571 = vmatpush.msra.mxu0 %v9480
    %9572 = vmatpush.msra.mxu0 %v9476
    %9573 = vmatpush.msra.mxu0 %v9472
    %9574 = vmatpush.msra.mxu0 %v9468
    %9575 = vmatpush.msra.mxu0 %v9464
    %9576 = vmatpush.msra.mxu0 %v9460
    %9577 = vmatpush.msra.mxu0 %v9456
    %9578 = vmatpush.msra.mxu0 %v9452
    %9579 = vmatpush.msra.mxu0 %v9448
    %9580 = vmatpush.msra.mxu0 %v9444
    %9581 = vmatpush.msra.mxu0 %v9440
    %9582 = vmatpush.msra.mxu0 %v9436
    %9583 = vmatpush.msra.mxu0 %v9432
    %9584 = vmatpush.msra.mxu0 %v9428
    %9585 = vmatpush.msra.mxu0 %v9424
    %9586 = vmatmul.f32.gmra.mxu0 %v9508
    %v9587 = vpop.f32.mrf.mxu0
    %v9588 = vadd.f32 0.0, %v9587
    %9589 = vdwg.mxu0
    %v9590 = vadd.f32 %v9416, %v9528
    %v9591 = vadd.f32 %v9417, %v9548
    %v9592 = vadd.f32 %v9418, %v9568
    %v9593 = vadd.f32 %v9419, %v9588
    %s9594 = scalar_lea.vmem [#allocation6], 4096
    %v9595 = vld [vmem:[%s9594] sm:$0xff]
    %v9596 = vld [vmem:[%s9594 + $0x8] sm:$0xff]
    %v9597 = vld [vmem:[%s9594 + $0x10] sm:$0xff]
    %v9598 = vld [vmem:[%s9594 + $0x18] sm:$0xff]
    %v9599 = vld [vmem:[%s9594 + $0x20] sm:$0xff]
    %v9600 = vld [vmem:[%s9594 + $0x28] sm:$0xff]
    %v9601 = vld [vmem:[%s9594 + $0x30] sm:$0xff]
    %v9602 = vld [vmem:[%s9594 + $0x38] sm:$0xff]
    %v9603 = vld [vmem:[%s9594 + $0x40] sm:$0xff]
    %v9604 = vld [vmem:[%s9594 + $0x48] sm:$0xff]
    %v9605 = vld [vmem:[%s9594 + $0x50] sm:$0xff]
    %v9606 = vld [vmem:[%s9594 + $0x58] sm:$0xff]
    %v9607 = vld [vmem:[%s9594 + $0x60] sm:$0xff]
    %v9608 = vld [vmem:[%s9594 + $0x68] sm:$0xff]
    %v9609 = vld [vmem:[%s9594 + $0x70] sm:$0xff]
    %v9610 = vld [vmem:[%s9594 + $0x78] sm:$0xff]
    %v9611 = vld [vmem:[%s9594 + $0x80] sm:$0xff]
    %v9612 = vld [vmem:[%s9594 + $0x88] sm:$0xff]
    %v9613 = vld [vmem:[%s9594 + $0x90] sm:$0xff]
    %v9614 = vld [vmem:[%s9594 + $0x98] sm:$0xff]
    %v9615 = vld [vmem:[%s9594 + $0xa0] sm:$0xff]
    %v9616 = vld [vmem:[%s9594 + $0xa8] sm:$0xff]
    %v9617 = vld [vmem:[%s9594 + $0xb0] sm:$0xff]
    %v9618 = vld [vmem:[%s9594 + $0xb8] sm:$0xff]
    %v9619 = vld [vmem:[%s9594 + $0xc0] sm:$0xff]
    %v9620 = vld [vmem:[%s9594 + $0xc8] sm:$0xff]
    %v9621 = vld [vmem:[%s9594 + $0xd0] sm:$0xff]
    %v9622 = vld [vmem:[%s9594 + $0xd8] sm:$0xff]
    %v9623 = vld [vmem:[%s9594 + $0xe0] sm:$0xff]
    %v9624 = vld [vmem:[%s9594 + $0xe8] sm:$0xff]
    %v9625 = vld [vmem:[%s9594 + $0xf0] sm:$0xff]
    %v9626 = vld [vmem:[%s9594 + $0xf8] sm:$0xff]
    %v9627 = vld [vmem:[%s9594 + $0x100] sm:$0xff]
    %v9628 = vld [vmem:[%s9594 + $0x108] sm:$0xff]
    %v9629 = vld [vmem:[%s9594 + $0x110] sm:$0xff]
    %v9630 = vld [vmem:[%s9594 + $0x118] sm:$0xff]
    %v9631 = vld [vmem:[%s9594 + $0x120] sm:$0xff]
    %v9632 = vld [vmem:[%s9594 + $0x128] sm:$0xff]
    %v9633 = vld [vmem:[%s9594 + $0x130] sm:$0xff]
    %v9634 = vld [vmem:[%s9594 + $0x138] sm:$0xff]
    %v9635 = vld [vmem:[%s9594 + $0x140] sm:$0xff]
    %v9636 = vld [vmem:[%s9594 + $0x148] sm:$0xff]
    %v9637 = vld [vmem:[%s9594 + $0x150] sm:$0xff]
    %v9638 = vld [vmem:[%s9594 + $0x158] sm:$0xff]
    %v9639 = vld [vmem:[%s9594 + $0x160] sm:$0xff]
    %v9640 = vld [vmem:[%s9594 + $0x168] sm:$0xff]
    %v9641 = vld [vmem:[%s9594 + $0x170] sm:$0xff]
    %v9642 = vld [vmem:[%s9594 + $0x178] sm:$0xff]
    %v9643 = vld [vmem:[%s9594 + $0x180] sm:$0xff]
    %v9644 = vld [vmem:[%s9594 + $0x188] sm:$0xff]
    %v9645 = vld [vmem:[%s9594 + $0x190] sm:$0xff]
    %v9646 = vld [vmem:[%s9594 + $0x198] sm:$0xff]
    %v9647 = vld [vmem:[%s9594 + $0x1a0] sm:$0xff]
    %v9648 = vld [vmem:[%s9594 + $0x1a8] sm:$0xff]
    %v9649 = vld [vmem:[%s9594 + $0x1b0] sm:$0xff]
    %v9650 = vld [vmem:[%s9594 + $0x1b8] sm:$0xff]
    %v9651 = vld [vmem:[%s9594 + $0x1c0] sm:$0xff]
    %v9652 = vld [vmem:[%s9594 + $0x1c8] sm:$0xff]
    %v9653 = vld [vmem:[%s9594 + $0x1d0] sm:$0xff]
    %v9654 = vld [vmem:[%s9594 + $0x1d8] sm:$0xff]
    %v9655 = vld [vmem:[%s9594 + $0x1e0] sm:$0xff]
    %v9656 = vld [vmem:[%s9594 + $0x1e8] sm:$0xff]
    %v9657 = vld [vmem:[%s9594 + $0x1f0] sm:$0xff]
    %v9658 = vld [vmem:[%s9594 + $0x1f8] sm:$0xff]
    %s9659 = scalar_lea.vmem %s22, 32
    %v9660 = vld [vmem:[%s9659] sm:$0xf]
    %v9662 = vsel %vm2166, %v9660, 0
    %9664 = vmatpush.msra.mxu0 0.0
    %9665 = vmatpush.msra.mxu0 0.0
    %9666 = vmatpush.msra.mxu0 0.0
    %9667 = vmatpush.msra.mxu0 0.0
    %9668 = vmatpush.msra.mxu0 0.0
    %9669 = vmatpush.msra.mxu0 0.0
    %9670 = vmatpush.msra.mxu0 0.0
    %9671 = vmatpush.msra.mxu0 0.0
    %9672 = vmatpush.msra.mxu0 0.0
    %9673 = vmatpush.msra.mxu0 0.0
    %9674 = vmatpush.msra.mxu0 0.0
    %9675 = vmatpush.msra.mxu0 0.0
    %9676 = vmatpush.msra.mxu0 %v8211
    %9677 = vmatpush.msra.mxu0 %v8210
    %9678 = vmatpush.msra.mxu0 %v8209
    %9679 = vmatpush.msra.mxu0 %v8208
    %9680 = vmatmul.f32.gmra.mxu0 %v9662
    %v9681 = vpop.f32.mrf.mxu0
    %v9682 = vadd.f32 0.0, %v9681
    %9683 = vdwg.mxu0
    %9684 = vmatpush.msra.mxu0 %v9655
    %9685 = vmatpush.msra.mxu0 %v9651
    %9686 = vmatpush.msra.mxu0 %v9647
    %9687 = vmatpush.msra.mxu0 %v9643
    %9688 = vmatpush.msra.mxu0 %v9639
    %9689 = vmatpush.msra.mxu0 %v9635
    %9690 = vmatpush.msra.mxu0 %v9631
    %9691 = vmatpush.msra.mxu0 %v9627
    %9692 = vmatpush.msra.mxu0 %v9623
    %9693 = vmatpush.msra.mxu0 %v9619
    %9694 = vmatpush.msra.mxu0 %v9615
    %9695 = vmatpush.msra.mxu0 %v9611
    %9696 = vmatpush.msra.mxu0 %v9607
    %9697 = vmatpush.msra.mxu0 %v9603
    %9698 = vmatpush.msra.mxu0 %v9599
    %9699 = vmatpush.msra.mxu0 %v9595
    %9700 = vmatmul.f32.gmra.mxu0 %v9682
    %v9701 = vpop.f32.mrf.mxu0
    %v9702 = vadd.f32 0.0, %v9701
    %9703 = vdwg.mxu0
    %9704 = vmatpush.msra.mxu0 %v9656
    %9705 = vmatpush.msra.mxu0 %v9652
    %9706 = vmatpush.msra.mxu0 %v9648
    %9707 = vmatpush.msra.mxu0 %v9644
    %9708 = vmatpush.msra.mxu0 %v9640
    %9709 = vmatpush.msra.mxu0 %v9636
    %9710 = vmatpush.msra.mxu0 %v9632
    %9711 = vmatpush.msra.mxu0 %v9628
    %9712 = vmatpush.msra.mxu0 %v9624
    %9713 = vmatpush.msra.mxu0 %v9620
    %9714 = vmatpush.msra.mxu0 %v9616
    %9715 = vmatpush.msra.mxu0 %v9612
    %9716 = vmatpush.msra.mxu0 %v9608
    %9717 = vmatpush.msra.mxu0 %v9604
    %9718 = vmatpush.msra.mxu0 %v9600
    %9719 = vmatpush.msra.mxu0 %v9596
    %9720 = vmatmul.f32.gmra.mxu0 %v9682
    %v9721 = vpop.f32.mrf.mxu0
    %v9722 = vadd.f32 0.0, %v9721
    %9723 = vdwg.mxu0
    %9724 = vmatpush.msra.mxu0 %v9657
    %9725 = vmatpush.msra.mxu0 %v9653
    %9726 = vmatpush.msra.mxu0 %v9649
    %9727 = vmatpush.msra.mxu0 %v9645
    %9728 = vmatpush.msra.mxu0 %v9641
    %9729 = vmatpush.msra.mxu0 %v9637
    %9730 = vmatpush.msra.mxu0 %v9633
    %9731 = vmatpush.msra.mxu0 %v9629
    %9732 = vmatpush.msra.mxu0 %v9625
    %9733 = vmatpush.msra.mxu0 %v9621
    %9734 = vmatpush.msra.mxu0 %v9617
    %9735 = vmatpush.msra.mxu0 %v9613
    %9736 = vmatpush.msra.mxu0 %v9609
    %9737 = vmatpush.msra.mxu0 %v9605
    %9738 = vmatpush.msra.mxu0 %v9601
    %9739 = vmatpush.msra.mxu0 %v9597
    %9740 = vmatmul.f32.gmra.mxu0 %v9682
    %v9741 = vpop.f32.mrf.mxu0
    %v9742 = vadd.f32 0.0, %v9741
    %9743 = vdwg.mxu0
    %9744 = vmatpush.msra.mxu0 %v9658
    %9745 = vmatpush.msra.mxu0 %v9654
    %9746 = vmatpush.msra.mxu0 %v9650
    %9747 = vmatpush.msra.mxu0 %v9646
    %9748 = vmatpush.msra.mxu0 %v9642
    %9749 = vmatpush.msra.mxu0 %v9638
    %9750 = vmatpush.msra.mxu0 %v9634
    %9751 = vmatpush.msra.mxu0 %v9630
    %9752 = vmatpush.msra.mxu0 %v9626
    %9753 = vmatpush.msra.mxu0 %v9622
    %9754 = vmatpush.msra.mxu0 %v9618
    %9755 = vmatpush.msra.mxu0 %v9614
    %9756 = vmatpush.msra.mxu0 %v9610
    %9757 = vmatpush.msra.mxu0 %v9606
    %9758 = vmatpush.msra.mxu0 %v9602
    %9759 = vmatpush.msra.mxu0 %v9598
    %9760 = vmatmul.f32.gmra.mxu0 %v9682
    %v9761 = vpop.f32.mrf.mxu0
    %v9762 = vadd.f32 0.0, %v9761
    %9763 = vdwg.mxu0
    %v9764 = vadd.f32 %v9590, %v9702
    %v9765 = vadd.f32 %v9591, %v9722
    %v9766 = vadd.f32 %v9592, %v9742
    %v9767 = vadd.f32 %v9593, %v9762
    %v9768 = vsel %vm448, %v9764, 0.0
    %v9769 = vsel %vm448, %v9765, 0.0
    %v9770 = vadd.f32 %v9768, %v9769
    %v9771 = vsel %vm448, %v9766, 0.0
    %v9772 = vadd.f32 %v9770, %v9771
    %v9773 = vsel %vm448, %v9767, 0.0
    %v9774 = vadd.f32 %v9772, %v9773
    %9775 = vadd.xlane.f32.xlu0 %v9774
    %v9776 = vpop.xlane.xlu0 %9775
    %v9777 = vrcp.pop 512.0
    %v9778 = vmul.f32 512.0, %v9777
    %v9779 = vsub.f32 1.0, %v9778
    %v9780 = vmul.f32 %v9777, %v9779
    %v9781 = vadd.f32 %v9777, %v9780
    %vm9782 = vweird.f32 %v9777
    %v9783 = vsel %vm9782, %v9777, %v9781
    %v9784 = vmul.f32 %v9776, %v9783
    %v9785 = vsub.f32 %v9764, %v9784
    %v9786 = vsub.f32 %v9765, %v9784
    %v9787 = vsub.f32 %v9766, %v9784
    %v9788 = vsub.f32 %v9767, %v9784
    %v9789 = vmul.f32 %v9785, %v9785
    %v9790 = vmul.f32 %v9786, %v9786
    %v9791 = vmul.f32 %v9787, %v9787
    %v9792 = vmul.f32 %v9788, %v9788
    %v9793 = vsel %vm448, %v9789, 0.0
    %v9794 = vsel %vm448, %v9790, 0.0
    %v9795 = vadd.f32 %v9793, %v9794
    %v9796 = vsel %vm448, %v9791, 0.0
    %v9797 = vadd.f32 %v9795, %v9796
    %v9798 = vsel %vm448, %v9792, 0.0
    %v9799 = vadd.f32 %v9797, %v9798
    %9800 = vadd.xlane.f32.xlu0 %v9799
    %v9801 = vpop.xlane.xlu0 %9800
    %v9802 = vmul.f32 %v9801, %v9783
    %v9803 = vadd.f32 %v9802, 1e-05
    %v9804 = vrsqrt.pop %v9803
    %v9805 = vmul.f32 %v9804, %v9803
    %v9806 = vmul.f32 %v9805, %v9804
    %v9807 = vmul.f32 0.5, %v9806
    %v9808 = vsub.f32 1.5, %v9807
    %v9809 = vmul.f32 %v9804, %v9808
    %vm9810 = vweird.f32 %v9803
    %vm9811 = vweird.f32 %v9804
    %vm9812 = vmor %vm9810, %vm9811
    %v9813 = vsel %vm9812, %v9804, %v9809
    %v9814 = vmul.f32 %v9785, %v9813
    %v9815 = vmul.f32 %v9786, %v9813
    %v9816 = vmul.f32 %v9787, %v9813
    %v9817 = vmul.f32 %v9788, %v9813
    %v9818 = vld [vmem:[%s23] sm:$0xf]
    %9820 = vset.pattern.permute.xlu0 0
    %9821 = vperm.xlu0 %9820, %v9818
    %v9822 = vpop.permute.xlu0 %9821
    %v9824 = vmul.f32 %v9814, %v9822
    %v9825 = vmul.f32 %v9815, %v9822
    %v9826 = vmul.f32 %v9816, %v9822
    %v9827 = vmul.f32 %v9817, %v9822
    %v9828 = vld [vmem:[%s24] sm:$0xf]
    %9830 = vset.pattern.permute.xlu0 0
    %9831 = vperm.xlu0 %9830, %v9828
    %v9832 = vpop.permute.xlu0 %9831
    %v9834 = vadd.f32 %v9824, %v9832
    %v9835 = vadd.f32 %v9825, %v9832
    %v9836 = vadd.f32 %v9826, %v9832
    %v9837 = vadd.f32 %v9827, %v9832
    %v9838 = vxor.u32 %v9834, 2147483648
    %v9839 = vxor.u32 %v9835, 2147483648
    %v9840 = vxor.u32 %v9836, 2147483648
    %v9841 = vxor.u32 %v9837, 2147483648
    %v9842 = vmul.f32 %v9838, 1.442695
    %v9843 = vpow.pop %v9842
    %v9844 = vmul.f32 %v9839, 1.442695
    %v9845 = vpow.pop %v9844
    %v9846 = vmul.f32 %v9840, 1.442695
    %v9847 = vpow.pop %v9846
    %v9848 = vmul.f32 %v9841, 1.442695
    %v9849 = vpow.pop %v9848
    %v9850 = vadd.f32 %v9843, 1.0
    %v9851 = vadd.f32 %v9845, 1.0
    %v9852 = vadd.f32 %v9847, 1.0
    %v9853 = vadd.f32 %v9849, 1.0
    %v9854 = vrcp.pop %v9850
    %v9855 = vmul.f32 %v9850, %v9854
    %v9856 = vsub.f32 1.0, %v9855
    %v9857 = vmul.f32 %v9854, %v9856
    %v9858 = vadd.f32 %v9854, %v9857
    %vm9859 = vweird.f32 %v9850
    %vm9860 = vweird.f32 %v9854
    %vm9861 = vmor %vm9859, %vm9860
    %v9862 = vsel %vm9861, %v9854, %v9858
    %v9863 = vand.u32 2147483647, %v9850
    %vm9864 = vcmp.eq.f32.partialorder %v9863, 8.507059e+37
    %v9865 = vand.u32 %v9850, 2147483648
    %v9866 = vor.u32 1.1754944e-38, %v9865
    %v9867 = vsel %vm9864, %v9866, %v9862
    %v9868 = vmul.f32 1.0, %v9867
    %v9869 = vrcp.pop %v9851
    %v9870 = vmul.f32 %v9851, %v9869
    %v9871 = vsub.f32 1.0, %v9870
    %v9872 = vmul.f32 %v9869, %v9871
    %v9873 = vadd.f32 %v9869, %v9872
    %vm9874 = vweird.f32 %v9851
    %vm9875 = vweird.f32 %v9869
    %vm9876 = vmor %vm9874, %vm9875
    %v9877 = vsel %vm9876, %v9869, %v9873
    %v9878 = vand.u32 2147483647, %v9851
    %vm9879 = vcmp.eq.f32.partialorder %v9878, 8.507059e+37
    %v9880 = vand.u32 %v9851, 2147483648
    %v9881 = vor.u32 1.1754944e-38, %v9880
    %v9882 = vsel %vm9879, %v9881, %v9877
    %v9883 = vmul.f32 1.0, %v9882
    %v9884 = vrcp.pop %v9852
    %v9885 = vmul.f32 %v9852, %v9884
    %v9886 = vsub.f32 1.0, %v9885
    %v9887 = vmul.f32 %v9884, %v9886
    %v9888 = vadd.f32 %v9884, %v9887
    %vm9889 = vweird.f32 %v9852
    %vm9890 = vweird.f32 %v9884
    %vm9891 = vmor %vm9889, %vm9890
    %v9892 = vsel %vm9891, %v9884, %v9888
    %v9893 = vand.u32 2147483647, %v9852
    %vm9894 = vcmp.eq.f32.partialorder %v9893, 8.507059e+37
    %v9895 = vand.u32 %v9852, 2147483648
    %v9896 = vor.u32 1.1754944e-38, %v9895
    %v9897 = vsel %vm9894, %v9896, %v9892
    %v9898 = vmul.f32 1.0, %v9897
    %v9899 = vrcp.pop %v9853
    %v9900 = vmul.f32 %v9853, %v9899
    %v9901 = vsub.f32 1.0, %v9900
    %v9902 = vmul.f32 %v9899, %v9901
    %v9903 = vadd.f32 %v9899, %v9902
    %vm9904 = vweird.f32 %v9853
    %vm9905 = vweird.f32 %v9899
    %vm9906 = vmor %vm9904, %vm9905
    %v9907 = vsel %vm9906, %v9899, %v9903
    %v9908 = vand.u32 2147483647, %v9853
    %vm9909 = vcmp.eq.f32.partialorder %v9908, 8.507059e+37
    %v9910 = vand.u32 %v9853, 2147483648
    %v9911 = vor.u32 1.1754944e-38, %v9910
    %v9912 = vsel %vm9909, %v9911, %v9907
    %v9913 = vmul.f32 1.0, %v9912
    %9914 = vst [vmem:[%s25] sm:$0xf] %v9868
    %9915 = vst [vmem:[%s25 + $0x8] sm:$0xf] %v9883
    %v9918 = vrot.slane %v9898, 4
    %v9919 = vrot.slane %v9913, 4
    %9922 = vst [vmem:[%s25] sm:$0xf0] %v9918
    %9923 = vst [vmem:[%s25 + $0x8] sm:$0xf0] %v9919
    // Predicated region
    $region114: #{conv2d_autoencoder_forward.1} parent=1 // pred_check
      _
    $region115: #{conv2d_autoencoder_forward.1} parent=1 // pred_check_branch
      %9925 = sbr.rel (0) target = $region117
    $region116: #{conv2d_autoencoder_forward.1} parent=1 // pred_region
      _
    $region117: #{conv2d_autoencoder_forward.1} parent=1 // pred_fallthru
      _
    // Predicated region
    $region118: #{conv2d_autoencoder_forward.1} parent=1 // pred_check
      _
    $region119: #{conv2d_autoencoder_forward.1} parent=1 // pred_check_branch
      %9927 = sbr.rel (0) target = $region121
    $region120: #{conv2d_autoencoder_forward.1} parent=1 // pred_region
      _
    $region121: #{conv2d_autoencoder_forward.1} parent=1 // pred_fallthru
      _
    %9928 = vsyncpa [#allocation3], 1
    %9929 = vsyncpa [#allocation5], 1

</llo_original>
